<compile_context>
chip_gen: v5e
topology: v5e:2x2
jax: 0.10.0
libtpu: 0.0.40
codegen_flags: <defaults>
</compile_context>

<pallas_src>
import jax
import jax.numpy as jnp
from jax.experimental import pallas as pl
from jax.experimental.pallas import tpu as pltpu

BN_EPS = 1e-5
C_PAD = 128          # lane-dense channel padding for the conv/BN/flatten stage


# ---------------------------------------------------------------------------
# Fused kernel (built per static (batch, Ho*Wo, C_PAD))
# ---------------------------------------------------------------------------
def _make_fused_kernel(nb, hw, cpad):
    def kernel(taps_ref, wc_ref, bc_ref, gamma_ref, beta_ref, wfc_ref, bfc_ref,
               o_ref, z_ref, flat_ref):
        # --- conv1 as ONE lane-dense im2col matmul (K = 9*Cin) + bias + ReLU ----------
        acc = jnp.dot(taps_ref[...], wc_ref[...], preferred_element_type=jnp.float32)
        r = jnp.maximum(acc + bc_ref[...], 0.0)                    # [M, C_PAD]

        # --- BatchNorm2d, training-mode batch statistics over M = N*Ho*Wo --------------
        inv_m = 1.0 / r.shape[0]
        mean = jnp.sum(r, axis=0, keepdims=True) * inv_m           # [1, C_PAD]
        ex2 = jnp.sum(r * r, axis=0, keepdims=True) * inv_m
        var = jnp.maximum(ex2 - mean * mean, 0.0)                  # clamp one-pass cancellation
        scale = gamma_ref[...] * jax.lax.rsqrt(var + BN_EPS)       # padded lanes: gamma=0 -> 0
        shift = beta_ref[...] - mean * scale
        z_ref[...] = r * scale + shift                             # BN out; padded lanes == 0

        # --- Flatten in-kernel: (n, hw, c) rows -> lane-dense [N, HW*C_PAD] scratch -----
        # Statically unrolled, 128-lane-aligned row moves (pure vld/vst, no relayout).
        for bi in range(nb):
            row0 = bi * hw
            for si in range(hw):
                off = si * cpad
                flat_ref[bi:bi + 1, off:off + cpad] = z_ref[row0 + si:row0 + si + 1, :]

        # --- fc2: one deep-K matmul + bias ----------------------------------------------
        o_ref[...] = (jnp.dot(flat_ref[...], wfc_ref[...],
                              preferred_element_type=jnp.float32)
                      + bfc_ref[...]).astype(o_ref.dtype)

    return kernel


# ---------------------------------------------------------------------------
# One-time parameter preparation (hoisted out of the jitted forward)
# ---------------------------------------------------------------------------
def prepare_params(conv_w, conv_b, gamma, beta, fc_w, fc_b, cpad=C_PAD):
    cout, cin, kh, kw = conv_w.shape
    o_dim, fc_in = fc_w.shape
    hw = fc_in // cout
    pad_c = cpad - cout

    # conv weight [Cout, Cin, kH, kW] -> [kH*kW*Cin, C_PAD]  (row order kh, kw, ci)
    wc = jnp.transpose(conv_w, (2, 3, 1, 0)).reshape(kh * kw * cin, cout)
    wc = jnp.pad(wc, ((0, 0), (0, pad_c)))

    bc = jnp.pad(conv_b, (0, pad_c)).reshape(1, cpad)
    g = jnp.pad(gamma, (0, pad_c)).reshape(1, cpad)    # zero-padded -> padded lanes stay 0
    b = jnp.pad(beta, (0, pad_c)).reshape(1, cpad)

    # fc weight [O, Cout*Ho*Wo] (PyTorch (c,h,w) flatten) -> [HW*C_PAD, O], row = hw*C_PAD + c,
    # zero rows for the padded channels (they multiply the exact-zero padded lanes anyway).
    w3 = jnp.transpose(fc_w.reshape(o_dim, cout, hw), (2, 1, 0))   # [HW, Cout, O]
    w3 = jnp.pad(w3, ((0, 0), (0, pad_c), (0, 0)))                 # [HW, C_PAD, O]
    wfc = w3.reshape(hw * cpad, o_dim)
    bfc = fc_b.reshape(1, o_dim)
    return wc, bc, g, b, wfc, bfc


# ---------------------------------------------------------------------------
# im2col (layout glue; data-dependent, stays inside the jitted forward)
# ---------------------------------------------------------------------------
def _im2col_taps(x_nchw, k, stride, pad):
    """NCHW input -> lane-dense tap matrix [N*Ho*Wo, k*k*Cin] (feature order kh, kw, ci)."""
    n, cin, h, w = x_nchw.shape
    ho = (h + 2 * pad - k) // stride + 1
    wo = (w + 2 * pad - k) // stride + 1
    x = jnp.transpose(x_nchw, (0, 2, 3, 1))                        # NHWC
    x = jnp.pad(x, ((0, 0), (pad, pad), (pad, pad), (0, 0)))
    taps = jnp.concatenate(
        [x[:, kh:kh + stride * ho:stride, kw:kw + stride * wo:stride, :]
         for kh in range(k) for kw in range(k)],
        axis=-1)                                                   # [N, Ho, Wo, k*k*Cin]
    return taps.reshape(n * ho * wo, k * k * cin), ho, wo
    # TODO(synk): for large batch/spatial, move im2col into the kernel (DMA padded NHWC,
    # build taps in VMEM) and add an M-grid with cross-step BN stats for megacore / VMEM.


# ---------------------------------------------------------------------------
# Forward
# ---------------------------------------------------------------------------
@jax.jit
def bn_before_flatten_linear(x, wc, bc, g, b, wfc, bfc):
    nb = x.shape[0]
    cpad = wc.shape[1]
    o_dim = wfc.shape[1]
    k, stride, pad = 3, 2, 1

    taps, ho, wo = _im2col_taps(x, k, stride, pad)                 # [M, 9*Cin], rows (n,ho,wo)
    hw = ho * wo
    m = nb * hw
    assert wfc.shape[0] == hw * cpad

    vmem = pl.BlockSpec(memory_space=pltpu.MemorySpace.VMEM)
    kernel = _make_fused_kernel(nb, hw, cpad)

    return pl.pallas_call(
        kernel,
        out_shape=jax.ShapeDtypeStruct((nb, o_dim), jnp.float32),
        in_specs=[vmem] * 7,
        out_specs=vmem,
        scratch_shapes=[
            pltpu.VMEM((m, cpad), jnp.float32),                    # BN output scratch
            pltpu.VMEM((nb, hw * cpad), jnp.float32),              # flattened activation
        ],
        compiler_params=pltpu.CompilerParams(vmem_limit_bytes=32 * 1024 * 1024),
    )(taps, wc, bc, g, b, wfc, bfc)


# ---------------------------------------------------------------------------
# Pure-JAX reference (mirrors the PyTorch forward in train mode)
# ---------------------------------------------------------------------------
def _reference(x, conv_w, conv_b, gamma, beta, fc_w, fc_b):
    hi = jax.lax.Precision.HIGHEST
    dn = ("NCHW", "OIHW", "NCHW")
    y = jax.lax.conv_general_dilated(x, conv_w, (2, 2), ((1, 1), (1, 1)),
                                     dimension_numbers=dn, precision=hi)
    y = y + conv_b[None, :, None, None]
    y = jnp.maximum(y, 0.0)
    mean = jnp.mean(y, axis=(0, 2, 3), keepdims=True)
    var = jnp.mean((y - mean) ** 2, axis=(0, 2, 3), keepdims=True)
    y = (y - mean) * jax.lax.rsqrt(var + BN_EPS)
    y = y * gamma[None, :, None, None] + beta[None, :, None, None]
    flat = y.reshape(y.shape[0], -1)                               # PyTorch flatten (c, h, w)
    return flat @ fc_w.T + fc_b


# ---------------------------------------------------------------------------
if __name__ == "__main__":
    key = jax.random.PRNGKey(0)
    kx, kw, kb, kg, kbe, kfw, kfb = jax.random.split(key, 7)

    # Module implies: Cin=10, Cout=20, 3x3 / pad 1 / stride 2, fc2 in = 20*12*12 -> H=W=24.
    N, CIN, H, W = 2, 10, 24, 24
    COUT, K, STRIDE, PAD = 20, 3, 2, 1
    HO = (H + 2 * PAD - K) // STRIDE + 1
    WO = (W + 2 * PAD - K) // STRIDE + 1
    FC_IN, FC_OUT = COUT * HO * WO, 20

    x = jax.random.normal(kx, (N, CIN, H, W), jnp.float32)
    conv_w = jax.random.normal(kw, (COUT, CIN, K, K), jnp.float32) * 0.1
    conv_b = jax.random.normal(kb, (COUT,), jnp.float32) * 0.1
    gamma = 1.0 + 0.1 * jax.random.normal(kg, (COUT,), jnp.float32)
    beta = 0.1 * jax.random.normal(kbe, (COUT,), jnp.float32)
    fc_w = jax.random.normal(kfw, (FC_OUT, FC_IN), jnp.float32) * 0.02
    fc_b = jax.random.normal(kfb, (FC_OUT,), jnp.float32) * 0.1

    # One-time parameter prep (weight permutes / lane padding hoisted out of the forward).
    params = prepare_params(conv_w, conv_b, gamma, beta, fc_w, fc_b)
    params = jax.tree_util.tree_map(jax.block_until_ready, params)

    out = bn_before_flatten_linear(x, *params)
    out = jax.block_until_ready(out)
    assert out.shape == (N, FC_OUT), out.shape

    ref = _reference(x, conv_w, conv_b, gamma, beta, fc_w, fc_b)
    max_err = float(jnp.max(jnp.abs(out - ref)))
    assert max_err < 2e-2, f"mismatch vs reference: {max_err}"

    print("KERNEL_OK")
</pallas_src>

<mosaic_0001>
module attributes {stable_mosaic.version = 11 : i64} {
  func.func @kernel(%arg0: memref<288x90xf32, #tpu.memory_space<vmem>>, %arg1: memref<90x128xf32, #tpu.memory_space<vmem>>, %arg2: memref<1x128xf32, #tpu.memory_space<vmem>>, %arg3: memref<1x128xf32, #tpu.memory_space<vmem>>, %arg4: memref<1x128xf32, #tpu.memory_space<vmem>>, %arg5: memref<18432x20xf32, #tpu.memory_space<vmem>>, %arg6: memref<1x20xf32, #tpu.memory_space<vmem>>, %arg7: memref<2x20xf32, #tpu.memory_space<vmem>>, %arg8: memref<288x128xf32, #tpu.memory_space<vmem>>, %arg9: memref<2x18432xf32, #tpu.memory_space<vmem>>) attributes {dimension_semantics = [], scalar_prefetch = 0 : i64, scratch_operands = 2 : i64, tpu.core_type = #tpu.core_type<tc>} {
    %c0 = arith.constant 0 : index
    %c0_0 = arith.constant 0 : index
    %0 = vector.load %arg0[%c0, %c0_0] : memref<288x90xf32, #tpu.memory_space<vmem>>, vector<288x90xf32>
    %c0_1 = arith.constant 0 : index
    %c0_2 = arith.constant 0 : index
    %1 = vector.load %arg1[%c0_1, %c0_2] : memref<90x128xf32, #tpu.memory_space<vmem>>, vector<90x128xf32>
    %cst = arith.constant dense<0.000000e+00> : vector<288x128xf32>
    %2 = tpu.matmul %0, %1, %cst {dimension_numbers = #tpu.dot_dimension_numbers<[1], [0], [0], [1], [0, 0, 1, 1], [], []>} : vector<288x90xf32>, vector<90x128xf32>, vector<288x128xf32> -> vector<288x128xf32>
    %c0_3 = arith.constant 0 : index
    %c0_4 = arith.constant 0 : index
    %3 = vector.load %arg2[%c0_3, %c0_4] : memref<1x128xf32, #tpu.memory_space<vmem>>, vector<1x128xf32>
    %4 = vector.broadcast %3 : vector<1x128xf32> to vector<288x128xf32>
    %5 = arith.addf %2, %4 : vector<288x128xf32>
    %cst_5 = arith.constant 0.000000e+00 : f32
    %6 = vector.broadcast %cst_5 : f32 to vector<288x128xf32>
    %7 = arith.maximumf %5, %6 : vector<288x128xf32>
    %cst_6 = arith.constant dense<0.000000e+00> : vector<128xf32>
    %8 = vector.multi_reduction <add>, %7, %cst_6 [0] : vector<288x128xf32> to vector<128xf32>
    %9 = vector.shape_cast %8 : vector<128xf32> to vector<1x128xf32>
    %cst_7 = arith.constant 0.00347222225 : f32
    %10 = vector.broadcast %cst_7 : f32 to vector<1x128xf32>
    %11 = arith.mulf %9, %10 : vector<1x128xf32>
    %12 = arith.mulf %7, %7 : vector<288x128xf32>
    %cst_8 = arith.constant dense<0.000000e+00> : vector<128xf32>
    %13 = vector.multi_reduction <add>, %12, %cst_8 [0] : vector<288x128xf32> to vector<128xf32>
    %14 = vector.shape_cast %13 : vector<128xf32> to vector<1x128xf32>
    %cst_9 = arith.constant 0.00347222225 : f32
    %15 = vector.broadcast %cst_9 : f32 to vector<1x128xf32>
    %16 = arith.mulf %14, %15 : vector<1x128xf32>
    %17 = arith.mulf %11, %11 : vector<1x128xf32>
    %18 = arith.subf %16, %17 : vector<1x128xf32>
    %cst_10 = arith.constant 0.000000e+00 : f32
    %19 = vector.broadcast %cst_10 : f32 to vector<1x128xf32>
    %20 = arith.maximumf %18, %19 : vector<1x128xf32>
    %c0_11 = arith.constant 0 : index
    %c0_12 = arith.constant 0 : index
    %21 = vector.load %arg3[%c0_11, %c0_12] : memref<1x128xf32, #tpu.memory_space<vmem>>, vector<1x128xf32>
    %cst_13 = arith.constant 9.99999974E-6 : f32
    %22 = vector.broadcast %cst_13 : f32 to vector<1x128xf32>
    %23 = arith.addf %20, %22 : vector<1x128xf32>
    %24 = math.rsqrt %23 : vector<1x128xf32>
    %25 = arith.mulf %21, %24 : vector<1x128xf32>
    %c0_14 = arith.constant 0 : index
    %c0_15 = arith.constant 0 : index
    %26 = vector.load %arg4[%c0_14, %c0_15] : memref<1x128xf32, #tpu.memory_space<vmem>>, vector<1x128xf32>
    %27 = arith.mulf %11, %25 : vector<1x128xf32>
    %28 = arith.subf %26, %27 : vector<1x128xf32>
    %29 = vector.broadcast %25 : vector<1x128xf32> to vector<288x128xf32>
    %30 = arith.mulf %7, %29 : vector<288x128xf32>
    %31 = vector.broadcast %28 : vector<1x128xf32> to vector<288x128xf32>
    %32 = arith.addf %30, %31 : vector<288x128xf32>
    %c0_16 = arith.constant 0 : index
    %c0_17 = arith.constant 0 : index
    %33 = vector.load %arg8[%c0_16, %c0_17] : memref<288x128xf32, #tpu.memory_space<vmem>>, vector<288x128xf32>
    tpu.vector_store %arg8[%c0_16, %c0_17], %32 {strides = array<i32>} : memref<288x128xf32, #tpu.memory_space<vmem>>, vector<288x128xf32>,
    %c0_18 = arith.constant 0 : index
    %c0_19 = arith.constant 0 : index
    %34 = vector.load %arg8[%c0_18, %c0_19] : memref<288x128xf32, #tpu.memory_space<vmem>>, vector<1x128xf32>
    %c0_20 = arith.constant 0 : index
    %c0_21 = arith.constant 0 : index
    %35 = vector.load %arg9[%c0_20, %c0_21] : memref<2x18432xf32, #tpu.memory_space<vmem>>, vector<1x128xf32>
    tpu.vector_store %arg9[%c0_20, %c0_21], %34 {strides = array<i32>} : memref<2x18432xf32, #tpu.memory_space<vmem>>, vector<1x128xf32>,
    %c1 = arith.constant 1 : index
    %c0_22 = arith.constant 0 : index
    %36 = vector.load %arg8[%c1, %c0_22] : memref<288x128xf32, #tpu.memory_space<vmem>>, vector<1x128xf32>
    %c0_23 = arith.constant 0 : index
    %c128 = arith.constant 128 : index
    %37 = vector.load %arg9[%c0_23, %c128] : memref<2x18432xf32, #tpu.memory_space<vmem>>, vector<1x128xf32>
    tpu.vector_store %arg9[%c0_23, %c128], %36 {strides = array<i32>} : memref<2x18432xf32, #tpu.memory_space<vmem>>, vector<1x128xf32>,
    %c2 = arith.constant 2 : index
    %c0_24 = arith.constant 0 : index
    %38 = vector.load %arg8[%c2, %c0_24] : memref<288x128xf32, #tpu.memory_space<vmem>>, vector<1x128xf32>
    %c0_25 = arith.constant 0 : index
    %c256 = arith.constant 256 : index
    %39 = vector.load %arg9[%c0_25, %c256] : memref<2x18432xf32, #tpu.memory_space<vmem>>, vector<1x128xf32>
    tpu.vector_store %arg9[%c0_25, %c256], %38 {strides = array<i32>} : memref<2x18432xf32, #tpu.memory_space<vmem>>, vector<1x128xf32>,
    %c3 = arith.constant 3 : index
    %c0_26 = arith.constant 0 : index
    %40 = vector.load %arg8[%c3, %c0_26] : memref<288x128xf32, #tpu.memory_space<vmem>>, vector<1x128xf32>
    %c0_27 = arith.constant 0 : index
    %c384 = arith.constant 384 : index
    %41 = vector.load %arg9[%c0_27, %c384] : memref<2x18432xf32, #tpu.memory_space<vmem>>, vector<1x128xf32>
    tpu.vector_store %arg9[%c0_27, %c384], %40 {strides = array<i32>} : memref<2x18432xf32, #tpu.memory_space<vmem>>, vector<1x128xf32>,
    %c4 = arith.constant 4 : index
    %c0_28 = arith.constant 0 : index
    %42 = vector.load %arg8[%c4, %c0_28] : memref<288x128xf32, #tpu.memory_space<vmem>>, vector<1x128xf32>
    %c0_29 = arith.constant 0 : index
    %c512 = arith.constant 512 : index
    %43 = vector.load %arg9[%c0_29, %c512] : memref<2x18432xf32, #tpu.memory_space<vmem>>, vector<1x128xf32>
    tpu.vector_store %arg9[%c0_29, %c512], %42 {strides = array<i32>} : memref<2x18432xf32, #tpu.memory_space<vmem>>, vector<1x128xf32>,
    %c5 = arith.constant 5 : index
    %c0_30 = arith.constant 0 : index
    %44 = vector.load %arg8[%c5, %c0_30] : memref<288x128xf32, #tpu.memory_space<vmem>>, vector<1x128xf32>
    %c0_31 = arith.constant 0 : index
    %c640 = arith.constant 640 : index
    %45 = vector.load %arg9[%c0_31, %c640] : memref<2x18432xf32, #tpu.memory_space<vmem>>, vector<1x128xf32>
    tpu.vector_store %arg9[%c0_31, %c640], %44 {strides = array<i32>} : memref<2x18432xf32, #tpu.memory_space<vmem>>, vector<1x128xf32>,
    %c6 = arith.constant 6 : index
    %c0_32 = arith.constant 0 : index
    %46 = vector.load %arg8[%c6, %c0_32] : memref<288x128xf32, #tpu.memory_space<vmem>>, vector<1x128xf32>
    %c0_33 = arith.constant 0 : index
    %c768 = arith.constant 768 : index
    %47 = vector.load %arg9[%c0_33, %c768] : memref<2x18432xf32, #tpu.memory_space<vmem>>, vector<1x128xf32>
    tpu.vector_store %arg9[%c0_33, %c768], %46 {strides = array<i32>} : memref<2x18432xf32, #tpu.memory_space<vmem>>, vector<1x128xf32>,
    %c7 = arith.constant 7 : index
    %c0_34 = arith.constant 0 : index
    %48 = vector.load %arg8[%c7, %c0_34] : memref<288x128xf32, #tpu.memory_space<vmem>>, vector<1x128xf32>
    %c0_35 = arith.constant 0 : index
    %c896 = arith.constant 896 : index
    %49 = vector.load %arg9[%c0_35, %c896] : memref<2x18432xf32, #tpu.memory_space<vmem>>, vector<1x128xf32>
    tpu.vector_store %arg9[%c0_35, %c896], %48 {strides = array<i32>} : memref<2x18432xf32, #tpu.memory_space<vmem>>, vector<1x128xf32>,
    %c8 = arith.constant 8 : index
    %c0_36 = arith.constant 0 : index
    %50 = vector.load %arg8[%c8, %c0_36] : memref<288x128xf32, #tpu.memory_space<vmem>>, vector<1x128xf32>
    %c0_37 = arith.constant 0 : index
    %c1024 = arith.constant 1024 : index
    %51 = vector.load %arg9[%c0_37, %c1024] : memref<2x18432xf32, #tpu.memory_space<vmem>>, vector<1x128xf32>
    tpu.vector_store %arg9[%c0_37, %c1024], %50 {strides = array<i32>} : memref<2x18432xf32, #tpu.memory_space<vmem>>, vector<1x128xf32>,
    %c9 = arith.constant 9 : index
    %c0_38 = arith.constant 0 : index
    %52 = vector.load %arg8[%c9, %c0_38] : memref<288x128xf32, #tpu.memory_space<vmem>>, vector<1x128xf32>
    %c0_39 = arith.constant 0 : index
    %c1152 = arith.constant 1152 : index
    %53 = vector.load %arg9[%c0_39, %c1152] : memref<2x18432xf32, #tpu.memory_space<vmem>>, vector<1x128xf32>
    tpu.vector_store %arg9[%c0_39, %c1152], %52 {strides = array<i32>} : memref<2x18432xf32, #tpu.memory_space<vmem>>, vector<1x128xf32>,
    %c10 = arith.constant 10 : index
    %c0_40 = arith.constant 0 : index
    %54 = vector.load %arg8[%c10, %c0_40] : memref<288x128xf32, #tpu.memory_space<vmem>>, vector<1x128xf32>
    %c0_41 = arith.constant 0 : index
    %c1280 = arith.constant 1280 : index
    %55 = vector.load %arg9[%c0_41, %c1280] : memref<2x18432xf32, #tpu.memory_space<vmem>>, vector<1x128xf32>
    tpu.vector_store %arg9[%c0_41, %c1280], %54 {strides = array<i32>} : memref<2x18432xf32, #tpu.memory_space<vmem>>, vector<1x128xf32>,
    %c11 = arith.constant 11 : index
    %c0_42 = arith.constant 0 : index
    %56 = vector.load %arg8[%c11, %c0_42] : memref<288x128xf32, #tpu.memory_space<vmem>>, vector<1x128xf32>
    %c0_43 = arith.constant 0 : index
    %c1408 = arith.constant 1408 : index
    %57 = vector.load %arg9[%c0_43, %c1408] : memref<2x18432xf32, #tpu.memory_space<vmem>>, vector<1x128xf32>
    tpu.vector_store %arg9[%c0_43, %c1408], %56 {strides = array<i32>} : memref<2x18432xf32, #tpu.memory_space<vmem>>, vector<1x128xf32>,
    %c12 = arith.constant 12 : index
    %c0_44 = arith.constant 0 : index
    %58 = vector.load %arg8[%c12, %c0_44] : memref<288x128xf32, #tpu.memory_space<vmem>>, vector<1x128xf32>
    %c0_45 = arith.constant 0 : index
    %c1536 = arith.constant 1536 : index
    %59 = vector.load %arg9[%c0_45, %c1536] : memref<2x18432xf32, #tpu.memory_space<vmem>>, vector<1x128xf32>
    tpu.vector_store %arg9[%c0_45, %c1536], %58 {strides = array<i32>} : memref<2x18432xf32, #tpu.memory_space<vmem>>, vector<1x128xf32>,
    %c13 = arith.constant 13 : index
    %c0_46 = arith.constant 0 : index
    %60 = vector.load %arg8[%c13, %c0_46] : memref<288x128xf32, #tpu.memory_space<vmem>>, vector<1x128xf32>
    %c0_47 = arith.constant 0 : index
    %c1664 = arith.constant 1664 : index
    %61 = vector.load %arg9[%c0_47, %c1664] : memref<2x18432xf32, #tpu.memory_space<vmem>>, vector<1x128xf32>
    tpu.vector_store %arg9[%c0_47, %c1664], %60 {strides = array<i32>} : memref<2x18432xf32, #tpu.memory_space<vmem>>, vector<1x128xf32>,
    %c14 = arith.constant 14 : index
    %c0_48 = arith.constant 0 : index
    %62 = vector.load %arg8[%c14, %c0_48] : memref<288x128xf32, #tpu.memory_space<vmem>>, vector<1x128xf32>
    %c0_49 = arith.constant 0 : index
    %c1792 = arith.constant 1792 : index
    %63 = vector.load %arg9[%c0_49, %c1792] : memref<2x18432xf32, #tpu.memory_space<vmem>>, vector<1x128xf32>
    tpu.vector_store %arg9[%c0_49, %c1792], %62 {strides = array<i32>} : memref<2x18432xf32, #tpu.memory_space<vmem>>, vector<1x128xf32>,
    %c15 = arith.constant 15 : index
    %c0_50 = arith.constant 0 : index
    %64 = vector.load %arg8[%c15, %c0_50] : memref<288x128xf32, #tpu.memory_space<vmem>>, vector<1x128xf32>
    %c0_51 = arith.constant 0 : index
    %c1920 = arith.constant 1920 : index
    %65 = vector.load %arg9[%c0_51, %c1920] : memref<2x18432xf32, #tpu.memory_space<vmem>>, vector<1x128xf32>
    tpu.vector_store %arg9[%c0_51, %c1920], %64 {strides = array<i32>} : memref<2x18432xf32, #tpu.memory_space<vmem>>, vector<1x128xf32>,
    %c16 = arith.constant 16 : index
    %c0_52 = arith.constant 0 : index
    %66 = vector.load %arg8[%c16, %c0_52] : memref<288x128xf32, #tpu.memory_space<vmem>>, vector<1x128xf32>
    %c0_53 = arith.constant 0 : index
    %c2048 = arith.constant 2048 : index
    %67 = vector.load %arg9[%c0_53, %c2048] : memref<2x18432xf32, #tpu.memory_space<vmem>>, vector<1x128xf32>
    tpu.vector_store %arg9[%c0_53, %c2048], %66 {strides = array<i32>} : memref<2x18432xf32, #tpu.memory_space<vmem>>, vector<1x128xf32>,
    %c17 = arith.constant 17 : index
    %c0_54 = arith.constant 0 : index
    %68 = vector.load %arg8[%c17, %c0_54] : memref<288x128xf32, #tpu.memory_space<vmem>>, vector<1x128xf32>
    %c0_55 = arith.constant 0 : index
    %c2176 = arith.constant 2176 : index
    %69 = vector.load %arg9[%c0_55, %c2176] : memref<2x18432xf32, #tpu.memory_space<vmem>>, vector<1x128xf32>
    tpu.vector_store %arg9[%c0_55, %c2176], %68 {strides = array<i32>} : memref<2x18432xf32, #tpu.memory_space<vmem>>, vector<1x128xf32>,
    %c18 = arith.constant 18 : index
    %c0_56 = arith.constant 0 : index
    %70 = vector.load %arg8[%c18, %c0_56] : memref<288x128xf32, #tpu.memory_space<vmem>>, vector<1x128xf32>
    %c0_57 = arith.constant 0 : index
    %c2304 = arith.constant 2304 : index
    %71 = vector.load %arg9[%c0_57, %c2304] : memref<2x18432xf32, #tpu.memory_space<vmem>>, vector<1x128xf32>
    tpu.vector_store %arg9[%c0_57, %c2304], %70 {strides = array<i32>} : memref<2x18432xf32, #tpu.memory_space<vmem>>, vector<1x128xf32>,
    %c19 = arith.constant 19 : index
    %c0_58 = arith.constant 0 : index
    %72 = vector.load %arg8[%c19, %c0_58] : memref<288x128xf32, #tpu.memory_space<vmem>>, vector<1x128xf32>
    %c0_59 = arith.constant 0 : index
    %c2432 = arith.constant 2432 : index
    %73 = vector.load %arg9[%c0_59, %c2432] : memref<2x18432xf32, #tpu.memory_space<vmem>>, vector<1x128xf32>
    tpu.vector_store %arg9[%c0_59, %c2432], %72 {strides = array<i32>} : memref<2x18432xf32, #tpu.memory_space<vmem>>, vector<1x128xf32>,
    %c20 = arith.constant 20 : index
    %c0_60 = arith.constant 0 : index
    %74 = vector.load %arg8[%c20, %c0_60] : memref<288x128xf32, #tpu.memory_space<vmem>>, vector<1x128xf32>
    %c0_61 = arith.constant 0 : index
    %c2560 = arith.constant 2560 : index
    %75 = vector.load %arg9[%c0_61, %c2560] : memref<2x18432xf32, #tpu.memory_space<vmem>>, vector<1x128xf32>
    tpu.vector_store %arg9[%c0_61, %c2560], %74 {strides = array<i32>} : memref<2x18432xf32, #tpu.memory_space<vmem>>, vector<1x128xf32>,
    %c21 = arith.constant 21 : index
    %c0_62 = arith.constant 0 : index
    %76 = vector.load %arg8[%c21, %c0_62] : memref<288x128xf32, #tpu.memory_space<vmem>>, vector<1x128xf32>
    %c0_63 = arith.constant 0 : index
    %c2688 = arith.constant 2688 : index
    %77 = vector.load %arg9[%c0_63, %c2688] : memref<2x18432xf32, #tpu.memory_space<vmem>>, vector<1x128xf32>
    tpu.vector_store %arg9[%c0_63, %c2688], %76 {strides = array<i32>} : memref<2x18432xf32, #tpu.memory_space<vmem>>, vector<1x128xf32>,
    %c22 = arith.constant 22 : index
    %c0_64 = arith.constant 0 : index
    %78 = vector.load %arg8[%c22, %c0_64] : memref<288x128xf32, #tpu.memory_space<vmem>>, vector<1x128xf32>
    %c0_65 = arith.constant 0 : index
    %c2816 = arith.constant 2816 : index
    %79 = vector.load %arg9[%c0_65, %c2816] : memref<2x18432xf32, #tpu.memory_space<vmem>>, vector<1x128xf32>
    tpu.vector_store %arg9[%c0_65, %c2816], %78 {strides = array<i32>} : memref<2x18432xf32, #tpu.memory_space<vmem>>, vector<1x128xf32>,
    %c23 = arith.constant 23 : index
    %c0_66 = arith.constant 0 : index
    %80 = vector.load %arg8[%c23, %c0_66] : memref<288x128xf32, #tpu.memory_space<vmem>>, vector<1x128xf32>
    %c0_67 = arith.constant 0 : index
    %c2944 = arith.constant 2944 : index
    %81 = vector.load %arg9[%c0_67, %c2944] : memref<2x18432xf32, #tpu.memory_space<vmem>>, vector<1x128xf32>
    tpu.vector_store %arg9[%c0_67, %c2944], %80 {strides = array<i32>} : memref<2x18432xf32, #tpu.memory_space<vmem>>, vector<1x128xf32>,
    %c24 = arith.constant 24 : index
    %c0_68 = arith.constant 0 : index
    %82 = vector.load %arg8[%c24, %c0_68] : memref<288x128xf32, #tpu.memory_space<vmem>>, vector<1x128xf32>
    %c0_69 = arith.constant 0 : index
    %c3072 = arith.constant 3072 : index
    %83 = vector.load %arg9[%c0_69, %c3072] : memref<2x18432xf32, #tpu.memory_space<vmem>>, vector<1x128xf32>
    tpu.vector_store %arg9[%c0_69, %c3072], %82 {strides = array<i32>} : memref<2x18432xf32, #tpu.memory_space<vmem>>, vector<1x128xf32>,
    %c25 = arith.constant 25 : index
    %c0_70 = arith.constant 0 : index
    %84 = vector.load %arg8[%c25, %c0_70] : memref<288x128xf32, #tpu.memory_space<vmem>>, vector<1x128xf32>
    %c0_71 = arith.constant 0 : index
    %c3200 = arith.constant 3200 : index
    %85 = vector.load %arg9[%c0_71, %c3200] : memref<2x18432xf32, #tpu.memory_space<vmem>>, vector<1x128xf32>
    tpu.vector_store %arg9[%c0_71, %c3200], %84 {strides = array<i32>} : memref<2x18432xf32, #tpu.memory_space<vmem>>, vector<1x128xf32>,
    %c26 = arith.constant 26 : index
    %c0_72 = arith.constant 0 : index
    %86 = vector.load %arg8[%c26, %c0_72] : memref<288x128xf32, #tpu.memory_space<vmem>>, vector<1x128xf32>
    %c0_73 = arith.constant 0 : index
    %c3328 = arith.constant 3328 : index
    %87 = vector.load %arg9[%c0_73, %c3328] : memref<2x18432xf32, #tpu.memory_space<vmem>>, vector<1x128xf32>
    tpu.vector_store %arg9[%c0_73, %c3328], %86 {strides = array<i32>} : memref<2x18432xf32, #tpu.memory_space<vmem>>, vector<1x128xf32>,
    %c27 = arith.constant 27 : index
    %c0_74 = arith.constant 0 : index
    %88 = vector.load %arg8[%c27, %c0_74] : memref<288x128xf32, #tpu.memory_space<vmem>>, vector<1x128xf32>
    %c0_75 = arith.constant 0 : index
    %c3456 = arith.constant 3456 : index
    %89 = vector.load %arg9[%c0_75, %c3456] : memref<2x18432xf32, #tpu.memory_space<vmem>>, vector<1x128xf32>
    tpu.vector_store %arg9[%c0_75, %c3456], %88 {strides = array<i32>} : memref<2x18432xf32, #tpu.memory_space<vmem>>, vector<1x128xf32>,
    %c28 = arith.constant 28 : index
    %c0_76 = arith.constant 0 : index
    %90 = vector.load %arg8[%c28, %c0_76] : memref<288x128xf32, #tpu.memory_space<vmem>>, vector<1x128xf32>
    %c0_77 = arith.constant 0 : index
    %c3584 = arith.constant 3584 : index
    %91 = vector.load %arg9[%c0_77, %c3584] : memref<2x18432xf32, #tpu.memory_space<vmem>>, vector<1x128xf32>
    tpu.vector_store %arg9[%c0_77, %c3584], %90 {strides = array<i32>} : memref<2x18432xf32, #tpu.memory_space<vmem>>, vector<1x128xf32>,
    %c29 = arith.constant 29 : index
    %c0_78 = arith.constant 0 : index
    %92 = vector.load %arg8[%c29, %c0_78] : memref<288x128xf32, #tpu.memory_space<vmem>>, vector<1x128xf32>
    %c0_79 = arith.constant 0 : index
    %c3712 = arith.constant 3712 : index
    %93 = vector.load %arg9[%c0_79, %c3712] : memref<2x18432xf32, #tpu.memory_space<vmem>>, vector<1x128xf32>
    tpu.vector_store %arg9[%c0_79, %c3712], %92 {strides = array<i32>} : memref<2x18432xf32, #tpu.memory_space<vmem>>, vector<1x128xf32>,
    %c30 = arith.constant 30 : index
    %c0_80 = arith.constant 0 : index
    %94 = vector.load %arg8[%c30, %c0_80] : memref<288x128xf32, #tpu.memory_space<vmem>>, vector<1x128xf32>
    %c0_81 = arith.constant 0 : index
    %c3840 = arith.constant 3840 : index
    %95 = vector.load %arg9[%c0_81, %c3840] : memref<2x18432xf32, #tpu.memory_space<vmem>>, vector<1x128xf32>
    tpu.vector_store %arg9[%c0_81, %c3840], %94 {strides = array<i32>} : memref<2x18432xf32, #tpu.memory_space<vmem>>, vector<1x128xf32>,
    %c31 = arith.constant 31 : index
    %c0_82 = arith.constant 0 : index
    %96 = vector.load %arg8[%c31, %c0_82] : memref<288x128xf32, #tpu.memory_space<vmem>>, vector<1x128xf32>
    %c0_83 = arith.constant 0 : index
    %c3968 = arith.constant 3968 : index
    %97 = vector.load %arg9[%c0_83, %c3968] : memref<2x18432xf32, #tpu.memory_space<vmem>>, vector<1x128xf32>
    tpu.vector_store %arg9[%c0_83, %c3968], %96 {strides = array<i32>} : memref<2x18432xf32, #tpu.memory_space<vmem>>, vector<1x128xf32>,
    %c32 = arith.constant 32 : index
    %c0_84 = arith.constant 0 : index
    %98 = vector.load %arg8[%c32, %c0_84] : memref<288x128xf32, #tpu.memory_space<vmem>>, vector<1x128xf32>
    %c0_85 = arith.constant 0 : index
    %c4096 = arith.constant 4096 : index
    %99 = vector.load %arg9[%c0_85, %c4096] : memref<2x18432xf32, #tpu.memory_space<vmem>>, vector<1x128xf32>
    tpu.vector_store %arg9[%c0_85, %c4096], %98 {strides = array<i32>} : memref<2x18432xf32, #tpu.memory_space<vmem>>, vector<1x128xf32>,
    %c33 = arith.constant 33 : index
    %c0_86 = arith.constant 0 : index
    %100 = vector.load %arg8[%c33, %c0_86] : memref<288x128xf32, #tpu.memory_space<vmem>>, vector<1x128xf32>
    %c0_87 = arith.constant 0 : index
    %c4224 = arith.constant 4224 : index
    %101 = vector.load %arg9[%c0_87, %c4224] : memref<2x18432xf32, #tpu.memory_space<vmem>>, vector<1x128xf32>
    tpu.vector_store %arg9[%c0_87, %c4224], %100 {strides = array<i32>} : memref<2x18432xf32, #tpu.memory_space<vmem>>, vector<1x128xf32>,
    %c34 = arith.constant 34 : index
    %c0_88 = arith.constant 0 : index
    %102 = vector.load %arg8[%c34, %c0_88] : memref<288x128xf32, #tpu.memory_space<vmem>>, vector<1x128xf32>
    %c0_89 = arith.constant 0 : index
    %c4352 = arith.constant 4352 : index
    %103 = vector.load %arg9[%c0_89, %c4352] : memref<2x18432xf32, #tpu.memory_space<vmem>>, vector<1x128xf32>
    tpu.vector_store %arg9[%c0_89, %c4352], %102 {strides = array<i32>} : memref<2x18432xf32, #tpu.memory_space<vmem>>, vector<1x128xf32>,
    %c35 = arith.constant 35 : index
    %c0_90 = arith.constant 0 : index
    %104 = vector.load %arg8[%c35, %c0_90] : memref<288x128xf32, #tpu.memory_space<vmem>>, vector<1x128xf32>
    %c0_91 = arith.constant 0 : index
    %c4480 = arith.constant 4480 : index
    %105 = vector.load %arg9[%c0_91, %c4480] : memref<2x18432xf32, #tpu.memory_space<vmem>>, vector<1x128xf32>
    tpu.vector_store %arg9[%c0_91, %c4480], %104 {strides = array<i32>} : memref<2x18432xf32, #tpu.memory_space<vmem>>, vector<1x128xf32>,
    %c36 = arith.constant 36 : index
    %c0_92 = arith.constant 0 : index
    %106 = vector.load %arg8[%c36, %c0_92] : memref<288x128xf32, #tpu.memory_space<vmem>>, vector<1x128xf32>
    %c0_93 = arith.constant 0 : index
    %c4608 = arith.constant 4608 : index
    %107 = vector.load %arg9[%c0_93, %c4608] : memref<2x18432xf32, #tpu.memory_space<vmem>>, vector<1x128xf32>
    tpu.vector_store %arg9[%c0_93, %c4608], %106 {strides = array<i32>} : memref<2x18432xf32, #tpu.memory_space<vmem>>, vector<1x128xf32>,
    %c37 = arith.constant 37 : index
    %c0_94 = arith.constant 0 : index
    %108 = vector.load %arg8[%c37, %c0_94] : memref<288x128xf32, #tpu.memory_space<vmem>>, vector<1x128xf32>
    %c0_95 = arith.constant 0 : index
    %c4736 = arith.constant 4736 : index
    %109 = vector.load %arg9[%c0_95, %c4736] : memref<2x18432xf32, #tpu.memory_space<vmem>>, vector<1x128xf32>
    tpu.vector_store %arg9[%c0_95, %c4736], %108 {strides = array<i32>} : memref<2x18432xf32, #tpu.memory_space<vmem>>, vector<1x128xf32>,
    %c38 = arith.constant 38 : index
    %c0_96 = arith.constant 0 : index
    %110 = vector.load %arg8[%c38, %c0_96] : memref<288x128xf32, #tpu.memory_space<vmem>>, vector<1x128xf32>
    %c0_97 = arith.constant 0 : index
    %c4864 = arith.constant 4864 : index
    %111 = vector.load %arg9[%c0_97, %c4864] : memref<2x18432xf32, #tpu.memory_space<vmem>>, vector<1x128xf32>
    tpu.vector_store %arg9[%c0_97, %c4864], %110 {strides = array<i32>} : memref<2x18432xf32, #tpu.memory_space<vmem>>, vector<1x128xf32>,
    %c39 = arith.constant 39 : index
    %c0_98 = arith.constant 0 : index
    %112 = vector.load %arg8[%c39, %c0_98] : memref<288x128xf32, #tpu.memory_space<vmem>>, vector<1x128xf32>
    %c0_99 = arith.constant 0 : index
    %c4992 = arith.constant 4992 : index
    %113 = vector.load %arg9[%c0_99, %c4992] : memref<2x18432xf32, #tpu.memory_space<vmem>>, vector<1x128xf32>
    tpu.vector_store %arg9[%c0_99, %c4992], %112 {strides = array<i32>} : memref<2x18432xf32, #tpu.memory_space<vmem>>, vector<1x128xf32>,
    %c40 = arith.constant 40 : index
    %c0_100 = arith.constant 0 : index
    %114 = vector.load %arg8[%c40, %c0_100] : memref<288x128xf32, #tpu.memory_space<vmem>>, vector<1x128xf32>
    %c0_101 = arith.constant 0 : index
    %c5120 = arith.constant 5120 : index
    %115 = vector.load %arg9[%c0_101, %c5120] : memref<2x18432xf32, #tpu.memory_space<vmem>>, vector<1x128xf32>
    tpu.vector_store %arg9[%c0_101, %c5120], %114 {strides = array<i32>} : memref<2x18432xf32, #tpu.memory_space<vmem>>, vector<1x128xf32>,
    %c41 = arith.constant 41 : index
    %c0_102 = arith.constant 0 : index
    %116 = vector.load %arg8[%c41, %c0_102] : memref<288x128xf32, #tpu.memory_space<vmem>>, vector<1x128xf32>
    %c0_103 = arith.constant 0 : index
    %c5248 = arith.constant 5248 : index
    %117 = vector.load %arg9[%c0_103, %c5248] : memref<2x18432xf32, #tpu.memory_space<vmem>>, vector<1x128xf32>
    tpu.vector_store %arg9[%c0_103, %c5248], %116 {strides = array<i32>} : memref<2x18432xf32, #tpu.memory_space<vmem>>, vector<1x128xf32>,
    %c42 = arith.constant 42 : index
    %c0_104 = arith.constant 0 : index
    %118 = vector.load %arg8[%c42, %c0_104] : memref<288x128xf32, #tpu.memory_space<vmem>>, vector<1x128xf32>
    %c0_105 = arith.constant 0 : index
    %c5376 = arith.constant 5376 : index
    %119 = vector.load %arg9[%c0_105, %c5376] : memref<2x18432xf32, #tpu.memory_space<vmem>>, vector<1x128xf32>
    tpu.vector_store %arg9[%c0_105, %c5376], %118 {strides = array<i32>} : memref<2x18432xf32, #tpu.memory_space<vmem>>, vector<1x128xf32>,
    %c43 = arith.constant 43 : index
    %c0_106 = arith.constant 0 : index
    %120 = vector.load %arg8[%c43, %c0_106] : memref<288x128xf32, #tpu.memory_space<vmem>>, vector<1x128xf32>
    %c0_107 = arith.constant 0 : index
    %c5504 = arith.constant 5504 : index
    %121 = vector.load %arg9[%c0_107, %c5504] : memref<2x18432xf32, #tpu.memory_space<vmem>>, vector<1x128xf32>
    tpu.vector_store %arg9[%c0_107, %c5504], %120 {strides = array<i32>} : memref<2x18432xf32, #tpu.memory_space<vmem>>, vector<1x128xf32>,
    %c44 = arith.constant 44 : index
    %c0_108 = arith.constant 0 : index
    %122 = vector.load %arg8[%c44, %c0_108] : memref<288x128xf32, #tpu.memory_space<vmem>>, vector<1x128xf32>
    %c0_109 = arith.constant 0 : index
    %c5632 = arith.constant 5632 : index
    %123 = vector.load %arg9[%c0_109, %c5632] : memref<2x18432xf32, #tpu.memory_space<vmem>>, vector<1x128xf32>
    tpu.vector_store %arg9[%c0_109, %c5632], %122 {strides = array<i32>} : memref<2x18432xf32, #tpu.memory_space<vmem>>, vector<1x128xf32>,
    %c45 = arith.constant 45 : index
    %c0_110 = arith.constant 0 : index
    %124 = vector.load %arg8[%c45, %c0_110] : memref<288x128xf32, #tpu.memory_space<vmem>>, vector<1x128xf32>
    %c0_111 = arith.constant 0 : index
    %c5760 = arith.constant 5760 : index
    %125 = vector.load %arg9[%c0_111, %c5760] : memref<2x18432xf32, #tpu.memory_space<vmem>>, vector<1x128xf32>
    tpu.vector_store %arg9[%c0_111, %c5760], %124 {strides = array<i32>} : memref<2x18432xf32, #tpu.memory_space<vmem>>, vector<1x128xf32>,
    %c46 = arith.constant 46 : index
    %c0_112 = arith.constant 0 : index
    %126 = vector.load %arg8[%c46, %c0_112] : memref<288x128xf32, #tpu.memory_space<vmem>>, vector<1x128xf32>
    %c0_113 = arith.constant 0 : index
    %c5888 = arith.constant 5888 : index
    %127 = vector.load %arg9[%c0_113, %c5888] : memref<2x18432xf32, #tpu.memory_space<vmem>>, vector<1x128xf32>
    tpu.vector_store %arg9[%c0_113, %c5888], %126 {strides = array<i32>} : memref<2x18432xf32, #tpu.memory_space<vmem>>, vector<1x128xf32>,
    %c47 = arith.constant 47 : index
    %c0_114 = arith.constant 0 : index
    %128 = vector.load %arg8[%c47, %c0_114] : memref<288x128xf32, #tpu.memory_space<vmem>>, vector<1x128xf32>
    %c0_115 = arith.constant 0 : index
    %c6016 = arith.constant 6016 : index
    %129 = vector.load %arg9[%c0_115, %c6016] : memref<2x18432xf32, #tpu.memory_space<vmem>>, vector<1x128xf32>
    tpu.vector_store %arg9[%c0_115, %c6016], %128 {strides = array<i32>} : memref<2x18432xf32, #tpu.memory_space<vmem>>, vector<1x128xf32>,
    %c48 = arith.constant 48 : index
    %c0_116 = arith.constant 0 : index
    %130 = vector.load %arg8[%c48, %c0_116] : memref<288x128xf32, #tpu.memory_space<vmem>>, vector<1x128xf32>
    %c0_117 = arith.constant 0 : index
    %c6144 = arith.constant 6144 : index
    %131 = vector.load %arg9[%c0_117, %c6144] : memref<2x18432xf32, #tpu.memory_space<vmem>>, vector<1x128xf32>
    tpu.vector_store %arg9[%c0_117, %c6144], %130 {strides = array<i32>} : memref<2x18432xf32, #tpu.memory_space<vmem>>, vector<1x128xf32>,
    %c49 = arith.constant 49 : index
    %c0_118 = arith.constant 0 : index
    %132 = vector.load %arg8[%c49, %c0_118] : memref<288x128xf32, #tpu.memory_space<vmem>>, vector<1x128xf32>
    %c0_119 = arith.constant 0 : index
    %c6272 = arith.constant 6272 : index
    %133 = vector.load %arg9[%c0_119, %c6272] : memref<2x18432xf32, #tpu.memory_space<vmem>>, vector<1x128xf32>
    tpu.vector_store %arg9[%c0_119, %c6272], %132 {strides = array<i32>} : memref<2x18432xf32, #tpu.memory_space<vmem>>, vector<1x128xf32>,
    %c50 = arith.constant 50 : index
    %c0_120 = arith.constant 0 : index
    %134 = vector.load %arg8[%c50, %c0_120] : memref<288x128xf32, #tpu.memory_space<vmem>>, vector<1x128xf32>
    %c0_121 = arith.constant 0 : index
    %c6400 = arith.constant 6400 : index
    %135 = vector.load %arg9[%c0_121, %c6400] : memref<2x18432xf32, #tpu.memory_space<vmem>>, vector<1x128xf32>
    tpu.vector_store %arg9[%c0_121, %c6400], %134 {strides = array<i32>} : memref<2x18432xf32, #tpu.memory_space<vmem>>, vector<1x128xf32>,
    %c51 = arith.constant 51 : index
    %c0_122 = arith.constant 0 : index
    %136 = vector.load %arg8[%c51, %c0_122] : memref<288x128xf32, #tpu.memory_space<vmem>>, vector<1x128xf32>
    %c0_123 = arith.constant 0 : index
    %c6528 = arith.constant 6528 : index
    %137 = vector.load %arg9[%c0_123, %c6528] : memref<2x18432xf32, #tpu.memory_space<vmem>>, vector<1x128xf32>
    tpu.vector_store %arg9[%c0_123, %c6528], %136 {strides = array<i32>} : memref<2x18432xf32, #tpu.memory_space<vmem>>, vector<1x128xf32>,
    %c52 = arith.constant 52 : index
    %c0_124 = arith.constant 0 : index
    %138 = vector.load %arg8[%c52, %c0_124] : memref<288x128xf32, #tpu.memory_space<vmem>>, vector<1x128xf32>
    %c0_125 = arith.constant 0 : index
    %c6656 = arith.constant 6656 : index
    %139 = vector.load %arg9[%c0_125, %c6656] : memref<2x18432xf32, #tpu.memory_space<vmem>>, vector<1x128xf32>
    tpu.vector_store %arg9[%c0_125, %c6656], %138 {strides = array<i32>} : memref<2x18432xf32, #tpu.memory_space<vmem>>, vector<1x128xf32>,
    %c53 = arith.constant 53 : index
    %c0_126 = arith.constant 0 : index
    %140 = vector.load %arg8[%c53, %c0_126] : memref<288x128xf32, #tpu.memory_space<vmem>>, vector<1x128xf32>
    %c0_127 = arith.constant 0 : index
    %c6784 = arith.constant 6784 : index
    %141 = vector.load %arg9[%c0_127, %c6784] : memref<2x18432xf32, #tpu.memory_space<vmem>>, vector<1x128xf32>
    tpu.vector_store %arg9[%c0_127, %c6784], %140 {strides = array<i32>} : memref<2x18432xf32, #tpu.memory_space<vmem>>, vector<1x128xf32>,
    %c54 = arith.constant 54 : index
    %c0_128 = arith.constant 0 : index
    %142 = vector.load %arg8[%c54, %c0_128] : memref<288x128xf32, #tpu.memory_space<vmem>>, vector<1x128xf32>
    %c0_129 = arith.constant 0 : index
    %c6912 = arith.constant 6912 : index
    %143 = vector.load %arg9[%c0_129, %c6912] : memref<2x18432xf32, #tpu.memory_space<vmem>>, vector<1x128xf32>
    tpu.vector_store %arg9[%c0_129, %c6912], %142 {strides = array<i32>} : memref<2x18432xf32, #tpu.memory_space<vmem>>, vector<1x128xf32>,
    %c55 = arith.constant 55 : index
    %c0_130 = arith.constant 0 : index
    %144 = vector.load %arg8[%c55, %c0_130] : memref<288x128xf32, #tpu.memory_space<vmem>>, vector<1x128xf32>
    %c0_131 = arith.constant 0 : index
    %c7040 = arith.constant 7040 : index
    %145 = vector.load %arg9[%c0_131, %c7040] : memref<2x18432xf32, #tpu.memory_space<vmem>>, vector<1x128xf32>
    tpu.vector_store %arg9[%c0_131, %c7040], %144 {strides = array<i32>} : memref<2x18432xf32, #tpu.memory_space<vmem>>, vector<1x128xf32>,
    %c56 = arith.constant 56 : index
    %c0_132 = arith.constant 0 : index
    %146 = vector.load %arg8[%c56, %c0_132] : memref<288x128xf32, #tpu.memory_space<vmem>>, vector<1x128xf32>
    %c0_133 = arith.constant 0 : index
    %c7168 = arith.constant 7168 : index
    %147 = vector.load %arg9[%c0_133, %c7168] : memref<2x18432xf32, #tpu.memory_space<vmem>>, vector<1x128xf32>
    tpu.vector_store %arg9[%c0_133, %c7168], %146 {strides = array<i32>} : memref<2x18432xf32, #tpu.memory_space<vmem>>, vector<1x128xf32>,
    %c57 = arith.constant 57 : index
    %c0_134 = arith.constant 0 : index
    %148 = vector.load %arg8[%c57, %c0_134] : memref<288x128xf32, #tpu.memory_space<vmem>>, vector<1x128xf32>
    %c0_135 = arith.constant 0 : index
    %c7296 = arith.constant 7296 : index
    %149 = vector.load %arg9[%c0_135, %c7296] : memref<2x18432xf32, #tpu.memory_space<vmem>>, vector<1x128xf32>
    tpu.vector_store %arg9[%c0_135, %c7296], %148 {strides = array<i32>} : memref<2x18432xf32, #tpu.memory_space<vmem>>, vector<1x128xf32>,
    %c58 = arith.constant 58 : index
    %c0_136 = arith.constant 0 : index
    %150 = vector.load %arg8[%c58, %c0_136] : memref<288x128xf32, #tpu.memory_space<vmem>>, vector<1x128xf32>
    %c0_137 = arith.constant 0 : index
    %c7424 = arith.constant 7424 : index
    %151 = vector.load %arg9[%c0_137, %c7424] : memref<2x18432xf32, #tpu.memory_space<vmem>>, vector<1x128xf32>
    tpu.vector_store %arg9[%c0_137, %c7424], %150 {strides = array<i32>} : memref<2x18432xf32, #tpu.memory_space<vmem>>, vector<1x128xf32>,
    %c59 = arith.constant 59 : index
    %c0_138 = arith.constant 0 : index
    %152 = vector.load %arg8[%c59, %c0_138] : memref<288x128xf32, #tpu.memory_space<vmem>>, vector<1x128xf32>
    %c0_139 = arith.constant 0 : index
    %c7552 = arith.constant 7552 : index
    %153 = vector.load %arg9[%c0_139, %c7552] : memref<2x18432xf32, #tpu.memory_space<vmem>>, vector<1x128xf32>
    tpu.vector_store %arg9[%c0_139, %c7552], %152 {strides = array<i32>} : memref<2x18432xf32, #tpu.memory_space<vmem>>, vector<1x128xf32>,
    %c60 = arith.constant 60 : index
    %c0_140 = arith.constant 0 : index
    %154 = vector.load %arg8[%c60, %c0_140] : memref<288x128xf32, #tpu.memory_space<vmem>>, vector<1x128xf32>
    %c0_141 = arith.constant 0 : index
    %c7680 = arith.constant 7680 : index
    %155 = vector.load %arg9[%c0_141, %c7680] : memref<2x18432xf32, #tpu.memory_space<vmem>>, vector<1x128xf32>
    tpu.vector_store %arg9[%c0_141, %c7680], %154 {strides = array<i32>} : memref<2x18432xf32, #tpu.memory_space<vmem>>, vector<1x128xf32>,
    %c61 = arith.constant 61 : index
    %c0_142 = arith.constant 0 : index
    %156 = vector.load %arg8[%c61, %c0_142] : memref<288x128xf32, #tpu.memory_space<vmem>>, vector<1x128xf32>
    %c0_143 = arith.constant 0 : index
    %c7808 = arith.constant 7808 : index
    %157 = vector.load %arg9[%c0_143, %c7808] : memref<2x18432xf32, #tpu.memory_space<vmem>>, vector<1x128xf32>
    tpu.vector_store %arg9[%c0_143, %c7808], %156 {strides = array<i32>} : memref<2x18432xf32, #tpu.memory_space<vmem>>, vector<1x128xf32>,
    %c62 = arith.constant 62 : index
    %c0_144 = arith.constant 0 : index
    %158 = vector.load %arg8[%c62, %c0_144] : memref<288x128xf32, #tpu.memory_space<vmem>>, vector<1x128xf32>
    %c0_145 = arith.constant 0 : index
    %c7936 = arith.constant 7936 : index
    %159 = vector.load %arg9[%c0_145, %c7936] : memref<2x18432xf32, #tpu.memory_space<vmem>>, vector<1x128xf32>
    tpu.vector_store %arg9[%c0_145, %c7936], %158 {strides = array<i32>} : memref<2x18432xf32, #tpu.memory_space<vmem>>, vector<1x128xf32>,
    %c63 = arith.constant 63 : index
    %c0_146 = arith.constant 0 : index
    %160 = vector.load %arg8[%c63, %c0_146] : memref<288x128xf32, #tpu.memory_space<vmem>>, vector<1x128xf32>
    %c0_147 = arith.constant 0 : index
    %c8064 = arith.constant 8064 : index
    %161 = vector.load %arg9[%c0_147, %c8064] : memref<2x18432xf32, #tpu.memory_space<vmem>>, vector<1x128xf32>
    tpu.vector_store %arg9[%c0_147, %c8064], %160 {strides = array<i32>} : memref<2x18432xf32, #tpu.memory_space<vmem>>, vector<1x128xf32>,
    %c64 = arith.constant 64 : index
    %c0_148 = arith.constant 0 : index
    %162 = vector.load %arg8[%c64, %c0_148] : memref<288x128xf32, #tpu.memory_space<vmem>>, vector<1x128xf32>
    %c0_149 = arith.constant 0 : index
    %c8192 = arith.constant 8192 : index
    %163 = vector.load %arg9[%c0_149, %c8192] : memref<2x18432xf32, #tpu.memory_space<vmem>>, vector<1x128xf32>
    tpu.vector_store %arg9[%c0_149, %c8192], %162 {strides = array<i32>} : memref<2x18432xf32, #tpu.memory_space<vmem>>, vector<1x128xf32>,
    %c65 = arith.constant 65 : index
    %c0_150 = arith.constant 0 : index
    %164 = vector.load %arg8[%c65, %c0_150] : memref<288x128xf32, #tpu.memory_space<vmem>>, vector<1x128xf32>
    %c0_151 = arith.constant 0 : index
    %c8320 = arith.constant 8320 : index
    %165 = vector.load %arg9[%c0_151, %c8320] : memref<2x18432xf32, #tpu.memory_space<vmem>>, vector<1x128xf32>
    tpu.vector_store %arg9[%c0_151, %c8320], %164 {strides = array<i32>} : memref<2x18432xf32, #tpu.memory_space<vmem>>, vector<1x128xf32>,
    %c66 = arith.constant 66 : index
    %c0_152 = arith.constant 0 : index
    %166 = vector.load %arg8[%c66, %c0_152] : memref<288x128xf32, #tpu.memory_space<vmem>>, vector<1x128xf32>
    %c0_153 = arith.constant 0 : index
    %c8448 = arith.constant 8448 : index
    %167 = vector.load %arg9[%c0_153, %c8448] : memref<2x18432xf32, #tpu.memory_space<vmem>>, vector<1x128xf32>
    tpu.vector_store %arg9[%c0_153, %c8448], %166 {strides = array<i32>} : memref<2x18432xf32, #tpu.memory_space<vmem>>, vector<1x128xf32>,
    %c67 = arith.constant 67 : index
    %c0_154 = arith.constant 0 : index
    %168 = vector.load %arg8[%c67, %c0_154] : memref<288x128xf32, #tpu.memory_space<vmem>>, vector<1x128xf32>
    %c0_155 = arith.constant 0 : index
    %c8576 = arith.constant 8576 : index
    %169 = vector.load %arg9[%c0_155, %c8576] : memref<2x18432xf32, #tpu.memory_space<vmem>>, vector<1x128xf32>
    tpu.vector_store %arg9[%c0_155, %c8576], %168 {strides = array<i32>} : memref<2x18432xf32, #tpu.memory_space<vmem>>, vector<1x128xf32>,
    %c68 = arith.constant 68 : index
    %c0_156 = arith.constant 0 : index
    %170 = vector.load %arg8[%c68, %c0_156] : memref<288x128xf32, #tpu.memory_space<vmem>>, vector<1x128xf32>
    %c0_157 = arith.constant 0 : index
    %c8704 = arith.constant 8704 : index
    %171 = vector.load %arg9[%c0_157, %c8704] : memref<2x18432xf32, #tpu.memory_space<vmem>>, vector<1x128xf32>
    tpu.vector_store %arg9[%c0_157, %c8704], %170 {strides = array<i32>} : memref<2x18432xf32, #tpu.memory_space<vmem>>, vector<1x128xf32>,
    %c69 = arith.constant 69 : index
    %c0_158 = arith.constant 0 : index
    %172 = vector.load %arg8[%c69, %c0_158] : memref<288x128xf32, #tpu.memory_space<vmem>>, vector<1x128xf32>
    %c0_159 = arith.constant 0 : index
    %c8832 = arith.constant 8832 : index
    %173 = vector.load %arg9[%c0_159, %c8832] : memref<2x18432xf32, #tpu.memory_space<vmem>>, vector<1x128xf32>
    tpu.vector_store %arg9[%c0_159, %c8832], %172 {strides = array<i32>} : memref<2x18432xf32, #tpu.memory_space<vmem>>, vector<1x128xf32>,
    %c70 = arith.constant 70 : index
    %c0_160 = arith.constant 0 : index
    %174 = vector.load %arg8[%c70, %c0_160] : memref<288x128xf32, #tpu.memory_space<vmem>>, vector<1x128xf32>
    %c0_161 = arith.constant 0 : index
    %c8960 = arith.constant 8960 : index
    %175 = vector.load %arg9[%c0_161, %c8960] : memref<2x18432xf32, #tpu.memory_space<vmem>>, vector<1x128xf32>
    tpu.vector_store %arg9[%c0_161, %c8960], %174 {strides = array<i32>} : memref<2x18432xf32, #tpu.memory_space<vmem>>, vector<1x128xf32>,
    %c71 = arith.constant 71 : index
    %c0_162 = arith.constant 0 : index
    %176 = vector.load %arg8[%c71, %c0_162] : memref<288x128xf32, #tpu.memory_space<vmem>>, vector<1x128xf32>
    %c0_163 = arith.constant 0 : index
    %c9088 = arith.constant 9088 : index
    %177 = vector.load %arg9[%c0_163, %c9088] : memref<2x18432xf32, #tpu.memory_space<vmem>>, vector<1x128xf32>
    tpu.vector_store %arg9[%c0_163, %c9088], %176 {strides = array<i32>} : memref<2x18432xf32, #tpu.memory_space<vmem>>, vector<1x128xf32>,
    %c72 = arith.constant 72 : index
    %c0_164 = arith.constant 0 : index
    %178 = vector.load %arg8[%c72, %c0_164] : memref<288x128xf32, #tpu.memory_space<vmem>>, vector<1x128xf32>
    %c0_165 = arith.constant 0 : index
    %c9216 = arith.constant 9216 : index
    %179 = vector.load %arg9[%c0_165, %c9216] : memref<2x18432xf32, #tpu.memory_space<vmem>>, vector<1x128xf32>
    tpu.vector_store %arg9[%c0_165, %c9216], %178 {strides = array<i32>} : memref<2x18432xf32, #tpu.memory_space<vmem>>, vector<1x128xf32>,
    %c73 = arith.constant 73 : index
    %c0_166 = arith.constant 0 : index
    %180 = vector.load %arg8[%c73, %c0_166] : memref<288x128xf32, #tpu.memory_space<vmem>>, vector<1x128xf32>
    %c0_167 = arith.constant 0 : index
    %c9344 = arith.constant 9344 : index
    %181 = vector.load %arg9[%c0_167, %c9344] : memref<2x18432xf32, #tpu.memory_space<vmem>>, vector<1x128xf32>
    tpu.vector_store %arg9[%c0_167, %c9344], %180 {strides = array<i32>} : memref<2x18432xf32, #tpu.memory_space<vmem>>, vector<1x128xf32>,
    %c74 = arith.constant 74 : index
    %c0_168 = arith.constant 0 : index
    %182 = vector.load %arg8[%c74, %c0_168] : memref<288x128xf32, #tpu.memory_space<vmem>>, vector<1x128xf32>
    %c0_169 = arith.constant 0 : index
    %c9472 = arith.constant 9472 : index
    %183 = vector.load %arg9[%c0_169, %c9472] : memref<2x18432xf32, #tpu.memory_space<vmem>>, vector<1x128xf32>
    tpu.vector_store %arg9[%c0_169, %c9472], %182 {strides = array<i32>} : memref<2x18432xf32, #tpu.memory_space<vmem>>, vector<1x128xf32>,
    %c75 = arith.constant 75 : index
    %c0_170 = arith.constant 0 : index
    %184 = vector.load %arg8[%c75, %c0_170] : memref<288x128xf32, #tpu.memory_space<vmem>>, vector<1x128xf32>
    %c0_171 = arith.constant 0 : index
    %c9600 = arith.constant 9600 : index
    %185 = vector.load %arg9[%c0_171, %c9600] : memref<2x18432xf32, #tpu.memory_space<vmem>>, vector<1x128xf32>
    tpu.vector_store %arg9[%c0_171, %c9600], %184 {strides = array<i32>} : memref<2x18432xf32, #tpu.memory_space<vmem>>, vector<1x128xf32>,
    %c76 = arith.constant 76 : index
    %c0_172 = arith.constant 0 : index
    %186 = vector.load %arg8[%c76, %c0_172] : memref<288x128xf32, #tpu.memory_space<vmem>>, vector<1x128xf32>
    %c0_173 = arith.constant 0 : index
    %c9728 = arith.constant 9728 : index
    %187 = vector.load %arg9[%c0_173, %c9728] : memref<2x18432xf32, #tpu.memory_space<vmem>>, vector<1x128xf32>
    tpu.vector_store %arg9[%c0_173, %c9728], %186 {strides = array<i32>} : memref<2x18432xf32, #tpu.memory_space<vmem>>, vector<1x128xf32>,
    %c77 = arith.constant 77 : index
    %c0_174 = arith.constant 0 : index
    %188 = vector.load %arg8[%c77, %c0_174] : memref<288x128xf32, #tpu.memory_space<vmem>>, vector<1x128xf32>
    %c0_175 = arith.constant 0 : index
    %c9856 = arith.constant 9856 : index
    %189 = vector.load %arg9[%c0_175, %c9856] : memref<2x18432xf32, #tpu.memory_space<vmem>>, vector<1x128xf32>
    tpu.vector_store %arg9[%c0_175, %c9856], %188 {strides = array<i32>} : memref<2x18432xf32, #tpu.memory_space<vmem>>, vector<1x128xf32>,
    %c78 = arith.constant 78 : index
    %c0_176 = arith.constant 0 : index
    %190 = vector.load %arg8[%c78, %c0_176] : memref<288x128xf32, #tpu.memory_space<vmem>>, vector<1x128xf32>
    %c0_177 = arith.constant 0 : index
    %c9984 = arith.constant 9984 : index
    %191 = vector.load %arg9[%c0_177, %c9984] : memref<2x18432xf32, #tpu.memory_space<vmem>>, vector<1x128xf32>
    tpu.vector_store %arg9[%c0_177, %c9984], %190 {strides = array<i32>} : memref<2x18432xf32, #tpu.memory_space<vmem>>, vector<1x128xf32>,
    %c79 = arith.constant 79 : index
    %c0_178 = arith.constant 0 : index
    %192 = vector.load %arg8[%c79, %c0_178] : memref<288x128xf32, #tpu.memory_space<vmem>>, vector<1x128xf32>
    %c0_179 = arith.constant 0 : index
    %c10112 = arith.constant 10112 : index
    %193 = vector.load %arg9[%c0_179, %c10112] : memref<2x18432xf32, #tpu.memory_space<vmem>>, vector<1x128xf32>
    tpu.vector_store %arg9[%c0_179, %c10112], %192 {strides = array<i32>} : memref<2x18432xf32, #tpu.memory_space<vmem>>, vector<1x128xf32>,
    %c80 = arith.constant 80 : index
    %c0_180 = arith.constant 0 : index
    %194 = vector.load %arg8[%c80, %c0_180] : memref<288x128xf32, #tpu.memory_space<vmem>>, vector<1x128xf32>
    %c0_181 = arith.constant 0 : index
    %c10240 = arith.constant 10240 : index
    %195 = vector.load %arg9[%c0_181, %c10240] : memref<2x18432xf32, #tpu.memory_space<vmem>>, vector<1x128xf32>
    tpu.vector_store %arg9[%c0_181, %c10240], %194 {strides = array<i32>} : memref<2x18432xf32, #tpu.memory_space<vmem>>, vector<1x128xf32>,
    %c81 = arith.constant 81 : index
    %c0_182 = arith.constant 0 : index
    %196 = vector.load %arg8[%c81, %c0_182] : memref<288x128xf32, #tpu.memory_space<vmem>>, vector<1x128xf32>
    %c0_183 = arith.constant 0 : index
    %c10368 = arith.constant 10368 : index
    %197 = vector.load %arg9[%c0_183, %c10368] : memref<2x18432xf32, #tpu.memory_space<vmem>>, vector<1x128xf32>
    tpu.vector_store %arg9[%c0_183, %c10368], %196 {strides = array<i32>} : memref<2x18432xf32, #tpu.memory_space<vmem>>, vector<1x128xf32>,
    %c82 = arith.constant 82 : index
    %c0_184 = arith.constant 0 : index
    %198 = vector.load %arg8[%c82, %c0_184] : memref<288x128xf32, #tpu.memory_space<vmem>>, vector<1x128xf32>
    %c0_185 = arith.constant 0 : index
    %c10496 = arith.constant 10496 : index
    %199 = vector.load %arg9[%c0_185, %c10496] : memref<2x18432xf32, #tpu.memory_space<vmem>>, vector<1x128xf32>
    tpu.vector_store %arg9[%c0_185, %c10496], %198 {strides = array<i32>} : memref<2x18432xf32, #tpu.memory_space<vmem>>, vector<1x128xf32>,
    %c83 = arith.constant 83 : index
    %c0_186 = arith.constant 0 : index
    %200 = vector.load %arg8[%c83, %c0_186] : memref<288x128xf32, #tpu.memory_space<vmem>>, vector<1x128xf32>
    %c0_187 = arith.constant 0 : index
    %c10624 = arith.constant 10624 : index
    %201 = vector.load %arg9[%c0_187, %c10624] : memref<2x18432xf32, #tpu.memory_space<vmem>>, vector<1x128xf32>
    tpu.vector_store %arg9[%c0_187, %c10624], %200 {strides = array<i32>} : memref<2x18432xf32, #tpu.memory_space<vmem>>, vector<1x128xf32>,
    %c84 = arith.constant 84 : index
    %c0_188 = arith.constant 0 : index
    %202 = vector.load %arg8[%c84, %c0_188] : memref<288x128xf32, #tpu.memory_space<vmem>>, vector<1x128xf32>
    %c0_189 = arith.constant 0 : index
    %c10752 = arith.constant 10752 : index
    %203 = vector.load %arg9[%c0_189, %c10752] : memref<2x18432xf32, #tpu.memory_space<vmem>>, vector<1x128xf32>
    tpu.vector_store %arg9[%c0_189, %c10752], %202 {strides = array<i32>} : memref<2x18432xf32, #tpu.memory_space<vmem>>, vector<1x128xf32>,
    %c85 = arith.constant 85 : index
    %c0_190 = arith.constant 0 : index
    %204 = vector.load %arg8[%c85, %c0_190] : memref<288x128xf32, #tpu.memory_space<vmem>>, vector<1x128xf32>
    %c0_191 = arith.constant 0 : index
    %c10880 = arith.constant 10880 : index
    %205 = vector.load %arg9[%c0_191, %c10880] : memref<2x18432xf32, #tpu.memory_space<vmem>>, vector<1x128xf32>
    tpu.vector_store %arg9[%c0_191, %c10880], %204 {strides = array<i32>} : memref<2x18432xf32, #tpu.memory_space<vmem>>, vector<1x128xf32>,
    %c86 = arith.constant 86 : index
    %c0_192 = arith.constant 0 : index
    %206 = vector.load %arg8[%c86, %c0_192] : memref<288x128xf32, #tpu.memory_space<vmem>>, vector<1x128xf32>
    %c0_193 = arith.constant 0 : index
    %c11008 = arith.constant 11008 : index
    %207 = vector.load %arg9[%c0_193, %c11008] : memref<2x18432xf32, #tpu.memory_space<vmem>>, vector<1x128xf32>
    tpu.vector_store %arg9[%c0_193, %c11008], %206 {strides = array<i32>} : memref<2x18432xf32, #tpu.memory_space<vmem>>, vector<1x128xf32>,
    %c87 = arith.constant 87 : index
    %c0_194 = arith.constant 0 : index
    %208 = vector.load %arg8[%c87, %c0_194] : memref<288x128xf32, #tpu.memory_space<vmem>>, vector<1x128xf32>
    %c0_195 = arith.constant 0 : index
    %c11136 = arith.constant 11136 : index
    %209 = vector.load %arg9[%c0_195, %c11136] : memref<2x18432xf32, #tpu.memory_space<vmem>>, vector<1x128xf32>
    tpu.vector_store %arg9[%c0_195, %c11136], %208 {strides = array<i32>} : memref<2x18432xf32, #tpu.memory_space<vmem>>, vector<1x128xf32>,
    %c88 = arith.constant 88 : index
    %c0_196 = arith.constant 0 : index
    %210 = vector.load %arg8[%c88, %c0_196] : memref<288x128xf32, #tpu.memory_space<vmem>>, vector<1x128xf32>
    %c0_197 = arith.constant 0 : index
    %c11264 = arith.constant 11264 : index
    %211 = vector.load %arg9[%c0_197, %c11264] : memref<2x18432xf32, #tpu.memory_space<vmem>>, vector<1x128xf32>
    tpu.vector_store %arg9[%c0_197, %c11264], %210 {strides = array<i32>} : memref<2x18432xf32, #tpu.memory_space<vmem>>, vector<1x128xf32>,
    %c89 = arith.constant 89 : index
    %c0_198 = arith.constant 0 : index
    %212 = vector.load %arg8[%c89, %c0_198] : memref<288x128xf32, #tpu.memory_space<vmem>>, vector<1x128xf32>
    %c0_199 = arith.constant 0 : index
    %c11392 = arith.constant 11392 : index
    %213 = vector.load %arg9[%c0_199, %c11392] : memref<2x18432xf32, #tpu.memory_space<vmem>>, vector<1x128xf32>
    tpu.vector_store %arg9[%c0_199, %c11392], %212 {strides = array<i32>} : memref<2x18432xf32, #tpu.memory_space<vmem>>, vector<1x128xf32>,
    %c90 = arith.constant 90 : index
    %c0_200 = arith.constant 0 : index
    %214 = vector.load %arg8[%c90, %c0_200] : memref<288x128xf32, #tpu.memory_space<vmem>>, vector<1x128xf32>
    %c0_201 = arith.constant 0 : index
    %c11520 = arith.constant 11520 : index
    %215 = vector.load %arg9[%c0_201, %c11520] : memref<2x18432xf32, #tpu.memory_space<vmem>>, vector<1x128xf32>
    tpu.vector_store %arg9[%c0_201, %c11520], %214 {strides = array<i32>} : memref<2x18432xf32, #tpu.memory_space<vmem>>, vector<1x128xf32>,
    %c91 = arith.constant 91 : index
    %c0_202 = arith.constant 0 : index
    %216 = vector.load %arg8[%c91, %c0_202] : memref<288x128xf32, #tpu.memory_space<vmem>>, vector<1x128xf32>
    %c0_203 = arith.constant 0 : index
    %c11648 = arith.constant 11648 : index
    %217 = vector.load %arg9[%c0_203, %c11648] : memref<2x18432xf32, #tpu.memory_space<vmem>>, vector<1x128xf32>
    tpu.vector_store %arg9[%c0_203, %c11648], %216 {strides = array<i32>} : memref<2x18432xf32, #tpu.memory_space<vmem>>, vector<1x128xf32>,
    %c92 = arith.constant 92 : index
    %c0_204 = arith.constant 0 : index
    %218 = vector.load %arg8[%c92, %c0_204] : memref<288x128xf32, #tpu.memory_space<vmem>>, vector<1x128xf32>
    %c0_205 = arith.constant 0 : index
    %c11776 = arith.constant 11776 : index
    %219 = vector.load %arg9[%c0_205, %c11776] : memref<2x18432xf32, #tpu.memory_space<vmem>>, vector<1x128xf32>
    tpu.vector_store %arg9[%c0_205, %c11776], %218 {strides = array<i32>} : memref<2x18432xf32, #tpu.memory_space<vmem>>, vector<1x128xf32>,
    %c93 = arith.constant 93 : index
    %c0_206 = arith.constant 0 : index
    %220 = vector.load %arg8[%c93, %c0_206] : memref<288x128xf32, #tpu.memory_space<vmem>>, vector<1x128xf32>
    %c0_207 = arith.constant 0 : index
    %c11904 = arith.constant 11904 : index
    %221 = vector.load %arg9[%c0_207, %c11904] : memref<2x18432xf32, #tpu.memory_space<vmem>>, vector<1x128xf32>
    tpu.vector_store %arg9[%c0_207, %c11904], %220 {strides = array<i32>} : memref<2x18432xf32, #tpu.memory_space<vmem>>, vector<1x128xf32>,
    %c94 = arith.constant 94 : index
    %c0_208 = arith.constant 0 : index
    %222 = vector.load %arg8[%c94, %c0_208] : memref<288x128xf32, #tpu.memory_space<vmem>>, vector<1x128xf32>
    %c0_209 = arith.constant 0 : index
    %c12032 = arith.constant 12032 : index
    %223 = vector.load %arg9[%c0_209, %c12032] : memref<2x18432xf32, #tpu.memory_space<vmem>>, vector<1x128xf32>
    tpu.vector_store %arg9[%c0_209, %c12032], %222 {strides = array<i32>} : memref<2x18432xf32, #tpu.memory_space<vmem>>, vector<1x128xf32>,
    %c95 = arith.constant 95 : index
    %c0_210 = arith.constant 0 : index
    %224 = vector.load %arg8[%c95, %c0_210] : memref<288x128xf32, #tpu.memory_space<vmem>>, vector<1x128xf32>
    %c0_211 = arith.constant 0 : index
    %c12160 = arith.constant 12160 : index
    %225 = vector.load %arg9[%c0_211, %c12160] : memref<2x18432xf32, #tpu.memory_space<vmem>>, vector<1x128xf32>
    tpu.vector_store %arg9[%c0_211, %c12160], %224 {strides = array<i32>} : memref<2x18432xf32, #tpu.memory_space<vmem>>, vector<1x128xf32>,
    %c96 = arith.constant 96 : index
    %c0_212 = arith.constant 0 : index
    %226 = vector.load %arg8[%c96, %c0_212] : memref<288x128xf32, #tpu.memory_space<vmem>>, vector<1x128xf32>
    %c0_213 = arith.constant 0 : index
    %c12288 = arith.constant 12288 : index
    %227 = vector.load %arg9[%c0_213, %c12288] : memref<2x18432xf32, #tpu.memory_space<vmem>>, vector<1x128xf32>
    tpu.vector_store %arg9[%c0_213, %c12288], %226 {strides = array<i32>} : memref<2x18432xf32, #tpu.memory_space<vmem>>, vector<1x128xf32>,
    %c97 = arith.constant 97 : index
    %c0_214 = arith.constant 0 : index
    %228 = vector.load %arg8[%c97, %c0_214] : memref<288x128xf32, #tpu.memory_space<vmem>>, vector<1x128xf32>
    %c0_215 = arith.constant 0 : index
    %c12416 = arith.constant 12416 : index
    %229 = vector.load %arg9[%c0_215, %c12416] : memref<2x18432xf32, #tpu.memory_space<vmem>>, vector<1x128xf32>
    tpu.vector_store %arg9[%c0_215, %c12416], %228 {strides = array<i32>} : memref<2x18432xf32, #tpu.memory_space<vmem>>, vector<1x128xf32>,
    %c98 = arith.constant 98 : index
    %c0_216 = arith.constant 0 : index
    %230 = vector.load %arg8[%c98, %c0_216] : memref<288x128xf32, #tpu.memory_space<vmem>>, vector<1x128xf32>
    %c0_217 = arith.constant 0 : index
    %c12544 = arith.constant 12544 : index
    %231 = vector.load %arg9[%c0_217, %c12544] : memref<2x18432xf32, #tpu.memory_space<vmem>>, vector<1x128xf32>
    tpu.vector_store %arg9[%c0_217, %c12544], %230 {strides = array<i32>} : memref<2x18432xf32, #tpu.memory_space<vmem>>, vector<1x128xf32>,
    %c99 = arith.constant 99 : index
    %c0_218 = arith.constant 0 : index
    %232 = vector.load %arg8[%c99, %c0_218] : memref<288x128xf32, #tpu.memory_space<vmem>>, vector<1x128xf32>
    %c0_219 = arith.constant 0 : index
    %c12672 = arith.constant 12672 : index
    %233 = vector.load %arg9[%c0_219, %c12672] : memref<2x18432xf32, #tpu.memory_space<vmem>>, vector<1x128xf32>
    tpu.vector_store %arg9[%c0_219, %c12672], %232 {strides = array<i32>} : memref<2x18432xf32, #tpu.memory_space<vmem>>, vector<1x128xf32>,
    %c100 = arith.constant 100 : index
    %c0_220 = arith.constant 0 : index
    %234 = vector.load %arg8[%c100, %c0_220] : memref<288x128xf32, #tpu.memory_space<vmem>>, vector<1x128xf32>
    %c0_221 = arith.constant 0 : index
    %c12800 = arith.constant 12800 : index
    %235 = vector.load %arg9[%c0_221, %c12800] : memref<2x18432xf32, #tpu.memory_space<vmem>>, vector<1x128xf32>
    tpu.vector_store %arg9[%c0_221, %c12800], %234 {strides = array<i32>} : memref<2x18432xf32, #tpu.memory_space<vmem>>, vector<1x128xf32>,
    %c101 = arith.constant 101 : index
    %c0_222 = arith.constant 0 : index
    %236 = vector.load %arg8[%c101, %c0_222] : memref<288x128xf32, #tpu.memory_space<vmem>>, vector<1x128xf32>
    %c0_223 = arith.constant 0 : index
    %c12928 = arith.constant 12928 : index
    %237 = vector.load %arg9[%c0_223, %c12928] : memref<2x18432xf32, #tpu.memory_space<vmem>>, vector<1x128xf32>
    tpu.vector_store %arg9[%c0_223, %c12928], %236 {strides = array<i32>} : memref<2x18432xf32, #tpu.memory_space<vmem>>, vector<1x128xf32>,
    %c102 = arith.constant 102 : index
    %c0_224 = arith.constant 0 : index
    %238 = vector.load %arg8[%c102, %c0_224] : memref<288x128xf32, #tpu.memory_space<vmem>>, vector<1x128xf32>
    %c0_225 = arith.constant 0 : index
    %c13056 = arith.constant 13056 : index
    %239 = vector.load %arg9[%c0_225, %c13056] : memref<2x18432xf32, #tpu.memory_space<vmem>>, vector<1x128xf32>
    tpu.vector_store %arg9[%c0_225, %c13056], %238 {strides = array<i32>} : memref<2x18432xf32, #tpu.memory_space<vmem>>, vector<1x128xf32>,
    %c103 = arith.constant 103 : index
    %c0_226 = arith.constant 0 : index
    %240 = vector.load %arg8[%c103, %c0_226] : memref<288x128xf32, #tpu.memory_space<vmem>>, vector<1x128xf32>
    %c0_227 = arith.constant 0 : index
    %c13184 = arith.constant 13184 : index
    %241 = vector.load %arg9[%c0_227, %c13184] : memref<2x18432xf32, #tpu.memory_space<vmem>>, vector<1x128xf32>
    tpu.vector_store %arg9[%c0_227, %c13184], %240 {strides = array<i32>} : memref<2x18432xf32, #tpu.memory_space<vmem>>, vector<1x128xf32>,
    %c104 = arith.constant 104 : index
    %c0_228 = arith.constant 0 : index
    %242 = vector.load %arg8[%c104, %c0_228] : memref<288x128xf32, #tpu.memory_space<vmem>>, vector<1x128xf32>
    %c0_229 = arith.constant 0 : index
    %c13312 = arith.constant 13312 : index
    %243 = vector.load %arg9[%c0_229, %c13312] : memref<2x18432xf32, #tpu.memory_space<vmem>>, vector<1x128xf32>
    tpu.vector_store %arg9[%c0_229, %c13312], %242 {strides = array<i32>} : memref<2x18432xf32, #tpu.memory_space<vmem>>, vector<1x128xf32>,
    %c105 = arith.constant 105 : index
    %c0_230 = arith.constant 0 : index
    %244 = vector.load %arg8[%c105, %c0_230] : memref<288x128xf32, #tpu.memory_space<vmem>>, vector<1x128xf32>
    %c0_231 = arith.constant 0 : index
    %c13440 = arith.constant 13440 : index
    %245 = vector.load %arg9[%c0_231, %c13440] : memref<2x18432xf32, #tpu.memory_space<vmem>>, vector<1x128xf32>
    tpu.vector_store %arg9[%c0_231, %c13440], %244 {strides = array<i32>} : memref<2x18432xf32, #tpu.memory_space<vmem>>, vector<1x128xf32>,
    %c106 = arith.constant 106 : index
    %c0_232 = arith.constant 0 : index
    %246 = vector.load %arg8[%c106, %c0_232] : memref<288x128xf32, #tpu.memory_space<vmem>>, vector<1x128xf32>
    %c0_233 = arith.constant 0 : index
    %c13568 = arith.constant 13568 : index
    %247 = vector.load %arg9[%c0_233, %c13568] : memref<2x18432xf32, #tpu.memory_space<vmem>>, vector<1x128xf32>
    tpu.vector_store %arg9[%c0_233, %c13568], %246 {strides = array<i32>} : memref<2x18432xf32, #tpu.memory_space<vmem>>, vector<1x128xf32>,
    %c107 = arith.constant 107 : index
    %c0_234 = arith.constant 0 : index
    %248 = vector.load %arg8[%c107, %c0_234] : memref<288x128xf32, #tpu.memory_space<vmem>>, vector<1x128xf32>
    %c0_235 = arith.constant 0 : index
    %c13696 = arith.constant 13696 : index
    %249 = vector.load %arg9[%c0_235, %c13696] : memref<2x18432xf32, #tpu.memory_space<vmem>>, vector<1x128xf32>
    tpu.vector_store %arg9[%c0_235, %c13696], %248 {strides = array<i32>} : memref<2x18432xf32, #tpu.memory_space<vmem>>, vector<1x128xf32>,
    %c108 = arith.constant 108 : index
    %c0_236 = arith.constant 0 : index
    %250 = vector.load %arg8[%c108, %c0_236] : memref<288x128xf32, #tpu.memory_space<vmem>>, vector<1x128xf32>
    %c0_237 = arith.constant 0 : index
    %c13824 = arith.constant 13824 : index
    %251 = vector.load %arg9[%c0_237, %c13824] : memref<2x18432xf32, #tpu.memory_space<vmem>>, vector<1x128xf32>
    tpu.vector_store %arg9[%c0_237, %c13824], %250 {strides = array<i32>} : memref<2x18432xf32, #tpu.memory_space<vmem>>, vector<1x128xf32>,
    %c109 = arith.constant 109 : index
    %c0_238 = arith.constant 0 : index
    %252 = vector.load %arg8[%c109, %c0_238] : memref<288x128xf32, #tpu.memory_space<vmem>>, vector<1x128xf32>
    %c0_239 = arith.constant 0 : index
    %c13952 = arith.constant 13952 : index
    %253 = vector.load %arg9[%c0_239, %c13952] : memref<2x18432xf32, #tpu.memory_space<vmem>>, vector<1x128xf32>
    tpu.vector_store %arg9[%c0_239, %c13952], %252 {strides = array<i32>} : memref<2x18432xf32, #tpu.memory_space<vmem>>, vector<1x128xf32>,
    %c110 = arith.constant 110 : index
    %c0_240 = arith.constant 0 : index
    %254 = vector.load %arg8[%c110, %c0_240] : memref<288x128xf32, #tpu.memory_space<vmem>>, vector<1x128xf32>
    %c0_241 = arith.constant 0 : index
    %c14080 = arith.constant 14080 : index
    %255 = vector.load %arg9[%c0_241, %c14080] : memref<2x18432xf32, #tpu.memory_space<vmem>>, vector<1x128xf32>
    tpu.vector_store %arg9[%c0_241, %c14080], %254 {strides = array<i32>} : memref<2x18432xf32, #tpu.memory_space<vmem>>, vector<1x128xf32>,
    %c111 = arith.constant 111 : index
    %c0_242 = arith.constant 0 : index
    %256 = vector.load %arg8[%c111, %c0_242] : memref<288x128xf32, #tpu.memory_space<vmem>>, vector<1x128xf32>
    %c0_243 = arith.constant 0 : index
    %c14208 = arith.constant 14208 : index
    %257 = vector.load %arg9[%c0_243, %c14208] : memref<2x18432xf32, #tpu.memory_space<vmem>>, vector<1x128xf32>
    tpu.vector_store %arg9[%c0_243, %c14208], %256 {strides = array<i32>} : memref<2x18432xf32, #tpu.memory_space<vmem>>, vector<1x128xf32>,
    %c112 = arith.constant 112 : index
    %c0_244 = arith.constant 0 : index
    %258 = vector.load %arg8[%c112, %c0_244] : memref<288x128xf32, #tpu.memory_space<vmem>>, vector<1x128xf32>
    %c0_245 = arith.constant 0 : index
    %c14336 = arith.constant 14336 : index
    %259 = vector.load %arg9[%c0_245, %c14336] : memref<2x18432xf32, #tpu.memory_space<vmem>>, vector<1x128xf32>
    tpu.vector_store %arg9[%c0_245, %c14336], %258 {strides = array<i32>} : memref<2x18432xf32, #tpu.memory_space<vmem>>, vector<1x128xf32>,
    %c113 = arith.constant 113 : index
    %c0_246 = arith.constant 0 : index
    %260 = vector.load %arg8[%c113, %c0_246] : memref<288x128xf32, #tpu.memory_space<vmem>>, vector<1x128xf32>
    %c0_247 = arith.constant 0 : index
    %c14464 = arith.constant 14464 : index
    %261 = vector.load %arg9[%c0_247, %c14464] : memref<2x18432xf32, #tpu.memory_space<vmem>>, vector<1x128xf32>
    tpu.vector_store %arg9[%c0_247, %c14464], %260 {strides = array<i32>} : memref<2x18432xf32, #tpu.memory_space<vmem>>, vector<1x128xf32>,
    %c114 = arith.constant 114 : index
    %c0_248 = arith.constant 0 : index
    %262 = vector.load %arg8[%c114, %c0_248] : memref<288x128xf32, #tpu.memory_space<vmem>>, vector<1x128xf32>
    %c0_249 = arith.constant 0 : index
    %c14592 = arith.constant 14592 : index
    %263 = vector.load %arg9[%c0_249, %c14592] : memref<2x18432xf32, #tpu.memory_space<vmem>>, vector<1x128xf32>
    tpu.vector_store %arg9[%c0_249, %c14592], %262 {strides = array<i32>} : memref<2x18432xf32, #tpu.memory_space<vmem>>, vector<1x128xf32>,
    %c115 = arith.constant 115 : index
    %c0_250 = arith.constant 0 : index
    %264 = vector.load %arg8[%c115, %c0_250] : memref<288x128xf32, #tpu.memory_space<vmem>>, vector<1x128xf32>
    %c0_251 = arith.constant 0 : index
    %c14720 = arith.constant 14720 : index
    %265 = vector.load %arg9[%c0_251, %c14720] : memref<2x18432xf32, #tpu.memory_space<vmem>>, vector<1x128xf32>
    tpu.vector_store %arg9[%c0_251, %c14720], %264 {strides = array<i32>} : memref<2x18432xf32, #tpu.memory_space<vmem>>, vector<1x128xf32>,
    %c116 = arith.constant 116 : index
    %c0_252 = arith.constant 0 : index
    %266 = vector.load %arg8[%c116, %c0_252] : memref<288x128xf32, #tpu.memory_space<vmem>>, vector<1x128xf32>
    %c0_253 = arith.constant 0 : index
    %c14848 = arith.constant 14848 : index
    %267 = vector.load %arg9[%c0_253, %c14848] : memref<2x18432xf32, #tpu.memory_space<vmem>>, vector<1x128xf32>
    tpu.vector_store %arg9[%c0_253, %c14848], %266 {strides = array<i32>} : memref<2x18432xf32, #tpu.memory_space<vmem>>, vector<1x128xf32>,
    %c117 = arith.constant 117 : index
    %c0_254 = arith.constant 0 : index
    %268 = vector.load %arg8[%c117, %c0_254] : memref<288x128xf32, #tpu.memory_space<vmem>>, vector<1x128xf32>
    %c0_255 = arith.constant 0 : index
    %c14976 = arith.constant 14976 : index
    %269 = vector.load %arg9[%c0_255, %c14976] : memref<2x18432xf32, #tpu.memory_space<vmem>>, vector<1x128xf32>
    tpu.vector_store %arg9[%c0_255, %c14976], %268 {strides = array<i32>} : memref<2x18432xf32, #tpu.memory_space<vmem>>, vector<1x128xf32>,
    %c118 = arith.constant 118 : index
    %c0_256 = arith.constant 0 : index
    %270 = vector.load %arg8[%c118, %c0_256] : memref<288x128xf32, #tpu.memory_space<vmem>>, vector<1x128xf32>
    %c0_257 = arith.constant 0 : index
    %c15104 = arith.constant 15104 : index
    %271 = vector.load %arg9[%c0_257, %c15104] : memref<2x18432xf32, #tpu.memory_space<vmem>>, vector<1x128xf32>
    tpu.vector_store %arg9[%c0_257, %c15104], %270 {strides = array<i32>} : memref<2x18432xf32, #tpu.memory_space<vmem>>, vector<1x128xf32>,
    %c119 = arith.constant 119 : index
    %c0_258 = arith.constant 0 : index
    %272 = vector.load %arg8[%c119, %c0_258] : memref<288x128xf32, #tpu.memory_space<vmem>>, vector<1x128xf32>
    %c0_259 = arith.constant 0 : index
    %c15232 = arith.constant 15232 : index
    %273 = vector.load %arg9[%c0_259, %c15232] : memref<2x18432xf32, #tpu.memory_space<vmem>>, vector<1x128xf32>
    tpu.vector_store %arg9[%c0_259, %c15232], %272 {strides = array<i32>} : memref<2x18432xf32, #tpu.memory_space<vmem>>, vector<1x128xf32>,
    %c120 = arith.constant 120 : index
    %c0_260 = arith.constant 0 : index
    %274 = vector.load %arg8[%c120, %c0_260] : memref<288x128xf32, #tpu.memory_space<vmem>>, vector<1x128xf32>
    %c0_261 = arith.constant 0 : index
    %c15360 = arith.constant 15360 : index
    %275 = vector.load %arg9[%c0_261, %c15360] : memref<2x18432xf32, #tpu.memory_space<vmem>>, vector<1x128xf32>
    tpu.vector_store %arg9[%c0_261, %c15360], %274 {strides = array<i32>} : memref<2x18432xf32, #tpu.memory_space<vmem>>, vector<1x128xf32>,
    %c121 = arith.constant 121 : index
    %c0_262 = arith.constant 0 : index
    %276 = vector.load %arg8[%c121, %c0_262] : memref<288x128xf32, #tpu.memory_space<vmem>>, vector<1x128xf32>
    %c0_263 = arith.constant 0 : index
    %c15488 = arith.constant 15488 : index
    %277 = vector.load %arg9[%c0_263, %c15488] : memref<2x18432xf32, #tpu.memory_space<vmem>>, vector<1x128xf32>
    tpu.vector_store %arg9[%c0_263, %c15488], %276 {strides = array<i32>} : memref<2x18432xf32, #tpu.memory_space<vmem>>, vector<1x128xf32>,
    %c122 = arith.constant 122 : index
    %c0_264 = arith.constant 0 : index
    %278 = vector.load %arg8[%c122, %c0_264] : memref<288x128xf32, #tpu.memory_space<vmem>>, vector<1x128xf32>
    %c0_265 = arith.constant 0 : index
    %c15616 = arith.constant 15616 : index
    %279 = vector.load %arg9[%c0_265, %c15616] : memref<2x18432xf32, #tpu.memory_space<vmem>>, vector<1x128xf32>
    tpu.vector_store %arg9[%c0_265, %c15616], %278 {strides = array<i32>} : memref<2x18432xf32, #tpu.memory_space<vmem>>, vector<1x128xf32>,
    %c123 = arith.constant 123 : index
    %c0_266 = arith.constant 0 : index
    %280 = vector.load %arg8[%c123, %c0_266] : memref<288x128xf32, #tpu.memory_space<vmem>>, vector<1x128xf32>
    %c0_267 = arith.constant 0 : index
    %c15744 = arith.constant 15744 : index
    %281 = vector.load %arg9[%c0_267, %c15744] : memref<2x18432xf32, #tpu.memory_space<vmem>>, vector<1x128xf32>
    tpu.vector_store %arg9[%c0_267, %c15744], %280 {strides = array<i32>} : memref<2x18432xf32, #tpu.memory_space<vmem>>, vector<1x128xf32>,
    %c124 = arith.constant 124 : index
    %c0_268 = arith.constant 0 : index
    %282 = vector.load %arg8[%c124, %c0_268] : memref<288x128xf32, #tpu.memory_space<vmem>>, vector<1x128xf32>
    %c0_269 = arith.constant 0 : index
    %c15872 = arith.constant 15872 : index
    %283 = vector.load %arg9[%c0_269, %c15872] : memref<2x18432xf32, #tpu.memory_space<vmem>>, vector<1x128xf32>
    tpu.vector_store %arg9[%c0_269, %c15872], %282 {strides = array<i32>} : memref<2x18432xf32, #tpu.memory_space<vmem>>, vector<1x128xf32>,
    %c125 = arith.constant 125 : index
    %c0_270 = arith.constant 0 : index
    %284 = vector.load %arg8[%c125, %c0_270] : memref<288x128xf32, #tpu.memory_space<vmem>>, vector<1x128xf32>
    %c0_271 = arith.constant 0 : index
    %c16000 = arith.constant 16000 : index
    %285 = vector.load %arg9[%c0_271, %c16000] : memref<2x18432xf32, #tpu.memory_space<vmem>>, vector<1x128xf32>
    tpu.vector_store %arg9[%c0_271, %c16000], %284 {strides = array<i32>} : memref<2x18432xf32, #tpu.memory_space<vmem>>, vector<1x128xf32>,
    %c126 = arith.constant 126 : index
    %c0_272 = arith.constant 0 : index
    %286 = vector.load %arg8[%c126, %c0_272] : memref<288x128xf32, #tpu.memory_space<vmem>>, vector<1x128xf32>
    %c0_273 = arith.constant 0 : index
    %c16128 = arith.constant 16128 : index
    %287 = vector.load %arg9[%c0_273, %c16128] : memref<2x18432xf32, #tpu.memory_space<vmem>>, vector<1x128xf32>
    tpu.vector_store %arg9[%c0_273, %c16128], %286 {strides = array<i32>} : memref<2x18432xf32, #tpu.memory_space<vmem>>, vector<1x128xf32>,
    %c127 = arith.constant 127 : index
    %c0_274 = arith.constant 0 : index
    %288 = vector.load %arg8[%c127, %c0_274] : memref<288x128xf32, #tpu.memory_space<vmem>>, vector<1x128xf32>
    %c0_275 = arith.constant 0 : index
    %c16256 = arith.constant 16256 : index
    %289 = vector.load %arg9[%c0_275, %c16256] : memref<2x18432xf32, #tpu.memory_space<vmem>>, vector<1x128xf32>
    tpu.vector_store %arg9[%c0_275, %c16256], %288 {strides = array<i32>} : memref<2x18432xf32, #tpu.memory_space<vmem>>, vector<1x128xf32>,
    %c128_276 = arith.constant 128 : index
    %c0_277 = arith.constant 0 : index
    %290 = vector.load %arg8[%c128_276, %c0_277] : memref<288x128xf32, #tpu.memory_space<vmem>>, vector<1x128xf32>
    %c0_278 = arith.constant 0 : index
    %c16384 = arith.constant 16384 : index
    %291 = vector.load %arg9[%c0_278, %c16384] : memref<2x18432xf32, #tpu.memory_space<vmem>>, vector<1x128xf32>
    tpu.vector_store %arg9[%c0_278, %c16384], %290 {strides = array<i32>} : memref<2x18432xf32, #tpu.memory_space<vmem>>, vector<1x128xf32>,
    %c129 = arith.constant 129 : index
    %c0_279 = arith.constant 0 : index
    %292 = vector.load %arg8[%c129, %c0_279] : memref<288x128xf32, #tpu.memory_space<vmem>>, vector<1x128xf32>
    %c0_280 = arith.constant 0 : index
    %c16512 = arith.constant 16512 : index
    %293 = vector.load %arg9[%c0_280, %c16512] : memref<2x18432xf32, #tpu.memory_space<vmem>>, vector<1x128xf32>
    tpu.vector_store %arg9[%c0_280, %c16512], %292 {strides = array<i32>} : memref<2x18432xf32, #tpu.memory_space<vmem>>, vector<1x128xf32>,
    %c130 = arith.constant 130 : index
    %c0_281 = arith.constant 0 : index
    %294 = vector.load %arg8[%c130, %c0_281] : memref<288x128xf32, #tpu.memory_space<vmem>>, vector<1x128xf32>
    %c0_282 = arith.constant 0 : index
    %c16640 = arith.constant 16640 : index
    %295 = vector.load %arg9[%c0_282, %c16640] : memref<2x18432xf32, #tpu.memory_space<vmem>>, vector<1x128xf32>
    tpu.vector_store %arg9[%c0_282, %c16640], %294 {strides = array<i32>} : memref<2x18432xf32, #tpu.memory_space<vmem>>, vector<1x128xf32>,
    %c131 = arith.constant 131 : index
    %c0_283 = arith.constant 0 : index
    %296 = vector.load %arg8[%c131, %c0_283] : memref<288x128xf32, #tpu.memory_space<vmem>>, vector<1x128xf32>
    %c0_284 = arith.constant 0 : index
    %c16768 = arith.constant 16768 : index
    %297 = vector.load %arg9[%c0_284, %c16768] : memref<2x18432xf32, #tpu.memory_space<vmem>>, vector<1x128xf32>
    tpu.vector_store %arg9[%c0_284, %c16768], %296 {strides = array<i32>} : memref<2x18432xf32, #tpu.memory_space<vmem>>, vector<1x128xf32>,
    %c132 = arith.constant 132 : index
    %c0_285 = arith.constant 0 : index
    %298 = vector.load %arg8[%c132, %c0_285] : memref<288x128xf32, #tpu.memory_space<vmem>>, vector<1x128xf32>
    %c0_286 = arith.constant 0 : index
    %c16896 = arith.constant 16896 : index
    %299 = vector.load %arg9[%c0_286, %c16896] : memref<2x18432xf32, #tpu.memory_space<vmem>>, vector<1x128xf32>
    tpu.vector_store %arg9[%c0_286, %c16896], %298 {strides = array<i32>} : memref<2x18432xf32, #tpu.memory_space<vmem>>, vector<1x128xf32>,
    %c133 = arith.constant 133 : index
    %c0_287 = arith.constant 0 : index
    %300 = vector.load %arg8[%c133, %c0_287] : memref<288x128xf32, #tpu.memory_space<vmem>>, vector<1x128xf32>
    %c0_288 = arith.constant 0 : index
    %c17024 = arith.constant 17024 : index
    %301 = vector.load %arg9[%c0_288, %c17024] : memref<2x18432xf32, #tpu.memory_space<vmem>>, vector<1x128xf32>
    tpu.vector_store %arg9[%c0_288, %c17024], %300 {strides = array<i32>} : memref<2x18432xf32, #tpu.memory_space<vmem>>, vector<1x128xf32>,
    %c134 = arith.constant 134 : index
    %c0_289 = arith.constant 0 : index
    %302 = vector.load %arg8[%c134, %c0_289] : memref<288x128xf32, #tpu.memory_space<vmem>>, vector<1x128xf32>
    %c0_290 = arith.constant 0 : index
    %c17152 = arith.constant 17152 : index
    %303 = vector.load %arg9[%c0_290, %c17152] : memref<2x18432xf32, #tpu.memory_space<vmem>>, vector<1x128xf32>
    tpu.vector_store %arg9[%c0_290, %c17152], %302 {strides = array<i32>} : memref<2x18432xf32, #tpu.memory_space<vmem>>, vector<1x128xf32>,
    %c135 = arith.constant 135 : index
    %c0_291 = arith.constant 0 : index
    %304 = vector.load %arg8[%c135, %c0_291] : memref<288x128xf32, #tpu.memory_space<vmem>>, vector<1x128xf32>
    %c0_292 = arith.constant 0 : index
    %c17280 = arith.constant 17280 : index
    %305 = vector.load %arg9[%c0_292, %c17280] : memref<2x18432xf32, #tpu.memory_space<vmem>>, vector<1x128xf32>
    tpu.vector_store %arg9[%c0_292, %c17280], %304 {strides = array<i32>} : memref<2x18432xf32, #tpu.memory_space<vmem>>, vector<1x128xf32>,
    %c136 = arith.constant 136 : index
    %c0_293 = arith.constant 0 : index
    %306 = vector.load %arg8[%c136, %c0_293] : memref<288x128xf32, #tpu.memory_space<vmem>>, vector<1x128xf32>
    %c0_294 = arith.constant 0 : index
    %c17408 = arith.constant 17408 : index
    %307 = vector.load %arg9[%c0_294, %c17408] : memref<2x18432xf32, #tpu.memory_space<vmem>>, vector<1x128xf32>
    tpu.vector_store %arg9[%c0_294, %c17408], %306 {strides = array<i32>} : memref<2x18432xf32, #tpu.memory_space<vmem>>, vector<1x128xf32>,
    %c137 = arith.constant 137 : index
    %c0_295 = arith.constant 0 : index
    %308 = vector.load %arg8[%c137, %c0_295] : memref<288x128xf32, #tpu.memory_space<vmem>>, vector<1x128xf32>
    %c0_296 = arith.constant 0 : index
    %c17536 = arith.constant 17536 : index
    %309 = vector.load %arg9[%c0_296, %c17536] : memref<2x18432xf32, #tpu.memory_space<vmem>>, vector<1x128xf32>
    tpu.vector_store %arg9[%c0_296, %c17536], %308 {strides = array<i32>} : memref<2x18432xf32, #tpu.memory_space<vmem>>, vector<1x128xf32>,
    %c138 = arith.constant 138 : index
    %c0_297 = arith.constant 0 : index
    %310 = vector.load %arg8[%c138, %c0_297] : memref<288x128xf32, #tpu.memory_space<vmem>>, vector<1x128xf32>
    %c0_298 = arith.constant 0 : index
    %c17664 = arith.constant 17664 : index
    %311 = vector.load %arg9[%c0_298, %c17664] : memref<2x18432xf32, #tpu.memory_space<vmem>>, vector<1x128xf32>
    tpu.vector_store %arg9[%c0_298, %c17664], %310 {strides = array<i32>} : memref<2x18432xf32, #tpu.memory_space<vmem>>, vector<1x128xf32>,
    %c139 = arith.constant 139 : index
    %c0_299 = arith.constant 0 : index
    %312 = vector.load %arg8[%c139, %c0_299] : memref<288x128xf32, #tpu.memory_space<vmem>>, vector<1x128xf32>
    %c0_300 = arith.constant 0 : index
    %c17792 = arith.constant 17792 : index
    %313 = vector.load %arg9[%c0_300, %c17792] : memref<2x18432xf32, #tpu.memory_space<vmem>>, vector<1x128xf32>
    tpu.vector_store %arg9[%c0_300, %c17792], %312 {strides = array<i32>} : memref<2x18432xf32, #tpu.memory_space<vmem>>, vector<1x128xf32>,
    %c140 = arith.constant 140 : index
    %c0_301 = arith.constant 0 : index
    %314 = vector.load %arg8[%c140, %c0_301] : memref<288x128xf32, #tpu.memory_space<vmem>>, vector<1x128xf32>
    %c0_302 = arith.constant 0 : index
    %c17920 = arith.constant 17920 : index
    %315 = vector.load %arg9[%c0_302, %c17920] : memref<2x18432xf32, #tpu.memory_space<vmem>>, vector<1x128xf32>
    tpu.vector_store %arg9[%c0_302, %c17920], %314 {strides = array<i32>} : memref<2x18432xf32, #tpu.memory_space<vmem>>, vector<1x128xf32>,
    %c141 = arith.constant 141 : index
    %c0_303 = arith.constant 0 : index
    %316 = vector.load %arg8[%c141, %c0_303] : memref<288x128xf32, #tpu.memory_space<vmem>>, vector<1x128xf32>
    %c0_304 = arith.constant 0 : index
    %c18048 = arith.constant 18048 : index
    %317 = vector.load %arg9[%c0_304, %c18048] : memref<2x18432xf32, #tpu.memory_space<vmem>>, vector<1x128xf32>
    tpu.vector_store %arg9[%c0_304, %c18048], %316 {strides = array<i32>} : memref<2x18432xf32, #tpu.memory_space<vmem>>, vector<1x128xf32>,
    %c142 = arith.constant 142 : index
    %c0_305 = arith.constant 0 : index
    %318 = vector.load %arg8[%c142, %c0_305] : memref<288x128xf32, #tpu.memory_space<vmem>>, vector<1x128xf32>
    %c0_306 = arith.constant 0 : index
    %c18176 = arith.constant 18176 : index
    %319 = vector.load %arg9[%c0_306, %c18176] : memref<2x18432xf32, #tpu.memory_space<vmem>>, vector<1x128xf32>
    tpu.vector_store %arg9[%c0_306, %c18176], %318 {strides = array<i32>} : memref<2x18432xf32, #tpu.memory_space<vmem>>, vector<1x128xf32>,
    %c143 = arith.constant 143 : index
    %c0_307 = arith.constant 0 : index
    %320 = vector.load %arg8[%c143, %c0_307] : memref<288x128xf32, #tpu.memory_space<vmem>>, vector<1x128xf32>
    %c0_308 = arith.constant 0 : index
    %c18304 = arith.constant 18304 : index
    %321 = vector.load %arg9[%c0_308, %c18304] : memref<2x18432xf32, #tpu.memory_space<vmem>>, vector<1x128xf32>
    tpu.vector_store %arg9[%c0_308, %c18304], %320 {strides = array<i32>} : memref<2x18432xf32, #tpu.memory_space<vmem>>, vector<1x128xf32>,
    %c144 = arith.constant 144 : index
    %c0_309 = arith.constant 0 : index
    %322 = vector.load %arg8[%c144, %c0_309] : memref<288x128xf32, #tpu.memory_space<vmem>>, vector<1x128xf32>
    %c1_310 = arith.constant 1 : index
    %c0_311 = arith.constant 0 : index
    %323 = vector.load %arg9[%c1_310, %c0_311] : memref<2x18432xf32, #tpu.memory_space<vmem>>, vector<1x128xf32>
    tpu.vector_store %arg9[%c1_310, %c0_311], %322 {strides = array<i32>} : memref<2x18432xf32, #tpu.memory_space<vmem>>, vector<1x128xf32>,
    %c145 = arith.constant 145 : index
    %c0_312 = arith.constant 0 : index
    %324 = vector.load %arg8[%c145, %c0_312] : memref<288x128xf32, #tpu.memory_space<vmem>>, vector<1x128xf32>
    %c1_313 = arith.constant 1 : index
    %c128_314 = arith.constant 128 : index
    %325 = vector.load %arg9[%c1_313, %c128_314] : memref<2x18432xf32, #tpu.memory_space<vmem>>, vector<1x128xf32>
    tpu.vector_store %arg9[%c1_313, %c128_314], %324 {strides = array<i32>} : memref<2x18432xf32, #tpu.memory_space<vmem>>, vector<1x128xf32>,
    %c146 = arith.constant 146 : index
    %c0_315 = arith.constant 0 : index
    %326 = vector.load %arg8[%c146, %c0_315] : memref<288x128xf32, #tpu.memory_space<vmem>>, vector<1x128xf32>
    %c1_316 = arith.constant 1 : index
    %c256_317 = arith.constant 256 : index
    %327 = vector.load %arg9[%c1_316, %c256_317] : memref<2x18432xf32, #tpu.memory_space<vmem>>, vector<1x128xf32>
    tpu.vector_store %arg9[%c1_316, %c256_317], %326 {strides = array<i32>} : memref<2x18432xf32, #tpu.memory_space<vmem>>, vector<1x128xf32>,
    %c147 = arith.constant 147 : index
    %c0_318 = arith.constant 0 : index
    %328 = vector.load %arg8[%c147, %c0_318] : memref<288x128xf32, #tpu.memory_space<vmem>>, vector<1x128xf32>
    %c1_319 = arith.constant 1 : index
    %c384_320 = arith.constant 384 : index
    %329 = vector.load %arg9[%c1_319, %c384_320] : memref<2x18432xf32, #tpu.memory_space<vmem>>, vector<1x128xf32>
    tpu.vector_store %arg9[%c1_319, %c384_320], %328 {strides = array<i32>} : memref<2x18432xf32, #tpu.memory_space<vmem>>, vector<1x128xf32>,
    %c148 = arith.constant 148 : index
    %c0_321 = arith.constant 0 : index
    %330 = vector.load %arg8[%c148, %c0_321] : memref<288x128xf32, #tpu.memory_space<vmem>>, vector<1x128xf32>
    %c1_322 = arith.constant 1 : index
    %c512_323 = arith.constant 512 : index
    %331 = vector.load %arg9[%c1_322, %c512_323] : memref<2x18432xf32, #tpu.memory_space<vmem>>, vector<1x128xf32>
    tpu.vector_store %arg9[%c1_322, %c512_323], %330 {strides = array<i32>} : memref<2x18432xf32, #tpu.memory_space<vmem>>, vector<1x128xf32>,
    %c149 = arith.constant 149 : index
    %c0_324 = arith.constant 0 : index
    %332 = vector.load %arg8[%c149, %c0_324] : memref<288x128xf32, #tpu.memory_space<vmem>>, vector<1x128xf32>
    %c1_325 = arith.constant 1 : index
    %c640_326 = arith.constant 640 : index
    %333 = vector.load %arg9[%c1_325, %c640_326] : memref<2x18432xf32, #tpu.memory_space<vmem>>, vector<1x128xf32>
    tpu.vector_store %arg9[%c1_325, %c640_326], %332 {strides = array<i32>} : memref<2x18432xf32, #tpu.memory_space<vmem>>, vector<1x128xf32>,
    %c150 = arith.constant 150 : index
    %c0_327 = arith.constant 0 : index
    %334 = vector.load %arg8[%c150, %c0_327] : memref<288x128xf32, #tpu.memory_space<vmem>>, vector<1x128xf32>
    %c1_328 = arith.constant 1 : index
    %c768_329 = arith.constant 768 : index
    %335 = vector.load %arg9[%c1_328, %c768_329] : memref<2x18432xf32, #tpu.memory_space<vmem>>, vector<1x128xf32>
    tpu.vector_store %arg9[%c1_328, %c768_329], %334 {strides = array<i32>} : memref<2x18432xf32, #tpu.memory_space<vmem>>, vector<1x128xf32>,
    %c151 = arith.constant 151 : index
    %c0_330 = arith.constant 0 : index
    %336 = vector.load %arg8[%c151, %c0_330] : memref<288x128xf32, #tpu.memory_space<vmem>>, vector<1x128xf32>
    %c1_331 = arith.constant 1 : index
    %c896_332 = arith.constant 896 : index
    %337 = vector.load %arg9[%c1_331, %c896_332] : memref<2x18432xf32, #tpu.memory_space<vmem>>, vector<1x128xf32>
    tpu.vector_store %arg9[%c1_331, %c896_332], %336 {strides = array<i32>} : memref<2x18432xf32, #tpu.memory_space<vmem>>, vector<1x128xf32>,
    %c152 = arith.constant 152 : index
    %c0_333 = arith.constant 0 : index
    %338 = vector.load %arg8[%c152, %c0_333] : memref<288x128xf32, #tpu.memory_space<vmem>>, vector<1x128xf32>
    %c1_334 = arith.constant 1 : index
    %c1024_335 = arith.constant 1024 : index
    %339 = vector.load %arg9[%c1_334, %c1024_335] : memref<2x18432xf32, #tpu.memory_space<vmem>>, vector<1x128xf32>
    tpu.vector_store %arg9[%c1_334, %c1024_335], %338 {strides = array<i32>} : memref<2x18432xf32, #tpu.memory_space<vmem>>, vector<1x128xf32>,
    %c153 = arith.constant 153 : index
    %c0_336 = arith.constant 0 : index
    %340 = vector.load %arg8[%c153, %c0_336] : memref<288x128xf32, #tpu.memory_space<vmem>>, vector<1x128xf32>
    %c1_337 = arith.constant 1 : index
    %c1152_338 = arith.constant 1152 : index
    %341 = vector.load %arg9[%c1_337, %c1152_338] : memref<2x18432xf32, #tpu.memory_space<vmem>>, vector<1x128xf32>
    tpu.vector_store %arg9[%c1_337, %c1152_338], %340 {strides = array<i32>} : memref<2x18432xf32, #tpu.memory_space<vmem>>, vector<1x128xf32>,
    %c154 = arith.constant 154 : index
    %c0_339 = arith.constant 0 : index
    %342 = vector.load %arg8[%c154, %c0_339] : memref<288x128xf32, #tpu.memory_space<vmem>>, vector<1x128xf32>
    %c1_340 = arith.constant 1 : index
    %c1280_341 = arith.constant 1280 : index
    %343 = vector.load %arg9[%c1_340, %c1280_341] : memref<2x18432xf32, #tpu.memory_space<vmem>>, vector<1x128xf32>
    tpu.vector_store %arg9[%c1_340, %c1280_341], %342 {strides = array<i32>} : memref<2x18432xf32, #tpu.memory_space<vmem>>, vector<1x128xf32>,
    %c155 = arith.constant 155 : index
    %c0_342 = arith.constant 0 : index
    %344 = vector.load %arg8[%c155, %c0_342] : memref<288x128xf32, #tpu.memory_space<vmem>>, vector<1x128xf32>
    %c1_343 = arith.constant 1 : index
    %c1408_344 = arith.constant 1408 : index
    %345 = vector.load %arg9[%c1_343, %c1408_344] : memref<2x18432xf32, #tpu.memory_space<vmem>>, vector<1x128xf32>
    tpu.vector_store %arg9[%c1_343, %c1408_344], %344 {strides = array<i32>} : memref<2x18432xf32, #tpu.memory_space<vmem>>, vector<1x128xf32>,
    %c156 = arith.constant 156 : index
    %c0_345 = arith.constant 0 : index
    %346 = vector.load %arg8[%c156, %c0_345] : memref<288x128xf32, #tpu.memory_space<vmem>>, vector<1x128xf32>
    %c1_346 = arith.constant 1 : index
    %c1536_347 = arith.constant 1536 : index
    %347 = vector.load %arg9[%c1_346, %c1536_347] : memref<2x18432xf32, #tpu.memory_space<vmem>>, vector<1x128xf32>
    tpu.vector_store %arg9[%c1_346, %c1536_347], %346 {strides = array<i32>} : memref<2x18432xf32, #tpu.memory_space<vmem>>, vector<1x128xf32>,
    %c157 = arith.constant 157 : index
    %c0_348 = arith.constant 0 : index
    %348 = vector.load %arg8[%c157, %c0_348] : memref<288x128xf32, #tpu.memory_space<vmem>>, vector<1x128xf32>
    %c1_349 = arith.constant 1 : index
    %c1664_350 = arith.constant 1664 : index
    %349 = vector.load %arg9[%c1_349, %c1664_350] : memref<2x18432xf32, #tpu.memory_space<vmem>>, vector<1x128xf32>
    tpu.vector_store %arg9[%c1_349, %c1664_350], %348 {strides = array<i32>} : memref<2x18432xf32, #tpu.memory_space<vmem>>, vector<1x128xf32>,
    %c158 = arith.constant 158 : index
    %c0_351 = arith.constant 0 : index
    %350 = vector.load %arg8[%c158, %c0_351] : memref<288x128xf32, #tpu.memory_space<vmem>>, vector<1x128xf32>
    %c1_352 = arith.constant 1 : index
    %c1792_353 = arith.constant 1792 : index
    %351 = vector.load %arg9[%c1_352, %c1792_353] : memref<2x18432xf32, #tpu.memory_space<vmem>>, vector<1x128xf32>
    tpu.vector_store %arg9[%c1_352, %c1792_353], %350 {strides = array<i32>} : memref<2x18432xf32, #tpu.memory_space<vmem>>, vector<1x128xf32>,
    %c159 = arith.constant 159 : index
    %c0_354 = arith.constant 0 : index
    %352 = vector.load %arg8[%c159, %c0_354] : memref<288x128xf32, #tpu.memory_space<vmem>>, vector<1x128xf32>
    %c1_355 = arith.constant 1 : index
    %c1920_356 = arith.constant 1920 : index
    %353 = vector.load %arg9[%c1_355, %c1920_356] : memref<2x18432xf32, #tpu.memory_space<vmem>>, vector<1x128xf32>
    tpu.vector_store %arg9[%c1_355, %c1920_356], %352 {strides = array<i32>} : memref<2x18432xf32, #tpu.memory_space<vmem>>, vector<1x128xf32>,
    %c160 = arith.constant 160 : index
    %c0_357 = arith.constant 0 : index
    %354 = vector.load %arg8[%c160, %c0_357] : memref<288x128xf32, #tpu.memory_space<vmem>>, vector<1x128xf32>
    %c1_358 = arith.constant 1 : index
    %c2048_359 = arith.constant 2048 : index
    %355 = vector.load %arg9[%c1_358, %c2048_359] : memref<2x18432xf32, #tpu.memory_space<vmem>>, vector<1x128xf32>
    tpu.vector_store %arg9[%c1_358, %c2048_359], %354 {strides = array<i32>} : memref<2x18432xf32, #tpu.memory_space<vmem>>, vector<1x128xf32>,
    %c161 = arith.constant 161 : index
    %c0_360 = arith.constant 0 : index
    %356 = vector.load %arg8[%c161, %c0_360] : memref<288x128xf32, #tpu.memory_space<vmem>>, vector<1x128xf32>
    %c1_361 = arith.constant 1 : index
    %c2176_362 = arith.constant 2176 : index
    %357 = vector.load %arg9[%c1_361, %c2176_362] : memref<2x18432xf32, #tpu.memory_space<vmem>>, vector<1x128xf32>
    tpu.vector_store %arg9[%c1_361, %c2176_362], %356 {strides = array<i32>} : memref<2x18432xf32, #tpu.memory_space<vmem>>, vector<1x128xf32>,
    %c162 = arith.constant 162 : index
    %c0_363 = arith.constant 0 : index
    %358 = vector.load %arg8[%c162, %c0_363] : memref<288x128xf32, #tpu.memory_space<vmem>>, vector<1x128xf32>
    %c1_364 = arith.constant 1 : index
    %c2304_365 = arith.constant 2304 : index
    %359 = vector.load %arg9[%c1_364, %c2304_365] : memref<2x18432xf32, #tpu.memory_space<vmem>>, vector<1x128xf32>
    tpu.vector_store %arg9[%c1_364, %c2304_365], %358 {strides = array<i32>} : memref<2x18432xf32, #tpu.memory_space<vmem>>, vector<1x128xf32>,
    %c163 = arith.constant 163 : index
    %c0_366 = arith.constant 0 : index
    %360 = vector.load %arg8[%c163, %c0_366] : memref<288x128xf32, #tpu.memory_space<vmem>>, vector<1x128xf32>
    %c1_367 = arith.constant 1 : index
    %c2432_368 = arith.constant 2432 : index
    %361 = vector.load %arg9[%c1_367, %c2432_368] : memref<2x18432xf32, #tpu.memory_space<vmem>>, vector<1x128xf32>
    tpu.vector_store %arg9[%c1_367, %c2432_368], %360 {strides = array<i32>} : memref<2x18432xf32, #tpu.memory_space<vmem>>, vector<1x128xf32>,
    %c164 = arith.constant 164 : index
    %c0_369 = arith.constant 0 : index
    %362 = vector.load %arg8[%c164, %c0_369] : memref<288x128xf32, #tpu.memory_space<vmem>>, vector<1x128xf32>
    %c1_370 = arith.constant 1 : index
    %c2560_371 = arith.constant 2560 : index
    %363 = vector.load %arg9[%c1_370, %c2560_371] : memref<2x18432xf32, #tpu.memory_space<vmem>>, vector<1x128xf32>
    tpu.vector_store %arg9[%c1_370, %c2560_371], %362 {strides = array<i32>} : memref<2x18432xf32, #tpu.memory_space<vmem>>, vector<1x128xf32>,
    %c165 = arith.constant 165 : index
    %c0_372 = arith.constant 0 : index
    %364 = vector.load %arg8[%c165, %c0_372] : memref<288x128xf32, #tpu.memory_space<vmem>>, vector<1x128xf32>
    %c1_373 = arith.constant 1 : index
    %c2688_374 = arith.constant 2688 : index
    %365 = vector.load %arg9[%c1_373, %c2688_374] : memref<2x18432xf32, #tpu.memory_space<vmem>>, vector<1x128xf32>
    tpu.vector_store %arg9[%c1_373, %c2688_374], %364 {strides = array<i32>} : memref<2x18432xf32, #tpu.memory_space<vmem>>, vector<1x128xf32>,
    %c166 = arith.constant 166 : index
    %c0_375 = arith.constant 0 : index
    %366 = vector.load %arg8[%c166, %c0_375] : memref<288x128xf32, #tpu.memory_space<vmem>>, vector<1x128xf32>
    %c1_376 = arith.constant 1 : index
    %c2816_377 = arith.constant 2816 : index
    %367 = vector.load %arg9[%c1_376, %c2816_377] : memref<2x18432xf32, #tpu.memory_space<vmem>>, vector<1x128xf32>
    tpu.vector_store %arg9[%c1_376, %c2816_377], %366 {strides = array<i32>} : memref<2x18432xf32, #tpu.memory_space<vmem>>, vector<1x128xf32>,
    %c167 = arith.constant 167 : index
    %c0_378 = arith.constant 0 : index
    %368 = vector.load %arg8[%c167, %c0_378] : memref<288x128xf32, #tpu.memory_space<vmem>>, vector<1x128xf32>
    %c1_379 = arith.constant 1 : index
    %c2944_380 = arith.constant 2944 : index
    %369 = vector.load %arg9[%c1_379, %c2944_380] : memref<2x18432xf32, #tpu.memory_space<vmem>>, vector<1x128xf32>
    tpu.vector_store %arg9[%c1_379, %c2944_380], %368 {strides = array<i32>} : memref<2x18432xf32, #tpu.memory_space<vmem>>, vector<1x128xf32>,
    %c168 = arith.constant 168 : index
    %c0_381 = arith.constant 0 : index
    %370 = vector.load %arg8[%c168, %c0_381] : memref<288x128xf32, #tpu.memory_space<vmem>>, vector<1x128xf32>
    %c1_382 = arith.constant 1 : index
    %c3072_383 = arith.constant 3072 : index
    %371 = vector.load %arg9[%c1_382, %c3072_383] : memref<2x18432xf32, #tpu.memory_space<vmem>>, vector<1x128xf32>
    tpu.vector_store %arg9[%c1_382, %c3072_383], %370 {strides = array<i32>} : memref<2x18432xf32, #tpu.memory_space<vmem>>, vector<1x128xf32>,
    %c169 = arith.constant 169 : index
    %c0_384 = arith.constant 0 : index
    %372 = vector.load %arg8[%c169, %c0_384] : memref<288x128xf32, #tpu.memory_space<vmem>>, vector<1x128xf32>
    %c1_385 = arith.constant 1 : index
    %c3200_386 = arith.constant 3200 : index
    %373 = vector.load %arg9[%c1_385, %c3200_386] : memref<2x18432xf32, #tpu.memory_space<vmem>>, vector<1x128xf32>
    tpu.vector_store %arg9[%c1_385, %c3200_386], %372 {strides = array<i32>} : memref<2x18432xf32, #tpu.memory_space<vmem>>, vector<1x128xf32>,
    %c170 = arith.constant 170 : index
    %c0_387 = arith.constant 0 : index
    %374 = vector.load %arg8[%c170, %c0_387] : memref<288x128xf32, #tpu.memory_space<vmem>>, vector<1x128xf32>
    %c1_388 = arith.constant 1 : index
    %c3328_389 = arith.constant 3328 : index
    %375 = vector.load %arg9[%c1_388, %c3328_389] : memref<2x18432xf32, #tpu.memory_space<vmem>>, vector<1x128xf32>
    tpu.vector_store %arg9[%c1_388, %c3328_389], %374 {strides = array<i32>} : memref<2x18432xf32, #tpu.memory_space<vmem>>, vector<1x128xf32>,
    %c171 = arith.constant 171 : index
    %c0_390 = arith.constant 0 : index
    %376 = vector.load %arg8[%c171, %c0_390] : memref<288x128xf32, #tpu.memory_space<vmem>>, vector<1x128xf32>
    %c1_391 = arith.constant 1 : index
    %c3456_392 = arith.constant 3456 : index
    %377 = vector.load %arg9[%c1_391, %c3456_392] : memref<2x18432xf32, #tpu.memory_space<vmem>>, vector<1x128xf32>
    tpu.vector_store %arg9[%c1_391, %c3456_392], %376 {strides = array<i32>} : memref<2x18432xf32, #tpu.memory_space<vmem>>, vector<1x128xf32>,
    %c172 = arith.constant 172 : index
    %c0_393 = arith.constant 0 : index
    %378 = vector.load %arg8[%c172, %c0_393] : memref<288x128xf32, #tpu.memory_space<vmem>>, vector<1x128xf32>
    %c1_394 = arith.constant 1 : index
    %c3584_395 = arith.constant 3584 : index
    %379 = vector.load %arg9[%c1_394, %c3584_395] : memref<2x18432xf32, #tpu.memory_space<vmem>>, vector<1x128xf32>
    tpu.vector_store %arg9[%c1_394, %c3584_395], %378 {strides = array<i32>} : memref<2x18432xf32, #tpu.memory_space<vmem>>, vector<1x128xf32>,
    %c173 = arith.constant 173 : index
    %c0_396 = arith.constant 0 : index
    %380 = vector.load %arg8[%c173, %c0_396] : memref<288x128xf32, #tpu.memory_space<vmem>>, vector<1x128xf32>
    %c1_397 = arith.constant 1 : index
    %c3712_398 = arith.constant 3712 : index
    %381 = vector.load %arg9[%c1_397, %c3712_398] : memref<2x18432xf32, #tpu.memory_space<vmem>>, vector<1x128xf32>
    tpu.vector_store %arg9[%c1_397, %c3712_398], %380 {strides = array<i32>} : memref<2x18432xf32, #tpu.memory_space<vmem>>, vector<1x128xf32>,
    %c174 = arith.constant 174 : index
    %c0_399 = arith.constant 0 : index
    %382 = vector.load %arg8[%c174, %c0_399] : memref<288x128xf32, #tpu.memory_space<vmem>>, vector<1x128xf32>
    %c1_400 = arith.constant 1 : index
    %c3840_401 = arith.constant 3840 : index
    %383 = vector.load %arg9[%c1_400, %c3840_401] : memref<2x18432xf32, #tpu.memory_space<vmem>>, vector<1x128xf32>
    tpu.vector_store %arg9[%c1_400, %c3840_401], %382 {strides = array<i32>} : memref<2x18432xf32, #tpu.memory_space<vmem>>, vector<1x128xf32>,
    %c175 = arith.constant 175 : index
    %c0_402 = arith.constant 0 : index
    %384 = vector.load %arg8[%c175, %c0_402] : memref<288x128xf32, #tpu.memory_space<vmem>>, vector<1x128xf32>
    %c1_403 = arith.constant 1 : index
    %c3968_404 = arith.constant 3968 : index
    %385 = vector.load %arg9[%c1_403, %c3968_404] : memref<2x18432xf32, #tpu.memory_space<vmem>>, vector<1x128xf32>
    tpu.vector_store %arg9[%c1_403, %c3968_404], %384 {strides = array<i32>} : memref<2x18432xf32, #tpu.memory_space<vmem>>, vector<1x128xf32>,
    %c176 = arith.constant 176 : index
    %c0_405 = arith.constant 0 : index
    %386 = vector.load %arg8[%c176, %c0_405] : memref<288x128xf32, #tpu.memory_space<vmem>>, vector<1x128xf32>
    %c1_406 = arith.constant 1 : index
    %c4096_407 = arith.constant 4096 : index
    %387 = vector.load %arg9[%c1_406, %c4096_407] : memref<2x18432xf32, #tpu.memory_space<vmem>>, vector<1x128xf32>
    tpu.vector_store %arg9[%c1_406, %c4096_407], %386 {strides = array<i32>} : memref<2x18432xf32, #tpu.memory_space<vmem>>, vector<1x128xf32>,
    %c177 = arith.constant 177 : index
    %c0_408 = arith.constant 0 : index
    %388 = vector.load %arg8[%c177, %c0_408] : memref<288x128xf32, #tpu.memory_space<vmem>>, vector<1x128xf32>
    %c1_409 = arith.constant 1 : index
    %c4224_410 = arith.constant 4224 : index
    %389 = vector.load %arg9[%c1_409, %c4224_410] : memref<2x18432xf32, #tpu.memory_space<vmem>>, vector<1x128xf32>
    tpu.vector_store %arg9[%c1_409, %c4224_410], %388 {strides = array<i32>} : memref<2x18432xf32, #tpu.memory_space<vmem>>, vector<1x128xf32>,
    %c178 = arith.constant 178 : index
    %c0_411 = arith.constant 0 : index
    %390 = vector.load %arg8[%c178, %c0_411] : memref<288x128xf32, #tpu.memory_space<vmem>>, vector<1x128xf32>
    %c1_412 = arith.constant 1 : index
    %c4352_413 = arith.constant 4352 : index
    %391 = vector.load %arg9[%c1_412, %c4352_413] : memref<2x18432xf32, #tpu.memory_space<vmem>>, vector<1x128xf32>
    tpu.vector_store %arg9[%c1_412, %c4352_413], %390 {strides = array<i32>} : memref<2x18432xf32, #tpu.memory_space<vmem>>, vector<1x128xf32>,
    %c179 = arith.constant 179 : index
    %c0_414 = arith.constant 0 : index
    %392 = vector.load %arg8[%c179, %c0_414] : memref<288x128xf32, #tpu.memory_space<vmem>>, vector<1x128xf32>
    %c1_415 = arith.constant 1 : index
    %c4480_416 = arith.constant 4480 : index
    %393 = vector.load %arg9[%c1_415, %c4480_416] : memref<2x18432xf32, #tpu.memory_space<vmem>>, vector<1x128xf32>
    tpu.vector_store %arg9[%c1_415, %c4480_416], %392 {strides = array<i32>} : memref<2x18432xf32, #tpu.memory_space<vmem>>, vector<1x128xf32>,
    %c180 = arith.constant 180 : index
    %c0_417 = arith.constant 0 : index
    %394 = vector.load %arg8[%c180, %c0_417] : memref<288x128xf32, #tpu.memory_space<vmem>>, vector<1x128xf32>
    %c1_418 = arith.constant 1 : index
    %c4608_419 = arith.constant 4608 : index
    %395 = vector.load %arg9[%c1_418, %c4608_419] : memref<2x18432xf32, #tpu.memory_space<vmem>>, vector<1x128xf32>
    tpu.vector_store %arg9[%c1_418, %c4608_419], %394 {strides = array<i32>} : memref<2x18432xf32, #tpu.memory_space<vmem>>, vector<1x128xf32>,
    %c181 = arith.constant 181 : index
    %c0_420 = arith.constant 0 : index
    %396 = vector.load %arg8[%c181, %c0_420] : memref<288x128xf32, #tpu.memory_space<vmem>>, vector<1x128xf32>
    %c1_421 = arith.constant 1 : index
    %c4736_422 = arith.constant 4736 : index
    %397 = vector.load %arg9[%c1_421, %c4736_422] : memref<2x18432xf32, #tpu.memory_space<vmem>>, vector<1x128xf32>
    tpu.vector_store %arg9[%c1_421, %c4736_422], %396 {strides = array<i32>} : memref<2x18432xf32, #tpu.memory_space<vmem>>, vector<1x128xf32>,
    %c182 = arith.constant 182 : index
    %c0_423 = arith.constant 0 : index
    %398 = vector.load %arg8[%c182, %c0_423] : memref<288x128xf32, #tpu.memory_space<vmem>>, vector<1x128xf32>
    %c1_424 = arith.constant 1 : index
    %c4864_425 = arith.constant 4864 : index
    %399 = vector.load %arg9[%c1_424, %c4864_425] : memref<2x18432xf32, #tpu.memory_space<vmem>>, vector<1x128xf32>
    tpu.vector_store %arg9[%c1_424, %c4864_425], %398 {strides = array<i32>} : memref<2x18432xf32, #tpu.memory_space<vmem>>, vector<1x128xf32>,
    %c183 = arith.constant 183 : index
    %c0_426 = arith.constant 0 : index
    %400 = vector.load %arg8[%c183, %c0_426] : memref<288x128xf32, #tpu.memory_space<vmem>>, vector<1x128xf32>
    %c1_427 = arith.constant 1 : index
    %c4992_428 = arith.constant 4992 : index
    %401 = vector.load %arg9[%c1_427, %c4992_428] : memref<2x18432xf32, #tpu.memory_space<vmem>>, vector<1x128xf32>
    tpu.vector_store %arg9[%c1_427, %c4992_428], %400 {strides = array<i32>} : memref<2x18432xf32, #tpu.memory_space<vmem>>, vector<1x128xf32>,
    %c184 = arith.constant 184 : index
    %c0_429 = arith.constant 0 : index
    %402 = vector.load %arg8[%c184, %c0_429] : memref<288x128xf32, #tpu.memory_space<vmem>>, vector<1x128xf32>
    %c1_430 = arith.constant 1 : index
    %c5120_431 = arith.constant 5120 : index
    %403 = vector.load %arg9[%c1_430, %c5120_431] : memref<2x18432xf32, #tpu.memory_space<vmem>>, vector<1x128xf32>
    tpu.vector_store %arg9[%c1_430, %c5120_431], %402 {strides = array<i32>} : memref<2x18432xf32, #tpu.memory_space<vmem>>, vector<1x128xf32>,
    %c185 = arith.constant 185 : index
    %c0_432 = arith.constant 0 : index
    %404 = vector.load %arg8[%c185, %c0_432] : memref<288x128xf32, #tpu.memory_space<vmem>>, vector<1x128xf32>
    %c1_433 = arith.constant 1 : index
    %c5248_434 = arith.constant 5248 : index
    %405 = vector.load %arg9[%c1_433, %c5248_434] : memref<2x18432xf32, #tpu.memory_space<vmem>>, vector<1x128xf32>
    tpu.vector_store %arg9[%c1_433, %c5248_434], %404 {strides = array<i32>} : memref<2x18432xf32, #tpu.memory_space<vmem>>, vector<1x128xf32>,
    %c186 = arith.constant 186 : index
    %c0_435 = arith.constant 0 : index
    %406 = vector.load %arg8[%c186, %c0_435] : memref<288x128xf32, #tpu.memory_space<vmem>>, vector<1x128xf32>
    %c1_436 = arith.constant 1 : index
    %c5376_437 = arith.constant 5376 : index
    %407 = vector.load %arg9[%c1_436, %c5376_437] : memref<2x18432xf32, #tpu.memory_space<vmem>>, vector<1x128xf32>
    tpu.vector_store %arg9[%c1_436, %c5376_437], %406 {strides = array<i32>} : memref<2x18432xf32, #tpu.memory_space<vmem>>, vector<1x128xf32>,
    %c187 = arith.constant 187 : index
    %c0_438 = arith.constant 0 : index
    %408 = vector.load %arg8[%c187, %c0_438] : memref<288x128xf32, #tpu.memory_space<vmem>>, vector<1x128xf32>
    %c1_439 = arith.constant 1 : index
    %c5504_440 = arith.constant 5504 : index
    %409 = vector.load %arg9[%c1_439, %c5504_440] : memref<2x18432xf32, #tpu.memory_space<vmem>>, vector<1x128xf32>
    tpu.vector_store %arg9[%c1_439, %c5504_440], %408 {strides = array<i32>} : memref<2x18432xf32, #tpu.memory_space<vmem>>, vector<1x128xf32>,
    %c188 = arith.constant 188 : index
    %c0_441 = arith.constant 0 : index
    %410 = vector.load %arg8[%c188, %c0_441] : memref<288x128xf32, #tpu.memory_space<vmem>>, vector<1x128xf32>
    %c1_442 = arith.constant 1 : index
    %c5632_443 = arith.constant 5632 : index
    %411 = vector.load %arg9[%c1_442, %c5632_443] : memref<2x18432xf32, #tpu.memory_space<vmem>>, vector<1x128xf32>
    tpu.vector_store %arg9[%c1_442, %c5632_443], %410 {strides = array<i32>} : memref<2x18432xf32, #tpu.memory_space<vmem>>, vector<1x128xf32>,
    %c189 = arith.constant 189 : index
    %c0_444 = arith.constant 0 : index
    %412 = vector.load %arg8[%c189, %c0_444] : memref<288x128xf32, #tpu.memory_space<vmem>>, vector<1x128xf32>
    %c1_445 = arith.constant 1 : index
    %c5760_446 = arith.constant 5760 : index
    %413 = vector.load %arg9[%c1_445, %c5760_446] : memref<2x18432xf32, #tpu.memory_space<vmem>>, vector<1x128xf32>
    tpu.vector_store %arg9[%c1_445, %c5760_446], %412 {strides = array<i32>} : memref<2x18432xf32, #tpu.memory_space<vmem>>, vector<1x128xf32>,
    %c190 = arith.constant 190 : index
    %c0_447 = arith.constant 0 : index
    %414 = vector.load %arg8[%c190, %c0_447] : memref<288x128xf32, #tpu.memory_space<vmem>>, vector<1x128xf32>
    %c1_448 = arith.constant 1 : index
    %c5888_449 = arith.constant 5888 : index
    %415 = vector.load %arg9[%c1_448, %c5888_449] : memref<2x18432xf32, #tpu.memory_space<vmem>>, vector<1x128xf32>
    tpu.vector_store %arg9[%c1_448, %c5888_449], %414 {strides = array<i32>} : memref<2x18432xf32, #tpu.memory_space<vmem>>, vector<1x128xf32>,
    %c191 = arith.constant 191 : index
    %c0_450 = arith.constant 0 : index
    %416 = vector.load %arg8[%c191, %c0_450] : memref<288x128xf32, #tpu.memory_space<vmem>>, vector<1x128xf32>
    %c1_451 = arith.constant 1 : index
    %c6016_452 = arith.constant 6016 : index
    %417 = vector.load %arg9[%c1_451, %c6016_452] : memref<2x18432xf32, #tpu.memory_space<vmem>>, vector<1x128xf32>
    tpu.vector_store %arg9[%c1_451, %c6016_452], %416 {strides = array<i32>} : memref<2x18432xf32, #tpu.memory_space<vmem>>, vector<1x128xf32>,
    %c192 = arith.constant 192 : index
    %c0_453 = arith.constant 0 : index
    %418 = vector.load %arg8[%c192, %c0_453] : memref<288x128xf32, #tpu.memory_space<vmem>>, vector<1x128xf32>
    %c1_454 = arith.constant 1 : index
    %c6144_455 = arith.constant 6144 : index
    %419 = vector.load %arg9[%c1_454, %c6144_455] : memref<2x18432xf32, #tpu.memory_space<vmem>>, vector<1x128xf32>
    tpu.vector_store %arg9[%c1_454, %c6144_455], %418 {strides = array<i32>} : memref<2x18432xf32, #tpu.memory_space<vmem>>, vector<1x128xf32>,
    %c193 = arith.constant 193 : index
    %c0_456 = arith.constant 0 : index
    %420 = vector.load %arg8[%c193, %c0_456] : memref<288x128xf32, #tpu.memory_space<vmem>>, vector<1x128xf32>
    %c1_457 = arith.constant 1 : index
    %c6272_458 = arith.constant 6272 : index
    %421 = vector.load %arg9[%c1_457, %c6272_458] : memref<2x18432xf32, #tpu.memory_space<vmem>>, vector<1x128xf32>
    tpu.vector_store %arg9[%c1_457, %c6272_458], %420 {strides = array<i32>} : memref<2x18432xf32, #tpu.memory_space<vmem>>, vector<1x128xf32>,
    %c194 = arith.constant 194 : index
    %c0_459 = arith.constant 0 : index
    %422 = vector.load %arg8[%c194, %c0_459] : memref<288x128xf32, #tpu.memory_space<vmem>>, vector<1x128xf32>
    %c1_460 = arith.constant 1 : index
    %c6400_461 = arith.constant 6400 : index
    %423 = vector.load %arg9[%c1_460, %c6400_461] : memref<2x18432xf32, #tpu.memory_space<vmem>>, vector<1x128xf32>
    tpu.vector_store %arg9[%c1_460, %c6400_461], %422 {strides = array<i32>} : memref<2x18432xf32, #tpu.memory_space<vmem>>, vector<1x128xf32>,
    %c195 = arith.constant 195 : index
    %c0_462 = arith.constant 0 : index
    %424 = vector.load %arg8[%c195, %c0_462] : memref<288x128xf32, #tpu.memory_space<vmem>>, vector<1x128xf32>
    %c1_463 = arith.constant 1 : index
    %c6528_464 = arith.constant 6528 : index
    %425 = vector.load %arg9[%c1_463, %c6528_464] : memref<2x18432xf32, #tpu.memory_space<vmem>>, vector<1x128xf32>
    tpu.vector_store %arg9[%c1_463, %c6528_464], %424 {strides = array<i32>} : memref<2x18432xf32, #tpu.memory_space<vmem>>, vector<1x128xf32>,
    %c196 = arith.constant 196 : index
    %c0_465 = arith.constant 0 : index
    %426 = vector.load %arg8[%c196, %c0_465] : memref<288x128xf32, #tpu.memory_space<vmem>>, vector<1x128xf32>
    %c1_466 = arith.constant 1 : index
    %c6656_467 = arith.constant 6656 : index
    %427 = vector.load %arg9[%c1_466, %c6656_467] : memref<2x18432xf32, #tpu.memory_space<vmem>>, vector<1x128xf32>
    tpu.vector_store %arg9[%c1_466, %c6656_467], %426 {strides = array<i32>} : memref<2x18432xf32, #tpu.memory_space<vmem>>, vector<1x128xf32>,
    %c197 = arith.constant 197 : index
    %c0_468 = arith.constant 0 : index
    %428 = vector.load %arg8[%c197, %c0_468] : memref<288x128xf32, #tpu.memory_space<vmem>>, vector<1x128xf32>
    %c1_469 = arith.constant 1 : index
    %c6784_470 = arith.constant 6784 : index
    %429 = vector.load %arg9[%c1_469, %c6784_470] : memref<2x18432xf32, #tpu.memory_space<vmem>>, vector<1x128xf32>
    tpu.vector_store %arg9[%c1_469, %c6784_470], %428 {strides = array<i32>} : memref<2x18432xf32, #tpu.memory_space<vmem>>, vector<1x128xf32>,
    %c198 = arith.constant 198 : index
    %c0_471 = arith.constant 0 : index
    %430 = vector.load %arg8[%c198, %c0_471] : memref<288x128xf32, #tpu.memory_space<vmem>>, vector<1x128xf32>
    %c1_472 = arith.constant 1 : index
    %c6912_473 = arith.constant 6912 : index
    %431 = vector.load %arg9[%c1_472, %c6912_473] : memref<2x18432xf32, #tpu.memory_space<vmem>>, vector<1x128xf32>
    tpu.vector_store %arg9[%c1_472, %c6912_473], %430 {strides = array<i32>} : memref<2x18432xf32, #tpu.memory_space<vmem>>, vector<1x128xf32>,
    %c199 = arith.constant 199 : index
    %c0_474 = arith.constant 0 : index
    %432 = vector.load %arg8[%c199, %c0_474] : memref<288x128xf32, #tpu.memory_space<vmem>>, vector<1x128xf32>
    %c1_475 = arith.constant 1 : index
    %c7040_476 = arith.constant 7040 : index
    %433 = vector.load %arg9[%c1_475, %c7040_476] : memref<2x18432xf32, #tpu.memory_space<vmem>>, vector<1x128xf32>
    tpu.vector_store %arg9[%c1_475, %c7040_476], %432 {strides = array<i32>} : memref<2x18432xf32, #tpu.memory_space<vmem>>, vector<1x128xf32>,
    %c200 = arith.constant 200 : index
    %c0_477 = arith.constant 0 : index
    %434 = vector.load %arg8[%c200, %c0_477] : memref<288x128xf32, #tpu.memory_space<vmem>>, vector<1x128xf32>
    %c1_478 = arith.constant 1 : index
    %c7168_479 = arith.constant 7168 : index
    %435 = vector.load %arg9[%c1_478, %c7168_479] : memref<2x18432xf32, #tpu.memory_space<vmem>>, vector<1x128xf32>
    tpu.vector_store %arg9[%c1_478, %c7168_479], %434 {strides = array<i32>} : memref<2x18432xf32, #tpu.memory_space<vmem>>, vector<1x128xf32>,
    %c201 = arith.constant 201 : index
    %c0_480 = arith.constant 0 : index
    %436 = vector.load %arg8[%c201, %c0_480] : memref<288x128xf32, #tpu.memory_space<vmem>>, vector<1x128xf32>
    %c1_481 = arith.constant 1 : index
    %c7296_482 = arith.constant 7296 : index
    %437 = vector.load %arg9[%c1_481, %c7296_482] : memref<2x18432xf32, #tpu.memory_space<vmem>>, vector<1x128xf32>
    tpu.vector_store %arg9[%c1_481, %c7296_482], %436 {strides = array<i32>} : memref<2x18432xf32, #tpu.memory_space<vmem>>, vector<1x128xf32>,
    %c202 = arith.constant 202 : index
    %c0_483 = arith.constant 0 : index
    %438 = vector.load %arg8[%c202, %c0_483] : memref<288x128xf32, #tpu.memory_space<vmem>>, vector<1x128xf32>
    %c1_484 = arith.constant 1 : index
    %c7424_485 = arith.constant 7424 : index
    %439 = vector.load %arg9[%c1_484, %c7424_485] : memref<2x18432xf32, #tpu.memory_space<vmem>>, vector<1x128xf32>
    tpu.vector_store %arg9[%c1_484, %c7424_485], %438 {strides = array<i32>} : memref<2x18432xf32, #tpu.memory_space<vmem>>, vector<1x128xf32>,
    %c203 = arith.constant 203 : index
    %c0_486 = arith.constant 0 : index
    %440 = vector.load %arg8[%c203, %c0_486] : memref<288x128xf32, #tpu.memory_space<vmem>>, vector<1x128xf32>
    %c1_487 = arith.constant 1 : index
    %c7552_488 = arith.constant 7552 : index
    %441 = vector.load %arg9[%c1_487, %c7552_488] : memref<2x18432xf32, #tpu.memory_space<vmem>>, vector<1x128xf32>
    tpu.vector_store %arg9[%c1_487, %c7552_488], %440 {strides = array<i32>} : memref<2x18432xf32, #tpu.memory_space<vmem>>, vector<1x128xf32>,
    %c204 = arith.constant 204 : index
    %c0_489 = arith.constant 0 : index
    %442 = vector.load %arg8[%c204, %c0_489] : memref<288x128xf32, #tpu.memory_space<vmem>>, vector<1x128xf32>
    %c1_490 = arith.constant 1 : index
    %c7680_491 = arith.constant 7680 : index
    %443 = vector.load %arg9[%c1_490, %c7680_491] : memref<2x18432xf32, #tpu.memory_space<vmem>>, vector<1x128xf32>
    tpu.vector_store %arg9[%c1_490, %c7680_491], %442 {strides = array<i32>} : memref<2x18432xf32, #tpu.memory_space<vmem>>, vector<1x128xf32>,
    %c205 = arith.constant 205 : index
    %c0_492 = arith.constant 0 : index
    %444 = vector.load %arg8[%c205, %c0_492] : memref<288x128xf32, #tpu.memory_space<vmem>>, vector<1x128xf32>
    %c1_493 = arith.constant 1 : index
    %c7808_494 = arith.constant 7808 : index
    %445 = vector.load %arg9[%c1_493, %c7808_494] : memref<2x18432xf32, #tpu.memory_space<vmem>>, vector<1x128xf32>
    tpu.vector_store %arg9[%c1_493, %c7808_494], %444 {strides = array<i32>} : memref<2x18432xf32, #tpu.memory_space<vmem>>, vector<1x128xf32>,
    %c206 = arith.constant 206 : index
    %c0_495 = arith.constant 0 : index
    %446 = vector.load %arg8[%c206, %c0_495] : memref<288x128xf32, #tpu.memory_space<vmem>>, vector<1x128xf32>
    %c1_496 = arith.constant 1 : index
    %c7936_497 = arith.constant 7936 : index
    %447 = vector.load %arg9[%c1_496, %c7936_497] : memref<2x18432xf32, #tpu.memory_space<vmem>>, vector<1x128xf32>
    tpu.vector_store %arg9[%c1_496, %c7936_497], %446 {strides = array<i32>} : memref<2x18432xf32, #tpu.memory_space<vmem>>, vector<1x128xf32>,
    %c207 = arith.constant 207 : index
    %c0_498 = arith.constant 0 : index
    %448 = vector.load %arg8[%c207, %c0_498] : memref<288x128xf32, #tpu.memory_space<vmem>>, vector<1x128xf32>
    %c1_499 = arith.constant 1 : index
    %c8064_500 = arith.constant 8064 : index
    %449 = vector.load %arg9[%c1_499, %c8064_500] : memref<2x18432xf32, #tpu.memory_space<vmem>>, vector<1x128xf32>
    tpu.vector_store %arg9[%c1_499, %c8064_500], %448 {strides = array<i32>} : memref<2x18432xf32, #tpu.memory_space<vmem>>, vector<1x128xf32>,
    %c208 = arith.constant 208 : index
    %c0_501 = arith.constant 0 : index
    %450 = vector.load %arg8[%c208, %c0_501] : memref<288x128xf32, #tpu.memory_space<vmem>>, vector<1x128xf32>
    %c1_502 = arith.constant 1 : index
    %c8192_503 = arith.constant 8192 : index
    %451 = vector.load %arg9[%c1_502, %c8192_503] : memref<2x18432xf32, #tpu.memory_space<vmem>>, vector<1x128xf32>
    tpu.vector_store %arg9[%c1_502, %c8192_503], %450 {strides = array<i32>} : memref<2x18432xf32, #tpu.memory_space<vmem>>, vector<1x128xf32>,
    %c209 = arith.constant 209 : index
    %c0_504 = arith.constant 0 : index
    %452 = vector.load %arg8[%c209, %c0_504] : memref<288x128xf32, #tpu.memory_space<vmem>>, vector<1x128xf32>
    %c1_505 = arith.constant 1 : index
    %c8320_506 = arith.constant 8320 : index
    %453 = vector.load %arg9[%c1_505, %c8320_506] : memref<2x18432xf32, #tpu.memory_space<vmem>>, vector<1x128xf32>
    tpu.vector_store %arg9[%c1_505, %c8320_506], %452 {strides = array<i32>} : memref<2x18432xf32, #tpu.memory_space<vmem>>, vector<1x128xf32>,
    %c210 = arith.constant 210 : index
    %c0_507 = arith.constant 0 : index
    %454 = vector.load %arg8[%c210, %c0_507] : memref<288x128xf32, #tpu.memory_space<vmem>>, vector<1x128xf32>
    %c1_508 = arith.constant 1 : index
    %c8448_509 = arith.constant 8448 : index
    %455 = vector.load %arg9[%c1_508, %c8448_509] : memref<2x18432xf32, #tpu.memory_space<vmem>>, vector<1x128xf32>
    tpu.vector_store %arg9[%c1_508, %c8448_509], %454 {strides = array<i32>} : memref<2x18432xf32, #tpu.memory_space<vmem>>, vector<1x128xf32>,
    %c211 = arith.constant 211 : index
    %c0_510 = arith.constant 0 : index
    %456 = vector.load %arg8[%c211, %c0_510] : memref<288x128xf32, #tpu.memory_space<vmem>>, vector<1x128xf32>
    %c1_511 = arith.constant 1 : index
    %c8576_512 = arith.constant 8576 : index
    %457 = vector.load %arg9[%c1_511, %c8576_512] : memref<2x18432xf32, #tpu.memory_space<vmem>>, vector<1x128xf32>
    tpu.vector_store %arg9[%c1_511, %c8576_512], %456 {strides = array<i32>} : memref<2x18432xf32, #tpu.memory_space<vmem>>, vector<1x128xf32>,
    %c212 = arith.constant 212 : index
    %c0_513 = arith.constant 0 : index
    %458 = vector.load %arg8[%c212, %c0_513] : memref<288x128xf32, #tpu.memory_space<vmem>>, vector<1x128xf32>
    %c1_514 = arith.constant 1 : index
    %c8704_515 = arith.constant 8704 : index
    %459 = vector.load %arg9[%c1_514, %c8704_515] : memref<2x18432xf32, #tpu.memory_space<vmem>>, vector<1x128xf32>
    tpu.vector_store %arg9[%c1_514, %c8704_515], %458 {strides = array<i32>} : memref<2x18432xf32, #tpu.memory_space<vmem>>, vector<1x128xf32>,
    %c213 = arith.constant 213 : index
    %c0_516 = arith.constant 0 : index
    %460 = vector.load %arg8[%c213, %c0_516] : memref<288x128xf32, #tpu.memory_space<vmem>>, vector<1x128xf32>
    %c1_517 = arith.constant 1 : index
    %c8832_518 = arith.constant 8832 : index
    %461 = vector.load %arg9[%c1_517, %c8832_518] : memref<2x18432xf32, #tpu.memory_space<vmem>>, vector<1x128xf32>
    tpu.vector_store %arg9[%c1_517, %c8832_518], %460 {strides = array<i32>} : memref<2x18432xf32, #tpu.memory_space<vmem>>, vector<1x128xf32>,
    %c214 = arith.constant 214 : index
    %c0_519 = arith.constant 0 : index
    %462 = vector.load %arg8[%c214, %c0_519] : memref<288x128xf32, #tpu.memory_space<vmem>>, vector<1x128xf32>
    %c1_520 = arith.constant 1 : index
    %c8960_521 = arith.constant 8960 : index
    %463 = vector.load %arg9[%c1_520, %c8960_521] : memref<2x18432xf32, #tpu.memory_space<vmem>>, vector<1x128xf32>
    tpu.vector_store %arg9[%c1_520, %c8960_521], %462 {strides = array<i32>} : memref<2x18432xf32, #tpu.memory_space<vmem>>, vector<1x128xf32>,
    %c215 = arith.constant 215 : index
    %c0_522 = arith.constant 0 : index
    %464 = vector.load %arg8[%c215, %c0_522] : memref<288x128xf32, #tpu.memory_space<vmem>>, vector<1x128xf32>
    %c1_523 = arith.constant 1 : index
    %c9088_524 = arith.constant 9088 : index
    %465 = vector.load %arg9[%c1_523, %c9088_524] : memref<2x18432xf32, #tpu.memory_space<vmem>>, vector<1x128xf32>
    tpu.vector_store %arg9[%c1_523, %c9088_524], %464 {strides = array<i32>} : memref<2x18432xf32, #tpu.memory_space<vmem>>, vector<1x128xf32>,
    %c216 = arith.constant 216 : index
    %c0_525 = arith.constant 0 : index
    %466 = vector.load %arg8[%c216, %c0_525] : memref<288x128xf32, #tpu.memory_space<vmem>>, vector<1x128xf32>
    %c1_526 = arith.constant 1 : index
    %c9216_527 = arith.constant 9216 : index
    %467 = vector.load %arg9[%c1_526, %c9216_527] : memref<2x18432xf32, #tpu.memory_space<vmem>>, vector<1x128xf32>
    tpu.vector_store %arg9[%c1_526, %c9216_527], %466 {strides = array<i32>} : memref<2x18432xf32, #tpu.memory_space<vmem>>, vector<1x128xf32>,
    %c217 = arith.constant 217 : index
    %c0_528 = arith.constant 0 : index
    %468 = vector.load %arg8[%c217, %c0_528] : memref<288x128xf32, #tpu.memory_space<vmem>>, vector<1x128xf32>
    %c1_529 = arith.constant 1 : index
    %c9344_530 = arith.constant 9344 : index
    %469 = vector.load %arg9[%c1_529, %c9344_530] : memref<2x18432xf32, #tpu.memory_space<vmem>>, vector<1x128xf32>
    tpu.vector_store %arg9[%c1_529, %c9344_530], %468 {strides = array<i32>} : memref<2x18432xf32, #tpu.memory_space<vmem>>, vector<1x128xf32>,
    %c218 = arith.constant 218 : index
    %c0_531 = arith.constant 0 : index
    %470 = vector.load %arg8[%c218, %c0_531] : memref<288x128xf32, #tpu.memory_space<vmem>>, vector<1x128xf32>
    %c1_532 = arith.constant 1 : index
    %c9472_533 = arith.constant 9472 : index
    %471 = vector.load %arg9[%c1_532, %c9472_533] : memref<2x18432xf32, #tpu.memory_space<vmem>>, vector<1x128xf32>
    tpu.vector_store %arg9[%c1_532, %c9472_533], %470 {strides = array<i32>} : memref<2x18432xf32, #tpu.memory_space<vmem>>, vector<1x128xf32>,
    %c219 = arith.constant 219 : index
    %c0_534 = arith.constant 0 : index
    %472 = vector.load %arg8[%c219, %c0_534] : memref<288x128xf32, #tpu.memory_space<vmem>>, vector<1x128xf32>
    %c1_535 = arith.constant 1 : index
    %c9600_536 = arith.constant 9600 : index
    %473 = vector.load %arg9[%c1_535, %c9600_536] : memref<2x18432xf32, #tpu.memory_space<vmem>>, vector<1x128xf32>
    tpu.vector_store %arg9[%c1_535, %c9600_536], %472 {strides = array<i32>} : memref<2x18432xf32, #tpu.memory_space<vmem>>, vector<1x128xf32>,
    %c220 = arith.constant 220 : index
    %c0_537 = arith.constant 0 : index
    %474 = vector.load %arg8[%c220, %c0_537] : memref<288x128xf32, #tpu.memory_space<vmem>>, vector<1x128xf32>
    %c1_538 = arith.constant 1 : index
    %c9728_539 = arith.constant 9728 : index
    %475 = vector.load %arg9[%c1_538, %c9728_539] : memref<2x18432xf32, #tpu.memory_space<vmem>>, vector<1x128xf32>
    tpu.vector_store %arg9[%c1_538, %c9728_539], %474 {strides = array<i32>} : memref<2x18432xf32, #tpu.memory_space<vmem>>, vector<1x128xf32>,
    %c221 = arith.constant 221 : index
    %c0_540 = arith.constant 0 : index
    %476 = vector.load %arg8[%c221, %c0_540] : memref<288x128xf32, #tpu.memory_space<vmem>>, vector<1x128xf32>
    %c1_541 = arith.constant 1 : index
    %c9856_542 = arith.constant 9856 : index
    %477 = vector.load %arg9[%c1_541, %c9856_542] : memref<2x18432xf32, #tpu.memory_space<vmem>>, vector<1x128xf32>
    tpu.vector_store %arg9[%c1_541, %c9856_542], %476 {strides = array<i32>} : memref<2x18432xf32, #tpu.memory_space<vmem>>, vector<1x128xf32>,
    %c222 = arith.constant 222 : index
    %c0_543 = arith.constant 0 : index
    %478 = vector.load %arg8[%c222, %c0_543] : memref<288x128xf32, #tpu.memory_space<vmem>>, vector<1x128xf32>
    %c1_544 = arith.constant 1 : index
    %c9984_545 = arith.constant 9984 : index
    %479 = vector.load %arg9[%c1_544, %c9984_545] : memref<2x18432xf32, #tpu.memory_space<vmem>>, vector<1x128xf32>
    tpu.vector_store %arg9[%c1_544, %c9984_545], %478 {strides = array<i32>} : memref<2x18432xf32, #tpu.memory_space<vmem>>, vector<1x128xf32>,
    %c223 = arith.constant 223 : index
    %c0_546 = arith.constant 0 : index
    %480 = vector.load %arg8[%c223, %c0_546] : memref<288x128xf32, #tpu.memory_space<vmem>>, vector<1x128xf32>
    %c1_547 = arith.constant 1 : index
    %c10112_548 = arith.constant 10112 : index
    %481 = vector.load %arg9[%c1_547, %c10112_548] : memref<2x18432xf32, #tpu.memory_space<vmem>>, vector<1x128xf32>
    tpu.vector_store %arg9[%c1_547, %c10112_548], %480 {strides = array<i32>} : memref<2x18432xf32, #tpu.memory_space<vmem>>, vector<1x128xf32>,
    %c224 = arith.constant 224 : index
    %c0_549 = arith.constant 0 : index
    %482 = vector.load %arg8[%c224, %c0_549] : memref<288x128xf32, #tpu.memory_space<vmem>>, vector<1x128xf32>
    %c1_550 = arith.constant 1 : index
    %c10240_551 = arith.constant 10240 : index
    %483 = vector.load %arg9[%c1_550, %c10240_551] : memref<2x18432xf32, #tpu.memory_space<vmem>>, vector<1x128xf32>
    tpu.vector_store %arg9[%c1_550, %c10240_551], %482 {strides = array<i32>} : memref<2x18432xf32, #tpu.memory_space<vmem>>, vector<1x128xf32>,
    %c225 = arith.constant 225 : index
    %c0_552 = arith.constant 0 : index
    %484 = vector.load %arg8[%c225, %c0_552] : memref<288x128xf32, #tpu.memory_space<vmem>>, vector<1x128xf32>
    %c1_553 = arith.constant 1 : index
    %c10368_554 = arith.constant 10368 : index
    %485 = vector.load %arg9[%c1_553, %c10368_554] : memref<2x18432xf32, #tpu.memory_space<vmem>>, vector<1x128xf32>
    tpu.vector_store %arg9[%c1_553, %c10368_554], %484 {strides = array<i32>} : memref<2x18432xf32, #tpu.memory_space<vmem>>, vector<1x128xf32>,
    %c226 = arith.constant 226 : index
    %c0_555 = arith.constant 0 : index
    %486 = vector.load %arg8[%c226, %c0_555] : memref<288x128xf32, #tpu.memory_space<vmem>>, vector<1x128xf32>
    %c1_556 = arith.constant 1 : index
    %c10496_557 = arith.constant 10496 : index
    %487 = vector.load %arg9[%c1_556, %c10496_557] : memref<2x18432xf32, #tpu.memory_space<vmem>>, vector<1x128xf32>
    tpu.vector_store %arg9[%c1_556, %c10496_557], %486 {strides = array<i32>} : memref<2x18432xf32, #tpu.memory_space<vmem>>, vector<1x128xf32>,
    %c227 = arith.constant 227 : index
    %c0_558 = arith.constant 0 : index
    %488 = vector.load %arg8[%c227, %c0_558] : memref<288x128xf32, #tpu.memory_space<vmem>>, vector<1x128xf32>
    %c1_559 = arith.constant 1 : index
    %c10624_560 = arith.constant 10624 : index
    %489 = vector.load %arg9[%c1_559, %c10624_560] : memref<2x18432xf32, #tpu.memory_space<vmem>>, vector<1x128xf32>
    tpu.vector_store %arg9[%c1_559, %c10624_560], %488 {strides = array<i32>} : memref<2x18432xf32, #tpu.memory_space<vmem>>, vector<1x128xf32>,
    %c228 = arith.constant 228 : index
    %c0_561 = arith.constant 0 : index
    %490 = vector.load %arg8[%c228, %c0_561] : memref<288x128xf32, #tpu.memory_space<vmem>>, vector<1x128xf32>
    %c1_562 = arith.constant 1 : index
    %c10752_563 = arith.constant 10752 : index
    %491 = vector.load %arg9[%c1_562, %c10752_563] : memref<2x18432xf32, #tpu.memory_space<vmem>>, vector<1x128xf32>
    tpu.vector_store %arg9[%c1_562, %c10752_563], %490 {strides = array<i32>} : memref<2x18432xf32, #tpu.memory_space<vmem>>, vector<1x128xf32>,
    %c229 = arith.constant 229 : index
    %c0_564 = arith.constant 0 : index
    %492 = vector.load %arg8[%c229, %c0_564] : memref<288x128xf32, #tpu.memory_space<vmem>>, vector<1x128xf32>
    %c1_565 = arith.constant 1 : index
    %c10880_566 = arith.constant 10880 : index
    %493 = vector.load %arg9[%c1_565, %c10880_566] : memref<2x18432xf32, #tpu.memory_space<vmem>>, vector<1x128xf32>
    tpu.vector_store %arg9[%c1_565, %c10880_566], %492 {strides = array<i32>} : memref<2x18432xf32, #tpu.memory_space<vmem>>, vector<1x128xf32>,
    %c230 = arith.constant 230 : index
    %c0_567 = arith.constant 0 : index
    %494 = vector.load %arg8[%c230, %c0_567] : memref<288x128xf32, #tpu.memory_space<vmem>>, vector<1x128xf32>
    %c1_568 = arith.constant 1 : index
    %c11008_569 = arith.constant 11008 : index
    %495 = vector.load %arg9[%c1_568, %c11008_569] : memref<2x18432xf32, #tpu.memory_space<vmem>>, vector<1x128xf32>
    tpu.vector_store %arg9[%c1_568, %c11008_569], %494 {strides = array<i32>} : memref<2x18432xf32, #tpu.memory_space<vmem>>, vector<1x128xf32>,
    %c231 = arith.constant 231 : index
    %c0_570 = arith.constant 0 : index
    %496 = vector.load %arg8[%c231, %c0_570] : memref<288x128xf32, #tpu.memory_space<vmem>>, vector<1x128xf32>
    %c1_571 = arith.constant 1 : index
    %c11136_572 = arith.constant 11136 : index
    %497 = vector.load %arg9[%c1_571, %c11136_572] : memref<2x18432xf32, #tpu.memory_space<vmem>>, vector<1x128xf32>
    tpu.vector_store %arg9[%c1_571, %c11136_572], %496 {strides = array<i32>} : memref<2x18432xf32, #tpu.memory_space<vmem>>, vector<1x128xf32>,
    %c232 = arith.constant 232 : index
    %c0_573 = arith.constant 0 : index
    %498 = vector.load %arg8[%c232, %c0_573] : memref<288x128xf32, #tpu.memory_space<vmem>>, vector<1x128xf32>
    %c1_574 = arith.constant 1 : index
    %c11264_575 = arith.constant 11264 : index
    %499 = vector.load %arg9[%c1_574, %c11264_575] : memref<2x18432xf32, #tpu.memory_space<vmem>>, vector<1x128xf32>
    tpu.vector_store %arg9[%c1_574, %c11264_575], %498 {strides = array<i32>} : memref<2x18432xf32, #tpu.memory_space<vmem>>, vector<1x128xf32>,
    %c233 = arith.constant 233 : index
    %c0_576 = arith.constant 0 : index
    %500 = vector.load %arg8[%c233, %c0_576] : memref<288x128xf32, #tpu.memory_space<vmem>>, vector<1x128xf32>
    %c1_577 = arith.constant 1 : index
    %c11392_578 = arith.constant 11392 : index
    %501 = vector.load %arg9[%c1_577, %c11392_578] : memref<2x18432xf32, #tpu.memory_space<vmem>>, vector<1x128xf32>
    tpu.vector_store %arg9[%c1_577, %c11392_578], %500 {strides = array<i32>} : memref<2x18432xf32, #tpu.memory_space<vmem>>, vector<1x128xf32>,
    %c234 = arith.constant 234 : index
    %c0_579 = arith.constant 0 : index
    %502 = vector.load %arg8[%c234, %c0_579] : memref<288x128xf32, #tpu.memory_space<vmem>>, vector<1x128xf32>
    %c1_580 = arith.constant 1 : index
    %c11520_581 = arith.constant 11520 : index
    %503 = vector.load %arg9[%c1_580, %c11520_581] : memref<2x18432xf32, #tpu.memory_space<vmem>>, vector<1x128xf32>
    tpu.vector_store %arg9[%c1_580, %c11520_581], %502 {strides = array<i32>} : memref<2x18432xf32, #tpu.memory_space<vmem>>, vector<1x128xf32>,
    %c235 = arith.constant 235 : index
    %c0_582 = arith.constant 0 : index
    %504 = vector.load %arg8[%c235, %c0_582] : memref<288x128xf32, #tpu.memory_space<vmem>>, vector<1x128xf32>
    %c1_583 = arith.constant 1 : index
    %c11648_584 = arith.constant 11648 : index
    %505 = vector.load %arg9[%c1_583, %c11648_584] : memref<2x18432xf32, #tpu.memory_space<vmem>>, vector<1x128xf32>
    tpu.vector_store %arg9[%c1_583, %c11648_584], %504 {strides = array<i32>} : memref<2x18432xf32, #tpu.memory_space<vmem>>, vector<1x128xf32>,
    %c236 = arith.constant 236 : index
    %c0_585 = arith.constant 0 : index
    %506 = vector.load %arg8[%c236, %c0_585] : memref<288x128xf32, #tpu.memory_space<vmem>>, vector<1x128xf32>
    %c1_586 = arith.constant 1 : index
    %c11776_587 = arith.constant 11776 : index
    %507 = vector.load %arg9[%c1_586, %c11776_587] : memref<2x18432xf32, #tpu.memory_space<vmem>>, vector<1x128xf32>
    tpu.vector_store %arg9[%c1_586, %c11776_587], %506 {strides = array<i32>} : memref<2x18432xf32, #tpu.memory_space<vmem>>, vector<1x128xf32>,
    %c237 = arith.constant 237 : index
    %c0_588 = arith.constant 0 : index
    %508 = vector.load %arg8[%c237, %c0_588] : memref<288x128xf32, #tpu.memory_space<vmem>>, vector<1x128xf32>
    %c1_589 = arith.constant 1 : index
    %c11904_590 = arith.constant 11904 : index
    %509 = vector.load %arg9[%c1_589, %c11904_590] : memref<2x18432xf32, #tpu.memory_space<vmem>>, vector<1x128xf32>
    tpu.vector_store %arg9[%c1_589, %c11904_590], %508 {strides = array<i32>} : memref<2x18432xf32, #tpu.memory_space<vmem>>, vector<1x128xf32>,
    %c238 = arith.constant 238 : index
    %c0_591 = arith.constant 0 : index
    %510 = vector.load %arg8[%c238, %c0_591] : memref<288x128xf32, #tpu.memory_space<vmem>>, vector<1x128xf32>
    %c1_592 = arith.constant 1 : index
    %c12032_593 = arith.constant 12032 : index
    %511 = vector.load %arg9[%c1_592, %c12032_593] : memref<2x18432xf32, #tpu.memory_space<vmem>>, vector<1x128xf32>
    tpu.vector_store %arg9[%c1_592, %c12032_593], %510 {strides = array<i32>} : memref<2x18432xf32, #tpu.memory_space<vmem>>, vector<1x128xf32>,
    %c239 = arith.constant 239 : index
    %c0_594 = arith.constant 0 : index
    %512 = vector.load %arg8[%c239, %c0_594] : memref<288x128xf32, #tpu.memory_space<vmem>>, vector<1x128xf32>
    %c1_595 = arith.constant 1 : index
    %c12160_596 = arith.constant 12160 : index
    %513 = vector.load %arg9[%c1_595, %c12160_596] : memref<2x18432xf32, #tpu.memory_space<vmem>>, vector<1x128xf32>
    tpu.vector_store %arg9[%c1_595, %c12160_596], %512 {strides = array<i32>} : memref<2x18432xf32, #tpu.memory_space<vmem>>, vector<1x128xf32>,
    %c240 = arith.constant 240 : index
    %c0_597 = arith.constant 0 : index
    %514 = vector.load %arg8[%c240, %c0_597] : memref<288x128xf32, #tpu.memory_space<vmem>>, vector<1x128xf32>
    %c1_598 = arith.constant 1 : index
    %c12288_599 = arith.constant 12288 : index
    %515 = vector.load %arg9[%c1_598, %c12288_599] : memref<2x18432xf32, #tpu.memory_space<vmem>>, vector<1x128xf32>
    tpu.vector_store %arg9[%c1_598, %c12288_599], %514 {strides = array<i32>} : memref<2x18432xf32, #tpu.memory_space<vmem>>, vector<1x128xf32>,
    %c241 = arith.constant 241 : index
    %c0_600 = arith.constant 0 : index
    %516 = vector.load %arg8[%c241, %c0_600] : memref<288x128xf32, #tpu.memory_space<vmem>>, vector<1x128xf32>
    %c1_601 = arith.constant 1 : index
    %c12416_602 = arith.constant 12416 : index
    %517 = vector.load %arg9[%c1_601, %c12416_602] : memref<2x18432xf32, #tpu.memory_space<vmem>>, vector<1x128xf32>
    tpu.vector_store %arg9[%c1_601, %c12416_602], %516 {strides = array<i32>} : memref<2x18432xf32, #tpu.memory_space<vmem>>, vector<1x128xf32>,
    %c242 = arith.constant 242 : index
    %c0_603 = arith.constant 0 : index
    %518 = vector.load %arg8[%c242, %c0_603] : memref<288x128xf32, #tpu.memory_space<vmem>>, vector<1x128xf32>
    %c1_604 = arith.constant 1 : index
    %c12544_605 = arith.constant 12544 : index
    %519 = vector.load %arg9[%c1_604, %c12544_605] : memref<2x18432xf32, #tpu.memory_space<vmem>>, vector<1x128xf32>
    tpu.vector_store %arg9[%c1_604, %c12544_605], %518 {strides = array<i32>} : memref<2x18432xf32, #tpu.memory_space<vmem>>, vector<1x128xf32>,
    %c243 = arith.constant 243 : index
    %c0_606 = arith.constant 0 : index
    %520 = vector.load %arg8[%c243, %c0_606] : memref<288x128xf32, #tpu.memory_space<vmem>>, vector<1x128xf32>
    %c1_607 = arith.constant 1 : index
    %c12672_608 = arith.constant 12672 : index
    %521 = vector.load %arg9[%c1_607, %c12672_608] : memref<2x18432xf32, #tpu.memory_space<vmem>>, vector<1x128xf32>
    tpu.vector_store %arg9[%c1_607, %c12672_608], %520 {strides = array<i32>} : memref<2x18432xf32, #tpu.memory_space<vmem>>, vector<1x128xf32>,
    %c244 = arith.constant 244 : index
    %c0_609 = arith.constant 0 : index
    %522 = vector.load %arg8[%c244, %c0_609] : memref<288x128xf32, #tpu.memory_space<vmem>>, vector<1x128xf32>
    %c1_610 = arith.constant 1 : index
    %c12800_611 = arith.constant 12800 : index
    %523 = vector.load %arg9[%c1_610, %c12800_611] : memref<2x18432xf32, #tpu.memory_space<vmem>>, vector<1x128xf32>
    tpu.vector_store %arg9[%c1_610, %c12800_611], %522 {strides = array<i32>} : memref<2x18432xf32, #tpu.memory_space<vmem>>, vector<1x128xf32>,
    %c245 = arith.constant 245 : index
    %c0_612 = arith.constant 0 : index
    %524 = vector.load %arg8[%c245, %c0_612] : memref<288x128xf32, #tpu.memory_space<vmem>>, vector<1x128xf32>
    %c1_613 = arith.constant 1 : index
    %c12928_614 = arith.constant 12928 : index
    %525 = vector.load %arg9[%c1_613, %c12928_614] : memref<2x18432xf32, #tpu.memory_space<vmem>>, vector<1x128xf32>
    tpu.vector_store %arg9[%c1_613, %c12928_614], %524 {strides = array<i32>} : memref<2x18432xf32, #tpu.memory_space<vmem>>, vector<1x128xf32>,
    %c246 = arith.constant 246 : index
    %c0_615 = arith.constant 0 : index
    %526 = vector.load %arg8[%c246, %c0_615] : memref<288x128xf32, #tpu.memory_space<vmem>>, vector<1x128xf32>
    %c1_616 = arith.constant 1 : index
    %c13056_617 = arith.constant 13056 : index
    %527 = vector.load %arg9[%c1_616, %c13056_617] : memref<2x18432xf32, #tpu.memory_space<vmem>>, vector<1x128xf32>
    tpu.vector_store %arg9[%c1_616, %c13056_617], %526 {strides = array<i32>} : memref<2x18432xf32, #tpu.memory_space<vmem>>, vector<1x128xf32>,
    %c247 = arith.constant 247 : index
    %c0_618 = arith.constant 0 : index
    %528 = vector.load %arg8[%c247, %c0_618] : memref<288x128xf32, #tpu.memory_space<vmem>>, vector<1x128xf32>
    %c1_619 = arith.constant 1 : index
    %c13184_620 = arith.constant 13184 : index
    %529 = vector.load %arg9[%c1_619, %c13184_620] : memref<2x18432xf32, #tpu.memory_space<vmem>>, vector<1x128xf32>
    tpu.vector_store %arg9[%c1_619, %c13184_620], %528 {strides = array<i32>} : memref<2x18432xf32, #tpu.memory_space<vmem>>, vector<1x128xf32>,
    %c248 = arith.constant 248 : index
    %c0_621 = arith.constant 0 : index
    %530 = vector.load %arg8[%c248, %c0_621] : memref<288x128xf32, #tpu.memory_space<vmem>>, vector<1x128xf32>
    %c1_622 = arith.constant 1 : index
    %c13312_623 = arith.constant 13312 : index
    %531 = vector.load %arg9[%c1_622, %c13312_623] : memref<2x18432xf32, #tpu.memory_space<vmem>>, vector<1x128xf32>
    tpu.vector_store %arg9[%c1_622, %c13312_623], %530 {strides = array<i32>} : memref<2x18432xf32, #tpu.memory_space<vmem>>, vector<1x128xf32>,
    %c249 = arith.constant 249 : index
    %c0_624 = arith.constant 0 : index
    %532 = vector.load %arg8[%c249, %c0_624] : memref<288x128xf32, #tpu.memory_space<vmem>>, vector<1x128xf32>
    %c1_625 = arith.constant 1 : index
    %c13440_626 = arith.constant 13440 : index
    %533 = vector.load %arg9[%c1_625, %c13440_626] : memref<2x18432xf32, #tpu.memory_space<vmem>>, vector<1x128xf32>
    tpu.vector_store %arg9[%c1_625, %c13440_626], %532 {strides = array<i32>} : memref<2x18432xf32, #tpu.memory_space<vmem>>, vector<1x128xf32>,
    %c250 = arith.constant 250 : index
    %c0_627 = arith.constant 0 : index
    %534 = vector.load %arg8[%c250, %c0_627] : memref<288x128xf32, #tpu.memory_space<vmem>>, vector<1x128xf32>
    %c1_628 = arith.constant 1 : index
    %c13568_629 = arith.constant 13568 : index
    %535 = vector.load %arg9[%c1_628, %c13568_629] : memref<2x18432xf32, #tpu.memory_space<vmem>>, vector<1x128xf32>
    tpu.vector_store %arg9[%c1_628, %c13568_629], %534 {strides = array<i32>} : memref<2x18432xf32, #tpu.memory_space<vmem>>, vector<1x128xf32>,
    %c251 = arith.constant 251 : index
    %c0_630 = arith.constant 0 : index
    %536 = vector.load %arg8[%c251, %c0_630] : memref<288x128xf32, #tpu.memory_space<vmem>>, vector<1x128xf32>
    %c1_631 = arith.constant 1 : index
    %c13696_632 = arith.constant 13696 : index
    %537 = vector.load %arg9[%c1_631, %c13696_632] : memref<2x18432xf32, #tpu.memory_space<vmem>>, vector<1x128xf32>
    tpu.vector_store %arg9[%c1_631, %c13696_632], %536 {strides = array<i32>} : memref<2x18432xf32, #tpu.memory_space<vmem>>, vector<1x128xf32>,
    %c252 = arith.constant 252 : index
    %c0_633 = arith.constant 0 : index
    %538 = vector.load %arg8[%c252, %c0_633] : memref<288x128xf32, #tpu.memory_space<vmem>>, vector<1x128xf32>
    %c1_634 = arith.constant 1 : index
    %c13824_635 = arith.constant 13824 : index
    %539 = vector.load %arg9[%c1_634, %c13824_635] : memref<2x18432xf32, #tpu.memory_space<vmem>>, vector<1x128xf32>
    tpu.vector_store %arg9[%c1_634, %c13824_635], %538 {strides = array<i32>} : memref<2x18432xf32, #tpu.memory_space<vmem>>, vector<1x128xf32>,
    %c253 = arith.constant 253 : index
    %c0_636 = arith.constant 0 : index
    %540 = vector.load %arg8[%c253, %c0_636] : memref<288x128xf32, #tpu.memory_space<vmem>>, vector<1x128xf32>
    %c1_637 = arith.constant 1 : index
    %c13952_638 = arith.constant 13952 : index
    %541 = vector.load %arg9[%c1_637, %c13952_638] : memref<2x18432xf32, #tpu.memory_space<vmem>>, vector<1x128xf32>
    tpu.vector_store %arg9[%c1_637, %c13952_638], %540 {strides = array<i32>} : memref<2x18432xf32, #tpu.memory_space<vmem>>, vector<1x128xf32>,
    %c254 = arith.constant 254 : index
    %c0_639 = arith.constant 0 : index
    %542 = vector.load %arg8[%c254, %c0_639] : memref<288x128xf32, #tpu.memory_space<vmem>>, vector<1x128xf32>
    %c1_640 = arith.constant 1 : index
    %c14080_641 = arith.constant 14080 : index
    %543 = vector.load %arg9[%c1_640, %c14080_641] : memref<2x18432xf32, #tpu.memory_space<vmem>>, vector<1x128xf32>
    tpu.vector_store %arg9[%c1_640, %c14080_641], %542 {strides = array<i32>} : memref<2x18432xf32, #tpu.memory_space<vmem>>, vector<1x128xf32>,
    %c255 = arith.constant 255 : index
    %c0_642 = arith.constant 0 : index
    %544 = vector.load %arg8[%c255, %c0_642] : memref<288x128xf32, #tpu.memory_space<vmem>>, vector<1x128xf32>
    %c1_643 = arith.constant 1 : index
    %c14208_644 = arith.constant 14208 : index
    %545 = vector.load %arg9[%c1_643, %c14208_644] : memref<2x18432xf32, #tpu.memory_space<vmem>>, vector<1x128xf32>
    tpu.vector_store %arg9[%c1_643, %c14208_644], %544 {strides = array<i32>} : memref<2x18432xf32, #tpu.memory_space<vmem>>, vector<1x128xf32>,
    %c256_645 = arith.constant 256 : index
    %c0_646 = arith.constant 0 : index
    %546 = vector.load %arg8[%c256_645, %c0_646] : memref<288x128xf32, #tpu.memory_space<vmem>>, vector<1x128xf32>
    %c1_647 = arith.constant 1 : index
    %c14336_648 = arith.constant 14336 : index
    %547 = vector.load %arg9[%c1_647, %c14336_648] : memref<2x18432xf32, #tpu.memory_space<vmem>>, vector<1x128xf32>
    tpu.vector_store %arg9[%c1_647, %c14336_648], %546 {strides = array<i32>} : memref<2x18432xf32, #tpu.memory_space<vmem>>, vector<1x128xf32>,
    %c257 = arith.constant 257 : index
    %c0_649 = arith.constant 0 : index
    %548 = vector.load %arg8[%c257, %c0_649] : memref<288x128xf32, #tpu.memory_space<vmem>>, vector<1x128xf32>
    %c1_650 = arith.constant 1 : index
    %c14464_651 = arith.constant 14464 : index
    %549 = vector.load %arg9[%c1_650, %c14464_651] : memref<2x18432xf32, #tpu.memory_space<vmem>>, vector<1x128xf32>
    tpu.vector_store %arg9[%c1_650, %c14464_651], %548 {strides = array<i32>} : memref<2x18432xf32, #tpu.memory_space<vmem>>, vector<1x128xf32>,
    %c258 = arith.constant 258 : index
    %c0_652 = arith.constant 0 : index
    %550 = vector.load %arg8[%c258, %c0_652] : memref<288x128xf32, #tpu.memory_space<vmem>>, vector<1x128xf32>
    %c1_653 = arith.constant 1 : index
    %c14592_654 = arith.constant 14592 : index
    %551 = vector.load %arg9[%c1_653, %c14592_654] : memref<2x18432xf32, #tpu.memory_space<vmem>>, vector<1x128xf32>
    tpu.vector_store %arg9[%c1_653, %c14592_654], %550 {strides = array<i32>} : memref<2x18432xf32, #tpu.memory_space<vmem>>, vector<1x128xf32>,
    %c259 = arith.constant 259 : index
    %c0_655 = arith.constant 0 : index
    %552 = vector.load %arg8[%c259, %c0_655] : memref<288x128xf32, #tpu.memory_space<vmem>>, vector<1x128xf32>
    %c1_656 = arith.constant 1 : index
    %c14720_657 = arith.constant 14720 : index
    %553 = vector.load %arg9[%c1_656, %c14720_657] : memref<2x18432xf32, #tpu.memory_space<vmem>>, vector<1x128xf32>
    tpu.vector_store %arg9[%c1_656, %c14720_657], %552 {strides = array<i32>} : memref<2x18432xf32, #tpu.memory_space<vmem>>, vector<1x128xf32>,
    %c260 = arith.constant 260 : index
    %c0_658 = arith.constant 0 : index
    %554 = vector.load %arg8[%c260, %c0_658] : memref<288x128xf32, #tpu.memory_space<vmem>>, vector<1x128xf32>
    %c1_659 = arith.constant 1 : index
    %c14848_660 = arith.constant 14848 : index
    %555 = vector.load %arg9[%c1_659, %c14848_660] : memref<2x18432xf32, #tpu.memory_space<vmem>>, vector<1x128xf32>
    tpu.vector_store %arg9[%c1_659, %c14848_660], %554 {strides = array<i32>} : memref<2x18432xf32, #tpu.memory_space<vmem>>, vector<1x128xf32>,
    %c261 = arith.constant 261 : index
    %c0_661 = arith.constant 0 : index
    %556 = vector.load %arg8[%c261, %c0_661] : memref<288x128xf32, #tpu.memory_space<vmem>>, vector<1x128xf32>
    %c1_662 = arith.constant 1 : index
    %c14976_663 = arith.constant 14976 : index
    %557 = vector.load %arg9[%c1_662, %c14976_663] : memref<2x18432xf32, #tpu.memory_space<vmem>>, vector<1x128xf32>
    tpu.vector_store %arg9[%c1_662, %c14976_663], %556 {strides = array<i32>} : memref<2x18432xf32, #tpu.memory_space<vmem>>, vector<1x128xf32>,
    %c262 = arith.constant 262 : index
    %c0_664 = arith.constant 0 : index
    %558 = vector.load %arg8[%c262, %c0_664] : memref<288x128xf32, #tpu.memory_space<vmem>>, vector<1x128xf32>
    %c1_665 = arith.constant 1 : index
    %c15104_666 = arith.constant 15104 : index
    %559 = vector.load %arg9[%c1_665, %c15104_666] : memref<2x18432xf32, #tpu.memory_space<vmem>>, vector<1x128xf32>
    tpu.vector_store %arg9[%c1_665, %c15104_666], %558 {strides = array<i32>} : memref<2x18432xf32, #tpu.memory_space<vmem>>, vector<1x128xf32>,
    %c263 = arith.constant 263 : index
    %c0_667 = arith.constant 0 : index
    %560 = vector.load %arg8[%c263, %c0_667] : memref<288x128xf32, #tpu.memory_space<vmem>>, vector<1x128xf32>
    %c1_668 = arith.constant 1 : index
    %c15232_669 = arith.constant 15232 : index
    %561 = vector.load %arg9[%c1_668, %c15232_669] : memref<2x18432xf32, #tpu.memory_space<vmem>>, vector<1x128xf32>
    tpu.vector_store %arg9[%c1_668, %c15232_669], %560 {strides = array<i32>} : memref<2x18432xf32, #tpu.memory_space<vmem>>, vector<1x128xf32>,
    %c264 = arith.constant 264 : index
    %c0_670 = arith.constant 0 : index
    %562 = vector.load %arg8[%c264, %c0_670] : memref<288x128xf32, #tpu.memory_space<vmem>>, vector<1x128xf32>
    %c1_671 = arith.constant 1 : index
    %c15360_672 = arith.constant 15360 : index
    %563 = vector.load %arg9[%c1_671, %c15360_672] : memref<2x18432xf32, #tpu.memory_space<vmem>>, vector<1x128xf32>
    tpu.vector_store %arg9[%c1_671, %c15360_672], %562 {strides = array<i32>} : memref<2x18432xf32, #tpu.memory_space<vmem>>, vector<1x128xf32>,
    %c265 = arith.constant 265 : index
    %c0_673 = arith.constant 0 : index
    %564 = vector.load %arg8[%c265, %c0_673] : memref<288x128xf32, #tpu.memory_space<vmem>>, vector<1x128xf32>
    %c1_674 = arith.constant 1 : index
    %c15488_675 = arith.constant 15488 : index
    %565 = vector.load %arg9[%c1_674, %c15488_675] : memref<2x18432xf32, #tpu.memory_space<vmem>>, vector<1x128xf32>
    tpu.vector_store %arg9[%c1_674, %c15488_675], %564 {strides = array<i32>} : memref<2x18432xf32, #tpu.memory_space<vmem>>, vector<1x128xf32>,
    %c266 = arith.constant 266 : index
    %c0_676 = arith.constant 0 : index
    %566 = vector.load %arg8[%c266, %c0_676] : memref<288x128xf32, #tpu.memory_space<vmem>>, vector<1x128xf32>
    %c1_677 = arith.constant 1 : index
    %c15616_678 = arith.constant 15616 : index
    %567 = vector.load %arg9[%c1_677, %c15616_678] : memref<2x18432xf32, #tpu.memory_space<vmem>>, vector<1x128xf32>
    tpu.vector_store %arg9[%c1_677, %c15616_678], %566 {strides = array<i32>} : memref<2x18432xf32, #tpu.memory_space<vmem>>, vector<1x128xf32>,
    %c267 = arith.constant 267 : index
    %c0_679 = arith.constant 0 : index
    %568 = vector.load %arg8[%c267, %c0_679] : memref<288x128xf32, #tpu.memory_space<vmem>>, vector<1x128xf32>
    %c1_680 = arith.constant 1 : index
    %c15744_681 = arith.constant 15744 : index
    %569 = vector.load %arg9[%c1_680, %c15744_681] : memref<2x18432xf32, #tpu.memory_space<vmem>>, vector<1x128xf32>
    tpu.vector_store %arg9[%c1_680, %c15744_681], %568 {strides = array<i32>} : memref<2x18432xf32, #tpu.memory_space<vmem>>, vector<1x128xf32>,
    %c268 = arith.constant 268 : index
    %c0_682 = arith.constant 0 : index
    %570 = vector.load %arg8[%c268, %c0_682] : memref<288x128xf32, #tpu.memory_space<vmem>>, vector<1x128xf32>
    %c1_683 = arith.constant 1 : index
    %c15872_684 = arith.constant 15872 : index
    %571 = vector.load %arg9[%c1_683, %c15872_684] : memref<2x18432xf32, #tpu.memory_space<vmem>>, vector<1x128xf32>
    tpu.vector_store %arg9[%c1_683, %c15872_684], %570 {strides = array<i32>} : memref<2x18432xf32, #tpu.memory_space<vmem>>, vector<1x128xf32>,
    %c269 = arith.constant 269 : index
    %c0_685 = arith.constant 0 : index
    %572 = vector.load %arg8[%c269, %c0_685] : memref<288x128xf32, #tpu.memory_space<vmem>>, vector<1x128xf32>
    %c1_686 = arith.constant 1 : index
    %c16000_687 = arith.constant 16000 : index
    %573 = vector.load %arg9[%c1_686, %c16000_687] : memref<2x18432xf32, #tpu.memory_space<vmem>>, vector<1x128xf32>
    tpu.vector_store %arg9[%c1_686, %c16000_687], %572 {strides = array<i32>} : memref<2x18432xf32, #tpu.memory_space<vmem>>, vector<1x128xf32>,
    %c270 = arith.constant 270 : index
    %c0_688 = arith.constant 0 : index
    %574 = vector.load %arg8[%c270, %c0_688] : memref<288x128xf32, #tpu.memory_space<vmem>>, vector<1x128xf32>
    %c1_689 = arith.constant 1 : index
    %c16128_690 = arith.constant 16128 : index
    %575 = vector.load %arg9[%c1_689, %c16128_690] : memref<2x18432xf32, #tpu.memory_space<vmem>>, vector<1x128xf32>
    tpu.vector_store %arg9[%c1_689, %c16128_690], %574 {strides = array<i32>} : memref<2x18432xf32, #tpu.memory_space<vmem>>, vector<1x128xf32>,
    %c271 = arith.constant 271 : index
    %c0_691 = arith.constant 0 : index
    %576 = vector.load %arg8[%c271, %c0_691] : memref<288x128xf32, #tpu.memory_space<vmem>>, vector<1x128xf32>
    %c1_692 = arith.constant 1 : index
    %c16256_693 = arith.constant 16256 : index
    %577 = vector.load %arg9[%c1_692, %c16256_693] : memref<2x18432xf32, #tpu.memory_space<vmem>>, vector<1x128xf32>
    tpu.vector_store %arg9[%c1_692, %c16256_693], %576 {strides = array<i32>} : memref<2x18432xf32, #tpu.memory_space<vmem>>, vector<1x128xf32>,
    %c272 = arith.constant 272 : index
    %c0_694 = arith.constant 0 : index
    %578 = vector.load %arg8[%c272, %c0_694] : memref<288x128xf32, #tpu.memory_space<vmem>>, vector<1x128xf32>
    %c1_695 = arith.constant 1 : index
    %c16384_696 = arith.constant 16384 : index
    %579 = vector.load %arg9[%c1_695, %c16384_696] : memref<2x18432xf32, #tpu.memory_space<vmem>>, vector<1x128xf32>
    tpu.vector_store %arg9[%c1_695, %c16384_696], %578 {strides = array<i32>} : memref<2x18432xf32, #tpu.memory_space<vmem>>, vector<1x128xf32>,
    %c273 = arith.constant 273 : index
    %c0_697 = arith.constant 0 : index
    %580 = vector.load %arg8[%c273, %c0_697] : memref<288x128xf32, #tpu.memory_space<vmem>>, vector<1x128xf32>
    %c1_698 = arith.constant 1 : index
    %c16512_699 = arith.constant 16512 : index
    %581 = vector.load %arg9[%c1_698, %c16512_699] : memref<2x18432xf32, #tpu.memory_space<vmem>>, vector<1x128xf32>
    tpu.vector_store %arg9[%c1_698, %c16512_699], %580 {strides = array<i32>} : memref<2x18432xf32, #tpu.memory_space<vmem>>, vector<1x128xf32>,
    %c274 = arith.constant 274 : index
    %c0_700 = arith.constant 0 : index
    %582 = vector.load %arg8[%c274, %c0_700] : memref<288x128xf32, #tpu.memory_space<vmem>>, vector<1x128xf32>
    %c1_701 = arith.constant 1 : index
    %c16640_702 = arith.constant 16640 : index
    %583 = vector.load %arg9[%c1_701, %c16640_702] : memref<2x18432xf32, #tpu.memory_space<vmem>>, vector<1x128xf32>
    tpu.vector_store %arg9[%c1_701, %c16640_702], %582 {strides = array<i32>} : memref<2x18432xf32, #tpu.memory_space<vmem>>, vector<1x128xf32>,
    %c275 = arith.constant 275 : index
    %c0_703 = arith.constant 0 : index
    %584 = vector.load %arg8[%c275, %c0_703] : memref<288x128xf32, #tpu.memory_space<vmem>>, vector<1x128xf32>
    %c1_704 = arith.constant 1 : index
    %c16768_705 = arith.constant 16768 : index
    %585 = vector.load %arg9[%c1_704, %c16768_705] : memref<2x18432xf32, #tpu.memory_space<vmem>>, vector<1x128xf32>
    tpu.vector_store %arg9[%c1_704, %c16768_705], %584 {strides = array<i32>} : memref<2x18432xf32, #tpu.memory_space<vmem>>, vector<1x128xf32>,
    %c276 = arith.constant 276 : index
    %c0_706 = arith.constant 0 : index
    %586 = vector.load %arg8[%c276, %c0_706] : memref<288x128xf32, #tpu.memory_space<vmem>>, vector<1x128xf32>
    %c1_707 = arith.constant 1 : index
    %c16896_708 = arith.constant 16896 : index
    %587 = vector.load %arg9[%c1_707, %c16896_708] : memref<2x18432xf32, #tpu.memory_space<vmem>>, vector<1x128xf32>
    tpu.vector_store %arg9[%c1_707, %c16896_708], %586 {strides = array<i32>} : memref<2x18432xf32, #tpu.memory_space<vmem>>, vector<1x128xf32>,
    %c277 = arith.constant 277 : index
    %c0_709 = arith.constant 0 : index
    %588 = vector.load %arg8[%c277, %c0_709] : memref<288x128xf32, #tpu.memory_space<vmem>>, vector<1x128xf32>
    %c1_710 = arith.constant 1 : index
    %c17024_711 = arith.constant 17024 : index
    %589 = vector.load %arg9[%c1_710, %c17024_711] : memref<2x18432xf32, #tpu.memory_space<vmem>>, vector<1x128xf32>
    tpu.vector_store %arg9[%c1_710, %c17024_711], %588 {strides = array<i32>} : memref<2x18432xf32, #tpu.memory_space<vmem>>, vector<1x128xf32>,
    %c278 = arith.constant 278 : index
    %c0_712 = arith.constant 0 : index
    %590 = vector.load %arg8[%c278, %c0_712] : memref<288x128xf32, #tpu.memory_space<vmem>>, vector<1x128xf32>
    %c1_713 = arith.constant 1 : index
    %c17152_714 = arith.constant 17152 : index
    %591 = vector.load %arg9[%c1_713, %c17152_714] : memref<2x18432xf32, #tpu.memory_space<vmem>>, vector<1x128xf32>
    tpu.vector_store %arg9[%c1_713, %c17152_714], %590 {strides = array<i32>} : memref<2x18432xf32, #tpu.memory_space<vmem>>, vector<1x128xf32>,
    %c279 = arith.constant 279 : index
    %c0_715 = arith.constant 0 : index
    %592 = vector.load %arg8[%c279, %c0_715] : memref<288x128xf32, #tpu.memory_space<vmem>>, vector<1x128xf32>
    %c1_716 = arith.constant 1 : index
    %c17280_717 = arith.constant 17280 : index
    %593 = vector.load %arg9[%c1_716, %c17280_717] : memref<2x18432xf32, #tpu.memory_space<vmem>>, vector<1x128xf32>
    tpu.vector_store %arg9[%c1_716, %c17280_717], %592 {strides = array<i32>} : memref<2x18432xf32, #tpu.memory_space<vmem>>, vector<1x128xf32>,
    %c280 = arith.constant 280 : index
    %c0_718 = arith.constant 0 : index
    %594 = vector.load %arg8[%c280, %c0_718] : memref<288x128xf32, #tpu.memory_space<vmem>>, vector<1x128xf32>
    %c1_719 = arith.constant 1 : index
    %c17408_720 = arith.constant 17408 : index
    %595 = vector.load %arg9[%c1_719, %c17408_720] : memref<2x18432xf32, #tpu.memory_space<vmem>>, vector<1x128xf32>
    tpu.vector_store %arg9[%c1_719, %c17408_720], %594 {strides = array<i32>} : memref<2x18432xf32, #tpu.memory_space<vmem>>, vector<1x128xf32>,
    %c281 = arith.constant 281 : index
    %c0_721 = arith.constant 0 : index
    %596 = vector.load %arg8[%c281, %c0_721] : memref<288x128xf32, #tpu.memory_space<vmem>>, vector<1x128xf32>
    %c1_722 = arith.constant 1 : index
    %c17536_723 = arith.constant 17536 : index
    %597 = vector.load %arg9[%c1_722, %c17536_723] : memref<2x18432xf32, #tpu.memory_space<vmem>>, vector<1x128xf32>
    tpu.vector_store %arg9[%c1_722, %c17536_723], %596 {strides = array<i32>} : memref<2x18432xf32, #tpu.memory_space<vmem>>, vector<1x128xf32>,
    %c282 = arith.constant 282 : index
    %c0_724 = arith.constant 0 : index
    %598 = vector.load %arg8[%c282, %c0_724] : memref<288x128xf32, #tpu.memory_space<vmem>>, vector<1x128xf32>
    %c1_725 = arith.constant 1 : index
    %c17664_726 = arith.constant 17664 : index
    %599 = vector.load %arg9[%c1_725, %c17664_726] : memref<2x18432xf32, #tpu.memory_space<vmem>>, vector<1x128xf32>
    tpu.vector_store %arg9[%c1_725, %c17664_726], %598 {strides = array<i32>} : memref<2x18432xf32, #tpu.memory_space<vmem>>, vector<1x128xf32>,
    %c283 = arith.constant 283 : index
    %c0_727 = arith.constant 0 : index
    %600 = vector.load %arg8[%c283, %c0_727] : memref<288x128xf32, #tpu.memory_space<vmem>>, vector<1x128xf32>
    %c1_728 = arith.constant 1 : index
    %c17792_729 = arith.constant 17792 : index
    %601 = vector.load %arg9[%c1_728, %c17792_729] : memref<2x18432xf32, #tpu.memory_space<vmem>>, vector<1x128xf32>
    tpu.vector_store %arg9[%c1_728, %c17792_729], %600 {strides = array<i32>} : memref<2x18432xf32, #tpu.memory_space<vmem>>, vector<1x128xf32>,
    %c284 = arith.constant 284 : index
    %c0_730 = arith.constant 0 : index
    %602 = vector.load %arg8[%c284, %c0_730] : memref<288x128xf32, #tpu.memory_space<vmem>>, vector<1x128xf32>
    %c1_731 = arith.constant 1 : index
    %c17920_732 = arith.constant 17920 : index
    %603 = vector.load %arg9[%c1_731, %c17920_732] : memref<2x18432xf32, #tpu.memory_space<vmem>>, vector<1x128xf32>
    tpu.vector_store %arg9[%c1_731, %c17920_732], %602 {strides = array<i32>} : memref<2x18432xf32, #tpu.memory_space<vmem>>, vector<1x128xf32>,
    %c285 = arith.constant 285 : index
    %c0_733 = arith.constant 0 : index
    %604 = vector.load %arg8[%c285, %c0_733] : memref<288x128xf32, #tpu.memory_space<vmem>>, vector<1x128xf32>
    %c1_734 = arith.constant 1 : index
    %c18048_735 = arith.constant 18048 : index
    %605 = vector.load %arg9[%c1_734, %c18048_735] : memref<2x18432xf32, #tpu.memory_space<vmem>>, vector<1x128xf32>
    tpu.vector_store %arg9[%c1_734, %c18048_735], %604 {strides = array<i32>} : memref<2x18432xf32, #tpu.memory_space<vmem>>, vector<1x128xf32>,
    %c286 = arith.constant 286 : index
    %c0_736 = arith.constant 0 : index
    %606 = vector.load %arg8[%c286, %c0_736] : memref<288x128xf32, #tpu.memory_space<vmem>>, vector<1x128xf32>
    %c1_737 = arith.constant 1 : index
    %c18176_738 = arith.constant 18176 : index
    %607 = vector.load %arg9[%c1_737, %c18176_738] : memref<2x18432xf32, #tpu.memory_space<vmem>>, vector<1x128xf32>
    tpu.vector_store %arg9[%c1_737, %c18176_738], %606 {strides = array<i32>} : memref<2x18432xf32, #tpu.memory_space<vmem>>, vector<1x128xf32>,
    %c287 = arith.constant 287 : index
    %c0_739 = arith.constant 0 : index
    %608 = vector.load %arg8[%c287, %c0_739] : memref<288x128xf32, #tpu.memory_space<vmem>>, vector<1x128xf32>
    %c1_740 = arith.constant 1 : index
    %c18304_741 = arith.constant 18304 : index
    %609 = vector.load %arg9[%c1_740, %c18304_741] : memref<2x18432xf32, #tpu.memory_space<vmem>>, vector<1x128xf32>
    tpu.vector_store %arg9[%c1_740, %c18304_741], %608 {strides = array<i32>} : memref<2x18432xf32, #tpu.memory_space<vmem>>, vector<1x128xf32>,
    %c0_742 = arith.constant 0 : index
    %c0_743 = arith.constant 0 : index
    %610 = vector.load %arg9[%c0_742, %c0_743] : memref<2x18432xf32, #tpu.memory_space<vmem>>, vector<2x18432xf32>
    %c0_744 = arith.constant 0 : index
    %c0_745 = arith.constant 0 : index
    %611 = vector.load %arg5[%c0_744, %c0_745] : memref<18432x20xf32, #tpu.memory_space<vmem>>, vector<18432x20xf32>
    %cst_746 = arith.constant dense<0.000000e+00> : vector<2x20xf32>
    %612 = tpu.matmul %610, %611, %cst_746 {dimension_numbers = #tpu.dot_dimension_numbers<[1], [0], [0], [1], [0, 0, 1, 1], [], []>} : vector<2x18432xf32>, vector<18432x20xf32>, vector<2x20xf32> -> vector<2x20xf32>
    %c0_747 = arith.constant 0 : index
    %c0_748 = arith.constant 0 : index
    %613 = vector.load %arg6[%c0_747, %c0_748] : memref<1x20xf32, #tpu.memory_space<vmem>>, vector<1x20xf32>
    %614 = vector.broadcast %613 : vector<1x20xf32> to vector<2x20xf32>
    %615 = arith.addf %612, %614 : vector<2x20xf32>
    %c0_749 = arith.constant 0 : index
    %c0_750 = arith.constant 0 : index
    %616 = vector.load %arg7[%c0_749, %c0_750] : memref<2x20xf32, #tpu.memory_space<vmem>>, vector<2x20xf32>
    tpu.vector_store %arg7[%c0_749, %c0_750], %615 {strides = array<i32>} : memref<2x20xf32, #tpu.memory_space<vmem>>, vector<2x20xf32>,
    return
  }
}

</mosaic_0001>

<llo_original>
// kernel: bn_before_flatten_linear.1
$region0: #{bn_before_flatten_linear.1}
  #allocation0 [shape = 'u32[]', space=smem, size = 0x4, offset = 0x4, fixed_abs, tag = 'smem constant byte address 0x4 - core index']
  #allocation1 [shape = 'u32[72,128]{1,0:T(1,128)}', space=vmem, size = 0x9000, scoped, tag = 'internal scratch']
  #allocation2 [shape = 'f32[288,128]{1,0:T(8,128)}', space=vmem, size = 0x24000, scoped, tag = 'scratch operand']
  #allocation3 [shape = 'f32[2,18432]{1,0:T(2,128)}', space=vmem, size = 0x24000, scoped, tag = 'scratch operand']
  %s0 = inlined_call_operand.vmem [shape: f32[288,90], index: 0, kind: input, shape index: {}]
  %s1 = inlined_call_operand.vmem [shape: f32[90,128], index: 1, kind: input, shape index: {}]
  %s2 = inlined_call_operand.vmem [shape: f32[1,128], index: 2, kind: input, shape index: {}]
  %s3 = inlined_call_operand.vmem [shape: f32[1,128], index: 3, kind: input, shape index: {}]
  %s4 = inlined_call_operand.vmem [shape: f32[1,128], index: 4, kind: input, shape index: {}]
  %s5 = inlined_call_operand.vmem [shape: f32[18432,20], index: 5, kind: input, shape index: {}]
  %s6 = inlined_call_operand.vmem [shape: f32[1,20], index: 6, kind: input, shape index: {}]
  %s7 = inlined_call_operand.hbm [shape: f32[2,20], index: 7, kind: output, shape index: {}]
  %s8 = sld [smem:[#allocation0]]
  $region38: #{bn_before_flatten_linear.1} parent=0
    _
  %s10 = ssub.s32 1, %s8
  %s11 = scalar_select 0, %s10, %s8
  $region1: #{bn_before_flatten_linear.1} parent=0
    #allocation4 [shape = 'u8[1024]{0}', space=vmem, size = 0x400, scoped, tag = 'output window, operand 0, single buffered']
    #allocation5 [shape = 's32[1]{0}', space=sflag, size = 0x4, scoped, tag = 'scoped memory for bn_before_flatten_linear.1']
    %12 = vsyncpa [#allocation5], 0
    // Predicated region
    $region2: #{bn_before_flatten_linear.1} parent=1 // pred_check
      _
    $region3: #{bn_before_flatten_linear.1} parent=1 // pred_check_branch
      %14 = sbr.rel (0) target = $region5
    $region4: #{bn_before_flatten_linear.1} parent=1 // pred_region
      _
    $region5: #{bn_before_flatten_linear.1} parent=1 // pred_fallthru
      _
    // Predicated region
    $region6: #{bn_before_flatten_linear.1} parent=1 // pred_check
      _
    $region7: #{bn_before_flatten_linear.1} parent=1 // pred_check_branch
      %16 = sbr.rel (0) target = $region9
    $region8: #{bn_before_flatten_linear.1} parent=1 // pred_region
      _
    $region9: #{bn_before_flatten_linear.1} parent=1 // pred_fallthru
      _
    // Predicated region
    $region10: #{bn_before_flatten_linear.1} parent=1 // pred_check
      _
    $region11: #{bn_before_flatten_linear.1} parent=1 // pred_check_branch
      %18 = sbr.rel (0) target = $region13
    $region12: #{bn_before_flatten_linear.1} parent=1 // pred_region
      _
    $region13: #{bn_before_flatten_linear.1} parent=1 // pred_fallthru
      _
    // Predicated region
    $region14: #{bn_before_flatten_linear.1} parent=1 // pred_check
      _
    $region15: #{bn_before_flatten_linear.1} parent=1 // pred_check_branch
      %20 = sbr.rel (0) target = $region17
    $region16: #{bn_before_flatten_linear.1} parent=1 // pred_region
      _
    $region17: #{bn_before_flatten_linear.1} parent=1 // pred_fallthru
      _
    // Predicated region
    $region18: #{bn_before_flatten_linear.1} parent=1 // pred_check
      _
    $region19: #{bn_before_flatten_linear.1} parent=1 // pred_check_branch
      %22 = sbr.rel (0) target = $region21
    $region20: #{bn_before_flatten_linear.1} parent=1 // pred_region
      _
    $region21: #{bn_before_flatten_linear.1} parent=1 // pred_fallthru
      _
    // Predicated region
    $region22: #{bn_before_flatten_linear.1} parent=1 // pred_check
      _
    $region23: #{bn_before_flatten_linear.1} parent=1 // pred_check_branch
      %24 = sbr.rel (0) target = $region25
    $region24: #{bn_before_flatten_linear.1} parent=1 // pred_region
      _
    $region25: #{bn_before_flatten_linear.1} parent=1 // pred_fallthru
      _
    // Predicated region
    $region26: #{bn_before_flatten_linear.1} parent=1 // pred_check
      _
    $region27: #{bn_before_flatten_linear.1} parent=1 // pred_check_branch
      %26 = sbr.rel (0) target = $region29
    $region28: #{bn_before_flatten_linear.1} parent=1 // pred_region
      _
    $region29: #{bn_before_flatten_linear.1} parent=1 // pred_fallthru
      _
    %v27 = vld [vmem:[%s0] sm:$0xff]
    %v28 = vld [vmem:[%s0 + $0x8] sm:$0xff]
    %v29 = vld [vmem:[%s0 + $0x10] sm:$0xff]
    %v30 = vld [vmem:[%s0 + $0x18] sm:$0xff]
    %v31 = vld [vmem:[%s0 + $0x20] sm:$0xff]
    %v32 = vld [vmem:[%s0 + $0x28] sm:$0xff]
    %v33 = vld [vmem:[%s0 + $0x30] sm:$0xff]
    %v34 = vld [vmem:[%s0 + $0x38] sm:$0xff]
    %v35 = vld [vmem:[%s0 + $0x40] sm:$0xff]
    %v36 = vld [vmem:[%s0 + $0x48] sm:$0xff]
    %v37 = vld [vmem:[%s0 + $0x50] sm:$0xff]
    %v38 = vld [vmem:[%s0 + $0x58] sm:$0xff]
    %v39 = vld [vmem:[%s0 + $0x60] sm:$0xff]
    %v40 = vld [vmem:[%s0 + $0x68] sm:$0xff]
    %v41 = vld [vmem:[%s0 + $0x70] sm:$0xff]
    %v42 = vld [vmem:[%s0 + $0x78] sm:$0xff]
    %v43 = vld [vmem:[%s0 + $0x80] sm:$0xff]
    %v44 = vld [vmem:[%s0 + $0x88] sm:$0xff]
    %v45 = vld [vmem:[%s0 + $0x90] sm:$0xff]
    %v46 = vld [vmem:[%s0 + $0x98] sm:$0xff]
    %v47 = vld [vmem:[%s0 + $0xa0] sm:$0xff]
    %v48 = vld [vmem:[%s0 + $0xa8] sm:$0xff]
    %v49 = vld [vmem:[%s0 + $0xb0] sm:$0xff]
    %v50 = vld [vmem:[%s0 + $0xb8] sm:$0xff]
    %v51 = vld [vmem:[%s0 + $0xc0] sm:$0xff]
    %v52 = vld [vmem:[%s0 + $0xc8] sm:$0xff]
    %v53 = vld [vmem:[%s0 + $0xd0] sm:$0xff]
    %v54 = vld [vmem:[%s0 + $0xd8] sm:$0xff]
    %v55 = vld [vmem:[%s0 + $0xe0] sm:$0xff]
    %v56 = vld [vmem:[%s0 + $0xe8] sm:$0xff]
    %v57 = vld [vmem:[%s0 + $0xf0] sm:$0xff]
    %v58 = vld [vmem:[%s0 + $0xf8] sm:$0xff]
    %v59 = vld [vmem:[%s0 + $0x100] sm:$0xff]
    %v60 = vld [vmem:[%s0 + $0x108] sm:$0xff]
    %v61 = vld [vmem:[%s0 + $0x110] sm:$0xff]
    %v62 = vld [vmem:[%s0 + $0x118] sm:$0xff]
    %v63 = vld [vmem:[%s1] sm:$0xff]
    %v64 = vld [vmem:[%s1 + $0x8] sm:$0xff]
    %v65 = vld [vmem:[%s1 + $0x10] sm:$0xff]
    %v66 = vld [vmem:[%s1 + $0x18] sm:$0xff]
    %v67 = vld [vmem:[%s1 + $0x20] sm:$0xff]
    %v68 = vld [vmem:[%s1 + $0x28] sm:$0xff]
    %v69 = vld [vmem:[%s1 + $0x30] sm:$0xff]
    %v70 = vld [vmem:[%s1 + $0x38] sm:$0xff]
    %v71 = vld [vmem:[%s1 + $0x40] sm:$0xff]
    %v72 = vld [vmem:[%s1 + $0x48] sm:$0xff]
    %v73 = vld [vmem:[%s1 + $0x50] sm:$0xff]
    %v74 = vld [vmem:[%s1 + $0x58] sm:$0x3]
    %v75 = vld [vmem:[%s2] sm:$0x1]
    %v77 = vperm.slane %v75, 0
    %vm79 = vcmask 736256
    %v81 = vsel %vm79, %v27, 0
    %v84 = vsel %vm79, %v28, 0
    %v87 = vsel %vm79, %v29, 0
    %v90 = vsel %vm79, %v30, 0
    %v93 = vsel %vm79, %v31, 0
    %v96 = vsel %vm79, %v32, 0
    %v99 = vsel %vm79, %v33, 0
    %v102 = vsel %vm79, %v34, 0
    %v105 = vsel %vm79, %v35, 0
    %v108 = vsel %vm79, %v36, 0
    %v111 = vsel %vm79, %v37, 0
    %v114 = vsel %vm79, %v38, 0
    %v117 = vsel %vm79, %v39, 0
    %v120 = vsel %vm79, %v40, 0
    %v123 = vsel %vm79, %v41, 0
    %v126 = vsel %vm79, %v42, 0
    %v129 = vsel %vm79, %v43, 0
    %v132 = vsel %vm79, %v44, 0
    %v135 = vsel %vm79, %v45, 0
    %v138 = vsel %vm79, %v46, 0
    %v141 = vsel %vm79, %v47, 0
    %v144 = vsel %vm79, %v48, 0
    %v147 = vsel %vm79, %v49, 0
    %v150 = vsel %vm79, %v50, 0
    %v153 = vsel %vm79, %v51, 0
    %v156 = vsel %vm79, %v52, 0
    %v159 = vsel %vm79, %v53, 0
    %v162 = vsel %vm79, %v54, 0
    %v165 = vsel %vm79, %v55, 0
    %v168 = vsel %vm79, %v56, 0
    %v171 = vsel %vm79, %v57, 0
    %v174 = vsel %vm79, %v58, 0
    %v177 = vsel %vm79, %v59, 0
    %v180 = vsel %vm79, %v60, 0
    %v183 = vsel %vm79, %v61, 0
    %v186 = vsel %vm79, %v62, 0
    %vm188 = vcmask 1041408
    %v190 = vsel %vm188, %v74, 0
    %192 = vmatpush.msra.mxu0 0.0
    %193 = vmatpush.msra.mxu0 0.0
    %194 = vmatpush.msra.mxu0 0.0
    %195 = vmatpush.msra.mxu0 0.0
    %196 = vmatpush.msra.mxu0 %v190
    %197 = vmatpush.msra.mxu0 %v73
    %198 = vmatpush.msra.mxu0 %v72
    %199 = vmatpush.msra.mxu0 %v71
    %200 = vmatpush.msra.mxu0 %v70
    %201 = vmatpush.msra.mxu0 %v69
    %202 = vmatpush.msra.mxu0 %v68
    %203 = vmatpush.msra.mxu0 %v67
    %204 = vmatpush.msra.mxu0 %v66
    %205 = vmatpush.msra.mxu0 %v65
    %206 = vmatpush.msra.mxu0 %v64
    %207 = vmatpush.msra.mxu0 %v63
    %208 = vmatmul.f32.gmra.mxu0 %v81
    %v209 = vpop.f32.mrf.mxu0
    %v210 = vadd.f32 %v77, %v209
    %211 = vmatmul.f32.gmra.mxu0 %v84
    %v212 = vpop.f32.mrf.mxu0
    %v213 = vadd.f32 %v77, %v212
    %214 = vmatmul.f32.gmra.mxu0 %v87
    %v215 = vpop.f32.mrf.mxu0
    %v216 = vadd.f32 %v77, %v215
    %217 = vmatmul.f32.gmra.mxu0 %v90
    %v218 = vpop.f32.mrf.mxu0
    %v219 = vadd.f32 %v77, %v218
    %220 = vmatmul.f32.gmra.mxu0 %v93
    %v221 = vpop.f32.mrf.mxu0
    %v222 = vadd.f32 %v77, %v221
    %223 = vmatmul.f32.gmra.mxu0 %v96
    %v224 = vpop.f32.mrf.mxu0
    %v225 = vadd.f32 %v77, %v224
    %226 = vmatmul.f32.gmra.mxu0 %v99
    %v227 = vpop.f32.mrf.mxu0
    %v228 = vadd.f32 %v77, %v227
    %229 = vmatmul.f32.gmra.mxu0 %v102
    %v230 = vpop.f32.mrf.mxu0
    %v231 = vadd.f32 %v77, %v230
    %232 = vmatmul.f32.gmra.mxu0 %v105
    %v233 = vpop.f32.mrf.mxu0
    %v234 = vadd.f32 %v77, %v233
    %235 = vmatmul.f32.gmra.mxu0 %v108
    %v236 = vpop.f32.mrf.mxu0
    %v237 = vadd.f32 %v77, %v236
    %238 = vmatmul.f32.gmra.mxu0 %v111
    %v239 = vpop.f32.mrf.mxu0
    %v240 = vadd.f32 %v77, %v239
    %241 = vmatmul.f32.gmra.mxu0 %v114
    %v242 = vpop.f32.mrf.mxu0
    %v243 = vadd.f32 %v77, %v242
    %244 = vmatmul.f32.gmra.mxu0 %v117
    %v245 = vpop.f32.mrf.mxu0
    %v246 = vadd.f32 %v77, %v245
    %247 = vmatmul.f32.gmra.mxu0 %v120
    %v248 = vpop.f32.mrf.mxu0
    %v249 = vadd.f32 %v77, %v248
    %250 = vmatmul.f32.gmra.mxu0 %v123
    %v251 = vpop.f32.mrf.mxu0
    %v252 = vadd.f32 %v77, %v251
    %253 = vmatmul.f32.gmra.mxu0 %v126
    %v254 = vpop.f32.mrf.mxu0
    %v255 = vadd.f32 %v77, %v254
    %256 = vmatmul.f32.gmra.mxu0 %v129
    %v257 = vpop.f32.mrf.mxu0
    %v258 = vadd.f32 %v77, %v257
    %259 = vmatmul.f32.gmra.mxu0 %v132
    %v260 = vpop.f32.mrf.mxu0
    %v261 = vadd.f32 %v77, %v260
    %262 = vmatmul.f32.gmra.mxu0 %v135
    %v263 = vpop.f32.mrf.mxu0
    %v264 = vadd.f32 %v77, %v263
    %265 = vmatmul.f32.gmra.mxu0 %v138
    %v266 = vpop.f32.mrf.mxu0
    %v267 = vadd.f32 %v77, %v266
    %268 = vmatmul.f32.gmra.mxu0 %v141
    %v269 = vpop.f32.mrf.mxu0
    %v270 = vadd.f32 %v77, %v269
    %271 = vmatmul.f32.gmra.mxu0 %v144
    %v272 = vpop.f32.mrf.mxu0
    %v273 = vadd.f32 %v77, %v272
    %274 = vmatmul.f32.gmra.mxu0 %v147
    %v275 = vpop.f32.mrf.mxu0
    %v276 = vadd.f32 %v77, %v275
    %277 = vmatmul.f32.gmra.mxu0 %v150
    %v278 = vpop.f32.mrf.mxu0
    %v279 = vadd.f32 %v77, %v278
    %280 = vmatmul.f32.gmra.mxu0 %v153
    %v281 = vpop.f32.mrf.mxu0
    %v282 = vadd.f32 %v77, %v281
    %283 = vmatmul.f32.gmra.mxu0 %v156
    %v284 = vpop.f32.mrf.mxu0
    %v285 = vadd.f32 %v77, %v284
    %286 = vmatmul.f32.gmra.mxu0 %v159
    %v287 = vpop.f32.mrf.mxu0
    %v288 = vadd.f32 %v77, %v287
    %289 = vmatmul.f32.gmra.mxu0 %v162
    %v290 = vpop.f32.mrf.mxu0
    %v291 = vadd.f32 %v77, %v290
    %292 = vmatmul.f32.gmra.mxu0 %v165
    %v293 = vpop.f32.mrf.mxu0
    %v294 = vadd.f32 %v77, %v293
    %295 = vmatmul.f32.gmra.mxu0 %v168
    %v296 = vpop.f32.mrf.mxu0
    %v297 = vadd.f32 %v77, %v296
    %298 = vmatmul.f32.gmra.mxu0 %v171
    %v299 = vpop.f32.mrf.mxu0
    %v300 = vadd.f32 %v77, %v299
    %301 = vmatmul.f32.gmra.mxu0 %v174
    %v302 = vpop.f32.mrf.mxu0
    %v303 = vadd.f32 %v77, %v302
    %304 = vmatmul.f32.gmra.mxu0 %v177
    %v305 = vpop.f32.mrf.mxu0
    %v306 = vadd.f32 %v77, %v305
    %307 = vmatmul.f32.gmra.mxu0 %v180
    %v308 = vpop.f32.mrf.mxu0
    %v309 = vadd.f32 %v77, %v308
    %310 = vmatmul.f32.gmra.mxu0 %v183
    %v311 = vpop.f32.mrf.mxu0
    %v312 = vadd.f32 %v77, %v311
    %313 = vmatmul.f32.gmra.mxu0 %v186
    %v314 = vpop.f32.mrf.mxu0
    %v315 = vadd.f32 %v77, %v314
    %316 = vdwg.mxu0
    %v317 = vmax.f32 %v210, 0.0
    %v318 = vmax.f32 %v213, 0.0
    %v319 = vmax.f32 %v216, 0.0
    %v320 = vmax.f32 %v219, 0.0
    %v321 = vmax.f32 %v222, 0.0
    %v322 = vmax.f32 %v225, 0.0
    %v323 = vmax.f32 %v228, 0.0
    %v324 = vmax.f32 %v231, 0.0
    %v325 = vmax.f32 %v234, 0.0
    %v326 = vmax.f32 %v237, 0.0
    %v327 = vmax.f32 %v240, 0.0
    %v328 = vmax.f32 %v243, 0.0
    %v329 = vmax.f32 %v246, 0.0
    %v330 = vmax.f32 %v249, 0.0
    %v331 = vmax.f32 %v252, 0.0
    %v332 = vmax.f32 %v255, 0.0
    %v333 = vmax.f32 %v258, 0.0
    %v334 = vmax.f32 %v261, 0.0
    %v335 = vmax.f32 %v264, 0.0
    %v336 = vmax.f32 %v267, 0.0
    %v337 = vmax.f32 %v270, 0.0
    %v338 = vmax.f32 %v273, 0.0
    %v339 = vmax.f32 %v276, 0.0
    %v340 = vmax.f32 %v279, 0.0
    %v341 = vmax.f32 %v282, 0.0
    %v342 = vmax.f32 %v285, 0.0
    %v343 = vmax.f32 %v288, 0.0
    %v344 = vmax.f32 %v291, 0.0
    %v345 = vmax.f32 %v294, 0.0
    %v346 = vmax.f32 %v297, 0.0
    %v347 = vmax.f32 %v300, 0.0
    %v348 = vmax.f32 %v303, 0.0
    %v349 = vmax.f32 %v306, 0.0
    %v350 = vmax.f32 %v309, 0.0
    %v351 = vmax.f32 %v312, 0.0
    %v352 = vmax.f32 %v315, 0.0
    %v353 = vadd.f32 %v317, %v318
    %v354 = vadd.f32 %v353, %v319
    %v355 = vadd.f32 %v354, %v320
    %v356 = vadd.f32 %v355, %v321
    %v357 = vadd.f32 %v356, %v322
    %v358 = vadd.f32 %v357, %v323
    %v359 = vadd.f32 %v358, %v324
    %v360 = vadd.f32 %v359, %v325
    %v361 = vadd.f32 %v360, %v326
    %v362 = vadd.f32 %v361, %v327
    %v363 = vadd.f32 %v362, %v328
    %v364 = vadd.f32 %v363, %v329
    %v365 = vadd.f32 %v364, %v330
    %v366 = vadd.f32 %v365, %v331
    %v367 = vadd.f32 %v366, %v332
    %v368 = vadd.f32 %v367, %v333
    %v369 = vadd.f32 %v368, %v334
    %v370 = vadd.f32 %v369, %v335
    %v371 = vadd.f32 %v370, %v336
    %v372 = vadd.f32 %v371, %v337
    %v373 = vadd.f32 %v372, %v338
    %v374 = vadd.f32 %v373, %v339
    %v375 = vadd.f32 %v374, %v340
    %v376 = vadd.f32 %v375, %v341
    %v377 = vadd.f32 %v376, %v342
    %v378 = vadd.f32 %v377, %v343
    %v379 = vadd.f32 %v378, %v344
    %v380 = vadd.f32 %v379, %v345
    %v381 = vadd.f32 %v380, %v346
    %v382 = vadd.f32 %v381, %v347
    %v383 = vadd.f32 %v382, %v348
    %v384 = vadd.f32 %v383, %v349
    %v385 = vadd.f32 %v384, %v350
    %v386 = vadd.f32 %v385, %v351
    %v387 = vadd.f32 %v386, %v352
    %v388 = vrot.slane %v387, 4
    %v389 = vadd.f32 %v387, %v388
    %v390 = vrot.slane %v389, 2
    %v391 = vadd.f32 %v389, %v390
    %v392 = vrot.slane %v391, 1
    %v393 = vadd.f32 %v391, %v392
    %v394 = vmul.f32 %v393, 0.0034722222
    %v395 = vmul.f32 %v317, %v317
    %v396 = vmul.f32 %v318, %v318
    %v397 = vmul.f32 %v319, %v319
    %v398 = vmul.f32 %v320, %v320
    %v399 = vmul.f32 %v321, %v321
    %v400 = vmul.f32 %v322, %v322
    %v401 = vmul.f32 %v323, %v323
    %v402 = vmul.f32 %v324, %v324
    %v403 = vmul.f32 %v325, %v325
    %v404 = vmul.f32 %v326, %v326
    %v405 = vmul.f32 %v327, %v327
    %v406 = vmul.f32 %v328, %v328
    %v407 = vmul.f32 %v329, %v329
    %v408 = vmul.f32 %v330, %v330
    %v409 = vmul.f32 %v331, %v331
    %v410 = vmul.f32 %v332, %v332
    %v411 = vmul.f32 %v333, %v333
    %v412 = vmul.f32 %v334, %v334
    %v413 = vmul.f32 %v335, %v335
    %v414 = vmul.f32 %v336, %v336
    %v415 = vmul.f32 %v337, %v337
    %v416 = vmul.f32 %v338, %v338
    %v417 = vmul.f32 %v339, %v339
    %v418 = vmul.f32 %v340, %v340
    %v419 = vmul.f32 %v341, %v341
    %v420 = vmul.f32 %v342, %v342
    %v421 = vmul.f32 %v343, %v343
    %v422 = vmul.f32 %v344, %v344
    %v423 = vmul.f32 %v345, %v345
    %v424 = vmul.f32 %v346, %v346
    %v425 = vmul.f32 %v347, %v347
    %v426 = vmul.f32 %v348, %v348
    %v427 = vmul.f32 %v349, %v349
    %v428 = vmul.f32 %v350, %v350
    %v429 = vmul.f32 %v351, %v351
    %v430 = vmul.f32 %v352, %v352
    %v431 = vadd.f32 %v395, %v396
    %v432 = vadd.f32 %v431, %v397
    %v433 = vadd.f32 %v432, %v398
    %v434 = vadd.f32 %v433, %v399
    %v435 = vadd.f32 %v434, %v400
    %v436 = vadd.f32 %v435, %v401
    %v437 = vadd.f32 %v436, %v402
    %v438 = vadd.f32 %v437, %v403
    %v439 = vadd.f32 %v438, %v404
    %v440 = vadd.f32 %v439, %v405
    %v441 = vadd.f32 %v440, %v406
    %v442 = vadd.f32 %v441, %v407
    %v443 = vadd.f32 %v442, %v408
    %v444 = vadd.f32 %v443, %v409
    %v445 = vadd.f32 %v444, %v410
    %v446 = vadd.f32 %v445, %v411
    %v447 = vadd.f32 %v446, %v412
    %v448 = vadd.f32 %v447, %v413
    %v449 = vadd.f32 %v448, %v414
    %v450 = vadd.f32 %v449, %v415
    %v451 = vadd.f32 %v450, %v416
    %v452 = vadd.f32 %v451, %v417
    %v453 = vadd.f32 %v452, %v418
    %v454 = vadd.f32 %v453, %v419
    %v455 = vadd.f32 %v454, %v420
    %v456 = vadd.f32 %v455, %v421
    %v457 = vadd.f32 %v456, %v422
    %v458 = vadd.f32 %v457, %v423
    %v459 = vadd.f32 %v458, %v424
    %v460 = vadd.f32 %v459, %v425
    %v461 = vadd.f32 %v460, %v426
    %v462 = vadd.f32 %v461, %v427
    %v463 = vadd.f32 %v462, %v428
    %v464 = vadd.f32 %v463, %v429
    %v465 = vadd.f32 %v464, %v430
    %v466 = vrot.slane %v465, 4
    %v467 = vadd.f32 %v465, %v466
    %v468 = vrot.slane %v467, 2
    %v469 = vadd.f32 %v467, %v468
    %v470 = vrot.slane %v469, 1
    %v471 = vadd.f32 %v469, %v470
    %v472 = vmul.f32 %v471, 0.0034722222
    %v473 = vmul.f32 %v394, %v394
    %v474 = vsub.f32 %v472, %v473
    %v475 = vmax.f32 %v474, 0.0
    %v476 = vld [vmem:[%s3] sm:$0x1]
    %v477 = vadd.f32 %v475, 1e-05
    %v478 = vrsqrt.pop %v477
    %v479 = vmul.f32 %v478, %v477
    %v480 = vmul.f32 %v479, %v478
    %v481 = vmul.f32 0.5, %v480
    %v482 = vsub.f32 1.5, %v481
    %v483 = vmul.f32 %v478, %v482
    %vm484 = vweird.f32 %v477
    %vm485 = vweird.f32 %v478
    %vm486 = vmor %vm484, %vm485
    %v487 = vsel %vm486, %v478, %v483
    %v488 = vmul.f32 %v476, %v487
    %v489 = vld [vmem:[%s4] sm:$0x1]
    %v490 = vmul.f32 %v394, %v488
    %v491 = vsub.f32 %v489, %v490
    %v493 = vperm.slane %v488, 0
    %v495 = vmul.f32 %v317, %v493
    %v496 = vmul.f32 %v318, %v493
    %v497 = vmul.f32 %v319, %v493
    %v498 = vmul.f32 %v320, %v493
    %v499 = vmul.f32 %v321, %v493
    %v500 = vmul.f32 %v322, %v493
    %v501 = vmul.f32 %v323, %v493
    %v502 = vmul.f32 %v324, %v493
    %v503 = vmul.f32 %v325, %v493
    %v504 = vmul.f32 %v326, %v493
    %v505 = vmul.f32 %v327, %v493
    %v506 = vmul.f32 %v328, %v493
    %v507 = vmul.f32 %v329, %v493
    %v508 = vmul.f32 %v330, %v493
    %v509 = vmul.f32 %v331, %v493
    %v510 = vmul.f32 %v332, %v493
    %v511 = vmul.f32 %v333, %v493
    %v512 = vmul.f32 %v334, %v493
    %v513 = vmul.f32 %v335, %v493
    %v514 = vmul.f32 %v336, %v493
    %v515 = vmul.f32 %v337, %v493
    %v516 = vmul.f32 %v338, %v493
    %v517 = vmul.f32 %v339, %v493
    %v518 = vmul.f32 %v340, %v493
    %v519 = vmul.f32 %v341, %v493
    %v520 = vmul.f32 %v342, %v493
    %v521 = vmul.f32 %v343, %v493
    %v522 = vmul.f32 %v344, %v493
    %v523 = vmul.f32 %v345, %v493
    %v524 = vmul.f32 %v346, %v493
    %v525 = vmul.f32 %v347, %v493
    %v526 = vmul.f32 %v348, %v493
    %v527 = vmul.f32 %v349, %v493
    %v528 = vmul.f32 %v350, %v493
    %v529 = vmul.f32 %v351, %v493
    %v530 = vmul.f32 %v352, %v493
    %v532 = vperm.slane %v491, 0
    %v534 = vadd.f32 %v495, %v532
    %v535 = vadd.f32 %v496, %v532
    %v536 = vadd.f32 %v497, %v532
    %v537 = vadd.f32 %v498, %v532
    %v538 = vadd.f32 %v499, %v532
    %v539 = vadd.f32 %v500, %v532
    %v540 = vadd.f32 %v501, %v532
    %v541 = vadd.f32 %v502, %v532
    %v542 = vadd.f32 %v503, %v532
    %v543 = vadd.f32 %v504, %v532
    %v544 = vadd.f32 %v505, %v532
    %v545 = vadd.f32 %v506, %v532
    %v546 = vadd.f32 %v507, %v532
    %v547 = vadd.f32 %v508, %v532
    %v548 = vadd.f32 %v509, %v532
    %v549 = vadd.f32 %v510, %v532
    %v550 = vadd.f32 %v511, %v532
    %v551 = vadd.f32 %v512, %v532
    %v552 = vadd.f32 %v513, %v532
    %v553 = vadd.f32 %v514, %v532
    %v554 = vadd.f32 %v515, %v532
    %v555 = vadd.f32 %v516, %v532
    %v556 = vadd.f32 %v517, %v532
    %v557 = vadd.f32 %v518, %v532
    %v558 = vadd.f32 %v519, %v532
    %v559 = vadd.f32 %v520, %v532
    %v560 = vadd.f32 %v521, %v532
    %v561 = vadd.f32 %v522, %v532
    %v562 = vadd.f32 %v523, %v532
    %v563 = vadd.f32 %v524, %v532
    %v564 = vadd.f32 %v525, %v532
    %v565 = vadd.f32 %v526, %v532
    %v566 = vadd.f32 %v527, %v532
    %v567 = vadd.f32 %v528, %v532
    %v568 = vadd.f32 %v529, %v532
    %v569 = vadd.f32 %v530, %v532
    %570 = vst [vmem:[#allocation2] sm:$0xff] %v534
    %571 = vst [vmem:[#allocation2 + $0x8] sm:$0xff] %v535
    %572 = vst [vmem:[#allocation2 + $0x10] sm:$0xff] %v536
    %573 = vst [vmem:[#allocation2 + $0x18] sm:$0xff] %v537
    %574 = vst [vmem:[#allocation2 + $0x20] sm:$0xff] %v538
    %575 = vst [vmem:[#allocation2 + $0x28] sm:$0xff] %v539
    %576 = vst [vmem:[#allocation2 + $0x30] sm:$0xff] %v540
    %577 = vst [vmem:[#allocation2 + $0x38] sm:$0xff] %v541
    %578 = vst [vmem:[#allocation2 + $0x40] sm:$0xff] %v542
    %579 = vst [vmem:[#allocation2 + $0x48] sm:$0xff] %v543
    %580 = vst [vmem:[#allocation2 + $0x50] sm:$0xff] %v544
    %581 = vst [vmem:[#allocation2 + $0x58] sm:$0xff] %v545
    %582 = vst [vmem:[#allocation2 + $0x60] sm:$0xff] %v546
    %583 = vst [vmem:[#allocation2 + $0x68] sm:$0xff] %v547
    %584 = vst [vmem:[#allocation2 + $0x70] sm:$0xff] %v548
    %585 = vst [vmem:[#allocation2 + $0x78] sm:$0xff] %v549
    %586 = vst [vmem:[#allocation2 + $0x80] sm:$0xff] %v550
    %587 = vst [vmem:[#allocation2 + $0x88] sm:$0xff] %v551
    %588 = vst [vmem:[#allocation2 + $0x90] sm:$0xff] %v552
    %589 = vst [vmem:[#allocation2 + $0x98] sm:$0xff] %v553
    %590 = vst [vmem:[#allocation2 + $0xa0] sm:$0xff] %v554
    %591 = vst [vmem:[#allocation2 + $0xa8] sm:$0xff] %v555
    %592 = vst [vmem:[#allocation2 + $0xb0] sm:$0xff] %v556
    %593 = vst [vmem:[#allocation2 + $0xb8] sm:$0xff] %v557
    %594 = vst [vmem:[#allocation2 + $0xc0] sm:$0xff] %v558
    %595 = vst [vmem:[#allocation2 + $0xc8] sm:$0xff] %v559
    %596 = vst [vmem:[#allocation2 + $0xd0] sm:$0xff] %v560
    %597 = vst [vmem:[#allocation2 + $0xd8] sm:$0xff] %v561
    %598 = vst [vmem:[#allocation2 + $0xe0] sm:$0xff] %v562
    %599 = vst [vmem:[#allocation2 + $0xe8] sm:$0xff] %v563
    %600 = vst [vmem:[#allocation2 + $0xf0] sm:$0xff] %v564
    %601 = vst [vmem:[#allocation2 + $0xf8] sm:$0xff] %v565
    %602 = vst [vmem:[#allocation2 + $0x100] sm:$0xff] %v566
    %603 = vst [vmem:[#allocation2 + $0x108] sm:$0xff] %v567
    %604 = vst [vmem:[#allocation2 + $0x110] sm:$0xff] %v568
    %605 = vst [vmem:[#allocation2 + $0x118] sm:$0xff] %v569
    %v606 = vld [vmem:[#allocation2] sm:$0x1]
    %607 = vst [vmem:[#allocation3] sm:$0x1] %v606
    %v608 = vld [vmem:[#allocation2 + $0x1] sm:$0x1]
    %609 = vst [vmem:[#allocation3 + $0x2] sm:$0x1] %v608
    %v610 = vld [vmem:[#allocation2 + $0x2] sm:$0x1]
    %611 = vst [vmem:[#allocation3 + $0x4] sm:$0x1] %v610
    %v612 = vld [vmem:[#allocation2 + $0x3] sm:$0x1]
    %613 = vst [vmem:[#allocation3 + $0x6] sm:$0x1] %v612
    %v614 = vld [vmem:[#allocation2 + $0x4] sm:$0x1]
    %615 = vst [vmem:[#allocation3 + $0x8] sm:$0x1] %v614
    %v616 = vld [vmem:[#allocation2 + $0x5] sm:$0x1]
    %617 = vst [vmem:[#allocation3 + $0xa] sm:$0x1] %v616
    %v618 = vld [vmem:[#allocation2 + $0x6] sm:$0x1]
    %619 = vst [vmem:[#allocation3 + $0xc] sm:$0x1] %v618
    %v620 = vld [vmem:[#allocation2 + $0x7] sm:$0x1]
    %621 = vst [vmem:[#allocation3 + $0xe] sm:$0x1] %v620
    %v622 = vld [vmem:[#allocation2 + $0x8] sm:$0x1]
    %623 = vst [vmem:[#allocation3 + $0x10] sm:$0x1] %v622
    %v624 = vld [vmem:[#allocation2 + $0x9] sm:$0x1]
    %625 = vst [vmem:[#allocation3 + $0x12] sm:$0x1] %v624
    %v626 = vld [vmem:[#allocation2 + $0xa] sm:$0x1]
    %627 = vst [vmem:[#allocation3 + $0x14] sm:$0x1] %v626
    %v628 = vld [vmem:[#allocation2 + $0xb] sm:$0x1]
    %629 = vst [vmem:[#allocation3 + $0x16] sm:$0x1] %v628
    %v630 = vld [vmem:[#allocation2 + $0xc] sm:$0x1]
    %631 = vst [vmem:[#allocation3 + $0x18] sm:$0x1] %v630
    %v632 = vld [vmem:[#allocation2 + $0xd] sm:$0x1]
    %633 = vst [vmem:[#allocation3 + $0x1a] sm:$0x1] %v632
    %v634 = vld [vmem:[#allocation2 + $0xe] sm:$0x1]
    %635 = vst [vmem:[#allocation3 + $0x1c] sm:$0x1] %v634
    %v636 = vld [vmem:[#allocation2 + $0xf] sm:$0x1]
    %637 = vst [vmem:[#allocation3 + $0x1e] sm:$0x1] %v636
    %v638 = vld [vmem:[#allocation2 + $0x10] sm:$0x1]
    %639 = vst [vmem:[#allocation3 + $0x20] sm:$0x1] %v638
    %v640 = vld [vmem:[#allocation2 + $0x11] sm:$0x1]
    %641 = vst [vmem:[#allocation3 + $0x22] sm:$0x1] %v640
    %v642 = vld [vmem:[#allocation2 + $0x12] sm:$0x1]
    %643 = vst [vmem:[#allocation3 + $0x24] sm:$0x1] %v642
    %v644 = vld [vmem:[#allocation2 + $0x13] sm:$0x1]
    %645 = vst [vmem:[#allocation3 + $0x26] sm:$0x1] %v644
    %v646 = vld [vmem:[#allocation2 + $0x14] sm:$0x1]
    %647 = vst [vmem:[#allocation3 + $0x28] sm:$0x1] %v646
    %v648 = vld [vmem:[#allocation2 + $0x15] sm:$0x1]
    %649 = vst [vmem:[#allocation3 + $0x2a] sm:$0x1] %v648
    %v650 = vld [vmem:[#allocation2 + $0x16] sm:$0x1]
    %651 = vst [vmem:[#allocation3 + $0x2c] sm:$0x1] %v650
    %v652 = vld [vmem:[#allocation2 + $0x17] sm:$0x1]
    %653 = vst [vmem:[#allocation3 + $0x2e] sm:$0x1] %v652
    %v654 = vld [vmem:[#allocation2 + $0x18] sm:$0x1]
    %655 = vst [vmem:[#allocation3 + $0x30] sm:$0x1] %v654
    %v656 = vld [vmem:[#allocation2 + $0x19] sm:$0x1]
    %657 = vst [vmem:[#allocation3 + $0x32] sm:$0x1] %v656
    %v658 = vld [vmem:[#allocation2 + $0x1a] sm:$0x1]
    %659 = vst [vmem:[#allocation3 + $0x34] sm:$0x1] %v658
    %v660 = vld [vmem:[#allocation2 + $0x1b] sm:$0x1]
    %661 = vst [vmem:[#allocation3 + $0x36] sm:$0x1] %v660
    %v662 = vld [vmem:[#allocation2 + $0x1c] sm:$0x1]
    %663 = vst [vmem:[#allocation3 + $0x38] sm:$0x1] %v662
    %v664 = vld [vmem:[#allocation2 + $0x1d] sm:$0x1]
    %665 = vst [vmem:[#allocation3 + $0x3a] sm:$0x1] %v664
    %v666 = vld [vmem:[#allocation2 + $0x1e] sm:$0x1]
    %667 = vst [vmem:[#allocation3 + $0x3c] sm:$0x1] %v666
    %v668 = vld [vmem:[#allocation2 + $0x1f] sm:$0x1]
    %669 = vst [vmem:[#allocation3 + $0x3e] sm:$0x1] %v668
    %v670 = vld [vmem:[#allocation2 + $0x20] sm:$0x1]
    %671 = vst [vmem:[#allocation3 + $0x40] sm:$0x1] %v670
    %v672 = vld [vmem:[#allocation2 + $0x21] sm:$0x1]
    %673 = vst [vmem:[#allocation3 + $0x42] sm:$0x1] %v672
    %v674 = vld [vmem:[#allocation2 + $0x22] sm:$0x1]
    %675 = vst [vmem:[#allocation3 + $0x44] sm:$0x1] %v674
    %v676 = vld [vmem:[#allocation2 + $0x23] sm:$0x1]
    %677 = vst [vmem:[#allocation3 + $0x46] sm:$0x1] %v676
    %v678 = vld [vmem:[#allocation2 + $0x24] sm:$0x1]
    %679 = vst [vmem:[#allocation3 + $0x48] sm:$0x1] %v678
    %v680 = vld [vmem:[#allocation2 + $0x25] sm:$0x1]
    %681 = vst [vmem:[#allocation3 + $0x4a] sm:$0x1] %v680
    %v682 = vld [vmem:[#allocation2 + $0x26] sm:$0x1]
    %683 = vst [vmem:[#allocation3 + $0x4c] sm:$0x1] %v682
    %v684 = vld [vmem:[#allocation2 + $0x27] sm:$0x1]
    %685 = vst [vmem:[#allocation3 + $0x4e] sm:$0x1] %v684
    %v686 = vld [vmem:[#allocation2 + $0x28] sm:$0x1]
    %687 = vst [vmem:[#allocation3 + $0x50] sm:$0x1] %v686
    %v688 = vld [vmem:[#allocation2 + $0x29] sm:$0x1]
    %689 = vst [vmem:[#allocation3 + $0x52] sm:$0x1] %v688
    %v690 = vld [vmem:[#allocation2 + $0x2a] sm:$0x1]
    %691 = vst [vmem:[#allocation3 + $0x54] sm:$0x1] %v690
    %v692 = vld [vmem:[#allocation2 + $0x2b] sm:$0x1]
    %693 = vst [vmem:[#allocation3 + $0x56] sm:$0x1] %v692
    %v694 = vld [vmem:[#allocation2 + $0x2c] sm:$0x1]
    %695 = vst [vmem:[#allocation3 + $0x58] sm:$0x1] %v694
    %v696 = vld [vmem:[#allocation2 + $0x2d] sm:$0x1]
    %697 = vst [vmem:[#allocation3 + $0x5a] sm:$0x1] %v696
    %v698 = vld [vmem:[#allocation2 + $0x2e] sm:$0x1]
    %699 = vst [vmem:[#allocation3 + $0x5c] sm:$0x1] %v698
    %v700 = vld [vmem:[#allocation2 + $0x2f] sm:$0x1]
    %701 = vst [vmem:[#allocation3 + $0x5e] sm:$0x1] %v700
    %v702 = vld [vmem:[#allocation2 + $0x30] sm:$0x1]
    %703 = vst [vmem:[#allocation3 + $0x60] sm:$0x1] %v702
    %v704 = vld [vmem:[#allocation2 + $0x31] sm:$0x1]
    %705 = vst [vmem:[#allocation3 + $0x62] sm:$0x1] %v704
    %v706 = vld [vmem:[#allocation2 + $0x32] sm:$0x1]
    %707 = vst [vmem:[#allocation3 + $0x64] sm:$0x1] %v706
    %v708 = vld [vmem:[#allocation2 + $0x33] sm:$0x1]
    %709 = vst [vmem:[#allocation3 + $0x66] sm:$0x1] %v708
    %v710 = vld [vmem:[#allocation2 + $0x34] sm:$0x1]
    %711 = vst [vmem:[#allocation3 + $0x68] sm:$0x1] %v710
    %v712 = vld [vmem:[#allocation2 + $0x35] sm:$0x1]
    %713 = vst [vmem:[#allocation3 + $0x6a] sm:$0x1] %v712
    %v714 = vld [vmem:[#allocation2 + $0x36] sm:$0x1]
    %715 = vst [vmem:[#allocation3 + $0x6c] sm:$0x1] %v714
    %v716 = vld [vmem:[#allocation2 + $0x37] sm:$0x1]
    %717 = vst [vmem:[#allocation3 + $0x6e] sm:$0x1] %v716
    %v718 = vld [vmem:[#allocation2 + $0x38] sm:$0x1]
    %719 = vst [vmem:[#allocation3 + $0x70] sm:$0x1] %v718
    %v720 = vld [vmem:[#allocation2 + $0x39] sm:$0x1]
    %721 = vst [vmem:[#allocation3 + $0x72] sm:$0x1] %v720
    %v722 = vld [vmem:[#allocation2 + $0x3a] sm:$0x1]
    %723 = vst [vmem:[#allocation3 + $0x74] sm:$0x1] %v722
    %v724 = vld [vmem:[#allocation2 + $0x3b] sm:$0x1]
    %725 = vst [vmem:[#allocation3 + $0x76] sm:$0x1] %v724
    %v726 = vld [vmem:[#allocation2 + $0x3c] sm:$0x1]
    %727 = vst [vmem:[#allocation3 + $0x78] sm:$0x1] %v726
    %v728 = vld [vmem:[#allocation2 + $0x3d] sm:$0x1]
    %729 = vst [vmem:[#allocation3 + $0x7a] sm:$0x1] %v728
    %v730 = vld [vmem:[#allocation2 + $0x3e] sm:$0x1]
    %731 = vst [vmem:[#allocation3 + $0x7c] sm:$0x1] %v730
    %v732 = vld [vmem:[#allocation2 + $0x3f] sm:$0x1]
    %733 = vst [vmem:[#allocation3 + $0x7e] sm:$0x1] %v732
    %v734 = vld [vmem:[#allocation2 + $0x40] sm:$0x1]
    %735 = vst [vmem:[#allocation3 + $0x80] sm:$0x1] %v734
    %v736 = vld [vmem:[#allocation2 + $0x41] sm:$0x1]
    %737 = vst [vmem:[#allocation3 + $0x82] sm:$0x1] %v736
    %v738 = vld [vmem:[#allocation2 + $0x42] sm:$0x1]
    %739 = vst [vmem:[#allocation3 + $0x84] sm:$0x1] %v738
    %v740 = vld [vmem:[#allocation2 + $0x43] sm:$0x1]
    %741 = vst [vmem:[#allocation3 + $0x86] sm:$0x1] %v740
    %v742 = vld [vmem:[#allocation2 + $0x44] sm:$0x1]
    %743 = vst [vmem:[#allocation3 + $0x88] sm:$0x1] %v742
    %v744 = vld [vmem:[#allocation2 + $0x45] sm:$0x1]
    %745 = vst [vmem:[#allocation3 + $0x8a] sm:$0x1] %v744
    %v746 = vld [vmem:[#allocation2 + $0x46] sm:$0x1]
    %747 = vst [vmem:[#allocation3 + $0x8c] sm:$0x1] %v746
    %v748 = vld [vmem:[#allocation2 + $0x47] sm:$0x1]
    %749 = vst [vmem:[#allocation3 + $0x8e] sm:$0x1] %v748
    %v750 = vld [vmem:[#allocation2 + $0x48] sm:$0x1]
    %751 = vst [vmem:[#allocation3 + $0x90] sm:$0x1] %v750
    %v752 = vld [vmem:[#allocation2 + $0x49] sm:$0x1]
    %753 = vst [vmem:[#allocation3 + $0x92] sm:$0x1] %v752
    %v754 = vld [vmem:[#allocation2 + $0x4a] sm:$0x1]
    %755 = vst [vmem:[#allocation3 + $0x94] sm:$0x1] %v754
    %v756 = vld [vmem:[#allocation2 + $0x4b] sm:$0x1]
    %757 = vst [vmem:[#allocation3 + $0x96] sm:$0x1] %v756
    %v758 = vld [vmem:[#allocation2 + $0x4c] sm:$0x1]
    %759 = vst [vmem:[#allocation3 + $0x98] sm:$0x1] %v758
    %v760 = vld [vmem:[#allocation2 + $0x4d] sm:$0x1]
    %761 = vst [vmem:[#allocation3 + $0x9a] sm:$0x1] %v760
    %v762 = vld [vmem:[#allocation2 + $0x4e] sm:$0x1]
    %763 = vst [vmem:[#allocation3 + $0x9c] sm:$0x1] %v762
    %v764 = vld [vmem:[#allocation2 + $0x4f] sm:$0x1]
    %765 = vst [vmem:[#allocation3 + $0x9e] sm:$0x1] %v764
    %v766 = vld [vmem:[#allocation2 + $0x50] sm:$0x1]
    %767 = vst [vmem:[#allocation3 + $0xa0] sm:$0x1] %v766
    %v768 = vld [vmem:[#allocation2 + $0x51] sm:$0x1]
    %769 = vst [vmem:[#allocation3 + $0xa2] sm:$0x1] %v768
    %v770 = vld [vmem:[#allocation2 + $0x52] sm:$0x1]
    %771 = vst [vmem:[#allocation3 + $0xa4] sm:$0x1] %v770
    %v772 = vld [vmem:[#allocation2 + $0x53] sm:$0x1]
    %773 = vst [vmem:[#allocation3 + $0xa6] sm:$0x1] %v772
    %v774 = vld [vmem:[#allocation2 + $0x54] sm:$0x1]
    %775 = vst [vmem:[#allocation3 + $0xa8] sm:$0x1] %v774
    %v776 = vld [vmem:[#allocation2 + $0x55] sm:$0x1]
    %777 = vst [vmem:[#allocation3 + $0xaa] sm:$0x1] %v776
    %v778 = vld [vmem:[#allocation2 + $0x56] sm:$0x1]
    %779 = vst [vmem:[#allocation3 + $0xac] sm:$0x1] %v778
    %v780 = vld [vmem:[#allocation2 + $0x57] sm:$0x1]
    %781 = vst [vmem:[#allocation3 + $0xae] sm:$0x1] %v780
    %v782 = vld [vmem:[#allocation2 + $0x58] sm:$0x1]
    %783 = vst [vmem:[#allocation3 + $0xb0] sm:$0x1] %v782
    %v784 = vld [vmem:[#allocation2 + $0x59] sm:$0x1]
    %785 = vst [vmem:[#allocation3 + $0xb2] sm:$0x1] %v784
    %v786 = vld [vmem:[#allocation2 + $0x5a] sm:$0x1]
    %787 = vst [vmem:[#allocation3 + $0xb4] sm:$0x1] %v786
    %v788 = vld [vmem:[#allocation2 + $0x5b] sm:$0x1]
    %789 = vst [vmem:[#allocation3 + $0xb6] sm:$0x1] %v788
    %v790 = vld [vmem:[#allocation2 + $0x5c] sm:$0x1]
    %791 = vst [vmem:[#allocation3 + $0xb8] sm:$0x1] %v790
    %v792 = vld [vmem:[#allocation2 + $0x5d] sm:$0x1]
    %793 = vst [vmem:[#allocation3 + $0xba] sm:$0x1] %v792
    %v794 = vld [vmem:[#allocation2 + $0x5e] sm:$0x1]
    %795 = vst [vmem:[#allocation3 + $0xbc] sm:$0x1] %v794
    %v796 = vld [vmem:[#allocation2 + $0x5f] sm:$0x1]
    %797 = vst [vmem:[#allocation3 + $0xbe] sm:$0x1] %v796
    %v798 = vld [vmem:[#allocation2 + $0x60] sm:$0x1]
    %799 = vst [vmem:[#allocation3 + $0xc0] sm:$0x1] %v798
    %v800 = vld [vmem:[#allocation2 + $0x61] sm:$0x1]
    %801 = vst [vmem:[#allocation3 + $0xc2] sm:$0x1] %v800
    %v802 = vld [vmem:[#allocation2 + $0x62] sm:$0x1]
    %803 = vst [vmem:[#allocation3 + $0xc4] sm:$0x1] %v802
    %v804 = vld [vmem:[#allocation2 + $0x63] sm:$0x1]
    %805 = vst [vmem:[#allocation3 + $0xc6] sm:$0x1] %v804
    %v806 = vld [vmem:[#allocation2 + $0x64] sm:$0x1]
    %807 = vst [vmem:[#allocation3 + $0xc8] sm:$0x1] %v806
    %v808 = vld [vmem:[#allocation2 + $0x65] sm:$0x1]
    %809 = vst [vmem:[#allocation3 + $0xca] sm:$0x1] %v808
    %v810 = vld [vmem:[#allocation2 + $0x66] sm:$0x1]
    %811 = vst [vmem:[#allocation3 + $0xcc] sm:$0x1] %v810
    %v812 = vld [vmem:[#allocation2 + $0x67] sm:$0x1]
    %813 = vst [vmem:[#allocation3 + $0xce] sm:$0x1] %v812
    %v814 = vld [vmem:[#allocation2 + $0x68] sm:$0x1]
    %815 = vst [vmem:[#allocation3 + $0xd0] sm:$0x1] %v814
    %v816 = vld [vmem:[#allocation2 + $0x69] sm:$0x1]
    %817 = vst [vmem:[#allocation3 + $0xd2] sm:$0x1] %v816
    %v818 = vld [vmem:[#allocation2 + $0x6a] sm:$0x1]
    %819 = vst [vmem:[#allocation3 + $0xd4] sm:$0x1] %v818
    %v820 = vld [vmem:[#allocation2 + $0x6b] sm:$0x1]
    %821 = vst [vmem:[#allocation3 + $0xd6] sm:$0x1] %v820
    %v822 = vld [vmem:[#allocation2 + $0x6c] sm:$0x1]
    %823 = vst [vmem:[#allocation3 + $0xd8] sm:$0x1] %v822
    %v824 = vld [vmem:[#allocation2 + $0x6d] sm:$0x1]
    %825 = vst [vmem:[#allocation3 + $0xda] sm:$0x1] %v824
    %v826 = vld [vmem:[#allocation2 + $0x6e] sm:$0x1]
    %827 = vst [vmem:[#allocation3 + $0xdc] sm:$0x1] %v826
    %v828 = vld [vmem:[#allocation2 + $0x6f] sm:$0x1]
    %829 = vst [vmem:[#allocation3 + $0xde] sm:$0x1] %v828
    %v830 = vld [vmem:[#allocation2 + $0x70] sm:$0x1]
    %831 = vst [vmem:[#allocation3 + $0xe0] sm:$0x1] %v830
    %v832 = vld [vmem:[#allocation2 + $0x71] sm:$0x1]
    %833 = vst [vmem:[#allocation3 + $0xe2] sm:$0x1] %v832
    %v834 = vld [vmem:[#allocation2 + $0x72] sm:$0x1]
    %835 = vst [vmem:[#allocation3 + $0xe4] sm:$0x1] %v834
    %v836 = vld [vmem:[#allocation2 + $0x73] sm:$0x1]
    %837 = vst [vmem:[#allocation3 + $0xe6] sm:$0x1] %v836
    %v838 = vld [vmem:[#allocation2 + $0x74] sm:$0x1]
    %839 = vst [vmem:[#allocation3 + $0xe8] sm:$0x1] %v838
    %v840 = vld [vmem:[#allocation2 + $0x75] sm:$0x1]
    %841 = vst [vmem:[#allocation3 + $0xea] sm:$0x1] %v840
    %v842 = vld [vmem:[#allocation2 + $0x76] sm:$0x1]
    %843 = vst [vmem:[#allocation3 + $0xec] sm:$0x1] %v842
    %v844 = vld [vmem:[#allocation2 + $0x77] sm:$0x1]
    %845 = vst [vmem:[#allocation3 + $0xee] sm:$0x1] %v844
    %v846 = vld [vmem:[#allocation2 + $0x78] sm:$0x1]
    %847 = vst [vmem:[#allocation3 + $0xf0] sm:$0x1] %v846
    %v848 = vld [vmem:[#allocation2 + $0x79] sm:$0x1]
    %849 = vst [vmem:[#allocation3 + $0xf2] sm:$0x1] %v848
    %v850 = vld [vmem:[#allocation2 + $0x7a] sm:$0x1]
    %851 = vst [vmem:[#allocation3 + $0xf4] sm:$0x1] %v850
    %v852 = vld [vmem:[#allocation2 + $0x7b] sm:$0x1]
    %853 = vst [vmem:[#allocation3 + $0xf6] sm:$0x1] %v852
    %v854 = vld [vmem:[#allocation2 + $0x7c] sm:$0x1]
    %855 = vst [vmem:[#allocation3 + $0xf8] sm:$0x1] %v854
    %v856 = vld [vmem:[#allocation2 + $0x7d] sm:$0x1]
    %857 = vst [vmem:[#allocation3 + $0xfa] sm:$0x1] %v856
    %v858 = vld [vmem:[#allocation2 + $0x7e] sm:$0x1]
    %859 = vst [vmem:[#allocation3 + $0xfc] sm:$0x1] %v858
    %v860 = vld [vmem:[#allocation2 + $0x7f] sm:$0x1]
    %861 = vst [vmem:[#allocation3 + $0xfe] sm:$0x1] %v860
    %v862 = vld [vmem:[#allocation2 + $0x80] sm:$0x1]
    %863 = vst [vmem:[#allocation3 + $0x100] sm:$0x1] %v862
    %v864 = vld [vmem:[#allocation2 + $0x81] sm:$0x1]
    %865 = vst [vmem:[#allocation3 + $0x102] sm:$0x1] %v864
    %v866 = vld [vmem:[#allocation2 + $0x82] sm:$0x1]
    %867 = vst [vmem:[#allocation3 + $0x104] sm:$0x1] %v866
    %v868 = vld [vmem:[#allocation2 + $0x83] sm:$0x1]
    %869 = vst [vmem:[#allocation3 + $0x106] sm:$0x1] %v868
    %v870 = vld [vmem:[#allocation2 + $0x84] sm:$0x1]
    %871 = vst [vmem:[#allocation3 + $0x108] sm:$0x1] %v870
    %v872 = vld [vmem:[#allocation2 + $0x85] sm:$0x1]
    %873 = vst [vmem:[#allocation3 + $0x10a] sm:$0x1] %v872
    %v874 = vld [vmem:[#allocation2 + $0x86] sm:$0x1]
    %875 = vst [vmem:[#allocation3 + $0x10c] sm:$0x1] %v874
    %v876 = vld [vmem:[#allocation2 + $0x87] sm:$0x1]
    %877 = vst [vmem:[#allocation3 + $0x10e] sm:$0x1] %v876
    %v878 = vld [vmem:[#allocation2 + $0x88] sm:$0x1]
    %879 = vst [vmem:[#allocation3 + $0x110] sm:$0x1] %v878
    %v880 = vld [vmem:[#allocation2 + $0x89] sm:$0x1]
    %881 = vst [vmem:[#allocation3 + $0x112] sm:$0x1] %v880
    %v882 = vld [vmem:[#allocation2 + $0x8a] sm:$0x1]
    %883 = vst [vmem:[#allocation3 + $0x114] sm:$0x1] %v882
    %v884 = vld [vmem:[#allocation2 + $0x8b] sm:$0x1]
    %885 = vst [vmem:[#allocation3 + $0x116] sm:$0x1] %v884
    %v886 = vld [vmem:[#allocation2 + $0x8c] sm:$0x1]
    %887 = vst [vmem:[#allocation3 + $0x118] sm:$0x1] %v886
    %v888 = vld [vmem:[#allocation2 + $0x8d] sm:$0x1]
    %889 = vst [vmem:[#allocation3 + $0x11a] sm:$0x1] %v888
    %v890 = vld [vmem:[#allocation2 + $0x8e] sm:$0x1]
    %891 = vst [vmem:[#allocation3 + $0x11c] sm:$0x1] %v890
    %v892 = vld [vmem:[#allocation2 + $0x8f] sm:$0x1]
    %893 = vst [vmem:[#allocation3 + $0x11e] sm:$0x1] %v892
    %v894 = vld [vmem:[#allocation2 + $0x90] sm:$0x1]
    %895 = vst [vmem:[#allocation3 + $0x1] sm:$0x1] %v894
    %v896 = vld [vmem:[#allocation2 + $0x91] sm:$0x1]
    %897 = vst [vmem:[#allocation3 + $0x3] sm:$0x1] %v896
    %v898 = vld [vmem:[#allocation2 + $0x92] sm:$0x1]
    %899 = vst [vmem:[#allocation3 + $0x5] sm:$0x1] %v898
    %v900 = vld [vmem:[#allocation2 + $0x93] sm:$0x1]
    %901 = vst [vmem:[#allocation3 + $0x7] sm:$0x1] %v900
    %v902 = vld [vmem:[#allocation2 + $0x94] sm:$0x1]
    %903 = vst [vmem:[#allocation3 + $0x9] sm:$0x1] %v902
    %v904 = vld [vmem:[#allocation2 + $0x95] sm:$0x1]
    %905 = vst [vmem:[#allocation3 + $0xb] sm:$0x1] %v904
    %v906 = vld [vmem:[#allocation2 + $0x96] sm:$0x1]
    %907 = vst [vmem:[#allocation3 + $0xd] sm:$0x1] %v906
    %v908 = vld [vmem:[#allocation2 + $0x97] sm:$0x1]
    %909 = vst [vmem:[#allocation3 + $0xf] sm:$0x1] %v908
    %v910 = vld [vmem:[#allocation2 + $0x98] sm:$0x1]
    %911 = vst [vmem:[#allocation3 + $0x11] sm:$0x1] %v910
    %v912 = vld [vmem:[#allocation2 + $0x99] sm:$0x1]
    %913 = vst [vmem:[#allocation3 + $0x13] sm:$0x1] %v912
    %v914 = vld [vmem:[#allocation2 + $0x9a] sm:$0x1]
    %915 = vst [vmem:[#allocation3 + $0x15] sm:$0x1] %v914
    %v916 = vld [vmem:[#allocation2 + $0x9b] sm:$0x1]
    %917 = vst [vmem:[#allocation3 + $0x17] sm:$0x1] %v916
    %v918 = vld [vmem:[#allocation2 + $0x9c] sm:$0x1]
    %919 = vst [vmem:[#allocation3 + $0x19] sm:$0x1] %v918
    %v920 = vld [vmem:[#allocation2 + $0x9d] sm:$0x1]
    %921 = vst [vmem:[#allocation3 + $0x1b] sm:$0x1] %v920
    %v922 = vld [vmem:[#allocation2 + $0x9e] sm:$0x1]
    %923 = vst [vmem:[#allocation3 + $0x1d] sm:$0x1] %v922
    %v924 = vld [vmem:[#allocation2 + $0x9f] sm:$0x1]
    %925 = vst [vmem:[#allocation3 + $0x1f] sm:$0x1] %v924
    %v926 = vld [vmem:[#allocation2 + $0xa0] sm:$0x1]
    %927 = vst [vmem:[#allocation3 + $0x21] sm:$0x1] %v926
    %v928 = vld [vmem:[#allocation2 + $0xa1] sm:$0x1]
    %929 = vst [vmem:[#allocation3 + $0x23] sm:$0x1] %v928
    %v930 = vld [vmem:[#allocation2 + $0xa2] sm:$0x1]
    %931 = vst [vmem:[#allocation3 + $0x25] sm:$0x1] %v930
    %v932 = vld [vmem:[#allocation2 + $0xa3] sm:$0x1]
    %933 = vst [vmem:[#allocation3 + $0x27] sm:$0x1] %v932
    %v934 = vld [vmem:[#allocation2 + $0xa4] sm:$0x1]
    %935 = vst [vmem:[#allocation3 + $0x29] sm:$0x1] %v934
    %v936 = vld [vmem:[#allocation2 + $0xa5] sm:$0x1]
    %937 = vst [vmem:[#allocation3 + $0x2b] sm:$0x1] %v936
    %v938 = vld [vmem:[#allocation2 + $0xa6] sm:$0x1]
    %939 = vst [vmem:[#allocation3 + $0x2d] sm:$0x1] %v938
    %v940 = vld [vmem:[#allocation2 + $0xa7] sm:$0x1]
    %941 = vst [vmem:[#allocation3 + $0x2f] sm:$0x1] %v940
    %v942 = vld [vmem:[#allocation2 + $0xa8] sm:$0x1]
    %943 = vst [vmem:[#allocation3 + $0x31] sm:$0x1] %v942
    %v944 = vld [vmem:[#allocation2 + $0xa9] sm:$0x1]
    %945 = vst [vmem:[#allocation3 + $0x33] sm:$0x1] %v944
    %v946 = vld [vmem:[#allocation2 + $0xaa] sm:$0x1]
    %947 = vst [vmem:[#allocation3 + $0x35] sm:$0x1] %v946
    %v948 = vld [vmem:[#allocation2 + $0xab] sm:$0x1]
    %949 = vst [vmem:[#allocation3 + $0x37] sm:$0x1] %v948
    %v950 = vld [vmem:[#allocation2 + $0xac] sm:$0x1]
    %951 = vst [vmem:[#allocation3 + $0x39] sm:$0x1] %v950
    %v952 = vld [vmem:[#allocation2 + $0xad] sm:$0x1]
    %953 = vst [vmem:[#allocation3 + $0x3b] sm:$0x1] %v952
    %v954 = vld [vmem:[#allocation2 + $0xae] sm:$0x1]
    %955 = vst [vmem:[#allocation3 + $0x3d] sm:$0x1] %v954
    %v956 = vld [vmem:[#allocation2 + $0xaf] sm:$0x1]
    %957 = vst [vmem:[#allocation3 + $0x3f] sm:$0x1] %v956
    %v958 = vld [vmem:[#allocation2 + $0xb0] sm:$0x1]
    %959 = vst [vmem:[#allocation3 + $0x41] sm:$0x1] %v958
    %v960 = vld [vmem:[#allocation2 + $0xb1] sm:$0x1]
    %961 = vst [vmem:[#allocation3 + $0x43] sm:$0x1] %v960
    %v962 = vld [vmem:[#allocation2 + $0xb2] sm:$0x1]
    %963 = vst [vmem:[#allocation3 + $0x45] sm:$0x1] %v962
    %v964 = vld [vmem:[#allocation2 + $0xb3] sm:$0x1]
    %965 = vst [vmem:[#allocation3 + $0x47] sm:$0x1] %v964
    %v966 = vld [vmem:[#allocation2 + $0xb4] sm:$0x1]
    %967 = vst [vmem:[#allocation3 + $0x49] sm:$0x1] %v966
    %v968 = vld [vmem:[#allocation2 + $0xb5] sm:$0x1]
    %969 = vst [vmem:[#allocation3 + $0x4b] sm:$0x1] %v968
    %v970 = vld [vmem:[#allocation2 + $0xb6] sm:$0x1]
    %971 = vst [vmem:[#allocation3 + $0x4d] sm:$0x1] %v970
    %v972 = vld [vmem:[#allocation2 + $0xb7] sm:$0x1]
    %973 = vst [vmem:[#allocation3 + $0x4f] sm:$0x1] %v972
    %v974 = vld [vmem:[#allocation2 + $0xb8] sm:$0x1]
    %975 = vst [vmem:[#allocation3 + $0x51] sm:$0x1] %v974
    %v976 = vld [vmem:[#allocation2 + $0xb9] sm:$0x1]
    %977 = vst [vmem:[#allocation3 + $0x53] sm:$0x1] %v976
    %v978 = vld [vmem:[#allocation2 + $0xba] sm:$0x1]
    %979 = vst [vmem:[#allocation3 + $0x55] sm:$0x1] %v978
    %v980 = vld [vmem:[#allocation2 + $0xbb] sm:$0x1]
    %981 = vst [vmem:[#allocation3 + $0x57] sm:$0x1] %v980
    %v982 = vld [vmem:[#allocation2 + $0xbc] sm:$0x1]
    %983 = vst [vmem:[#allocation3 + $0x59] sm:$0x1] %v982
    %v984 = vld [vmem:[#allocation2 + $0xbd] sm:$0x1]
    %985 = vst [vmem:[#allocation3 + $0x5b] sm:$0x1] %v984
    %v986 = vld [vmem:[#allocation2 + $0xbe] sm:$0x1]
    %987 = vst [vmem:[#allocation3 + $0x5d] sm:$0x1] %v986
    %v988 = vld [vmem:[#allocation2 + $0xbf] sm:$0x1]
    %989 = vst [vmem:[#allocation3 + $0x5f] sm:$0x1] %v988
    %v990 = vld [vmem:[#allocation2 + $0xc0] sm:$0x1]
    %991 = vst [vmem:[#allocation3 + $0x61] sm:$0x1] %v990
    %v992 = vld [vmem:[#allocation2 + $0xc1] sm:$0x1]
    %993 = vst [vmem:[#allocation3 + $0x63] sm:$0x1] %v992
    %v994 = vld [vmem:[#allocation2 + $0xc2] sm:$0x1]
    %995 = vst [vmem:[#allocation3 + $0x65] sm:$0x1] %v994
    %v996 = vld [vmem:[#allocation2 + $0xc3] sm:$0x1]
    %997 = vst [vmem:[#allocation3 + $0x67] sm:$0x1] %v996
    %v998 = vld [vmem:[#allocation2 + $0xc4] sm:$0x1]
    %999 = vst [vmem:[#allocation3 + $0x69] sm:$0x1] %v998
    %v1000 = vld [vmem:[#allocation2 + $0xc5] sm:$0x1]
    %1001 = vst [vmem:[#allocation3 + $0x6b] sm:$0x1] %v1000
    %v1002 = vld [vmem:[#allocation2 + $0xc6] sm:$0x1]
    %1003 = vst [vmem:[#allocation3 + $0x6d] sm:$0x1] %v1002
    %v1004 = vld [vmem:[#allocation2 + $0xc7] sm:$0x1]
    %1005 = vst [vmem:[#allocation3 + $0x6f] sm:$0x1] %v1004
    %v1006 = vld [vmem:[#allocation2 + $0xc8] sm:$0x1]
    %1007 = vst [vmem:[#allocation3 + $0x71] sm:$0x1] %v1006
    %v1008 = vld [vmem:[#allocation2 + $0xc9] sm:$0x1]
    %1009 = vst [vmem:[#allocation3 + $0x73] sm:$0x1] %v1008
    %v1010 = vld [vmem:[#allocation2 + $0xca] sm:$0x1]
    %1011 = vst [vmem:[#allocation3 + $0x75] sm:$0x1] %v1010
    %v1012 = vld [vmem:[#allocation2 + $0xcb] sm:$0x1]
    %1013 = vst [vmem:[#allocation3 + $0x77] sm:$0x1] %v1012
    %v1014 = vld [vmem:[#allocation2 + $0xcc] sm:$0x1]
    %1015 = vst [vmem:[#allocation3 + $0x79] sm:$0x1] %v1014
    %v1016 = vld [vmem:[#allocation2 + $0xcd] sm:$0x1]
    %1017 = vst [vmem:[#allocation3 + $0x7b] sm:$0x1] %v1016
    %v1018 = vld [vmem:[#allocation2 + $0xce] sm:$0x1]
    %1019 = vst [vmem:[#allocation3 + $0x7d] sm:$0x1] %v1018
    %v1020 = vld [vmem:[#allocation2 + $0xcf] sm:$0x1]
    %1021 = vst [vmem:[#allocation3 + $0x7f] sm:$0x1] %v1020
    %v1022 = vld [vmem:[#allocation2 + $0xd0] sm:$0x1]
    %1023 = vst [vmem:[#allocation3 + $0x81] sm:$0x1] %v1022
    %v1024 = vld [vmem:[#allocation2 + $0xd1] sm:$0x1]
    %1025 = vst [vmem:[#allocation3 + $0x83] sm:$0x1] %v1024
    %v1026 = vld [vmem:[#allocation2 + $0xd2] sm:$0x1]
    %1027 = vst [vmem:[#allocation3 + $0x85] sm:$0x1] %v1026
    %v1028 = vld [vmem:[#allocation2 + $0xd3] sm:$0x1]
    %1029 = vst [vmem:[#allocation3 + $0x87] sm:$0x1] %v1028
    %v1030 = vld [vmem:[#allocation2 + $0xd4] sm:$0x1]
    %1031 = vst [vmem:[#allocation3 + $0x89] sm:$0x1] %v1030
    %v1032 = vld [vmem:[#allocation2 + $0xd5] sm:$0x1]
    %1033 = vst [vmem:[#allocation3 + $0x8b] sm:$0x1] %v1032
    %v1034 = vld [vmem:[#allocation2 + $0xd6] sm:$0x1]
    %1035 = vst [vmem:[#allocation3 + $0x8d] sm:$0x1] %v1034
    %v1036 = vld [vmem:[#allocation2 + $0xd7] sm:$0x1]
    %1037 = vst [vmem:[#allocation3 + $0x8f] sm:$0x1] %v1036
    %v1038 = vld [vmem:[#allocation2 + $0xd8] sm:$0x1]
    %1039 = vst [vmem:[#allocation3 + $0x91] sm:$0x1] %v1038
    %v1040 = vld [vmem:[#allocation2 + $0xd9] sm:$0x1]
    %1041 = vst [vmem:[#allocation3 + $0x93] sm:$0x1] %v1040
    %v1042 = vld [vmem:[#allocation2 + $0xda] sm:$0x1]
    %1043 = vst [vmem:[#allocation3 + $0x95] sm:$0x1] %v1042
    %v1044 = vld [vmem:[#allocation2 + $0xdb] sm:$0x1]
    %1045 = vst [vmem:[#allocation3 + $0x97] sm:$0x1] %v1044
    %v1046 = vld [vmem:[#allocation2 + $0xdc] sm:$0x1]
    %1047 = vst [vmem:[#allocation3 + $0x99] sm:$0x1] %v1046
    %v1048 = vld [vmem:[#allocation2 + $0xdd] sm:$0x1]
    %1049 = vst [vmem:[#allocation3 + $0x9b] sm:$0x1] %v1048
    %v1050 = vld [vmem:[#allocation2 + $0xde] sm:$0x1]
    %1051 = vst [vmem:[#allocation3 + $0x9d] sm:$0x1] %v1050
    %v1052 = vld [vmem:[#allocation2 + $0xdf] sm:$0x1]
    %1053 = vst [vmem:[#allocation3 + $0x9f] sm:$0x1] %v1052
    %v1054 = vld [vmem:[#allocation2 + $0xe0] sm:$0x1]
    %1055 = vst [vmem:[#allocation3 + $0xa1] sm:$0x1] %v1054
    %v1056 = vld [vmem:[#allocation2 + $0xe1] sm:$0x1]
    %1057 = vst [vmem:[#allocation3 + $0xa3] sm:$0x1] %v1056
    %v1058 = vld [vmem:[#allocation2 + $0xe2] sm:$0x1]
    %1059 = vst [vmem:[#allocation3 + $0xa5] sm:$0x1] %v1058
    %v1060 = vld [vmem:[#allocation2 + $0xe3] sm:$0x1]
    %1061 = vst [vmem:[#allocation3 + $0xa7] sm:$0x1] %v1060
    %v1062 = vld [vmem:[#allocation2 + $0xe4] sm:$0x1]
    %1063 = vst [vmem:[#allocation3 + $0xa9] sm:$0x1] %v1062
    %v1064 = vld [vmem:[#allocation2 + $0xe5] sm:$0x1]
    %1065 = vst [vmem:[#allocation3 + $0xab] sm:$0x1] %v1064
    %v1066 = vld [vmem:[#allocation2 + $0xe6] sm:$0x1]
    %1067 = vst [vmem:[#allocation3 + $0xad] sm:$0x1] %v1066
    %v1068 = vld [vmem:[#allocation2 + $0xe7] sm:$0x1]
    %1069 = vst [vmem:[#allocation3 + $0xaf] sm:$0x1] %v1068
    %v1070 = vld [vmem:[#allocation2 + $0xe8] sm:$0x1]
    %1071 = vst [vmem:[#allocation3 + $0xb1] sm:$0x1] %v1070
    %v1072 = vld [vmem:[#allocation2 + $0xe9] sm:$0x1]
    %1073 = vst [vmem:[#allocation3 + $0xb3] sm:$0x1] %v1072
    %v1074 = vld [vmem:[#allocation2 + $0xea] sm:$0x1]
    %1075 = vst [vmem:[#allocation3 + $0xb5] sm:$0x1] %v1074
    %v1076 = vld [vmem:[#allocation2 + $0xeb] sm:$0x1]
    %1077 = vst [vmem:[#allocation3 + $0xb7] sm:$0x1] %v1076
    %v1078 = vld [vmem:[#allocation2 + $0xec] sm:$0x1]
    %1079 = vst [vmem:[#allocation3 + $0xb9] sm:$0x1] %v1078
    %v1080 = vld [vmem:[#allocation2 + $0xed] sm:$0x1]
    %1081 = vst [vmem:[#allocation3 + $0xbb] sm:$0x1] %v1080
    %v1082 = vld [vmem:[#allocation2 + $0xee] sm:$0x1]
    %1083 = vst [vmem:[#allocation3 + $0xbd] sm:$0x1] %v1082
    %v1084 = vld [vmem:[#allocation2 + $0xef] sm:$0x1]
    %1085 = vst [vmem:[#allocation3 + $0xbf] sm:$0x1] %v1084
    %v1086 = vld [vmem:[#allocation2 + $0xf0] sm:$0x1]
    %1087 = vst [vmem:[#allocation3 + $0xc1] sm:$0x1] %v1086
    %v1088 = vld [vmem:[#allocation2 + $0xf1] sm:$0x1]
    %1089 = vst [vmem:[#allocation3 + $0xc3] sm:$0x1] %v1088
    %v1090 = vld [vmem:[#allocation2 + $0xf2] sm:$0x1]
    %1091 = vst [vmem:[#allocation3 + $0xc5] sm:$0x1] %v1090
    %v1092 = vld [vmem:[#allocation2 + $0xf3] sm:$0x1]
    %1093 = vst [vmem:[#allocation3 + $0xc7] sm:$0x1] %v1092
    %v1094 = vld [vmem:[#allocation2 + $0xf4] sm:$0x1]
    %1095 = vst [vmem:[#allocation3 + $0xc9] sm:$0x1] %v1094
    %v1096 = vld [vmem:[#allocation2 + $0xf5] sm:$0x1]
    %1097 = vst [vmem:[#allocation3 + $0xcb] sm:$0x1] %v1096
    %v1098 = vld [vmem:[#allocation2 + $0xf6] sm:$0x1]
    %1099 = vst [vmem:[#allocation3 + $0xcd] sm:$0x1] %v1098
    %v1100 = vld [vmem:[#allocation2 + $0xf7] sm:$0x1]
    %1101 = vst [vmem:[#allocation3 + $0xcf] sm:$0x1] %v1100
    %v1102 = vld [vmem:[#allocation2 + $0xf8] sm:$0x1]
    %1103 = vst [vmem:[#allocation3 + $0xd1] sm:$0x1] %v1102
    %v1104 = vld [vmem:[#allocation2 + $0xf9] sm:$0x1]
    %1105 = vst [vmem:[#allocation3 + $0xd3] sm:$0x1] %v1104
    %v1106 = vld [vmem:[#allocation2 + $0xfa] sm:$0x1]
    %1107 = vst [vmem:[#allocation3 + $0xd5] sm:$0x1] %v1106
    %v1108 = vld [vmem:[#allocation2 + $0xfb] sm:$0x1]
    %1109 = vst [vmem:[#allocation3 + $0xd7] sm:$0x1] %v1108
    %v1110 = vld [vmem:[#allocation2 + $0xfc] sm:$0x1]
    %1111 = vst [vmem:[#allocation3 + $0xd9] sm:$0x1] %v1110
    %v1112 = vld [vmem:[#allocation2 + $0xfd] sm:$0x1]
    %1113 = vst [vmem:[#allocation3 + $0xdb] sm:$0x1] %v1112
    %v1114 = vld [vmem:[#allocation2 + $0xfe] sm:$0x1]
    %1115 = vst [vmem:[#allocation3 + $0xdd] sm:$0x1] %v1114
    %v1116 = vld [vmem:[#allocation2 + $0xff] sm:$0x1]
    %1117 = vst [vmem:[#allocation3 + $0xdf] sm:$0x1] %v1116
    %v1118 = vld [vmem:[#allocation2 + $0x100] sm:$0x1]
    %1119 = vst [vmem:[#allocation3 + $0xe1] sm:$0x1] %v1118
    %v1120 = vld [vmem:[#allocation2 + $0x101] sm:$0x1]
    %1121 = vst [vmem:[#allocation3 + $0xe3] sm:$0x1] %v1120
    %v1122 = vld [vmem:[#allocation2 + $0x102] sm:$0x1]
    %1123 = vst [vmem:[#allocation3 + $0xe5] sm:$0x1] %v1122
    %v1124 = vld [vmem:[#allocation2 + $0x103] sm:$0x1]
    %1125 = vst [vmem:[#allocation3 + $0xe7] sm:$0x1] %v1124
    %v1126 = vld [vmem:[#allocation2 + $0x104] sm:$0x1]
    %1127 = vst [vmem:[#allocation3 + $0xe9] sm:$0x1] %v1126
    %v1128 = vld [vmem:[#allocation2 + $0x105] sm:$0x1]
    %1129 = vst [vmem:[#allocation3 + $0xeb] sm:$0x1] %v1128
    %v1130 = vld [vmem:[#allocation2 + $0x106] sm:$0x1]
    %1131 = vst [vmem:[#allocation3 + $0xed] sm:$0x1] %v1130
    %v1132 = vld [vmem:[#allocation2 + $0x107] sm:$0x1]
    %1133 = vst [vmem:[#allocation3 + $0xef] sm:$0x1] %v1132
    %v1134 = vld [vmem:[#allocation2 + $0x108] sm:$0x1]
    %1135 = vst [vmem:[#allocation3 + $0xf1] sm:$0x1] %v1134
    %v1136 = vld [vmem:[#allocation2 + $0x109] sm:$0x1]
    %1137 = vst [vmem:[#allocation3 + $0xf3] sm:$0x1] %v1136
    %v1138 = vld [vmem:[#allocation2 + $0x10a] sm:$0x1]
    %1139 = vst [vmem:[#allocation3 + $0xf5] sm:$0x1] %v1138
    %v1140 = vld [vmem:[#allocation2 + $0x10b] sm:$0x1]
    %1141 = vst [vmem:[#allocation3 + $0xf7] sm:$0x1] %v1140
    %v1142 = vld [vmem:[#allocation2 + $0x10c] sm:$0x1]
    %1143 = vst [vmem:[#allocation3 + $0xf9] sm:$0x1] %v1142
    %v1144 = vld [vmem:[#allocation2 + $0x10d] sm:$0x1]
    %1145 = vst [vmem:[#allocation3 + $0xfb] sm:$0x1] %v1144
    %v1146 = vld [vmem:[#allocation2 + $0x10e] sm:$0x1]
    %1147 = vst [vmem:[#allocation3 + $0xfd] sm:$0x1] %v1146
    %v1148 = vld [vmem:[#allocation2 + $0x10f] sm:$0x1]
    %1149 = vst [vmem:[#allocation3 + $0xff] sm:$0x1] %v1148
    %v1150 = vld [vmem:[#allocation2 + $0x110] sm:$0x1]
    %1151 = vst [vmem:[#allocation3 + $0x101] sm:$0x1] %v1150
    %v1152 = vld [vmem:[#allocation2 + $0x111] sm:$0x1]
    %1153 = vst [vmem:[#allocation3 + $0x103] sm:$0x1] %v1152
    %v1154 = vld [vmem:[#allocation2 + $0x112] sm:$0x1]
    %1155 = vst [vmem:[#allocation3 + $0x105] sm:$0x1] %v1154
    %v1156 = vld [vmem:[#allocation2 + $0x113] sm:$0x1]
    %1157 = vst [vmem:[#allocation3 + $0x107] sm:$0x1] %v1156
    %v1158 = vld [vmem:[#allocation2 + $0x114] sm:$0x1]
    %1159 = vst [vmem:[#allocation3 + $0x109] sm:$0x1] %v1158
    %v1160 = vld [vmem:[#allocation2 + $0x115] sm:$0x1]
    %1161 = vst [vmem:[#allocation3 + $0x10b] sm:$0x1] %v1160
    %v1162 = vld [vmem:[#allocation2 + $0x116] sm:$0x1]
    %1163 = vst [vmem:[#allocation3 + $0x10d] sm:$0x1] %v1162
    %v1164 = vld [vmem:[#allocation2 + $0x117] sm:$0x1]
    %1165 = vst [vmem:[#allocation3 + $0x10f] sm:$0x1] %v1164
    %v1166 = vld [vmem:[#allocation2 + $0x118] sm:$0x1]
    %1167 = vst [vmem:[#allocation3 + $0x111] sm:$0x1] %v1166
    %v1168 = vld [vmem:[#allocation2 + $0x119] sm:$0x1]
    %1169 = vst [vmem:[#allocation3 + $0x113] sm:$0x1] %v1168
    %v1170 = vld [vmem:[#allocation2 + $0x11a] sm:$0x1]
    %1171 = vst [vmem:[#allocation3 + $0x115] sm:$0x1] %v1170
    %v1172 = vld [vmem:[#allocation2 + $0x11b] sm:$0x1]
    %1173 = vst [vmem:[#allocation3 + $0x117] sm:$0x1] %v1172
    %v1174 = vld [vmem:[#allocation2 + $0x11c] sm:$0x1]
    %1175 = vst [vmem:[#allocation3 + $0x119] sm:$0x1] %v1174
    %v1176 = vld [vmem:[#allocation2 + $0x11d] sm:$0x1]
    %1177 = vst [vmem:[#allocation3 + $0x11b] sm:$0x1] %v1176
    %v1178 = vld [vmem:[#allocation2 + $0x11e] sm:$0x1]
    %1179 = vst [vmem:[#allocation3 + $0x11d] sm:$0x1] %v1178
    %v1180 = vld [vmem:[#allocation2 + $0x11f] sm:$0x1]
    %1181 = vst [vmem:[#allocation3 + $0x11f] sm:$0x1] %v1180
    %v1182 = vld [vmem:[#allocation3] sm:$0xff]
    %v1183 = vld [vmem:[#allocation3 + $0x8] sm:$0xff]
    %v1184 = vld [vmem:[#allocation3 + $0x10] sm:$0xff]
    %v1185 = vld [vmem:[#allocation3 + $0x18] sm:$0xff]
    %v1186 = vld [vmem:[#allocation3 + $0x20] sm:$0xff]
    %v1187 = vld [vmem:[#allocation3 + $0x28] sm:$0xff]
    %v1188 = vld [vmem:[#allocation3 + $0x30] sm:$0xff]
    %v1189 = vld [vmem:[#allocation3 + $0x38] sm:$0xff]
    %v1190 = vld [vmem:[#allocation3 + $0x40] sm:$0xff]
    %v1191 = vld [vmem:[#allocation3 + $0x48] sm:$0xff]
    %v1192 = vld [vmem:[#allocation3 + $0x50] sm:$0xff]
    %v1193 = vld [vmem:[#allocation3 + $0x58] sm:$0xff]
    %v1194 = vld [vmem:[#allocation3 + $0x60] sm:$0xff]
    %v1195 = vld [vmem:[#allocation3 + $0x68] sm:$0xff]
    %v1196 = vld [vmem:[#allocation3 + $0x70] sm:$0xff]
    %v1197 = vld [vmem:[#allocation3 + $0x78] sm:$0xff]
    %v1198 = vld [vmem:[#allocation3 + $0x80] sm:$0xff]
    %v1199 = vld [vmem:[#allocation3 + $0x88] sm:$0xff]
    %v1200 = vld [vmem:[#allocation3 + $0x90] sm:$0xff]
    %v1201 = vld [vmem:[#allocation3 + $0x98] sm:$0xff]
    %v1202 = vld [vmem:[#allocation3 + $0xa0] sm:$0xff]
    %v1203 = vld [vmem:[#allocation3 + $0xa8] sm:$0xff]
    %v1204 = vld [vmem:[#allocation3 + $0xb0] sm:$0xff]
    %v1205 = vld [vmem:[#allocation3 + $0xb8] sm:$0xff]
    %v1206 = vld [vmem:[#allocation3 + $0xc0] sm:$0xff]
    %v1207 = vld [vmem:[#allocation3 + $0xc8] sm:$0xff]
    %v1208 = vld [vmem:[#allocation3 + $0xd0] sm:$0xff]
    %v1209 = vld [vmem:[#allocation3 + $0xd8] sm:$0xff]
    %v1210 = vld [vmem:[#allocation3 + $0xe0] sm:$0xff]
    %v1211 = vld [vmem:[#allocation3 + $0xe8] sm:$0xff]
    %v1212 = vld [vmem:[#allocation3 + $0xf0] sm:$0xff]
    %v1213 = vld [vmem:[#allocation3 + $0xf8] sm:$0xff]
    %v1214 = vld [vmem:[#allocation3 + $0x100] sm:$0xff]
    %v1215 = vld [vmem:[#allocation3 + $0x108] sm:$0xff]
    %v1216 = vld [vmem:[#allocation3 + $0x110] sm:$0xff]
    %v1217 = vld [vmem:[#allocation3 + $0x118] sm:$0xff]
    %v1218 = vld [vmem:[%s5] sm:$0xff]
    %v1219 = vld [vmem:[%s5 + $0x8] sm:$0xff]
    %v1220 = vld [vmem:[%s5 + $0x10] sm:$0xff]
    %v1221 = vld [vmem:[%s5 + $0x18] sm:$0xff]
    %v1222 = vld [vmem:[%s5 + $0x20] sm:$0xff]
    %v1223 = vld [vmem:[%s5 + $0x28] sm:$0xff]
    %v1224 = vld [vmem:[%s5 + $0x30] sm:$0xff]
    %v1225 = vld [vmem:[%s5 + $0x38] sm:$0xff]
    %v1226 = vld [vmem:[%s5 + $0x40] sm:$0xff]
    %v1227 = vld [vmem:[%s5 + $0x48] sm:$0xff]
    %v1228 = vld [vmem:[%s5 + $0x50] sm:$0xff]
    %v1229 = vld [vmem:[%s5 + $0x58] sm:$0xff]
    %v1230 = vld [vmem:[%s5 + $0x60] sm:$0xff]
    %v1231 = vld [vmem:[%s5 + $0x68] sm:$0xff]
    %v1232 = vld [vmem:[%s5 + $0x70] sm:$0xff]
    %v1233 = vld [vmem:[%s5 + $0x78] sm:$0xff]
    %v1234 = vld [vmem:[%s5 + $0x80] sm:$0xff]
    %v1235 = vld [vmem:[%s5 + $0x88] sm:$0xff]
    %v1236 = vld [vmem:[%s5 + $0x90] sm:$0xff]
    %v1237 = vld [vmem:[%s5 + $0x98] sm:$0xff]
    %v1238 = vld [vmem:[%s5 + $0xa0] sm:$0xff]
    %v1239 = vld [vmem:[%s5 + $0xa8] sm:$0xff]
    %v1240 = vld [vmem:[%s5 + $0xb0] sm:$0xff]
    %v1241 = vld [vmem:[%s5 + $0xb8] sm:$0xff]
    %v1242 = vld [vmem:[%s5 + $0xc0] sm:$0xff]
    %v1243 = vld [vmem:[%s5 + $0xc8] sm:$0xff]
    %v1244 = vld [vmem:[%s5 + $0xd0] sm:$0xff]
    %v1245 = vld [vmem:[%s5 + $0xd8] sm:$0xff]
    %v1246 = vld [vmem:[%s5 + $0xe0] sm:$0xff]
    %v1247 = vld [vmem:[%s5 + $0xe8] sm:$0xff]
    %v1248 = vld [vmem:[%s5 + $0xf0] sm:$0xff]
    %v1249 = vld [vmem:[%s5 + $0xf8] sm:$0xff]
    %v1250 = vld [vmem:[%s5 + $0x100] sm:$0xff]
    %v1251 = vld [vmem:[%s5 + $0x108] sm:$0xff]
    %v1252 = vld [vmem:[%s5 + $0x110] sm:$0xff]
    %v1253 = vld [vmem:[%s5 + $0x118] sm:$0xff]
    %v1254 = vld [vmem:[%s5 + $0x120] sm:$0xff]
    %v1255 = vld [vmem:[%s5 + $0x128] sm:$0xff]
    %v1256 = vld [vmem:[%s5 + $0x130] sm:$0xff]
    %v1257 = vld [vmem:[%s5 + $0x138] sm:$0xff]
    %v1258 = vld [vmem:[%s5 + $0x140] sm:$0xff]
    %v1259 = vld [vmem:[%s5 + $0x148] sm:$0xff]
    %v1260 = vld [vmem:[%s5 + $0x150] sm:$0xff]
    %v1261 = vld [vmem:[%s5 + $0x158] sm:$0xff]
    %v1262 = vld [vmem:[%s5 + $0x160] sm:$0xff]
    %v1263 = vld [vmem:[%s5 + $0x168] sm:$0xff]
    %v1264 = vld [vmem:[%s5 + $0x170] sm:$0xff]
    %v1265 = vld [vmem:[%s5 + $0x178] sm:$0xff]
    %v1266 = vld [vmem:[%s5 + $0x180] sm:$0xff]
    %v1267 = vld [vmem:[%s5 + $0x188] sm:$0xff]
    %v1268 = vld [vmem:[%s5 + $0x190] sm:$0xff]
    %v1269 = vld [vmem:[%s5 + $0x198] sm:$0xff]
    %v1270 = vld [vmem:[%s5 + $0x1a0] sm:$0xff]
    %v1271 = vld [vmem:[%s5 + $0x1a8] sm:$0xff]
    %v1272 = vld [vmem:[%s5 + $0x1b0] sm:$0xff]
    %v1273 = vld [vmem:[%s5 + $0x1b8] sm:$0xff]
    %v1274 = vld [vmem:[%s5 + $0x1c0] sm:$0xff]
    %v1275 = vld [vmem:[%s5 + $0x1c8] sm:$0xff]
    %v1276 = vld [vmem:[%s5 + $0x1d0] sm:$0xff]
    %v1277 = vld [vmem:[%s5 + $0x1d8] sm:$0xff]
    %v1278 = vld [vmem:[%s5 + $0x1e0] sm:$0xff]
    %v1279 = vld [vmem:[%s5 + $0x1e8] sm:$0xff]
    %v1280 = vld [vmem:[%s5 + $0x1f0] sm:$0xff]
    %v1281 = vld [vmem:[%s5 + $0x1f8] sm:$0xff]
    %v1282 = vld [vmem:[%s5 + $0x200] sm:$0xff]
    %v1283 = vld [vmem:[%s5 + $0x208] sm:$0xff]
    %v1284 = vld [vmem:[%s5 + $0x210] sm:$0xff]
    %v1285 = vld [vmem:[%s5 + $0x218] sm:$0xff]
    %v1286 = vld [vmem:[%s5 + $0x220] sm:$0xff]
    %v1287 = vld [vmem:[%s5 + $0x228] sm:$0xff]
    %v1288 = vld [vmem:[%s5 + $0x230] sm:$0xff]
    %v1289 = vld [vmem:[%s5 + $0x238] sm:$0xff]
    %v1290 = vld [vmem:[%s5 + $0x240] sm:$0xff]
    %v1291 = vld [vmem:[%s5 + $0x248] sm:$0xff]
    %v1292 = vld [vmem:[%s5 + $0x250] sm:$0xff]
    %v1293 = vld [vmem:[%s5 + $0x258] sm:$0xff]
    %v1294 = vld [vmem:[%s5 + $0x260] sm:$0xff]
    %v1295 = vld [vmem:[%s5 + $0x268] sm:$0xff]
    %v1296 = vld [vmem:[%s5 + $0x270] sm:$0xff]
    %v1297 = vld [vmem:[%s5 + $0x278] sm:$0xff]
    %v1298 = vld [vmem:[%s5 + $0x280] sm:$0xff]
    %v1299 = vld [vmem:[%s5 + $0x288] sm:$0xff]
    %v1300 = vld [vmem:[%s5 + $0x290] sm:$0xff]
    %v1301 = vld [vmem:[%s5 + $0x298] sm:$0xff]
    %v1302 = vld [vmem:[%s5 + $0x2a0] sm:$0xff]
    %v1303 = vld [vmem:[%s5 + $0x2a8] sm:$0xff]
    %v1304 = vld [vmem:[%s5 + $0x2b0] sm:$0xff]
    %v1305 = vld [vmem:[%s5 + $0x2b8] sm:$0xff]
    %v1306 = vld [vmem:[%s5 + $0x2c0] sm:$0xff]
    %v1307 = vld [vmem:[%s5 + $0x2c8] sm:$0xff]
    %v1308 = vld [vmem:[%s5 + $0x2d0] sm:$0xff]
    %v1309 = vld [vmem:[%s5 + $0x2d8] sm:$0xff]
    %v1310 = vld [vmem:[%s5 + $0x2e0] sm:$0xff]
    %v1311 = vld [vmem:[%s5 + $0x2e8] sm:$0xff]
    %v1312 = vld [vmem:[%s5 + $0x2f0] sm:$0xff]
    %v1313 = vld [vmem:[%s5 + $0x2f8] sm:$0xff]
    %v1314 = vld [vmem:[%s5 + $0x300] sm:$0xff]
    %v1315 = vld [vmem:[%s5 + $0x308] sm:$0xff]
    %v1316 = vld [vmem:[%s5 + $0x310] sm:$0xff]
    %v1317 = vld [vmem:[%s5 + $0x318] sm:$0xff]
    %v1318 = vld [vmem:[%s5 + $0x320] sm:$0xff]
    %v1319 = vld [vmem:[%s5 + $0x328] sm:$0xff]
    %v1320 = vld [vmem:[%s5 + $0x330] sm:$0xff]
    %v1321 = vld [vmem:[%s5 + $0x338] sm:$0xff]
    %v1322 = vld [vmem:[%s5 + $0x340] sm:$0xff]
    %v1323 = vld [vmem:[%s5 + $0x348] sm:$0xff]
    %v1324 = vld [vmem:[%s5 + $0x350] sm:$0xff]
    %v1325 = vld [vmem:[%s5 + $0x358] sm:$0xff]
    %v1326 = vld [vmem:[%s5 + $0x360] sm:$0xff]
    %v1327 = vld [vmem:[%s5 + $0x368] sm:$0xff]
    %v1328 = vld [vmem:[%s5 + $0x370] sm:$0xff]
    %v1329 = vld [vmem:[%s5 + $0x378] sm:$0xff]
    %v1330 = vld [vmem:[%s5 + $0x380] sm:$0xff]
    %v1331 = vld [vmem:[%s5 + $0x388] sm:$0xff]
    %v1332 = vld [vmem:[%s5 + $0x390] sm:$0xff]
    %v1333 = vld [vmem:[%s5 + $0x398] sm:$0xff]
    %v1334 = vld [vmem:[%s5 + $0x3a0] sm:$0xff]
    %v1335 = vld [vmem:[%s5 + $0x3a8] sm:$0xff]
    %v1336 = vld [vmem:[%s5 + $0x3b0] sm:$0xff]
    %v1337 = vld [vmem:[%s5 + $0x3b8] sm:$0xff]
    %v1338 = vld [vmem:[%s5 + $0x3c0] sm:$0xff]
    %v1339 = vld [vmem:[%s5 + $0x3c8] sm:$0xff]
    %v1340 = vld [vmem:[%s5 + $0x3d0] sm:$0xff]
    %v1341 = vld [vmem:[%s5 + $0x3d8] sm:$0xff]
    %v1342 = vld [vmem:[%s5 + $0x3e0] sm:$0xff]
    %v1343 = vld [vmem:[%s5 + $0x3e8] sm:$0xff]
    %v1344 = vld [vmem:[%s5 + $0x3f0] sm:$0xff]
    %v1345 = vld [vmem:[%s5 + $0x3f8] sm:$0xff]
    %v1346 = vld [vmem:[%s5 + $0x400] sm:$0xff]
    %v1347 = vld [vmem:[%s5 + $0x408] sm:$0xff]
    %v1348 = vld [vmem:[%s5 + $0x410] sm:$0xff]
    %v1349 = vld [vmem:[%s5 + $0x418] sm:$0xff]
    %v1350 = vld [vmem:[%s5 + $0x420] sm:$0xff]
    %v1351 = vld [vmem:[%s5 + $0x428] sm:$0xff]
    %v1352 = vld [vmem:[%s5 + $0x430] sm:$0xff]
    %v1353 = vld [vmem:[%s5 + $0x438] sm:$0xff]
    %v1354 = vld [vmem:[%s5 + $0x440] sm:$0xff]
    %v1355 = vld [vmem:[%s5 + $0x448] sm:$0xff]
    %v1356 = vld [vmem:[%s5 + $0x450] sm:$0xff]
    %v1357 = vld [vmem:[%s5 + $0x458] sm:$0xff]
    %v1358 = vld [vmem:[%s5 + $0x460] sm:$0xff]
    %v1359 = vld [vmem:[%s5 + $0x468] sm:$0xff]
    %v1360 = vld [vmem:[%s5 + $0x470] sm:$0xff]
    %v1361 = vld [vmem:[%s5 + $0x478] sm:$0xff]
    %v1362 = vld [vmem:[%s5 + $0x480] sm:$0xff]
    %v1363 = vld [vmem:[%s5 + $0x488] sm:$0xff]
    %v1364 = vld [vmem:[%s5 + $0x490] sm:$0xff]
    %v1365 = vld [vmem:[%s5 + $0x498] sm:$0xff]
    %v1366 = vld [vmem:[%s5 + $0x4a0] sm:$0xff]
    %v1367 = vld [vmem:[%s5 + $0x4a8] sm:$0xff]
    %v1368 = vld [vmem:[%s5 + $0x4b0] sm:$0xff]
    %v1369 = vld [vmem:[%s5 + $0x4b8] sm:$0xff]
    %v1370 = vld [vmem:[%s5 + $0x4c0] sm:$0xff]
    %v1371 = vld [vmem:[%s5 + $0x4c8] sm:$0xff]
    %v1372 = vld [vmem:[%s5 + $0x4d0] sm:$0xff]
    %v1373 = vld [vmem:[%s5 + $0x4d8] sm:$0xff]
    %v1374 = vld [vmem:[%s5 + $0x4e0] sm:$0xff]
    %v1375 = vld [vmem:[%s5 + $0x4e8] sm:$0xff]
    %v1376 = vld [vmem:[%s5 + $0x4f0] sm:$0xff]
    %v1377 = vld [vmem:[%s5 + $0x4f8] sm:$0xff]
    %v1378 = vld [vmem:[%s5 + $0x500] sm:$0xff]
    %v1379 = vld [vmem:[%s5 + $0x508] sm:$0xff]
    %v1380 = vld [vmem:[%s5 + $0x510] sm:$0xff]
    %v1381 = vld [vmem:[%s5 + $0x518] sm:$0xff]
    %v1382 = vld [vmem:[%s5 + $0x520] sm:$0xff]
    %v1383 = vld [vmem:[%s5 + $0x528] sm:$0xff]
    %v1384 = vld [vmem:[%s5 + $0x530] sm:$0xff]
    %v1385 = vld [vmem:[%s5 + $0x538] sm:$0xff]
    %v1386 = vld [vmem:[%s5 + $0x540] sm:$0xff]
    %v1387 = vld [vmem:[%s5 + $0x548] sm:$0xff]
    %v1388 = vld [vmem:[%s5 + $0x550] sm:$0xff]
    %v1389 = vld [vmem:[%s5 + $0x558] sm:$0xff]
    %v1390 = vld [vmem:[%s5 + $0x560] sm:$0xff]
    %v1391 = vld [vmem:[%s5 + $0x568] sm:$0xff]
    %v1392 = vld [vmem:[%s5 + $0x570] sm:$0xff]
    %v1393 = vld [vmem:[%s5 + $0x578] sm:$0xff]
    %v1394 = vld [vmem:[%s5 + $0x580] sm:$0xff]
    %v1395 = vld [vmem:[%s5 + $0x588] sm:$0xff]
    %v1396 = vld [vmem:[%s5 + $0x590] sm:$0xff]
    %v1397 = vld [vmem:[%s5 + $0x598] sm:$0xff]
    %v1398 = vld [vmem:[%s5 + $0x5a0] sm:$0xff]
    %v1399 = vld [vmem:[%s5 + $0x5a8] sm:$0xff]
    %v1400 = vld [vmem:[%s5 + $0x5b0] sm:$0xff]
    %v1401 = vld [vmem:[%s5 + $0x5b8] sm:$0xff]
    %v1402 = vld [vmem:[%s5 + $0x5c0] sm:$0xff]
    %v1403 = vld [vmem:[%s5 + $0x5c8] sm:$0xff]
    %v1404 = vld [vmem:[%s5 + $0x5d0] sm:$0xff]
    %v1405 = vld [vmem:[%s5 + $0x5d8] sm:$0xff]
    %v1406 = vld [vmem:[%s5 + $0x5e0] sm:$0xff]
    %v1407 = vld [vmem:[%s5 + $0x5e8] sm:$0xff]
    %v1408 = vld [vmem:[%s5 + $0x5f0] sm:$0xff]
    %v1409 = vld [vmem:[%s5 + $0x5f8] sm:$0xff]
    %v1410 = vld [vmem:[%s5 + $0x600] sm:$0xff]
    %v1411 = vld [vmem:[%s5 + $0x608] sm:$0xff]
    %v1412 = vld [vmem:[%s5 + $0x610] sm:$0xff]
    %v1413 = vld [vmem:[%s5 + $0x618] sm:$0xff]
    %v1414 = vld [vmem:[%s5 + $0x620] sm:$0xff]
    %v1415 = vld [vmem:[%s5 + $0x628] sm:$0xff]
    %v1416 = vld [vmem:[%s5 + $0x630] sm:$0xff]
    %v1417 = vld [vmem:[%s5 + $0x638] sm:$0xff]
    %v1418 = vld [vmem:[%s5 + $0x640] sm:$0xff]
    %v1419 = vld [vmem:[%s5 + $0x648] sm:$0xff]
    %v1420 = vld [vmem:[%s5 + $0x650] sm:$0xff]
    %v1421 = vld [vmem:[%s5 + $0x658] sm:$0xff]
    %v1422 = vld [vmem:[%s5 + $0x660] sm:$0xff]
    %v1423 = vld [vmem:[%s5 + $0x668] sm:$0xff]
    %v1424 = vld [vmem:[%s5 + $0x670] sm:$0xff]
    %v1425 = vld [vmem:[%s5 + $0x678] sm:$0xff]
    %v1426 = vld [vmem:[%s5 + $0x680] sm:$0xff]
    %v1427 = vld [vmem:[%s5 + $0x688] sm:$0xff]
    %v1428 = vld [vmem:[%s5 + $0x690] sm:$0xff]
    %v1429 = vld [vmem:[%s5 + $0x698] sm:$0xff]
    %v1430 = vld [vmem:[%s5 + $0x6a0] sm:$0xff]
    %v1431 = vld [vmem:[%s5 + $0x6a8] sm:$0xff]
    %v1432 = vld [vmem:[%s5 + $0x6b0] sm:$0xff]
    %v1433 = vld [vmem:[%s5 + $0x6b8] sm:$0xff]
    %v1434 = vld [vmem:[%s5 + $0x6c0] sm:$0xff]
    %v1435 = vld [vmem:[%s5 + $0x6c8] sm:$0xff]
    %v1436 = vld [vmem:[%s5 + $0x6d0] sm:$0xff]
    %v1437 = vld [vmem:[%s5 + $0x6d8] sm:$0xff]
    %v1438 = vld [vmem:[%s5 + $0x6e0] sm:$0xff]
    %v1439 = vld [vmem:[%s5 + $0x6e8] sm:$0xff]
    %v1440 = vld [vmem:[%s5 + $0x6f0] sm:$0xff]
    %v1441 = vld [vmem:[%s5 + $0x6f8] sm:$0xff]
    %v1442 = vld [vmem:[%s5 + $0x700] sm:$0xff]
    %v1443 = vld [vmem:[%s5 + $0x708] sm:$0xff]
    %v1444 = vld [vmem:[%s5 + $0x710] sm:$0xff]
    %v1445 = vld [vmem:[%s5 + $0x718] sm:$0xff]
    %v1446 = vld [vmem:[%s5 + $0x720] sm:$0xff]
    %v1447 = vld [vmem:[%s5 + $0x728] sm:$0xff]
    %v1448 = vld [vmem:[%s5 + $0x730] sm:$0xff]
    %v1449 = vld [vmem:[%s5 + $0x738] sm:$0xff]
    %v1450 = vld [vmem:[%s5 + $0x740] sm:$0xff]
    %v1451 = vld [vmem:[%s5 + $0x748] sm:$0xff]
    %v1452 = vld [vmem:[%s5 + $0x750] sm:$0xff]
    %v1453 = vld [vmem:[%s5 + $0x758] sm:$0xff]
    %v1454 = vld [vmem:[%s5 + $0x760] sm:$0xff]
    %v1455 = vld [vmem:[%s5 + $0x768] sm:$0xff]
    %v1456 = vld [vmem:[%s5 + $0x770] sm:$0xff]
    %v1457 = vld [vmem:[%s5 + $0x778] sm:$0xff]
    %v1458 = vld [vmem:[%s5 + $0x780] sm:$0xff]
    %v1459 = vld [vmem:[%s5 + $0x788] sm:$0xff]
    %v1460 = vld [vmem:[%s5 + $0x790] sm:$0xff]
    %v1461 = vld [vmem:[%s5 + $0x798] sm:$0xff]
    %v1462 = vld [vmem:[%s5 + $0x7a0] sm:$0xff]
    %v1463 = vld [vmem:[%s5 + $0x7a8] sm:$0xff]
    %v1464 = vld [vmem:[%s5 + $0x7b0] sm:$0xff]
    %v1465 = vld [vmem:[%s5 + $0x7b8] sm:$0xff]
    %v1466 = vld [vmem:[%s5 + $0x7c0] sm:$0xff]
    %v1467 = vld [vmem:[%s5 + $0x7c8] sm:$0xff]
    %v1468 = vld [vmem:[%s5 + $0x7d0] sm:$0xff]
    %v1469 = vld [vmem:[%s5 + $0x7d8] sm:$0xff]
    %v1470 = vld [vmem:[%s5 + $0x7e0] sm:$0xff]
    %v1471 = vld [vmem:[%s5 + $0x7e8] sm:$0xff]
    %v1472 = vld [vmem:[%s5 + $0x7f0] sm:$0xff]
    %v1473 = vld [vmem:[%s5 + $0x7f8] sm:$0xff]
    %v1474 = vld [vmem:[%s5 + $0x800] sm:$0xff]
    %v1475 = vld [vmem:[%s5 + $0x808] sm:$0xff]
    %v1476 = vld [vmem:[%s5 + $0x810] sm:$0xff]
    %v1477 = vld [vmem:[%s5 + $0x818] sm:$0xff]
    %v1478 = vld [vmem:[%s5 + $0x820] sm:$0xff]
    %v1479 = vld [vmem:[%s5 + $0x828] sm:$0xff]
    %v1480 = vld [vmem:[%s5 + $0x830] sm:$0xff]
    %v1481 = vld [vmem:[%s5 + $0x838] sm:$0xff]
    %v1482 = vld [vmem:[%s5 + $0x840] sm:$0xff]
    %v1483 = vld [vmem:[%s5 + $0x848] sm:$0xff]
    %v1484 = vld [vmem:[%s5 + $0x850] sm:$0xff]
    %v1485 = vld [vmem:[%s5 + $0x858] sm:$0xff]
    %v1486 = vld [vmem:[%s5 + $0x860] sm:$0xff]
    %v1487 = vld [vmem:[%s5 + $0x868] sm:$0xff]
    %v1488 = vld [vmem:[%s5 + $0x870] sm:$0xff]
    %v1489 = vld [vmem:[%s5 + $0x878] sm:$0xff]
    %v1490 = vld [vmem:[%s5 + $0x880] sm:$0xff]
    %v1491 = vld [vmem:[%s5 + $0x888] sm:$0xff]
    %v1492 = vld [vmem:[%s5 + $0x890] sm:$0xff]
    %v1493 = vld [vmem:[%s5 + $0x898] sm:$0xff]
    %v1494 = vld [vmem:[%s5 + $0x8a0] sm:$0xff]
    %v1495 = vld [vmem:[%s5 + $0x8a8] sm:$0xff]
    %v1496 = vld [vmem:[%s5 + $0x8b0] sm:$0xff]
    %v1497 = vld [vmem:[%s5 + $0x8b8] sm:$0xff]
    %v1498 = vld [vmem:[%s5 + $0x8c0] sm:$0xff]
    %v1499 = vld [vmem:[%s5 + $0x8c8] sm:$0xff]
    %v1500 = vld [vmem:[%s5 + $0x8d0] sm:$0xff]
    %v1501 = vld [vmem:[%s5 + $0x8d8] sm:$0xff]
    %v1502 = vld [vmem:[%s5 + $0x8e0] sm:$0xff]
    %v1503 = vld [vmem:[%s5 + $0x8e8] sm:$0xff]
    %v1504 = vld [vmem:[%s5 + $0x8f0] sm:$0xff]
    %v1505 = vld [vmem:[%s5 + $0x8f8] sm:$0xff]
    %v1506 = vld [vmem:[%s5 + $0x900] sm:$0xff]
    %v1507 = vld [vmem:[%s5 + $0x908] sm:$0xff]
    %v1508 = vld [vmem:[%s5 + $0x910] sm:$0xff]
    %v1509 = vld [vmem:[%s5 + $0x918] sm:$0xff]
    %v1510 = vld [vmem:[%s5 + $0x920] sm:$0xff]
    %v1511 = vld [vmem:[%s5 + $0x928] sm:$0xff]
    %v1512 = vld [vmem:[%s5 + $0x930] sm:$0xff]
    %v1513 = vld [vmem:[%s5 + $0x938] sm:$0xff]
    %v1514 = vld [vmem:[%s5 + $0x940] sm:$0xff]
    %v1515 = vld [vmem:[%s5 + $0x948] sm:$0xff]
    %v1516 = vld [vmem:[%s5 + $0x950] sm:$0xff]
    %v1517 = vld [vmem:[%s5 + $0x958] sm:$0xff]
    %v1518 = vld [vmem:[%s5 + $0x960] sm:$0xff]
    %v1519 = vld [vmem:[%s5 + $0x968] sm:$0xff]
    %v1520 = vld [vmem:[%s5 + $0x970] sm:$0xff]
    %v1521 = vld [vmem:[%s5 + $0x978] sm:$0xff]
    %v1522 = vld [vmem:[%s5 + $0x980] sm:$0xff]
    %v1523 = vld [vmem:[%s5 + $0x988] sm:$0xff]
    %v1524 = vld [vmem:[%s5 + $0x990] sm:$0xff]
    %v1525 = vld [vmem:[%s5 + $0x998] sm:$0xff]
    %v1526 = vld [vmem:[%s5 + $0x9a0] sm:$0xff]
    %v1527 = vld [vmem:[%s5 + $0x9a8] sm:$0xff]
    %v1528 = vld [vmem:[%s5 + $0x9b0] sm:$0xff]
    %v1529 = vld [vmem:[%s5 + $0x9b8] sm:$0xff]
    %v1530 = vld [vmem:[%s5 + $0x9c0] sm:$0xff]
    %v1531 = vld [vmem:[%s5 + $0x9c8] sm:$0xff]
    %v1532 = vld [vmem:[%s5 + $0x9d0] sm:$0xff]
    %v1533 = vld [vmem:[%s5 + $0x9d8] sm:$0xff]
    %v1534 = vld [vmem:[%s5 + $0x9e0] sm:$0xff]
    %v1535 = vld [vmem:[%s5 + $0x9e8] sm:$0xff]
    %v1536 = vld [vmem:[%s5 + $0x9f0] sm:$0xff]
    %v1537 = vld [vmem:[%s5 + $0x9f8] sm:$0xff]
    %v1538 = vld [vmem:[%s5 + $0xa00] sm:$0xff]
    %v1539 = vld [vmem:[%s5 + $0xa08] sm:$0xff]
    %v1540 = vld [vmem:[%s5 + $0xa10] sm:$0xff]
    %v1541 = vld [vmem:[%s5 + $0xa18] sm:$0xff]
    %v1542 = vld [vmem:[%s5 + $0xa20] sm:$0xff]
    %v1543 = vld [vmem:[%s5 + $0xa28] sm:$0xff]
    %v1544 = vld [vmem:[%s5 + $0xa30] sm:$0xff]
    %v1545 = vld [vmem:[%s5 + $0xa38] sm:$0xff]
    %v1546 = vld [vmem:[%s5 + $0xa40] sm:$0xff]
    %v1547 = vld [vmem:[%s5 + $0xa48] sm:$0xff]
    %v1548 = vld [vmem:[%s5 + $0xa50] sm:$0xff]
    %v1549 = vld [vmem:[%s5 + $0xa58] sm:$0xff]
    %v1550 = vld [vmem:[%s5 + $0xa60] sm:$0xff]
    %v1551 = vld [vmem:[%s5 + $0xa68] sm:$0xff]
    %v1552 = vld [vmem:[%s5 + $0xa70] sm:$0xff]
    %v1553 = vld [vmem:[%s5 + $0xa78] sm:$0xff]
    %v1554 = vld [vmem:[%s5 + $0xa80] sm:$0xff]
    %v1555 = vld [vmem:[%s5 + $0xa88] sm:$0xff]
    %v1556 = vld [vmem:[%s5 + $0xa90] sm:$0xff]
    %v1557 = vld [vmem:[%s5 + $0xa98] sm:$0xff]
    %v1558 = vld [vmem:[%s5 + $0xaa0] sm:$0xff]
    %v1559 = vld [vmem:[%s5 + $0xaa8] sm:$0xff]
    %v1560 = vld [vmem:[%s5 + $0xab0] sm:$0xff]
    %v1561 = vld [vmem:[%s5 + $0xab8] sm:$0xff]
    %v1562 = vld [vmem:[%s5 + $0xac0] sm:$0xff]
    %v1563 = vld [vmem:[%s5 + $0xac8] sm:$0xff]
    %v1564 = vld [vmem:[%s5 + $0xad0] sm:$0xff]
    %v1565 = vld [vmem:[%s5 + $0xad8] sm:$0xff]
    %v1566 = vld [vmem:[%s5 + $0xae0] sm:$0xff]
    %v1567 = vld [vmem:[%s5 + $0xae8] sm:$0xff]
    %v1568 = vld [vmem:[%s5 + $0xaf0] sm:$0xff]
    %v1569 = vld [vmem:[%s5 + $0xaf8] sm:$0xff]
    %v1570 = vld [vmem:[%s5 + $0xb00] sm:$0xff]
    %v1571 = vld [vmem:[%s5 + $0xb08] sm:$0xff]
    %v1572 = vld [vmem:[%s5 + $0xb10] sm:$0xff]
    %v1573 = vld [vmem:[%s5 + $0xb18] sm:$0xff]
    %v1574 = vld [vmem:[%s5 + $0xb20] sm:$0xff]
    %v1575 = vld [vmem:[%s5 + $0xb28] sm:$0xff]
    %v1576 = vld [vmem:[%s5 + $0xb30] sm:$0xff]
    %v1577 = vld [vmem:[%s5 + $0xb38] sm:$0xff]
    %v1578 = vld [vmem:[%s5 + $0xb40] sm:$0xff]
    %v1579 = vld [vmem:[%s5 + $0xb48] sm:$0xff]
    %v1580 = vld [vmem:[%s5 + $0xb50] sm:$0xff]
    %v1581 = vld [vmem:[%s5 + $0xb58] sm:$0xff]
    %v1582 = vld [vmem:[%s5 + $0xb60] sm:$0xff]
    %v1583 = vld [vmem:[%s5 + $0xb68] sm:$0xff]
    %v1584 = vld [vmem:[%s5 + $0xb70] sm:$0xff]
    %v1585 = vld [vmem:[%s5 + $0xb78] sm:$0xff]
    %v1586 = vld [vmem:[%s5 + $0xb80] sm:$0xff]
    %v1587 = vld [vmem:[%s5 + $0xb88] sm:$0xff]
    %v1588 = vld [vmem:[%s5 + $0xb90] sm:$0xff]
    %v1589 = vld [vmem:[%s5 + $0xb98] sm:$0xff]
    %v1590 = vld [vmem:[%s5 + $0xba0] sm:$0xff]
    %v1591 = vld [vmem:[%s5 + $0xba8] sm:$0xff]
    %v1592 = vld [vmem:[%s5 + $0xbb0] sm:$0xff]
    %v1593 = vld [vmem:[%s5 + $0xbb8] sm:$0xff]
    %v1594 = vld [vmem:[%s5 + $0xbc0] sm:$0xff]
    %v1595 = vld [vmem:[%s5 + $0xbc8] sm:$0xff]
    %v1596 = vld [vmem:[%s5 + $0xbd0] sm:$0xff]
    %v1597 = vld [vmem:[%s5 + $0xbd8] sm:$0xff]
    %v1598 = vld [vmem:[%s5 + $0xbe0] sm:$0xff]
    %v1599 = vld [vmem:[%s5 + $0xbe8] sm:$0xff]
    %v1600 = vld [vmem:[%s5 + $0xbf0] sm:$0xff]
    %v1601 = vld [vmem:[%s5 + $0xbf8] sm:$0xff]
    %v1602 = vld [vmem:[%s5 + $0xc00] sm:$0xff]
    %v1603 = vld [vmem:[%s5 + $0xc08] sm:$0xff]
    %v1604 = vld [vmem:[%s5 + $0xc10] sm:$0xff]
    %v1605 = vld [vmem:[%s5 + $0xc18] sm:$0xff]
    %v1606 = vld [vmem:[%s5 + $0xc20] sm:$0xff]
    %v1607 = vld [vmem:[%s5 + $0xc28] sm:$0xff]
    %v1608 = vld [vmem:[%s5 + $0xc30] sm:$0xff]
    %v1609 = vld [vmem:[%s5 + $0xc38] sm:$0xff]
    %v1610 = vld [vmem:[%s5 + $0xc40] sm:$0xff]
    %v1611 = vld [vmem:[%s5 + $0xc48] sm:$0xff]
    %v1612 = vld [vmem:[%s5 + $0xc50] sm:$0xff]
    %v1613 = vld [vmem:[%s5 + $0xc58] sm:$0xff]
    %v1614 = vld [vmem:[%s5 + $0xc60] sm:$0xff]
    %v1615 = vld [vmem:[%s5 + $0xc68] sm:$0xff]
    %v1616 = vld [vmem:[%s5 + $0xc70] sm:$0xff]
    %v1617 = vld [vmem:[%s5 + $0xc78] sm:$0xff]
    %v1618 = vld [vmem:[%s5 + $0xc80] sm:$0xff]
    %v1619 = vld [vmem:[%s5 + $0xc88] sm:$0xff]
    %v1620 = vld [vmem:[%s5 + $0xc90] sm:$0xff]
    %v1621 = vld [vmem:[%s5 + $0xc98] sm:$0xff]
    %v1622 = vld [vmem:[%s5 + $0xca0] sm:$0xff]
    %v1623 = vld [vmem:[%s5 + $0xca8] sm:$0xff]
    %v1624 = vld [vmem:[%s5 + $0xcb0] sm:$0xff]
    %v1625 = vld [vmem:[%s5 + $0xcb8] sm:$0xff]
    %v1626 = vld [vmem:[%s5 + $0xcc0] sm:$0xff]
    %v1627 = vld [vmem:[%s5 + $0xcc8] sm:$0xff]
    %v1628 = vld [vmem:[%s5 + $0xcd0] sm:$0xff]
    %v1629 = vld [vmem:[%s5 + $0xcd8] sm:$0xff]
    %v1630 = vld [vmem:[%s5 + $0xce0] sm:$0xff]
    %v1631 = vld [vmem:[%s5 + $0xce8] sm:$0xff]
    %v1632 = vld [vmem:[%s5 + $0xcf0] sm:$0xff]
    %v1633 = vld [vmem:[%s5 + $0xcf8] sm:$0xff]
    %v1634 = vld [vmem:[%s5 + $0xd00] sm:$0xff]
    %v1635 = vld [vmem:[%s5 + $0xd08] sm:$0xff]
    %v1636 = vld [vmem:[%s5 + $0xd10] sm:$0xff]
    %v1637 = vld [vmem:[%s5 + $0xd18] sm:$0xff]
    %v1638 = vld [vmem:[%s5 + $0xd20] sm:$0xff]
    %v1639 = vld [vmem:[%s5 + $0xd28] sm:$0xff]
    %v1640 = vld [vmem:[%s5 + $0xd30] sm:$0xff]
    %v1641 = vld [vmem:[%s5 + $0xd38] sm:$0xff]
    %v1642 = vld [vmem:[%s5 + $0xd40] sm:$0xff]
    %v1643 = vld [vmem:[%s5 + $0xd48] sm:$0xff]
    %v1644 = vld [vmem:[%s5 + $0xd50] sm:$0xff]
    %v1645 = vld [vmem:[%s5 + $0xd58] sm:$0xff]
    %v1646 = vld [vmem:[%s5 + $0xd60] sm:$0xff]
    %v1647 = vld [vmem:[%s5 + $0xd68] sm:$0xff]
    %v1648 = vld [vmem:[%s5 + $0xd70] sm:$0xff]
    %v1649 = vld [vmem:[%s5 + $0xd78] sm:$0xff]
    %v1650 = vld [vmem:[%s5 + $0xd80] sm:$0xff]
    %v1651 = vld [vmem:[%s5 + $0xd88] sm:$0xff]
    %v1652 = vld [vmem:[%s5 + $0xd90] sm:$0xff]
    %v1653 = vld [vmem:[%s5 + $0xd98] sm:$0xff]
    %v1654 = vld [vmem:[%s5 + $0xda0] sm:$0xff]
    %v1655 = vld [vmem:[%s5 + $0xda8] sm:$0xff]
    %v1656 = vld [vmem:[%s5 + $0xdb0] sm:$0xff]
    %v1657 = vld [vmem:[%s5 + $0xdb8] sm:$0xff]
    %v1658 = vld [vmem:[%s5 + $0xdc0] sm:$0xff]
    %v1659 = vld [vmem:[%s5 + $0xdc8] sm:$0xff]
    %v1660 = vld [vmem:[%s5 + $0xdd0] sm:$0xff]
    %v1661 = vld [vmem:[%s5 + $0xdd8] sm:$0xff]
    %v1662 = vld [vmem:[%s5 + $0xde0] sm:$0xff]
    %v1663 = vld [vmem:[%s5 + $0xde8] sm:$0xff]
    %v1664 = vld [vmem:[%s5 + $0xdf0] sm:$0xff]
    %v1665 = vld [vmem:[%s5 + $0xdf8] sm:$0xff]
    %v1666 = vld [vmem:[%s5 + $0xe00] sm:$0xff]
    %v1667 = vld [vmem:[%s5 + $0xe08] sm:$0xff]
    %v1668 = vld [vmem:[%s5 + $0xe10] sm:$0xff]
    %v1669 = vld [vmem:[%s5 + $0xe18] sm:$0xff]
    %v1670 = vld [vmem:[%s5 + $0xe20] sm:$0xff]
    %v1671 = vld [vmem:[%s5 + $0xe28] sm:$0xff]
    %v1672 = vld [vmem:[%s5 + $0xe30] sm:$0xff]
    %v1673 = vld [vmem:[%s5 + $0xe38] sm:$0xff]
    %v1674 = vld [vmem:[%s5 + $0xe40] sm:$0xff]
    %v1675 = vld [vmem:[%s5 + $0xe48] sm:$0xff]
    %v1676 = vld [vmem:[%s5 + $0xe50] sm:$0xff]
    %v1677 = vld [vmem:[%s5 + $0xe58] sm:$0xff]
    %v1678 = vld [vmem:[%s5 + $0xe60] sm:$0xff]
    %v1679 = vld [vmem:[%s5 + $0xe68] sm:$0xff]
    %v1680 = vld [vmem:[%s5 + $0xe70] sm:$0xff]
    %v1681 = vld [vmem:[%s5 + $0xe78] sm:$0xff]
    %v1682 = vld [vmem:[%s5 + $0xe80] sm:$0xff]
    %v1683 = vld [vmem:[%s5 + $0xe88] sm:$0xff]
    %v1684 = vld [vmem:[%s5 + $0xe90] sm:$0xff]
    %v1685 = vld [vmem:[%s5 + $0xe98] sm:$0xff]
    %v1686 = vld [vmem:[%s5 + $0xea0] sm:$0xff]
    %v1687 = vld [vmem:[%s5 + $0xea8] sm:$0xff]
    %v1688 = vld [vmem:[%s5 + $0xeb0] sm:$0xff]
    %v1689 = vld [vmem:[%s5 + $0xeb8] sm:$0xff]
    %v1690 = vld [vmem:[%s5 + $0xec0] sm:$0xff]
    %v1691 = vld [vmem:[%s5 + $0xec8] sm:$0xff]
    %v1692 = vld [vmem:[%s5 + $0xed0] sm:$0xff]
    %v1693 = vld [vmem:[%s5 + $0xed8] sm:$0xff]
    %v1694 = vld [vmem:[%s5 + $0xee0] sm:$0xff]
    %v1695 = vld [vmem:[%s5 + $0xee8] sm:$0xff]
    %v1696 = vld [vmem:[%s5 + $0xef0] sm:$0xff]
    %v1697 = vld [vmem:[%s5 + $0xef8] sm:$0xff]
    %v1698 = vld [vmem:[%s5 + $0xf00] sm:$0xff]
    %v1699 = vld [vmem:[%s5 + $0xf08] sm:$0xff]
    %v1700 = vld [vmem:[%s5 + $0xf10] sm:$0xff]
    %v1701 = vld [vmem:[%s5 + $0xf18] sm:$0xff]
    %v1702 = vld [vmem:[%s5 + $0xf20] sm:$0xff]
    %v1703 = vld [vmem:[%s5 + $0xf28] sm:$0xff]
    %v1704 = vld [vmem:[%s5 + $0xf30] sm:$0xff]
    %v1705 = vld [vmem:[%s5 + $0xf38] sm:$0xff]
    %v1706 = vld [vmem:[%s5 + $0xf40] sm:$0xff]
    %v1707 = vld [vmem:[%s5 + $0xf48] sm:$0xff]
    %v1708 = vld [vmem:[%s5 + $0xf50] sm:$0xff]
    %v1709 = vld [vmem:[%s5 + $0xf58] sm:$0xff]
    %v1710 = vld [vmem:[%s5 + $0xf60] sm:$0xff]
    %v1711 = vld [vmem:[%s5 + $0xf68] sm:$0xff]
    %v1712 = vld [vmem:[%s5 + $0xf70] sm:$0xff]
    %v1713 = vld [vmem:[%s5 + $0xf78] sm:$0xff]
    %v1714 = vld [vmem:[%s5 + $0xf80] sm:$0xff]
    %v1715 = vld [vmem:[%s5 + $0xf88] sm:$0xff]
    %v1716 = vld [vmem:[%s5 + $0xf90] sm:$0xff]
    %v1717 = vld [vmem:[%s5 + $0xf98] sm:$0xff]
    %v1718 = vld [vmem:[%s5 + $0xfa0] sm:$0xff]
    %v1719 = vld [vmem:[%s5 + $0xfa8] sm:$0xff]
    %v1720 = vld [vmem:[%s5 + $0xfb0] sm:$0xff]
    %v1721 = vld [vmem:[%s5 + $0xfb8] sm:$0xff]
    %v1722 = vld [vmem:[%s5 + $0xfc0] sm:$0xff]
    %v1723 = vld [vmem:[%s5 + $0xfc8] sm:$0xff]
    %v1724 = vld [vmem:[%s5 + $0xfd0] sm:$0xff]
    %v1725 = vld [vmem:[%s5 + $0xfd8] sm:$0xff]
    %v1726 = vld [vmem:[%s5 + $0xfe0] sm:$0xff]
    %v1727 = vld [vmem:[%s5 + $0xfe8] sm:$0xff]
    %v1728 = vld [vmem:[%s5 + $0xff0] sm:$0xff]
    %v1729 = vld [vmem:[%s5 + $0xff8] sm:$0xff]
    %v1730 = vld [vmem:[%s5 + $0x1000] sm:$0xff]
    %v1731 = vld [vmem:[%s5 + $0x1008] sm:$0xff]
    %v1732 = vld [vmem:[%s5 + $0x1010] sm:$0xff]
    %v1733 = vld [vmem:[%s5 + $0x1018] sm:$0xff]
    %v1734 = vld [vmem:[%s5 + $0x1020] sm:$0xff]
    %v1735 = vld [vmem:[%s5 + $0x1028] sm:$0xff]
    %v1736 = vld [vmem:[%s5 + $0x1030] sm:$0xff]
    %v1737 = vld [vmem:[%s5 + $0x1038] sm:$0xff]
    %v1738 = vld [vmem:[%s5 + $0x1040] sm:$0xff]
    %v1739 = vld [vmem:[%s5 + $0x1048] sm:$0xff]
    %v1740 = vld [vmem:[%s5 + $0x1050] sm:$0xff]
    %v1741 = vld [vmem:[%s5 + $0x1058] sm:$0xff]
    %v1742 = vld [vmem:[%s5 + $0x1060] sm:$0xff]
    %v1743 = vld [vmem:[%s5 + $0x1068] sm:$0xff]
    %v1744 = vld [vmem:[%s5 + $0x1070] sm:$0xff]
    %v1745 = vld [vmem:[%s5 + $0x1078] sm:$0xff]
    %v1746 = vld [vmem:[%s5 + $0x1080] sm:$0xff]
    %v1747 = vld [vmem:[%s5 + $0x1088] sm:$0xff]
    %v1748 = vld [vmem:[%s5 + $0x1090] sm:$0xff]
    %v1749 = vld [vmem:[%s5 + $0x1098] sm:$0xff]
    %v1750 = vld [vmem:[%s5 + $0x10a0] sm:$0xff]
    %v1751 = vld [vmem:[%s5 + $0x10a8] sm:$0xff]
    %v1752 = vld [vmem:[%s5 + $0x10b0] sm:$0xff]
    %v1753 = vld [vmem:[%s5 + $0x10b8] sm:$0xff]
    %v1754 = vld [vmem:[%s5 + $0x10c0] sm:$0xff]
    %v1755 = vld [vmem:[%s5 + $0x10c8] sm:$0xff]
    %v1756 = vld [vmem:[%s5 + $0x10d0] sm:$0xff]
    %v1757 = vld [vmem:[%s5 + $0x10d8] sm:$0xff]
    %v1758 = vld [vmem:[%s5 + $0x10e0] sm:$0xff]
    %v1759 = vld [vmem:[%s5 + $0x10e8] sm:$0xff]
    %v1760 = vld [vmem:[%s5 + $0x10f0] sm:$0xff]
    %v1761 = vld [vmem:[%s5 + $0x10f8] sm:$0xff]
    %v1762 = vld [vmem:[%s5 + $0x1100] sm:$0xff]
    %v1763 = vld [vmem:[%s5 + $0x1108] sm:$0xff]
    %v1764 = vld [vmem:[%s5 + $0x1110] sm:$0xff]
    %v1765 = vld [vmem:[%s5 + $0x1118] sm:$0xff]
    %v1766 = vld [vmem:[%s5 + $0x1120] sm:$0xff]
    %v1767 = vld [vmem:[%s5 + $0x1128] sm:$0xff]
    %v1768 = vld [vmem:[%s5 + $0x1130] sm:$0xff]
    %v1769 = vld [vmem:[%s5 + $0x1138] sm:$0xff]
    %v1770 = vld [vmem:[%s5 + $0x1140] sm:$0xff]
    %v1771 = vld [vmem:[%s5 + $0x1148] sm:$0xff]
    %v1772 = vld [vmem:[%s5 + $0x1150] sm:$0xff]
    %v1773 = vld [vmem:[%s5 + $0x1158] sm:$0xff]
    %v1774 = vld [vmem:[%s5 + $0x1160] sm:$0xff]
    %v1775 = vld [vmem:[%s5 + $0x1168] sm:$0xff]
    %v1776 = vld [vmem:[%s5 + $0x1170] sm:$0xff]
    %v1777 = vld [vmem:[%s5 + $0x1178] sm:$0xff]
    %v1778 = vld [vmem:[%s5 + $0x1180] sm:$0xff]
    %v1779 = vld [vmem:[%s5 + $0x1188] sm:$0xff]
    %v1780 = vld [vmem:[%s5 + $0x1190] sm:$0xff]
    %v1781 = vld [vmem:[%s5 + $0x1198] sm:$0xff]
    %v1782 = vld [vmem:[%s5 + $0x11a0] sm:$0xff]
    %v1783 = vld [vmem:[%s5 + $0x11a8] sm:$0xff]
    %v1784 = vld [vmem:[%s5 + $0x11b0] sm:$0xff]
    %v1785 = vld [vmem:[%s5 + $0x11b8] sm:$0xff]
    %v1786 = vld [vmem:[%s5 + $0x11c0] sm:$0xff]
    %v1787 = vld [vmem:[%s5 + $0x11c8] sm:$0xff]
    %v1788 = vld [vmem:[%s5 + $0x11d0] sm:$0xff]
    %v1789 = vld [vmem:[%s5 + $0x11d8] sm:$0xff]
    %v1790 = vld [vmem:[%s5 + $0x11e0] sm:$0xff]
    %v1791 = vld [vmem:[%s5 + $0x11e8] sm:$0xff]
    %v1792 = vld [vmem:[%s5 + $0x11f0] sm:$0xff]
    %v1793 = vld [vmem:[%s5 + $0x11f8] sm:$0xff]
    %v1794 = vld [vmem:[%s5 + $0x1200] sm:$0xff]
    %v1795 = vld [vmem:[%s5 + $0x1208] sm:$0xff]
    %v1796 = vld [vmem:[%s5 + $0x1210] sm:$0xff]
    %v1797 = vld [vmem:[%s5 + $0x1218] sm:$0xff]
    %v1798 = vld [vmem:[%s5 + $0x1220] sm:$0xff]
    %v1799 = vld [vmem:[%s5 + $0x1228] sm:$0xff]
    %v1800 = vld [vmem:[%s5 + $0x1230] sm:$0xff]
    %v1801 = vld [vmem:[%s5 + $0x1238] sm:$0xff]
    %v1802 = vld [vmem:[%s5 + $0x1240] sm:$0xff]
    %v1803 = vld [vmem:[%s5 + $0x1248] sm:$0xff]
    %v1804 = vld [vmem:[%s5 + $0x1250] sm:$0xff]
    %v1805 = vld [vmem:[%s5 + $0x1258] sm:$0xff]
    %v1806 = vld [vmem:[%s5 + $0x1260] sm:$0xff]
    %v1807 = vld [vmem:[%s5 + $0x1268] sm:$0xff]
    %v1808 = vld [vmem:[%s5 + $0x1270] sm:$0xff]
    %v1809 = vld [vmem:[%s5 + $0x1278] sm:$0xff]
    %v1810 = vld [vmem:[%s5 + $0x1280] sm:$0xff]
    %v1811 = vld [vmem:[%s5 + $0x1288] sm:$0xff]
    %v1812 = vld [vmem:[%s5 + $0x1290] sm:$0xff]
    %v1813 = vld [vmem:[%s5 + $0x1298] sm:$0xff]
    %v1814 = vld [vmem:[%s5 + $0x12a0] sm:$0xff]
    %v1815 = vld [vmem:[%s5 + $0x12a8] sm:$0xff]
    %v1816 = vld [vmem:[%s5 + $0x12b0] sm:$0xff]
    %v1817 = vld [vmem:[%s5 + $0x12b8] sm:$0xff]
    %v1818 = vld [vmem:[%s5 + $0x12c0] sm:$0xff]
    %v1819 = vld [vmem:[%s5 + $0x12c8] sm:$0xff]
    %v1820 = vld [vmem:[%s5 + $0x12d0] sm:$0xff]
    %v1821 = vld [vmem:[%s5 + $0x12d8] sm:$0xff]
    %v1822 = vld [vmem:[%s5 + $0x12e0] sm:$0xff]
    %v1823 = vld [vmem:[%s5 + $0x12e8] sm:$0xff]
    %v1824 = vld [vmem:[%s5 + $0x12f0] sm:$0xff]
    %v1825 = vld [vmem:[%s5 + $0x12f8] sm:$0xff]
    %v1826 = vld [vmem:[%s5 + $0x1300] sm:$0xff]
    %v1827 = vld [vmem:[%s5 + $0x1308] sm:$0xff]
    %v1828 = vld [vmem:[%s5 + $0x1310] sm:$0xff]
    %v1829 = vld [vmem:[%s5 + $0x1318] sm:$0xff]
    %v1830 = vld [vmem:[%s5 + $0x1320] sm:$0xff]
    %v1831 = vld [vmem:[%s5 + $0x1328] sm:$0xff]
    %v1832 = vld [vmem:[%s5 + $0x1330] sm:$0xff]
    %v1833 = vld [vmem:[%s5 + $0x1338] sm:$0xff]
    %v1834 = vld [vmem:[%s5 + $0x1340] sm:$0xff]
    %v1835 = vld [vmem:[%s5 + $0x1348] sm:$0xff]
    %v1836 = vld [vmem:[%s5 + $0x1350] sm:$0xff]
    %v1837 = vld [vmem:[%s5 + $0x1358] sm:$0xff]
    %v1838 = vld [vmem:[%s5 + $0x1360] sm:$0xff]
    %v1839 = vld [vmem:[%s5 + $0x1368] sm:$0xff]
    %v1840 = vld [vmem:[%s5 + $0x1370] sm:$0xff]
    %v1841 = vld [vmem:[%s5 + $0x1378] sm:$0xff]
    %v1842 = vld [vmem:[%s5 + $0x1380] sm:$0xff]
    %v1843 = vld [vmem:[%s5 + $0x1388] sm:$0xff]
    %v1844 = vld [vmem:[%s5 + $0x1390] sm:$0xff]
    %v1845 = vld [vmem:[%s5 + $0x1398] sm:$0xff]
    %v1846 = vld [vmem:[%s5 + $0x13a0] sm:$0xff]
    %v1847 = vld [vmem:[%s5 + $0x13a8] sm:$0xff]
    %v1848 = vld [vmem:[%s5 + $0x13b0] sm:$0xff]
    %v1849 = vld [vmem:[%s5 + $0x13b8] sm:$0xff]
    %v1850 = vld [vmem:[%s5 + $0x13c0] sm:$0xff]
    %v1851 = vld [vmem:[%s5 + $0x13c8] sm:$0xff]
    %v1852 = vld [vmem:[%s5 + $0x13d0] sm:$0xff]
    %v1853 = vld [vmem:[%s5 + $0x13d8] sm:$0xff]
    %v1854 = vld [vmem:[%s5 + $0x13e0] sm:$0xff]
    %v1855 = vld [vmem:[%s5 + $0x13e8] sm:$0xff]
    %v1856 = vld [vmem:[%s5 + $0x13f0] sm:$0xff]
    %v1857 = vld [vmem:[%s5 + $0x13f8] sm:$0xff]
    %v1858 = vld [vmem:[%s5 + $0x1400] sm:$0xff]
    %v1859 = vld [vmem:[%s5 + $0x1408] sm:$0xff]
    %v1860 = vld [vmem:[%s5 + $0x1410] sm:$0xff]
    %v1861 = vld [vmem:[%s5 + $0x1418] sm:$0xff]
    %v1862 = vld [vmem:[%s5 + $0x1420] sm:$0xff]
    %v1863 = vld [vmem:[%s5 + $0x1428] sm:$0xff]
    %v1864 = vld [vmem:[%s5 + $0x1430] sm:$0xff]
    %v1865 = vld [vmem:[%s5 + $0x1438] sm:$0xff]
    %v1866 = vld [vmem:[%s5 + $0x1440] sm:$0xff]
    %v1867 = vld [vmem:[%s5 + $0x1448] sm:$0xff]
    %v1868 = vld [vmem:[%s5 + $0x1450] sm:$0xff]
    %v1869 = vld [vmem:[%s5 + $0x1458] sm:$0xff]
    %v1870 = vld [vmem:[%s5 + $0x1460] sm:$0xff]
    %v1871 = vld [vmem:[%s5 + $0x1468] sm:$0xff]
    %v1872 = vld [vmem:[%s5 + $0x1470] sm:$0xff]
    %v1873 = vld [vmem:[%s5 + $0x1478] sm:$0xff]
    %v1874 = vld [vmem:[%s5 + $0x1480] sm:$0xff]
    %v1875 = vld [vmem:[%s5 + $0x1488] sm:$0xff]
    %v1876 = vld [vmem:[%s5 + $0x1490] sm:$0xff]
    %v1877 = vld [vmem:[%s5 + $0x1498] sm:$0xff]
    %v1878 = vld [vmem:[%s5 + $0x14a0] sm:$0xff]
    %v1879 = vld [vmem:[%s5 + $0x14a8] sm:$0xff]
    %v1880 = vld [vmem:[%s5 + $0x14b0] sm:$0xff]
    %v1881 = vld [vmem:[%s5 + $0x14b8] sm:$0xff]
    %v1882 = vld [vmem:[%s5 + $0x14c0] sm:$0xff]
    %v1883 = vld [vmem:[%s5 + $0x14c8] sm:$0xff]
    %v1884 = vld [vmem:[%s5 + $0x14d0] sm:$0xff]
    %v1885 = vld [vmem:[%s5 + $0x14d8] sm:$0xff]
    %v1886 = vld [vmem:[%s5 + $0x14e0] sm:$0xff]
    %v1887 = vld [vmem:[%s5 + $0x14e8] sm:$0xff]
    %v1888 = vld [vmem:[%s5 + $0x14f0] sm:$0xff]
    %v1889 = vld [vmem:[%s5 + $0x14f8] sm:$0xff]
    %v1890 = vld [vmem:[%s5 + $0x1500] sm:$0xff]
    %v1891 = vld [vmem:[%s5 + $0x1508] sm:$0xff]
    %v1892 = vld [vmem:[%s5 + $0x1510] sm:$0xff]
    %v1893 = vld [vmem:[%s5 + $0x1518] sm:$0xff]
    %v1894 = vld [vmem:[%s5 + $0x1520] sm:$0xff]
    %v1895 = vld [vmem:[%s5 + $0x1528] sm:$0xff]
    %v1896 = vld [vmem:[%s5 + $0x1530] sm:$0xff]
    %v1897 = vld [vmem:[%s5 + $0x1538] sm:$0xff]
    %v1898 = vld [vmem:[%s5 + $0x1540] sm:$0xff]
    %v1899 = vld [vmem:[%s5 + $0x1548] sm:$0xff]
    %v1900 = vld [vmem:[%s5 + $0x1550] sm:$0xff]
    %v1901 = vld [vmem:[%s5 + $0x1558] sm:$0xff]
    %v1902 = vld [vmem:[%s5 + $0x1560] sm:$0xff]
    %v1903 = vld [vmem:[%s5 + $0x1568] sm:$0xff]
    %v1904 = vld [vmem:[%s5 + $0x1570] sm:$0xff]
    %v1905 = vld [vmem:[%s5 + $0x1578] sm:$0xff]
    %v1906 = vld [vmem:[%s5 + $0x1580] sm:$0xff]
    %v1907 = vld [vmem:[%s5 + $0x1588] sm:$0xff]
    %v1908 = vld [vmem:[%s5 + $0x1590] sm:$0xff]
    %v1909 = vld [vmem:[%s5 + $0x1598] sm:$0xff]
    %v1910 = vld [vmem:[%s5 + $0x15a0] sm:$0xff]
    %v1911 = vld [vmem:[%s5 + $0x15a8] sm:$0xff]
    %v1912 = vld [vmem:[%s5 + $0x15b0] sm:$0xff]
    %v1913 = vld [vmem:[%s5 + $0x15b8] sm:$0xff]
    %v1914 = vld [vmem:[%s5 + $0x15c0] sm:$0xff]
    %v1915 = vld [vmem:[%s5 + $0x15c8] sm:$0xff]
    %v1916 = vld [vmem:[%s5 + $0x15d0] sm:$0xff]
    %v1917 = vld [vmem:[%s5 + $0x15d8] sm:$0xff]
    %v1918 = vld [vmem:[%s5 + $0x15e0] sm:$0xff]
    %v1919 = vld [vmem:[%s5 + $0x15e8] sm:$0xff]
    %v1920 = vld [vmem:[%s5 + $0x15f0] sm:$0xff]
    %v1921 = vld [vmem:[%s5 + $0x15f8] sm:$0xff]
    %v1922 = vld [vmem:[%s5 + $0x1600] sm:$0xff]
    %v1923 = vld [vmem:[%s5 + $0x1608] sm:$0xff]
    %v1924 = vld [vmem:[%s5 + $0x1610] sm:$0xff]
    %v1925 = vld [vmem:[%s5 + $0x1618] sm:$0xff]
    %v1926 = vld [vmem:[%s5 + $0x1620] sm:$0xff]
    %v1927 = vld [vmem:[%s5 + $0x1628] sm:$0xff]
    %v1928 = vld [vmem:[%s5 + $0x1630] sm:$0xff]
    %v1929 = vld [vmem:[%s5 + $0x1638] sm:$0xff]
    %v1930 = vld [vmem:[%s5 + $0x1640] sm:$0xff]
    %v1931 = vld [vmem:[%s5 + $0x1648] sm:$0xff]
    %v1932 = vld [vmem:[%s5 + $0x1650] sm:$0xff]
    %v1933 = vld [vmem:[%s5 + $0x1658] sm:$0xff]
    %v1934 = vld [vmem:[%s5 + $0x1660] sm:$0xff]
    %v1935 = vld [vmem:[%s5 + $0x1668] sm:$0xff]
    %v1936 = vld [vmem:[%s5 + $0x1670] sm:$0xff]
    %v1937 = vld [vmem:[%s5 + $0x1678] sm:$0xff]
    %v1938 = vld [vmem:[%s5 + $0x1680] sm:$0xff]
    %v1939 = vld [vmem:[%s5 + $0x1688] sm:$0xff]
    %v1940 = vld [vmem:[%s5 + $0x1690] sm:$0xff]
    %v1941 = vld [vmem:[%s5 + $0x1698] sm:$0xff]
    %v1942 = vld [vmem:[%s5 + $0x16a0] sm:$0xff]
    %v1943 = vld [vmem:[%s5 + $0x16a8] sm:$0xff]
    %v1944 = vld [vmem:[%s5 + $0x16b0] sm:$0xff]
    %v1945 = vld [vmem:[%s5 + $0x16b8] sm:$0xff]
    %v1946 = vld [vmem:[%s5 + $0x16c0] sm:$0xff]
    %v1947 = vld [vmem:[%s5 + $0x16c8] sm:$0xff]
    %v1948 = vld [vmem:[%s5 + $0x16d0] sm:$0xff]
    %v1949 = vld [vmem:[%s5 + $0x16d8] sm:$0xff]
    %v1950 = vld [vmem:[%s5 + $0x16e0] sm:$0xff]
    %v1951 = vld [vmem:[%s5 + $0x16e8] sm:$0xff]
    %v1952 = vld [vmem:[%s5 + $0x16f0] sm:$0xff]
    %v1953 = vld [vmem:[%s5 + $0x16f8] sm:$0xff]
    %v1954 = vld [vmem:[%s5 + $0x1700] sm:$0xff]
    %v1955 = vld [vmem:[%s5 + $0x1708] sm:$0xff]
    %v1956 = vld [vmem:[%s5 + $0x1710] sm:$0xff]
    %v1957 = vld [vmem:[%s5 + $0x1718] sm:$0xff]
    %v1958 = vld [vmem:[%s5 + $0x1720] sm:$0xff]
    %v1959 = vld [vmem:[%s5 + $0x1728] sm:$0xff]
    %v1960 = vld [vmem:[%s5 + $0x1730] sm:$0xff]
    %v1961 = vld [vmem:[%s5 + $0x1738] sm:$0xff]
    %v1962 = vld [vmem:[%s5 + $0x1740] sm:$0xff]
    %v1963 = vld [vmem:[%s5 + $0x1748] sm:$0xff]
    %v1964 = vld [vmem:[%s5 + $0x1750] sm:$0xff]
    %v1965 = vld [vmem:[%s5 + $0x1758] sm:$0xff]
    %v1966 = vld [vmem:[%s5 + $0x1760] sm:$0xff]
    %v1967 = vld [vmem:[%s5 + $0x1768] sm:$0xff]
    %v1968 = vld [vmem:[%s5 + $0x1770] sm:$0xff]
    %v1969 = vld [vmem:[%s5 + $0x1778] sm:$0xff]
    %v1970 = vld [vmem:[%s5 + $0x1780] sm:$0xff]
    %v1971 = vld [vmem:[%s5 + $0x1788] sm:$0xff]
    %v1972 = vld [vmem:[%s5 + $0x1790] sm:$0xff]
    %v1973 = vld [vmem:[%s5 + $0x1798] sm:$0xff]
    %v1974 = vld [vmem:[%s5 + $0x17a0] sm:$0xff]
    %v1975 = vld [vmem:[%s5 + $0x17a8] sm:$0xff]
    %v1976 = vld [vmem:[%s5 + $0x17b0] sm:$0xff]
    %v1977 = vld [vmem:[%s5 + $0x17b8] sm:$0xff]
    %v1978 = vld [vmem:[%s5 + $0x17c0] sm:$0xff]
    %v1979 = vld [vmem:[%s5 + $0x17c8] sm:$0xff]
    %v1980 = vld [vmem:[%s5 + $0x17d0] sm:$0xff]
    %v1981 = vld [vmem:[%s5 + $0x17d8] sm:$0xff]
    %v1982 = vld [vmem:[%s5 + $0x17e0] sm:$0xff]
    %v1983 = vld [vmem:[%s5 + $0x17e8] sm:$0xff]
    %v1984 = vld [vmem:[%s5 + $0x17f0] sm:$0xff]
    %v1985 = vld [vmem:[%s5 + $0x17f8] sm:$0xff]
    %v1986 = vld [vmem:[%s5 + $0x1800] sm:$0xff]
    %v1987 = vld [vmem:[%s5 + $0x1808] sm:$0xff]
    %v1988 = vld [vmem:[%s5 + $0x1810] sm:$0xff]
    %v1989 = vld [vmem:[%s5 + $0x1818] sm:$0xff]
    %v1990 = vld [vmem:[%s5 + $0x1820] sm:$0xff]
    %v1991 = vld [vmem:[%s5 + $0x1828] sm:$0xff]
    %v1992 = vld [vmem:[%s5 + $0x1830] sm:$0xff]
    %v1993 = vld [vmem:[%s5 + $0x1838] sm:$0xff]
    %v1994 = vld [vmem:[%s5 + $0x1840] sm:$0xff]
    %v1995 = vld [vmem:[%s5 + $0x1848] sm:$0xff]
    %v1996 = vld [vmem:[%s5 + $0x1850] sm:$0xff]
    %v1997 = vld [vmem:[%s5 + $0x1858] sm:$0xff]
    %v1998 = vld [vmem:[%s5 + $0x1860] sm:$0xff]
    %v1999 = vld [vmem:[%s5 + $0x1868] sm:$0xff]
    %v2000 = vld [vmem:[%s5 + $0x1870] sm:$0xff]
    %v2001 = vld [vmem:[%s5 + $0x1878] sm:$0xff]
    %v2002 = vld [vmem:[%s5 + $0x1880] sm:$0xff]
    %v2003 = vld [vmem:[%s5 + $0x1888] sm:$0xff]
    %v2004 = vld [vmem:[%s5 + $0x1890] sm:$0xff]
    %v2005 = vld [vmem:[%s5 + $0x1898] sm:$0xff]
    %v2006 = vld [vmem:[%s5 + $0x18a0] sm:$0xff]
    %v2007 = vld [vmem:[%s5 + $0x18a8] sm:$0xff]
    %v2008 = vld [vmem:[%s5 + $0x18b0] sm:$0xff]
    %v2009 = vld [vmem:[%s5 + $0x18b8] sm:$0xff]
    %v2010 = vld [vmem:[%s5 + $0x18c0] sm:$0xff]
    %v2011 = vld [vmem:[%s5 + $0x18c8] sm:$0xff]
    %v2012 = vld [vmem:[%s5 + $0x18d0] sm:$0xff]
    %v2013 = vld [vmem:[%s5 + $0x18d8] sm:$0xff]
    %v2014 = vld [vmem:[%s5 + $0x18e0] sm:$0xff]
    %v2015 = vld [vmem:[%s5 + $0x18e8] sm:$0xff]
    %v2016 = vld [vmem:[%s5 + $0x18f0] sm:$0xff]
    %v2017 = vld [vmem:[%s5 + $0x18f8] sm:$0xff]
    %v2018 = vld [vmem:[%s5 + $0x1900] sm:$0xff]
    %v2019 = vld [vmem:[%s5 + $0x1908] sm:$0xff]
    %v2020 = vld [vmem:[%s5 + $0x1910] sm:$0xff]
    %v2021 = vld [vmem:[%s5 + $0x1918] sm:$0xff]
    %v2022 = vld [vmem:[%s5 + $0x1920] sm:$0xff]
    %v2023 = vld [vmem:[%s5 + $0x1928] sm:$0xff]
    %v2024 = vld [vmem:[%s5 + $0x1930] sm:$0xff]
    %v2025 = vld [vmem:[%s5 + $0x1938] sm:$0xff]
    %v2026 = vld [vmem:[%s5 + $0x1940] sm:$0xff]
    %v2027 = vld [vmem:[%s5 + $0x1948] sm:$0xff]
    %v2028 = vld [vmem:[%s5 + $0x1950] sm:$0xff]
    %v2029 = vld [vmem:[%s5 + $0x1958] sm:$0xff]
    %v2030 = vld [vmem:[%s5 + $0x1960] sm:$0xff]
    %v2031 = vld [vmem:[%s5 + $0x1968] sm:$0xff]
    %v2032 = vld [vmem:[%s5 + $0x1970] sm:$0xff]
    %v2033 = vld [vmem:[%s5 + $0x1978] sm:$0xff]
    %v2034 = vld [vmem:[%s5 + $0x1980] sm:$0xff]
    %v2035 = vld [vmem:[%s5 + $0x1988] sm:$0xff]
    %v2036 = vld [vmem:[%s5 + $0x1990] sm:$0xff]
    %v2037 = vld [vmem:[%s5 + $0x1998] sm:$0xff]
    %v2038 = vld [vmem:[%s5 + $0x19a0] sm:$0xff]
    %v2039 = vld [vmem:[%s5 + $0x19a8] sm:$0xff]
    %v2040 = vld [vmem:[%s5 + $0x19b0] sm:$0xff]
    %v2041 = vld [vmem:[%s5 + $0x19b8] sm:$0xff]
    %v2042 = vld [vmem:[%s5 + $0x19c0] sm:$0xff]
    %v2043 = vld [vmem:[%s5 + $0x19c8] sm:$0xff]
    %v2044 = vld [vmem:[%s5 + $0x19d0] sm:$0xff]
    %v2045 = vld [vmem:[%s5 + $0x19d8] sm:$0xff]
    %v2046 = vld [vmem:[%s5 + $0x19e0] sm:$0xff]
    %v2047 = vld [vmem:[%s5 + $0x19e8] sm:$0xff]
    %v2048 = vld [vmem:[%s5 + $0x19f0] sm:$0xff]
    %v2049 = vld [vmem:[%s5 + $0x19f8] sm:$0xff]
    %v2050 = vld [vmem:[%s5 + $0x1a00] sm:$0xff]
    %v2051 = vld [vmem:[%s5 + $0x1a08] sm:$0xff]
    %v2052 = vld [vmem:[%s5 + $0x1a10] sm:$0xff]
    %v2053 = vld [vmem:[%s5 + $0x1a18] sm:$0xff]
    %v2054 = vld [vmem:[%s5 + $0x1a20] sm:$0xff]
    %v2055 = vld [vmem:[%s5 + $0x1a28] sm:$0xff]
    %v2056 = vld [vmem:[%s5 + $0x1a30] sm:$0xff]
    %v2057 = vld [vmem:[%s5 + $0x1a38] sm:$0xff]
    %v2058 = vld [vmem:[%s5 + $0x1a40] sm:$0xff]
    %v2059 = vld [vmem:[%s5 + $0x1a48] sm:$0xff]
    %v2060 = vld [vmem:[%s5 + $0x1a50] sm:$0xff]
    %v2061 = vld [vmem:[%s5 + $0x1a58] sm:$0xff]
    %v2062 = vld [vmem:[%s5 + $0x1a60] sm:$0xff]
    %v2063 = vld [vmem:[%s5 + $0x1a68] sm:$0xff]
    %v2064 = vld [vmem:[%s5 + $0x1a70] sm:$0xff]
    %v2065 = vld [vmem:[%s5 + $0x1a78] sm:$0xff]
    %v2066 = vld [vmem:[%s5 + $0x1a80] sm:$0xff]
    %v2067 = vld [vmem:[%s5 + $0x1a88] sm:$0xff]
    %v2068 = vld [vmem:[%s5 + $0x1a90] sm:$0xff]
    %v2069 = vld [vmem:[%s5 + $0x1a98] sm:$0xff]
    %v2070 = vld [vmem:[%s5 + $0x1aa0] sm:$0xff]
    %v2071 = vld [vmem:[%s5 + $0x1aa8] sm:$0xff]
    %v2072 = vld [vmem:[%s5 + $0x1ab0] sm:$0xff]
    %v2073 = vld [vmem:[%s5 + $0x1ab8] sm:$0xff]
    %v2074 = vld [vmem:[%s5 + $0x1ac0] sm:$0xff]
    %v2075 = vld [vmem:[%s5 + $0x1ac8] sm:$0xff]
    %v2076 = vld [vmem:[%s5 + $0x1ad0] sm:$0xff]
    %v2077 = vld [vmem:[%s5 + $0x1ad8] sm:$0xff]
    %v2078 = vld [vmem:[%s5 + $0x1ae0] sm:$0xff]
    %v2079 = vld [vmem:[%s5 + $0x1ae8] sm:$0xff]
    %v2080 = vld [vmem:[%s5 + $0x1af0] sm:$0xff]
    %v2081 = vld [vmem:[%s5 + $0x1af8] sm:$0xff]
    %v2082 = vld [vmem:[%s5 + $0x1b00] sm:$0xff]
    %v2083 = vld [vmem:[%s5 + $0x1b08] sm:$0xff]
    %v2084 = vld [vmem:[%s5 + $0x1b10] sm:$0xff]
    %v2085 = vld [vmem:[%s5 + $0x1b18] sm:$0xff]
    %v2086 = vld [vmem:[%s5 + $0x1b20] sm:$0xff]
    %v2087 = vld [vmem:[%s5 + $0x1b28] sm:$0xff]
    %v2088 = vld [vmem:[%s5 + $0x1b30] sm:$0xff]
    %v2089 = vld [vmem:[%s5 + $0x1b38] sm:$0xff]
    %v2090 = vld [vmem:[%s5 + $0x1b40] sm:$0xff]
    %v2091 = vld [vmem:[%s5 + $0x1b48] sm:$0xff]
    %v2092 = vld [vmem:[%s5 + $0x1b50] sm:$0xff]
    %v2093 = vld [vmem:[%s5 + $0x1b58] sm:$0xff]
    %v2094 = vld [vmem:[%s5 + $0x1b60] sm:$0xff]
    %v2095 = vld [vmem:[%s5 + $0x1b68] sm:$0xff]
    %v2096 = vld [vmem:[%s5 + $0x1b70] sm:$0xff]
    %v2097 = vld [vmem:[%s5 + $0x1b78] sm:$0xff]
    %v2098 = vld [vmem:[%s5 + $0x1b80] sm:$0xff]
    %v2099 = vld [vmem:[%s5 + $0x1b88] sm:$0xff]
    %v2100 = vld [vmem:[%s5 + $0x1b90] sm:$0xff]
    %v2101 = vld [vmem:[%s5 + $0x1b98] sm:$0xff]
    %v2102 = vld [vmem:[%s5 + $0x1ba0] sm:$0xff]
    %v2103 = vld [vmem:[%s5 + $0x1ba8] sm:$0xff]
    %v2104 = vld [vmem:[%s5 + $0x1bb0] sm:$0xff]
    %v2105 = vld [vmem:[%s5 + $0x1bb8] sm:$0xff]
    %v2106 = vld [vmem:[%s5 + $0x1bc0] sm:$0xff]
    %v2107 = vld [vmem:[%s5 + $0x1bc8] sm:$0xff]
    %v2108 = vld [vmem:[%s5 + $0x1bd0] sm:$0xff]
    %v2109 = vld [vmem:[%s5 + $0x1bd8] sm:$0xff]
    %v2110 = vld [vmem:[%s5 + $0x1be0] sm:$0xff]
    %v2111 = vld [vmem:[%s5 + $0x1be8] sm:$0xff]
    %v2112 = vld [vmem:[%s5 + $0x1bf0] sm:$0xff]
    %v2113 = vld [vmem:[%s5 + $0x1bf8] sm:$0xff]
    %v2114 = vld [vmem:[%s5 + $0x1c00] sm:$0xff]
    %v2115 = vld [vmem:[%s5 + $0x1c08] sm:$0xff]
    %v2116 = vld [vmem:[%s5 + $0x1c10] sm:$0xff]
    %v2117 = vld [vmem:[%s5 + $0x1c18] sm:$0xff]
    %v2118 = vld [vmem:[%s5 + $0x1c20] sm:$0xff]
    %v2119 = vld [vmem:[%s5 + $0x1c28] sm:$0xff]
    %v2120 = vld [vmem:[%s5 + $0x1c30] sm:$0xff]
    %v2121 = vld [vmem:[%s5 + $0x1c38] sm:$0xff]
    %v2122 = vld [vmem:[%s5 + $0x1c40] sm:$0xff]
    %v2123 = vld [vmem:[%s5 + $0x1c48] sm:$0xff]
    %v2124 = vld [vmem:[%s5 + $0x1c50] sm:$0xff]
    %v2125 = vld [vmem:[%s5 + $0x1c58] sm:$0xff]
    %v2126 = vld [vmem:[%s5 + $0x1c60] sm:$0xff]
    %v2127 = vld [vmem:[%s5 + $0x1c68] sm:$0xff]
    %v2128 = vld [vmem:[%s5 + $0x1c70] sm:$0xff]
    %v2129 = vld [vmem:[%s5 + $0x1c78] sm:$0xff]
    %v2130 = vld [vmem:[%s5 + $0x1c80] sm:$0xff]
    %v2131 = vld [vmem:[%s5 + $0x1c88] sm:$0xff]
    %v2132 = vld [vmem:[%s5 + $0x1c90] sm:$0xff]
    %v2133 = vld [vmem:[%s5 + $0x1c98] sm:$0xff]
    %v2134 = vld [vmem:[%s5 + $0x1ca0] sm:$0xff]
    %v2135 = vld [vmem:[%s5 + $0x1ca8] sm:$0xff]
    %v2136 = vld [vmem:[%s5 + $0x1cb0] sm:$0xff]
    %v2137 = vld [vmem:[%s5 + $0x1cb8] sm:$0xff]
    %v2138 = vld [vmem:[%s5 + $0x1cc0] sm:$0xff]
    %v2139 = vld [vmem:[%s5 + $0x1cc8] sm:$0xff]
    %v2140 = vld [vmem:[%s5 + $0x1cd0] sm:$0xff]
    %v2141 = vld [vmem:[%s5 + $0x1cd8] sm:$0xff]
    %v2142 = vld [vmem:[%s5 + $0x1ce0] sm:$0xff]
    %v2143 = vld [vmem:[%s5 + $0x1ce8] sm:$0xff]
    %v2144 = vld [vmem:[%s5 + $0x1cf0] sm:$0xff]
    %v2145 = vld [vmem:[%s5 + $0x1cf8] sm:$0xff]
    %v2146 = vld [vmem:[%s5 + $0x1d00] sm:$0xff]
    %v2147 = vld [vmem:[%s5 + $0x1d08] sm:$0xff]
    %v2148 = vld [vmem:[%s5 + $0x1d10] sm:$0xff]
    %v2149 = vld [vmem:[%s5 + $0x1d18] sm:$0xff]
    %v2150 = vld [vmem:[%s5 + $0x1d20] sm:$0xff]
    %v2151 = vld [vmem:[%s5 + $0x1d28] sm:$0xff]
    %v2152 = vld [vmem:[%s5 + $0x1d30] sm:$0xff]
    %v2153 = vld [vmem:[%s5 + $0x1d38] sm:$0xff]
    %v2154 = vld [vmem:[%s5 + $0x1d40] sm:$0xff]
    %v2155 = vld [vmem:[%s5 + $0x1d48] sm:$0xff]
    %v2156 = vld [vmem:[%s5 + $0x1d50] sm:$0xff]
    %v2157 = vld [vmem:[%s5 + $0x1d58] sm:$0xff]
    %v2158 = vld [vmem:[%s5 + $0x1d60] sm:$0xff]
    %v2159 = vld [vmem:[%s5 + $0x1d68] sm:$0xff]
    %v2160 = vld [vmem:[%s5 + $0x1d70] sm:$0xff]
    %v2161 = vld [vmem:[%s5 + $0x1d78] sm:$0xff]
    %v2162 = vld [vmem:[%s5 + $0x1d80] sm:$0xff]
    %v2163 = vld [vmem:[%s5 + $0x1d88] sm:$0xff]
    %v2164 = vld [vmem:[%s5 + $0x1d90] sm:$0xff]
    %v2165 = vld [vmem:[%s5 + $0x1d98] sm:$0xff]
    %v2166 = vld [vmem:[%s5 + $0x1da0] sm:$0xff]
    %v2167 = vld [vmem:[%s5 + $0x1da8] sm:$0xff]
    %v2168 = vld [vmem:[%s5 + $0x1db0] sm:$0xff]
    %v2169 = vld [vmem:[%s5 + $0x1db8] sm:$0xff]
    %v2170 = vld [vmem:[%s5 + $0x1dc0] sm:$0xff]
    %v2171 = vld [vmem:[%s5 + $0x1dc8] sm:$0xff]
    %v2172 = vld [vmem:[%s5 + $0x1dd0] sm:$0xff]
    %v2173 = vld [vmem:[%s5 + $0x1dd8] sm:$0xff]
    %v2174 = vld [vmem:[%s5 + $0x1de0] sm:$0xff]
    %v2175 = vld [vmem:[%s5 + $0x1de8] sm:$0xff]
    %v2176 = vld [vmem:[%s5 + $0x1df0] sm:$0xff]
    %v2177 = vld [vmem:[%s5 + $0x1df8] sm:$0xff]
    %v2178 = vld [vmem:[%s5 + $0x1e00] sm:$0xff]
    %v2179 = vld [vmem:[%s5 + $0x1e08] sm:$0xff]
    %v2180 = vld [vmem:[%s5 + $0x1e10] sm:$0xff]
    %v2181 = vld [vmem:[%s5 + $0x1e18] sm:$0xff]
    %v2182 = vld [vmem:[%s5 + $0x1e20] sm:$0xff]
    %v2183 = vld [vmem:[%s5 + $0x1e28] sm:$0xff]
    %v2184 = vld [vmem:[%s5 + $0x1e30] sm:$0xff]
    %v2185 = vld [vmem:[%s5 + $0x1e38] sm:$0xff]
    %v2186 = vld [vmem:[%s5 + $0x1e40] sm:$0xff]
    %v2187 = vld [vmem:[%s5 + $0x1e48] sm:$0xff]
    %v2188 = vld [vmem:[%s5 + $0x1e50] sm:$0xff]
    %v2189 = vld [vmem:[%s5 + $0x1e58] sm:$0xff]
    %v2190 = vld [vmem:[%s5 + $0x1e60] sm:$0xff]
    %v2191 = vld [vmem:[%s5 + $0x1e68] sm:$0xff]
    %v2192 = vld [vmem:[%s5 + $0x1e70] sm:$0xff]
    %v2193 = vld [vmem:[%s5 + $0x1e78] sm:$0xff]
    %v2194 = vld [vmem:[%s5 + $0x1e80] sm:$0xff]
    %v2195 = vld [vmem:[%s5 + $0x1e88] sm:$0xff]
    %v2196 = vld [vmem:[%s5 + $0x1e90] sm:$0xff]
    %v2197 = vld [vmem:[%s5 + $0x1e98] sm:$0xff]
    %v2198 = vld [vmem:[%s5 + $0x1ea0] sm:$0xff]
    %v2199 = vld [vmem:[%s5 + $0x1ea8] sm:$0xff]
    %v2200 = vld [vmem:[%s5 + $0x1eb0] sm:$0xff]
    %v2201 = vld [vmem:[%s5 + $0x1eb8] sm:$0xff]
    %v2202 = vld [vmem:[%s5 + $0x1ec0] sm:$0xff]
    %v2203 = vld [vmem:[%s5 + $0x1ec8] sm:$0xff]
    %v2204 = vld [vmem:[%s5 + $0x1ed0] sm:$0xff]
    %v2205 = vld [vmem:[%s5 + $0x1ed8] sm:$0xff]
    %v2206 = vld [vmem:[%s5 + $0x1ee0] sm:$0xff]
    %v2207 = vld [vmem:[%s5 + $0x1ee8] sm:$0xff]
    %v2208 = vld [vmem:[%s5 + $0x1ef0] sm:$0xff]
    %v2209 = vld [vmem:[%s5 + $0x1ef8] sm:$0xff]
    %v2210 = vld [vmem:[%s5 + $0x1f00] sm:$0xff]
    %v2211 = vld [vmem:[%s5 + $0x1f08] sm:$0xff]
    %v2212 = vld [vmem:[%s5 + $0x1f10] sm:$0xff]
    %v2213 = vld [vmem:[%s5 + $0x1f18] sm:$0xff]
    %v2214 = vld [vmem:[%s5 + $0x1f20] sm:$0xff]
    %v2215 = vld [vmem:[%s5 + $0x1f28] sm:$0xff]
    %v2216 = vld [vmem:[%s5 + $0x1f30] sm:$0xff]
    %v2217 = vld [vmem:[%s5 + $0x1f38] sm:$0xff]
    %v2218 = vld [vmem:[%s5 + $0x1f40] sm:$0xff]
    %v2219 = vld [vmem:[%s5 + $0x1f48] sm:$0xff]
    %v2220 = vld [vmem:[%s5 + $0x1f50] sm:$0xff]
    %v2221 = vld [vmem:[%s5 + $0x1f58] sm:$0xff]
    %v2222 = vld [vmem:[%s5 + $0x1f60] sm:$0xff]
    %v2223 = vld [vmem:[%s5 + $0x1f68] sm:$0xff]
    %v2224 = vld [vmem:[%s5 + $0x1f70] sm:$0xff]
    %v2225 = vld [vmem:[%s5 + $0x1f78] sm:$0xff]
    %v2226 = vld [vmem:[%s5 + $0x1f80] sm:$0xff]
    %v2227 = vld [vmem:[%s5 + $0x1f88] sm:$0xff]
    %v2228 = vld [vmem:[%s5 + $0x1f90] sm:$0xff]
    %v2229 = vld [vmem:[%s5 + $0x1f98] sm:$0xff]
    %v2230 = vld [vmem:[%s5 + $0x1fa0] sm:$0xff]
    %v2231 = vld [vmem:[%s5 + $0x1fa8] sm:$0xff]
    %v2232 = vld [vmem:[%s5 + $0x1fb0] sm:$0xff]
    %v2233 = vld [vmem:[%s5 + $0x1fb8] sm:$0xff]
    %v2234 = vld [vmem:[%s5 + $0x1fc0] sm:$0xff]
    %v2235 = vld [vmem:[%s5 + $0x1fc8] sm:$0xff]
    %v2236 = vld [vmem:[%s5 + $0x1fd0] sm:$0xff]
    %v2237 = vld [vmem:[%s5 + $0x1fd8] sm:$0xff]
    %v2238 = vld [vmem:[%s5 + $0x1fe0] sm:$0xff]
    %v2239 = vld [vmem:[%s5 + $0x1fe8] sm:$0xff]
    %v2240 = vld [vmem:[%s5 + $0x1ff0] sm:$0xff]
    %v2241 = vld [vmem:[%s5 + $0x1ff8] sm:$0xff]
    %v2242 = vld [vmem:[%s5 + $0x2000] sm:$0xff]
    %v2243 = vld [vmem:[%s5 + $0x2008] sm:$0xff]
    %v2244 = vld [vmem:[%s5 + $0x2010] sm:$0xff]
    %v2245 = vld [vmem:[%s5 + $0x2018] sm:$0xff]
    %v2246 = vld [vmem:[%s5 + $0x2020] sm:$0xff]
    %v2247 = vld [vmem:[%s5 + $0x2028] sm:$0xff]
    %v2248 = vld [vmem:[%s5 + $0x2030] sm:$0xff]
    %v2249 = vld [vmem:[%s5 + $0x2038] sm:$0xff]
    %v2250 = vld [vmem:[%s5 + $0x2040] sm:$0xff]
    %v2251 = vld [vmem:[%s5 + $0x2048] sm:$0xff]
    %v2252 = vld [vmem:[%s5 + $0x2050] sm:$0xff]
    %v2253 = vld [vmem:[%s5 + $0x2058] sm:$0xff]
    %v2254 = vld [vmem:[%s5 + $0x2060] sm:$0xff]
    %v2255 = vld [vmem:[%s5 + $0x2068] sm:$0xff]
    %v2256 = vld [vmem:[%s5 + $0x2070] sm:$0xff]
    %v2257 = vld [vmem:[%s5 + $0x2078] sm:$0xff]
    %v2258 = vld [vmem:[%s5 + $0x2080] sm:$0xff]
    %v2259 = vld [vmem:[%s5 + $0x2088] sm:$0xff]
    %v2260 = vld [vmem:[%s5 + $0x2090] sm:$0xff]
    %v2261 = vld [vmem:[%s5 + $0x2098] sm:$0xff]
    %v2262 = vld [vmem:[%s5 + $0x20a0] sm:$0xff]
    %v2263 = vld [vmem:[%s5 + $0x20a8] sm:$0xff]
    %v2264 = vld [vmem:[%s5 + $0x20b0] sm:$0xff]
    %v2265 = vld [vmem:[%s5 + $0x20b8] sm:$0xff]
    %v2266 = vld [vmem:[%s5 + $0x20c0] sm:$0xff]
    %v2267 = vld [vmem:[%s5 + $0x20c8] sm:$0xff]
    %v2268 = vld [vmem:[%s5 + $0x20d0] sm:$0xff]
    %v2269 = vld [vmem:[%s5 + $0x20d8] sm:$0xff]
    %v2270 = vld [vmem:[%s5 + $0x20e0] sm:$0xff]
    %v2271 = vld [vmem:[%s5 + $0x20e8] sm:$0xff]
    %v2272 = vld [vmem:[%s5 + $0x20f0] sm:$0xff]
    %v2273 = vld [vmem:[%s5 + $0x20f8] sm:$0xff]
    %v2274 = vld [vmem:[%s5 + $0x2100] sm:$0xff]
    %v2275 = vld [vmem:[%s5 + $0x2108] sm:$0xff]
    %v2276 = vld [vmem:[%s5 + $0x2110] sm:$0xff]
    %v2277 = vld [vmem:[%s5 + $0x2118] sm:$0xff]
    %v2278 = vld [vmem:[%s5 + $0x2120] sm:$0xff]
    %v2279 = vld [vmem:[%s5 + $0x2128] sm:$0xff]
    %v2280 = vld [vmem:[%s5 + $0x2130] sm:$0xff]
    %v2281 = vld [vmem:[%s5 + $0x2138] sm:$0xff]
    %v2282 = vld [vmem:[%s5 + $0x2140] sm:$0xff]
    %v2283 = vld [vmem:[%s5 + $0x2148] sm:$0xff]
    %v2284 = vld [vmem:[%s5 + $0x2150] sm:$0xff]
    %v2285 = vld [vmem:[%s5 + $0x2158] sm:$0xff]
    %v2286 = vld [vmem:[%s5 + $0x2160] sm:$0xff]
    %v2287 = vld [vmem:[%s5 + $0x2168] sm:$0xff]
    %v2288 = vld [vmem:[%s5 + $0x2170] sm:$0xff]
    %v2289 = vld [vmem:[%s5 + $0x2178] sm:$0xff]
    %v2290 = vld [vmem:[%s5 + $0x2180] sm:$0xff]
    %v2291 = vld [vmem:[%s5 + $0x2188] sm:$0xff]
    %v2292 = vld [vmem:[%s5 + $0x2190] sm:$0xff]
    %v2293 = vld [vmem:[%s5 + $0x2198] sm:$0xff]
    %v2294 = vld [vmem:[%s5 + $0x21a0] sm:$0xff]
    %v2295 = vld [vmem:[%s5 + $0x21a8] sm:$0xff]
    %v2296 = vld [vmem:[%s5 + $0x21b0] sm:$0xff]
    %v2297 = vld [vmem:[%s5 + $0x21b8] sm:$0xff]
    %v2298 = vld [vmem:[%s5 + $0x21c0] sm:$0xff]
    %v2299 = vld [vmem:[%s5 + $0x21c8] sm:$0xff]
    %v2300 = vld [vmem:[%s5 + $0x21d0] sm:$0xff]
    %v2301 = vld [vmem:[%s5 + $0x21d8] sm:$0xff]
    %v2302 = vld [vmem:[%s5 + $0x21e0] sm:$0xff]
    %v2303 = vld [vmem:[%s5 + $0x21e8] sm:$0xff]
    %v2304 = vld [vmem:[%s5 + $0x21f0] sm:$0xff]
    %v2305 = vld [vmem:[%s5 + $0x21f8] sm:$0xff]
    %v2306 = vld [vmem:[%s5 + $0x2200] sm:$0xff]
    %v2307 = vld [vmem:[%s5 + $0x2208] sm:$0xff]
    %v2308 = vld [vmem:[%s5 + $0x2210] sm:$0xff]
    %v2309 = vld [vmem:[%s5 + $0x2218] sm:$0xff]
    %v2310 = vld [vmem:[%s5 + $0x2220] sm:$0xff]
    %v2311 = vld [vmem:[%s5 + $0x2228] sm:$0xff]
    %v2312 = vld [vmem:[%s5 + $0x2230] sm:$0xff]
    %v2313 = vld [vmem:[%s5 + $0x2238] sm:$0xff]
    %v2314 = vld [vmem:[%s5 + $0x2240] sm:$0xff]
    %v2315 = vld [vmem:[%s5 + $0x2248] sm:$0xff]
    %v2316 = vld [vmem:[%s5 + $0x2250] sm:$0xff]
    %v2317 = vld [vmem:[%s5 + $0x2258] sm:$0xff]
    %v2318 = vld [vmem:[%s5 + $0x2260] sm:$0xff]
    %v2319 = vld [vmem:[%s5 + $0x2268] sm:$0xff]
    %v2320 = vld [vmem:[%s5 + $0x2270] sm:$0xff]
    %v2321 = vld [vmem:[%s5 + $0x2278] sm:$0xff]
    %v2322 = vld [vmem:[%s5 + $0x2280] sm:$0xff]
    %v2323 = vld [vmem:[%s5 + $0x2288] sm:$0xff]
    %v2324 = vld [vmem:[%s5 + $0x2290] sm:$0xff]
    %v2325 = vld [vmem:[%s5 + $0x2298] sm:$0xff]
    %v2326 = vld [vmem:[%s5 + $0x22a0] sm:$0xff]
    %v2327 = vld [vmem:[%s5 + $0x22a8] sm:$0xff]
    %v2328 = vld [vmem:[%s5 + $0x22b0] sm:$0xff]
    %v2329 = vld [vmem:[%s5 + $0x22b8] sm:$0xff]
    %v2330 = vld [vmem:[%s5 + $0x22c0] sm:$0xff]
    %v2331 = vld [vmem:[%s5 + $0x22c8] sm:$0xff]
    %v2332 = vld [vmem:[%s5 + $0x22d0] sm:$0xff]
    %v2333 = vld [vmem:[%s5 + $0x22d8] sm:$0xff]
    %v2334 = vld [vmem:[%s5 + $0x22e0] sm:$0xff]
    %v2335 = vld [vmem:[%s5 + $0x22e8] sm:$0xff]
    %v2336 = vld [vmem:[%s5 + $0x22f0] sm:$0xff]
    %v2337 = vld [vmem:[%s5 + $0x22f8] sm:$0xff]
    %v2338 = vld [vmem:[%s5 + $0x2300] sm:$0xff]
    %v2339 = vld [vmem:[%s5 + $0x2308] sm:$0xff]
    %v2340 = vld [vmem:[%s5 + $0x2310] sm:$0xff]
    %v2341 = vld [vmem:[%s5 + $0x2318] sm:$0xff]
    %v2342 = vld [vmem:[%s5 + $0x2320] sm:$0xff]
    %v2343 = vld [vmem:[%s5 + $0x2328] sm:$0xff]
    %v2344 = vld [vmem:[%s5 + $0x2330] sm:$0xff]
    %v2345 = vld [vmem:[%s5 + $0x2338] sm:$0xff]
    %v2346 = vld [vmem:[%s5 + $0x2340] sm:$0xff]
    %v2347 = vld [vmem:[%s5 + $0x2348] sm:$0xff]
    %v2348 = vld [vmem:[%s5 + $0x2350] sm:$0xff]
    %v2349 = vld [vmem:[%s5 + $0x2358] sm:$0xff]
    %v2350 = vld [vmem:[%s5 + $0x2360] sm:$0xff]
    %v2351 = vld [vmem:[%s5 + $0x2368] sm:$0xff]
    %v2352 = vld [vmem:[%s5 + $0x2370] sm:$0xff]
    %v2353 = vld [vmem:[%s5 + $0x2378] sm:$0xff]
    %v2354 = vld [vmem:[%s5 + $0x2380] sm:$0xff]
    %v2355 = vld [vmem:[%s5 + $0x2388] sm:$0xff]
    %v2356 = vld [vmem:[%s5 + $0x2390] sm:$0xff]
    %v2357 = vld [vmem:[%s5 + $0x2398] sm:$0xff]
    %v2358 = vld [vmem:[%s5 + $0x23a0] sm:$0xff]
    %v2359 = vld [vmem:[%s5 + $0x23a8] sm:$0xff]
    %v2360 = vld [vmem:[%s5 + $0x23b0] sm:$0xff]
    %v2361 = vld [vmem:[%s5 + $0x23b8] sm:$0xff]
    %v2362 = vld [vmem:[%s5 + $0x23c0] sm:$0xff]
    %v2363 = vld [vmem:[%s5 + $0x23c8] sm:$0xff]
    %v2364 = vld [vmem:[%s5 + $0x23d0] sm:$0xff]
    %v2365 = vld [vmem:[%s5 + $0x23d8] sm:$0xff]
    %v2366 = vld [vmem:[%s5 + $0x23e0] sm:$0xff]
    %v2367 = vld [vmem:[%s5 + $0x23e8] sm:$0xff]
    %v2368 = vld [vmem:[%s5 + $0x23f0] sm:$0xff]
    %v2369 = vld [vmem:[%s5 + $0x23f8] sm:$0xff]
    %v2370 = vld [vmem:[%s5 + $0x2400] sm:$0xff]
    %v2371 = vld [vmem:[%s5 + $0x2408] sm:$0xff]
    %v2372 = vld [vmem:[%s5 + $0x2410] sm:$0xff]
    %v2373 = vld [vmem:[%s5 + $0x2418] sm:$0xff]
    %v2374 = vld [vmem:[%s5 + $0x2420] sm:$0xff]
    %v2375 = vld [vmem:[%s5 + $0x2428] sm:$0xff]
    %v2376 = vld [vmem:[%s5 + $0x2430] sm:$0xff]
    %v2377 = vld [vmem:[%s5 + $0x2438] sm:$0xff]
    %v2378 = vld [vmem:[%s5 + $0x2440] sm:$0xff]
    %v2379 = vld [vmem:[%s5 + $0x2448] sm:$0xff]
    %v2380 = vld [vmem:[%s5 + $0x2450] sm:$0xff]
    %v2381 = vld [vmem:[%s5 + $0x2458] sm:$0xff]
    %v2382 = vld [vmem:[%s5 + $0x2460] sm:$0xff]
    %v2383 = vld [vmem:[%s5 + $0x2468] sm:$0xff]
    %v2384 = vld [vmem:[%s5 + $0x2470] sm:$0xff]
    %v2385 = vld [vmem:[%s5 + $0x2478] sm:$0xff]
    %v2386 = vld [vmem:[%s5 + $0x2480] sm:$0xff]
    %v2387 = vld [vmem:[%s5 + $0x2488] sm:$0xff]
    %v2388 = vld [vmem:[%s5 + $0x2490] sm:$0xff]
    %v2389 = vld [vmem:[%s5 + $0x2498] sm:$0xff]
    %v2390 = vld [vmem:[%s5 + $0x24a0] sm:$0xff]
    %v2391 = vld [vmem:[%s5 + $0x24a8] sm:$0xff]
    %v2392 = vld [vmem:[%s5 + $0x24b0] sm:$0xff]
    %v2393 = vld [vmem:[%s5 + $0x24b8] sm:$0xff]
    %v2394 = vld [vmem:[%s5 + $0x24c0] sm:$0xff]
    %v2395 = vld [vmem:[%s5 + $0x24c8] sm:$0xff]
    %v2396 = vld [vmem:[%s5 + $0x24d0] sm:$0xff]
    %v2397 = vld [vmem:[%s5 + $0x24d8] sm:$0xff]
    %v2398 = vld [vmem:[%s5 + $0x24e0] sm:$0xff]
    %v2399 = vld [vmem:[%s5 + $0x24e8] sm:$0xff]
    %v2400 = vld [vmem:[%s5 + $0x24f0] sm:$0xff]
    %v2401 = vld [vmem:[%s5 + $0x24f8] sm:$0xff]
    %v2402 = vld [vmem:[%s5 + $0x2500] sm:$0xff]
    %v2403 = vld [vmem:[%s5 + $0x2508] sm:$0xff]
    %v2404 = vld [vmem:[%s5 + $0x2510] sm:$0xff]
    %v2405 = vld [vmem:[%s5 + $0x2518] sm:$0xff]
    %v2406 = vld [vmem:[%s5 + $0x2520] sm:$0xff]
    %v2407 = vld [vmem:[%s5 + $0x2528] sm:$0xff]
    %v2408 = vld [vmem:[%s5 + $0x2530] sm:$0xff]
    %v2409 = vld [vmem:[%s5 + $0x2538] sm:$0xff]
    %v2410 = vld [vmem:[%s5 + $0x2540] sm:$0xff]
    %v2411 = vld [vmem:[%s5 + $0x2548] sm:$0xff]
    %v2412 = vld [vmem:[%s5 + $0x2550] sm:$0xff]
    %v2413 = vld [vmem:[%s5 + $0x2558] sm:$0xff]
    %v2414 = vld [vmem:[%s5 + $0x2560] sm:$0xff]
    %v2415 = vld [vmem:[%s5 + $0x2568] sm:$0xff]
    %v2416 = vld [vmem:[%s5 + $0x2570] sm:$0xff]
    %v2417 = vld [vmem:[%s5 + $0x2578] sm:$0xff]
    %v2418 = vld [vmem:[%s5 + $0x2580] sm:$0xff]
    %v2419 = vld [vmem:[%s5 + $0x2588] sm:$0xff]
    %v2420 = vld [vmem:[%s5 + $0x2590] sm:$0xff]
    %v2421 = vld [vmem:[%s5 + $0x2598] sm:$0xff]
    %v2422 = vld [vmem:[%s5 + $0x25a0] sm:$0xff]
    %v2423 = vld [vmem:[%s5 + $0x25a8] sm:$0xff]
    %v2424 = vld [vmem:[%s5 + $0x25b0] sm:$0xff]
    %v2425 = vld [vmem:[%s5 + $0x25b8] sm:$0xff]
    %v2426 = vld [vmem:[%s5 + $0x25c0] sm:$0xff]
    %v2427 = vld [vmem:[%s5 + $0x25c8] sm:$0xff]
    %v2428 = vld [vmem:[%s5 + $0x25d0] sm:$0xff]
    %v2429 = vld [vmem:[%s5 + $0x25d8] sm:$0xff]
    %v2430 = vld [vmem:[%s5 + $0x25e0] sm:$0xff]
    %v2431 = vld [vmem:[%s5 + $0x25e8] sm:$0xff]
    %v2432 = vld [vmem:[%s5 + $0x25f0] sm:$0xff]
    %v2433 = vld [vmem:[%s5 + $0x25f8] sm:$0xff]
    %v2434 = vld [vmem:[%s5 + $0x2600] sm:$0xff]
    %v2435 = vld [vmem:[%s5 + $0x2608] sm:$0xff]
    %v2436 = vld [vmem:[%s5 + $0x2610] sm:$0xff]
    %v2437 = vld [vmem:[%s5 + $0x2618] sm:$0xff]
    %v2438 = vld [vmem:[%s5 + $0x2620] sm:$0xff]
    %v2439 = vld [vmem:[%s5 + $0x2628] sm:$0xff]
    %v2440 = vld [vmem:[%s5 + $0x2630] sm:$0xff]
    %v2441 = vld [vmem:[%s5 + $0x2638] sm:$0xff]
    %v2442 = vld [vmem:[%s5 + $0x2640] sm:$0xff]
    %v2443 = vld [vmem:[%s5 + $0x2648] sm:$0xff]
    %v2444 = vld [vmem:[%s5 + $0x2650] sm:$0xff]
    %v2445 = vld [vmem:[%s5 + $0x2658] sm:$0xff]
    %v2446 = vld [vmem:[%s5 + $0x2660] sm:$0xff]
    %v2447 = vld [vmem:[%s5 + $0x2668] sm:$0xff]
    %v2448 = vld [vmem:[%s5 + $0x2670] sm:$0xff]
    %v2449 = vld [vmem:[%s5 + $0x2678] sm:$0xff]
    %v2450 = vld [vmem:[%s5 + $0x2680] sm:$0xff]
    %v2451 = vld [vmem:[%s5 + $0x2688] sm:$0xff]
    %v2452 = vld [vmem:[%s5 + $0x2690] sm:$0xff]
    %v2453 = vld [vmem:[%s5 + $0x2698] sm:$0xff]
    %v2454 = vld [vmem:[%s5 + $0x26a0] sm:$0xff]
    %v2455 = vld [vmem:[%s5 + $0x26a8] sm:$0xff]
    %v2456 = vld [vmem:[%s5 + $0x26b0] sm:$0xff]
    %v2457 = vld [vmem:[%s5 + $0x26b8] sm:$0xff]
    %v2458 = vld [vmem:[%s5 + $0x26c0] sm:$0xff]
    %v2459 = vld [vmem:[%s5 + $0x26c8] sm:$0xff]
    %v2460 = vld [vmem:[%s5 + $0x26d0] sm:$0xff]
    %v2461 = vld [vmem:[%s5 + $0x26d8] sm:$0xff]
    %v2462 = vld [vmem:[%s5 + $0x26e0] sm:$0xff]
    %v2463 = vld [vmem:[%s5 + $0x26e8] sm:$0xff]
    %v2464 = vld [vmem:[%s5 + $0x26f0] sm:$0xff]
    %v2465 = vld [vmem:[%s5 + $0x26f8] sm:$0xff]
    %v2466 = vld [vmem:[%s5 + $0x2700] sm:$0xff]
    %v2467 = vld [vmem:[%s5 + $0x2708] sm:$0xff]
    %v2468 = vld [vmem:[%s5 + $0x2710] sm:$0xff]
    %v2469 = vld [vmem:[%s5 + $0x2718] sm:$0xff]
    %v2470 = vld [vmem:[%s5 + $0x2720] sm:$0xff]
    %v2471 = vld [vmem:[%s5 + $0x2728] sm:$0xff]
    %v2472 = vld [vmem:[%s5 + $0x2730] sm:$0xff]
    %v2473 = vld [vmem:[%s5 + $0x2738] sm:$0xff]
    %v2474 = vld [vmem:[%s5 + $0x2740] sm:$0xff]
    %v2475 = vld [vmem:[%s5 + $0x2748] sm:$0xff]
    %v2476 = vld [vmem:[%s5 + $0x2750] sm:$0xff]
    %v2477 = vld [vmem:[%s5 + $0x2758] sm:$0xff]
    %v2478 = vld [vmem:[%s5 + $0x2760] sm:$0xff]
    %v2479 = vld [vmem:[%s5 + $0x2768] sm:$0xff]
    %v2480 = vld [vmem:[%s5 + $0x2770] sm:$0xff]
    %v2481 = vld [vmem:[%s5 + $0x2778] sm:$0xff]
    %v2482 = vld [vmem:[%s5 + $0x2780] sm:$0xff]
    %v2483 = vld [vmem:[%s5 + $0x2788] sm:$0xff]
    %v2484 = vld [vmem:[%s5 + $0x2790] sm:$0xff]
    %v2485 = vld [vmem:[%s5 + $0x2798] sm:$0xff]
    %v2486 = vld [vmem:[%s5 + $0x27a0] sm:$0xff]
    %v2487 = vld [vmem:[%s5 + $0x27a8] sm:$0xff]
    %v2488 = vld [vmem:[%s5 + $0x27b0] sm:$0xff]
    %v2489 = vld [vmem:[%s5 + $0x27b8] sm:$0xff]
    %v2490 = vld [vmem:[%s5 + $0x27c0] sm:$0xff]
    %v2491 = vld [vmem:[%s5 + $0x27c8] sm:$0xff]
    %v2492 = vld [vmem:[%s5 + $0x27d0] sm:$0xff]
    %v2493 = vld [vmem:[%s5 + $0x27d8] sm:$0xff]
    %v2494 = vld [vmem:[%s5 + $0x27e0] sm:$0xff]
    %v2495 = vld [vmem:[%s5 + $0x27e8] sm:$0xff]
    %v2496 = vld [vmem:[%s5 + $0x27f0] sm:$0xff]
    %v2497 = vld [vmem:[%s5 + $0x27f8] sm:$0xff]
    %v2498 = vld [vmem:[%s5 + $0x2800] sm:$0xff]
    %v2499 = vld [vmem:[%s5 + $0x2808] sm:$0xff]
    %v2500 = vld [vmem:[%s5 + $0x2810] sm:$0xff]
    %v2501 = vld [vmem:[%s5 + $0x2818] sm:$0xff]
    %v2502 = vld [vmem:[%s5 + $0x2820] sm:$0xff]
    %v2503 = vld [vmem:[%s5 + $0x2828] sm:$0xff]
    %v2504 = vld [vmem:[%s5 + $0x2830] sm:$0xff]
    %v2505 = vld [vmem:[%s5 + $0x2838] sm:$0xff]
    %v2506 = vld [vmem:[%s5 + $0x2840] sm:$0xff]
    %v2507 = vld [vmem:[%s5 + $0x2848] sm:$0xff]
    %v2508 = vld [vmem:[%s5 + $0x2850] sm:$0xff]
    %v2509 = vld [vmem:[%s5 + $0x2858] sm:$0xff]
    %v2510 = vld [vmem:[%s5 + $0x2860] sm:$0xff]
    %v2511 = vld [vmem:[%s5 + $0x2868] sm:$0xff]
    %v2512 = vld [vmem:[%s5 + $0x2870] sm:$0xff]
    %v2513 = vld [vmem:[%s5 + $0x2878] sm:$0xff]
    %v2514 = vld [vmem:[%s5 + $0x2880] sm:$0xff]
    %v2515 = vld [vmem:[%s5 + $0x2888] sm:$0xff]
    %v2516 = vld [vmem:[%s5 + $0x2890] sm:$0xff]
    %v2517 = vld [vmem:[%s5 + $0x2898] sm:$0xff]
    %v2518 = vld [vmem:[%s5 + $0x28a0] sm:$0xff]
    %v2519 = vld [vmem:[%s5 + $0x28a8] sm:$0xff]
    %v2520 = vld [vmem:[%s5 + $0x28b0] sm:$0xff]
    %v2521 = vld [vmem:[%s5 + $0x28b8] sm:$0xff]
    %v2522 = vld [vmem:[%s5 + $0x28c0] sm:$0xff]
    %v2523 = vld [vmem:[%s5 + $0x28c8] sm:$0xff]
    %v2524 = vld [vmem:[%s5 + $0x28d0] sm:$0xff]
    %v2525 = vld [vmem:[%s5 + $0x28d8] sm:$0xff]
    %v2526 = vld [vmem:[%s5 + $0x28e0] sm:$0xff]
    %v2527 = vld [vmem:[%s5 + $0x28e8] sm:$0xff]
    %v2528 = vld [vmem:[%s5 + $0x28f0] sm:$0xff]
    %v2529 = vld [vmem:[%s5 + $0x28f8] sm:$0xff]
    %v2530 = vld [vmem:[%s5 + $0x2900] sm:$0xff]
    %v2531 = vld [vmem:[%s5 + $0x2908] sm:$0xff]
    %v2532 = vld [vmem:[%s5 + $0x2910] sm:$0xff]
    %v2533 = vld [vmem:[%s5 + $0x2918] sm:$0xff]
    %v2534 = vld [vmem:[%s5 + $0x2920] sm:$0xff]
    %v2535 = vld [vmem:[%s5 + $0x2928] sm:$0xff]
    %v2536 = vld [vmem:[%s5 + $0x2930] sm:$0xff]
    %v2537 = vld [vmem:[%s5 + $0x2938] sm:$0xff]
    %v2538 = vld [vmem:[%s5 + $0x2940] sm:$0xff]
    %v2539 = vld [vmem:[%s5 + $0x2948] sm:$0xff]
    %v2540 = vld [vmem:[%s5 + $0x2950] sm:$0xff]
    %v2541 = vld [vmem:[%s5 + $0x2958] sm:$0xff]
    %v2542 = vld [vmem:[%s5 + $0x2960] sm:$0xff]
    %v2543 = vld [vmem:[%s5 + $0x2968] sm:$0xff]
    %v2544 = vld [vmem:[%s5 + $0x2970] sm:$0xff]
    %v2545 = vld [vmem:[%s5 + $0x2978] sm:$0xff]
    %v2546 = vld [vmem:[%s5 + $0x2980] sm:$0xff]
    %v2547 = vld [vmem:[%s5 + $0x2988] sm:$0xff]
    %v2548 = vld [vmem:[%s5 + $0x2990] sm:$0xff]
    %v2549 = vld [vmem:[%s5 + $0x2998] sm:$0xff]
    %v2550 = vld [vmem:[%s5 + $0x29a0] sm:$0xff]
    %v2551 = vld [vmem:[%s5 + $0x29a8] sm:$0xff]
    %v2552 = vld [vmem:[%s5 + $0x29b0] sm:$0xff]
    %v2553 = vld [vmem:[%s5 + $0x29b8] sm:$0xff]
    %v2554 = vld [vmem:[%s5 + $0x29c0] sm:$0xff]
    %v2555 = vld [vmem:[%s5 + $0x29c8] sm:$0xff]
    %v2556 = vld [vmem:[%s5 + $0x29d0] sm:$0xff]
    %v2557 = vld [vmem:[%s5 + $0x29d8] sm:$0xff]
    %v2558 = vld [vmem:[%s5 + $0x29e0] sm:$0xff]
    %v2559 = vld [vmem:[%s5 + $0x29e8] sm:$0xff]
    %v2560 = vld [vmem:[%s5 + $0x29f0] sm:$0xff]
    %v2561 = vld [vmem:[%s5 + $0x29f8] sm:$0xff]
    %v2562 = vld [vmem:[%s5 + $0x2a00] sm:$0xff]
    %v2563 = vld [vmem:[%s5 + $0x2a08] sm:$0xff]
    %v2564 = vld [vmem:[%s5 + $0x2a10] sm:$0xff]
    %v2565 = vld [vmem:[%s5 + $0x2a18] sm:$0xff]
    %v2566 = vld [vmem:[%s5 + $0x2a20] sm:$0xff]
    %v2567 = vld [vmem:[%s5 + $0x2a28] sm:$0xff]
    %v2568 = vld [vmem:[%s5 + $0x2a30] sm:$0xff]
    %v2569 = vld [vmem:[%s5 + $0x2a38] sm:$0xff]
    %v2570 = vld [vmem:[%s5 + $0x2a40] sm:$0xff]
    %v2571 = vld [vmem:[%s5 + $0x2a48] sm:$0xff]
    %v2572 = vld [vmem:[%s5 + $0x2a50] sm:$0xff]
    %v2573 = vld [vmem:[%s5 + $0x2a58] sm:$0xff]
    %v2574 = vld [vmem:[%s5 + $0x2a60] sm:$0xff]
    %v2575 = vld [vmem:[%s5 + $0x2a68] sm:$0xff]
    %v2576 = vld [vmem:[%s5 + $0x2a70] sm:$0xff]
    %v2577 = vld [vmem:[%s5 + $0x2a78] sm:$0xff]
    %v2578 = vld [vmem:[%s5 + $0x2a80] sm:$0xff]
    %v2579 = vld [vmem:[%s5 + $0x2a88] sm:$0xff]
    %v2580 = vld [vmem:[%s5 + $0x2a90] sm:$0xff]
    %v2581 = vld [vmem:[%s5 + $0x2a98] sm:$0xff]
    %v2582 = vld [vmem:[%s5 + $0x2aa0] sm:$0xff]
    %v2583 = vld [vmem:[%s5 + $0x2aa8] sm:$0xff]
    %v2584 = vld [vmem:[%s5 + $0x2ab0] sm:$0xff]
    %v2585 = vld [vmem:[%s5 + $0x2ab8] sm:$0xff]
    %v2586 = vld [vmem:[%s5 + $0x2ac0] sm:$0xff]
    %v2587 = vld [vmem:[%s5 + $0x2ac8] sm:$0xff]
    %v2588 = vld [vmem:[%s5 + $0x2ad0] sm:$0xff]
    %v2589 = vld [vmem:[%s5 + $0x2ad8] sm:$0xff]
    %v2590 = vld [vmem:[%s5 + $0x2ae0] sm:$0xff]
    %v2591 = vld [vmem:[%s5 + $0x2ae8] sm:$0xff]
    %v2592 = vld [vmem:[%s5 + $0x2af0] sm:$0xff]
    %v2593 = vld [vmem:[%s5 + $0x2af8] sm:$0xff]
    %v2594 = vld [vmem:[%s5 + $0x2b00] sm:$0xff]
    %v2595 = vld [vmem:[%s5 + $0x2b08] sm:$0xff]
    %v2596 = vld [vmem:[%s5 + $0x2b10] sm:$0xff]
    %v2597 = vld [vmem:[%s5 + $0x2b18] sm:$0xff]
    %v2598 = vld [vmem:[%s5 + $0x2b20] sm:$0xff]
    %v2599 = vld [vmem:[%s5 + $0x2b28] sm:$0xff]
    %v2600 = vld [vmem:[%s5 + $0x2b30] sm:$0xff]
    %v2601 = vld [vmem:[%s5 + $0x2b38] sm:$0xff]
    %v2602 = vld [vmem:[%s5 + $0x2b40] sm:$0xff]
    %v2603 = vld [vmem:[%s5 + $0x2b48] sm:$0xff]
    %v2604 = vld [vmem:[%s5 + $0x2b50] sm:$0xff]
    %v2605 = vld [vmem:[%s5 + $0x2b58] sm:$0xff]
    %v2606 = vld [vmem:[%s5 + $0x2b60] sm:$0xff]
    %v2607 = vld [vmem:[%s5 + $0x2b68] sm:$0xff]
    %v2608 = vld [vmem:[%s5 + $0x2b70] sm:$0xff]
    %v2609 = vld [vmem:[%s5 + $0x2b78] sm:$0xff]
    %v2610 = vld [vmem:[%s5 + $0x2b80] sm:$0xff]
    %v2611 = vld [vmem:[%s5 + $0x2b88] sm:$0xff]
    %v2612 = vld [vmem:[%s5 + $0x2b90] sm:$0xff]
    %v2613 = vld [vmem:[%s5 + $0x2b98] sm:$0xff]
    %v2614 = vld [vmem:[%s5 + $0x2ba0] sm:$0xff]
    %v2615 = vld [vmem:[%s5 + $0x2ba8] sm:$0xff]
    %v2616 = vld [vmem:[%s5 + $0x2bb0] sm:$0xff]
    %v2617 = vld [vmem:[%s5 + $0x2bb8] sm:$0xff]
    %v2618 = vld [vmem:[%s5 + $0x2bc0] sm:$0xff]
    %v2619 = vld [vmem:[%s5 + $0x2bc8] sm:$0xff]
    %v2620 = vld [vmem:[%s5 + $0x2bd0] sm:$0xff]
    %v2621 = vld [vmem:[%s5 + $0x2bd8] sm:$0xff]
    %v2622 = vld [vmem:[%s5 + $0x2be0] sm:$0xff]
    %v2623 = vld [vmem:[%s5 + $0x2be8] sm:$0xff]
    %v2624 = vld [vmem:[%s5 + $0x2bf0] sm:$0xff]
    %v2625 = vld [vmem:[%s5 + $0x2bf8] sm:$0xff]
    %v2626 = vld [vmem:[%s5 + $0x2c00] sm:$0xff]
    %v2627 = vld [vmem:[%s5 + $0x2c08] sm:$0xff]
    %v2628 = vld [vmem:[%s5 + $0x2c10] sm:$0xff]
    %v2629 = vld [vmem:[%s5 + $0x2c18] sm:$0xff]
    %v2630 = vld [vmem:[%s5 + $0x2c20] sm:$0xff]
    %v2631 = vld [vmem:[%s5 + $0x2c28] sm:$0xff]
    %v2632 = vld [vmem:[%s5 + $0x2c30] sm:$0xff]
    %v2633 = vld [vmem:[%s5 + $0x2c38] sm:$0xff]
    %v2634 = vld [vmem:[%s5 + $0x2c40] sm:$0xff]
    %v2635 = vld [vmem:[%s5 + $0x2c48] sm:$0xff]
    %v2636 = vld [vmem:[%s5 + $0x2c50] sm:$0xff]
    %v2637 = vld [vmem:[%s5 + $0x2c58] sm:$0xff]
    %v2638 = vld [vmem:[%s5 + $0x2c60] sm:$0xff]
    %v2639 = vld [vmem:[%s5 + $0x2c68] sm:$0xff]
    %v2640 = vld [vmem:[%s5 + $0x2c70] sm:$0xff]
    %v2641 = vld [vmem:[%s5 + $0x2c78] sm:$0xff]
    %v2642 = vld [vmem:[%s5 + $0x2c80] sm:$0xff]
    %v2643 = vld [vmem:[%s5 + $0x2c88] sm:$0xff]
    %v2644 = vld [vmem:[%s5 + $0x2c90] sm:$0xff]
    %v2645 = vld [vmem:[%s5 + $0x2c98] sm:$0xff]
    %v2646 = vld [vmem:[%s5 + $0x2ca0] sm:$0xff]
    %v2647 = vld [vmem:[%s5 + $0x2ca8] sm:$0xff]
    %v2648 = vld [vmem:[%s5 + $0x2cb0] sm:$0xff]
    %v2649 = vld [vmem:[%s5 + $0x2cb8] sm:$0xff]
    %v2650 = vld [vmem:[%s5 + $0x2cc0] sm:$0xff]
    %v2651 = vld [vmem:[%s5 + $0x2cc8] sm:$0xff]
    %v2652 = vld [vmem:[%s5 + $0x2cd0] sm:$0xff]
    %v2653 = vld [vmem:[%s5 + $0x2cd8] sm:$0xff]
    %v2654 = vld [vmem:[%s5 + $0x2ce0] sm:$0xff]
    %v2655 = vld [vmem:[%s5 + $0x2ce8] sm:$0xff]
    %v2656 = vld [vmem:[%s5 + $0x2cf0] sm:$0xff]
    %v2657 = vld [vmem:[%s5 + $0x2cf8] sm:$0xff]
    %v2658 = vld [vmem:[%s5 + $0x2d00] sm:$0xff]
    %v2659 = vld [vmem:[%s5 + $0x2d08] sm:$0xff]
    %v2660 = vld [vmem:[%s5 + $0x2d10] sm:$0xff]
    %v2661 = vld [vmem:[%s5 + $0x2d18] sm:$0xff]
    %v2662 = vld [vmem:[%s5 + $0x2d20] sm:$0xff]
    %v2663 = vld [vmem:[%s5 + $0x2d28] sm:$0xff]
    %v2664 = vld [vmem:[%s5 + $0x2d30] sm:$0xff]
    %v2665 = vld [vmem:[%s5 + $0x2d38] sm:$0xff]
    %v2666 = vld [vmem:[%s5 + $0x2d40] sm:$0xff]
    %v2667 = vld [vmem:[%s5 + $0x2d48] sm:$0xff]
    %v2668 = vld [vmem:[%s5 + $0x2d50] sm:$0xff]
    %v2669 = vld [vmem:[%s5 + $0x2d58] sm:$0xff]
    %v2670 = vld [vmem:[%s5 + $0x2d60] sm:$0xff]
    %v2671 = vld [vmem:[%s5 + $0x2d68] sm:$0xff]
    %v2672 = vld [vmem:[%s5 + $0x2d70] sm:$0xff]
    %v2673 = vld [vmem:[%s5 + $0x2d78] sm:$0xff]
    %v2674 = vld [vmem:[%s5 + $0x2d80] sm:$0xff]
    %v2675 = vld [vmem:[%s5 + $0x2d88] sm:$0xff]
    %v2676 = vld [vmem:[%s5 + $0x2d90] sm:$0xff]
    %v2677 = vld [vmem:[%s5 + $0x2d98] sm:$0xff]
    %v2678 = vld [vmem:[%s5 + $0x2da0] sm:$0xff]
    %v2679 = vld [vmem:[%s5 + $0x2da8] sm:$0xff]
    %v2680 = vld [vmem:[%s5 + $0x2db0] sm:$0xff]
    %v2681 = vld [vmem:[%s5 + $0x2db8] sm:$0xff]
    %v2682 = vld [vmem:[%s5 + $0x2dc0] sm:$0xff]
    %v2683 = vld [vmem:[%s5 + $0x2dc8] sm:$0xff]
    %v2684 = vld [vmem:[%s5 + $0x2dd0] sm:$0xff]
    %v2685 = vld [vmem:[%s5 + $0x2dd8] sm:$0xff]
    %v2686 = vld [vmem:[%s5 + $0x2de0] sm:$0xff]
    %v2687 = vld [vmem:[%s5 + $0x2de8] sm:$0xff]
    %v2688 = vld [vmem:[%s5 + $0x2df0] sm:$0xff]
    %v2689 = vld [vmem:[%s5 + $0x2df8] sm:$0xff]
    %v2690 = vld [vmem:[%s5 + $0x2e00] sm:$0xff]
    %v2691 = vld [vmem:[%s5 + $0x2e08] sm:$0xff]
    %v2692 = vld [vmem:[%s5 + $0x2e10] sm:$0xff]
    %v2693 = vld [vmem:[%s5 + $0x2e18] sm:$0xff]
    %v2694 = vld [vmem:[%s5 + $0x2e20] sm:$0xff]
    %v2695 = vld [vmem:[%s5 + $0x2e28] sm:$0xff]
    %v2696 = vld [vmem:[%s5 + $0x2e30] sm:$0xff]
    %v2697 = vld [vmem:[%s5 + $0x2e38] sm:$0xff]
    %v2698 = vld [vmem:[%s5 + $0x2e40] sm:$0xff]
    %v2699 = vld [vmem:[%s5 + $0x2e48] sm:$0xff]
    %v2700 = vld [vmem:[%s5 + $0x2e50] sm:$0xff]
    %v2701 = vld [vmem:[%s5 + $0x2e58] sm:$0xff]
    %v2702 = vld [vmem:[%s5 + $0x2e60] sm:$0xff]
    %v2703 = vld [vmem:[%s5 + $0x2e68] sm:$0xff]
    %v2704 = vld [vmem:[%s5 + $0x2e70] sm:$0xff]
    %v2705 = vld [vmem:[%s5 + $0x2e78] sm:$0xff]
    %v2706 = vld [vmem:[%s5 + $0x2e80] sm:$0xff]
    %v2707 = vld [vmem:[%s5 + $0x2e88] sm:$0xff]
    %v2708 = vld [vmem:[%s5 + $0x2e90] sm:$0xff]
    %v2709 = vld [vmem:[%s5 + $0x2e98] sm:$0xff]
    %v2710 = vld [vmem:[%s5 + $0x2ea0] sm:$0xff]
    %v2711 = vld [vmem:[%s5 + $0x2ea8] sm:$0xff]
    %v2712 = vld [vmem:[%s5 + $0x2eb0] sm:$0xff]
    %v2713 = vld [vmem:[%s5 + $0x2eb8] sm:$0xff]
    %v2714 = vld [vmem:[%s5 + $0x2ec0] sm:$0xff]
    %v2715 = vld [vmem:[%s5 + $0x2ec8] sm:$0xff]
    %v2716 = vld [vmem:[%s5 + $0x2ed0] sm:$0xff]
    %v2717 = vld [vmem:[%s5 + $0x2ed8] sm:$0xff]
    %v2718 = vld [vmem:[%s5 + $0x2ee0] sm:$0xff]
    %v2719 = vld [vmem:[%s5 + $0x2ee8] sm:$0xff]
    %v2720 = vld [vmem:[%s5 + $0x2ef0] sm:$0xff]
    %v2721 = vld [vmem:[%s5 + $0x2ef8] sm:$0xff]
    %v2722 = vld [vmem:[%s5 + $0x2f00] sm:$0xff]
    %v2723 = vld [vmem:[%s5 + $0x2f08] sm:$0xff]
    %v2724 = vld [vmem:[%s5 + $0x2f10] sm:$0xff]
    %v2725 = vld [vmem:[%s5 + $0x2f18] sm:$0xff]
    %v2726 = vld [vmem:[%s5 + $0x2f20] sm:$0xff]
    %v2727 = vld [vmem:[%s5 + $0x2f28] sm:$0xff]
    %v2728 = vld [vmem:[%s5 + $0x2f30] sm:$0xff]
    %v2729 = vld [vmem:[%s5 + $0x2f38] sm:$0xff]
    %v2730 = vld [vmem:[%s5 + $0x2f40] sm:$0xff]
    %v2731 = vld [vmem:[%s5 + $0x2f48] sm:$0xff]
    %v2732 = vld [vmem:[%s5 + $0x2f50] sm:$0xff]
    %v2733 = vld [vmem:[%s5 + $0x2f58] sm:$0xff]
    %v2734 = vld [vmem:[%s5 + $0x2f60] sm:$0xff]
    %v2735 = vld [vmem:[%s5 + $0x2f68] sm:$0xff]
    %v2736 = vld [vmem:[%s5 + $0x2f70] sm:$0xff]
    %v2737 = vld [vmem:[%s5 + $0x2f78] sm:$0xff]
    %v2738 = vld [vmem:[%s5 + $0x2f80] sm:$0xff]
    %v2739 = vld [vmem:[%s5 + $0x2f88] sm:$0xff]
    %v2740 = vld [vmem:[%s5 + $0x2f90] sm:$0xff]
    %v2741 = vld [vmem:[%s5 + $0x2f98] sm:$0xff]
    %v2742 = vld [vmem:[%s5 + $0x2fa0] sm:$0xff]
    %v2743 = vld [vmem:[%s5 + $0x2fa8] sm:$0xff]
    %v2744 = vld [vmem:[%s5 + $0x2fb0] sm:$0xff]
    %v2745 = vld [vmem:[%s5 + $0x2fb8] sm:$0xff]
    %v2746 = vld [vmem:[%s5 + $0x2fc0] sm:$0xff]
    %v2747 = vld [vmem:[%s5 + $0x2fc8] sm:$0xff]
    %v2748 = vld [vmem:[%s5 + $0x2fd0] sm:$0xff]
    %v2749 = vld [vmem:[%s5 + $0x2fd8] sm:$0xff]
    %v2750 = vld [vmem:[%s5 + $0x2fe0] sm:$0xff]
    %v2751 = vld [vmem:[%s5 + $0x2fe8] sm:$0xff]
    %v2752 = vld [vmem:[%s5 + $0x2ff0] sm:$0xff]
    %v2753 = vld [vmem:[%s5 + $0x2ff8] sm:$0xff]
    %v2754 = vld [vmem:[%s5 + $0x3000] sm:$0xff]
    %v2755 = vld [vmem:[%s5 + $0x3008] sm:$0xff]
    %v2756 = vld [vmem:[%s5 + $0x3010] sm:$0xff]
    %v2757 = vld [vmem:[%s5 + $0x3018] sm:$0xff]
    %v2758 = vld [vmem:[%s5 + $0x3020] sm:$0xff]
    %v2759 = vld [vmem:[%s5 + $0x3028] sm:$0xff]
    %v2760 = vld [vmem:[%s5 + $0x3030] sm:$0xff]
    %v2761 = vld [vmem:[%s5 + $0x3038] sm:$0xff]
    %v2762 = vld [vmem:[%s5 + $0x3040] sm:$0xff]
    %v2763 = vld [vmem:[%s5 + $0x3048] sm:$0xff]
    %v2764 = vld [vmem:[%s5 + $0x3050] sm:$0xff]
    %v2765 = vld [vmem:[%s5 + $0x3058] sm:$0xff]
    %v2766 = vld [vmem:[%s5 + $0x3060] sm:$0xff]
    %v2767 = vld [vmem:[%s5 + $0x3068] sm:$0xff]
    %v2768 = vld [vmem:[%s5 + $0x3070] sm:$0xff]
    %v2769 = vld [vmem:[%s5 + $0x3078] sm:$0xff]
    %v2770 = vld [vmem:[%s5 + $0x3080] sm:$0xff]
    %v2771 = vld [vmem:[%s5 + $0x3088] sm:$0xff]
    %v2772 = vld [vmem:[%s5 + $0x3090] sm:$0xff]
    %v2773 = vld [vmem:[%s5 + $0x3098] sm:$0xff]
    %v2774 = vld [vmem:[%s5 + $0x30a0] sm:$0xff]
    %v2775 = vld [vmem:[%s5 + $0x30a8] sm:$0xff]
    %v2776 = vld [vmem:[%s5 + $0x30b0] sm:$0xff]
    %v2777 = vld [vmem:[%s5 + $0x30b8] sm:$0xff]
    %v2778 = vld [vmem:[%s5 + $0x30c0] sm:$0xff]
    %v2779 = vld [vmem:[%s5 + $0x30c8] sm:$0xff]
    %v2780 = vld [vmem:[%s5 + $0x30d0] sm:$0xff]
    %v2781 = vld [vmem:[%s5 + $0x30d8] sm:$0xff]
    %v2782 = vld [vmem:[%s5 + $0x30e0] sm:$0xff]
    %v2783 = vld [vmem:[%s5 + $0x30e8] sm:$0xff]
    %v2784 = vld [vmem:[%s5 + $0x30f0] sm:$0xff]
    %v2785 = vld [vmem:[%s5 + $0x30f8] sm:$0xff]
    %v2786 = vld [vmem:[%s5 + $0x3100] sm:$0xff]
    %v2787 = vld [vmem:[%s5 + $0x3108] sm:$0xff]
    %v2788 = vld [vmem:[%s5 + $0x3110] sm:$0xff]
    %v2789 = vld [vmem:[%s5 + $0x3118] sm:$0xff]
    %v2790 = vld [vmem:[%s5 + $0x3120] sm:$0xff]
    %v2791 = vld [vmem:[%s5 + $0x3128] sm:$0xff]
    %v2792 = vld [vmem:[%s5 + $0x3130] sm:$0xff]
    %v2793 = vld [vmem:[%s5 + $0x3138] sm:$0xff]
    %v2794 = vld [vmem:[%s5 + $0x3140] sm:$0xff]
    %v2795 = vld [vmem:[%s5 + $0x3148] sm:$0xff]
    %v2796 = vld [vmem:[%s5 + $0x3150] sm:$0xff]
    %v2797 = vld [vmem:[%s5 + $0x3158] sm:$0xff]
    %v2798 = vld [vmem:[%s5 + $0x3160] sm:$0xff]
    %v2799 = vld [vmem:[%s5 + $0x3168] sm:$0xff]
    %v2800 = vld [vmem:[%s5 + $0x3170] sm:$0xff]
    %v2801 = vld [vmem:[%s5 + $0x3178] sm:$0xff]
    %v2802 = vld [vmem:[%s5 + $0x3180] sm:$0xff]
    %v2803 = vld [vmem:[%s5 + $0x3188] sm:$0xff]
    %v2804 = vld [vmem:[%s5 + $0x3190] sm:$0xff]
    %v2805 = vld [vmem:[%s5 + $0x3198] sm:$0xff]
    %v2806 = vld [vmem:[%s5 + $0x31a0] sm:$0xff]
    %v2807 = vld [vmem:[%s5 + $0x31a8] sm:$0xff]
    %v2808 = vld [vmem:[%s5 + $0x31b0] sm:$0xff]
    %v2809 = vld [vmem:[%s5 + $0x31b8] sm:$0xff]
    %v2810 = vld [vmem:[%s5 + $0x31c0] sm:$0xff]
    %v2811 = vld [vmem:[%s5 + $0x31c8] sm:$0xff]
    %v2812 = vld [vmem:[%s5 + $0x31d0] sm:$0xff]
    %v2813 = vld [vmem:[%s5 + $0x31d8] sm:$0xff]
    %v2814 = vld [vmem:[%s5 + $0x31e0] sm:$0xff]
    %v2815 = vld [vmem:[%s5 + $0x31e8] sm:$0xff]
    %v2816 = vld [vmem:[%s5 + $0x31f0] sm:$0xff]
    %v2817 = vld [vmem:[%s5 + $0x31f8] sm:$0xff]
    %v2818 = vld [vmem:[%s5 + $0x3200] sm:$0xff]
    %v2819 = vld [vmem:[%s5 + $0x3208] sm:$0xff]
    %v2820 = vld [vmem:[%s5 + $0x3210] sm:$0xff]
    %v2821 = vld [vmem:[%s5 + $0x3218] sm:$0xff]
    %v2822 = vld [vmem:[%s5 + $0x3220] sm:$0xff]
    %v2823 = vld [vmem:[%s5 + $0x3228] sm:$0xff]
    %v2824 = vld [vmem:[%s5 + $0x3230] sm:$0xff]
    %v2825 = vld [vmem:[%s5 + $0x3238] sm:$0xff]
    %v2826 = vld [vmem:[%s5 + $0x3240] sm:$0xff]
    %v2827 = vld [vmem:[%s5 + $0x3248] sm:$0xff]
    %v2828 = vld [vmem:[%s5 + $0x3250] sm:$0xff]
    %v2829 = vld [vmem:[%s5 + $0x3258] sm:$0xff]
    %v2830 = vld [vmem:[%s5 + $0x3260] sm:$0xff]
    %v2831 = vld [vmem:[%s5 + $0x3268] sm:$0xff]
    %v2832 = vld [vmem:[%s5 + $0x3270] sm:$0xff]
    %v2833 = vld [vmem:[%s5 + $0x3278] sm:$0xff]
    %v2834 = vld [vmem:[%s5 + $0x3280] sm:$0xff]
    %v2835 = vld [vmem:[%s5 + $0x3288] sm:$0xff]
    %v2836 = vld [vmem:[%s5 + $0x3290] sm:$0xff]
    %v2837 = vld [vmem:[%s5 + $0x3298] sm:$0xff]
    %v2838 = vld [vmem:[%s5 + $0x32a0] sm:$0xff]
    %v2839 = vld [vmem:[%s5 + $0x32a8] sm:$0xff]
    %v2840 = vld [vmem:[%s5 + $0x32b0] sm:$0xff]
    %v2841 = vld [vmem:[%s5 + $0x32b8] sm:$0xff]
    %v2842 = vld [vmem:[%s5 + $0x32c0] sm:$0xff]
    %v2843 = vld [vmem:[%s5 + $0x32c8] sm:$0xff]
    %v2844 = vld [vmem:[%s5 + $0x32d0] sm:$0xff]
    %v2845 = vld [vmem:[%s5 + $0x32d8] sm:$0xff]
    %v2846 = vld [vmem:[%s5 + $0x32e0] sm:$0xff]
    %v2847 = vld [vmem:[%s5 + $0x32e8] sm:$0xff]
    %v2848 = vld [vmem:[%s5 + $0x32f0] sm:$0xff]
    %v2849 = vld [vmem:[%s5 + $0x32f8] sm:$0xff]
    %v2850 = vld [vmem:[%s5 + $0x3300] sm:$0xff]
    %v2851 = vld [vmem:[%s5 + $0x3308] sm:$0xff]
    %v2852 = vld [vmem:[%s5 + $0x3310] sm:$0xff]
    %v2853 = vld [vmem:[%s5 + $0x3318] sm:$0xff]
    %v2854 = vld [vmem:[%s5 + $0x3320] sm:$0xff]
    %v2855 = vld [vmem:[%s5 + $0x3328] sm:$0xff]
    %v2856 = vld [vmem:[%s5 + $0x3330] sm:$0xff]
    %v2857 = vld [vmem:[%s5 + $0x3338] sm:$0xff]
    %v2858 = vld [vmem:[%s5 + $0x3340] sm:$0xff]
    %v2859 = vld [vmem:[%s5 + $0x3348] sm:$0xff]
    %v2860 = vld [vmem:[%s5 + $0x3350] sm:$0xff]
    %v2861 = vld [vmem:[%s5 + $0x3358] sm:$0xff]
    %v2862 = vld [vmem:[%s5 + $0x3360] sm:$0xff]
    %v2863 = vld [vmem:[%s5 + $0x3368] sm:$0xff]
    %v2864 = vld [vmem:[%s5 + $0x3370] sm:$0xff]
    %v2865 = vld [vmem:[%s5 + $0x3378] sm:$0xff]
    %v2866 = vld [vmem:[%s5 + $0x3380] sm:$0xff]
    %v2867 = vld [vmem:[%s5 + $0x3388] sm:$0xff]
    %v2868 = vld [vmem:[%s5 + $0x3390] sm:$0xff]
    %v2869 = vld [vmem:[%s5 + $0x3398] sm:$0xff]
    %v2870 = vld [vmem:[%s5 + $0x33a0] sm:$0xff]
    %v2871 = vld [vmem:[%s5 + $0x33a8] sm:$0xff]
    %v2872 = vld [vmem:[%s5 + $0x33b0] sm:$0xff]
    %v2873 = vld [vmem:[%s5 + $0x33b8] sm:$0xff]
    %v2874 = vld [vmem:[%s5 + $0x33c0] sm:$0xff]
    %v2875 = vld [vmem:[%s5 + $0x33c8] sm:$0xff]
    %v2876 = vld [vmem:[%s5 + $0x33d0] sm:$0xff]
    %v2877 = vld [vmem:[%s5 + $0x33d8] sm:$0xff]
    %v2878 = vld [vmem:[%s5 + $0x33e0] sm:$0xff]
    %v2879 = vld [vmem:[%s5 + $0x33e8] sm:$0xff]
    %v2880 = vld [vmem:[%s5 + $0x33f0] sm:$0xff]
    %v2881 = vld [vmem:[%s5 + $0x33f8] sm:$0xff]
    %v2882 = vld [vmem:[%s5 + $0x3400] sm:$0xff]
    %v2883 = vld [vmem:[%s5 + $0x3408] sm:$0xff]
    %v2884 = vld [vmem:[%s5 + $0x3410] sm:$0xff]
    %v2885 = vld [vmem:[%s5 + $0x3418] sm:$0xff]
    %v2886 = vld [vmem:[%s5 + $0x3420] sm:$0xff]
    %v2887 = vld [vmem:[%s5 + $0x3428] sm:$0xff]
    %v2888 = vld [vmem:[%s5 + $0x3430] sm:$0xff]
    %v2889 = vld [vmem:[%s5 + $0x3438] sm:$0xff]
    %v2890 = vld [vmem:[%s5 + $0x3440] sm:$0xff]
    %v2891 = vld [vmem:[%s5 + $0x3448] sm:$0xff]
    %v2892 = vld [vmem:[%s5 + $0x3450] sm:$0xff]
    %v2893 = vld [vmem:[%s5 + $0x3458] sm:$0xff]
    %v2894 = vld [vmem:[%s5 + $0x3460] sm:$0xff]
    %v2895 = vld [vmem:[%s5 + $0x3468] sm:$0xff]
    %v2896 = vld [vmem:[%s5 + $0x3470] sm:$0xff]
    %v2897 = vld [vmem:[%s5 + $0x3478] sm:$0xff]
    %v2898 = vld [vmem:[%s5 + $0x3480] sm:$0xff]
    %v2899 = vld [vmem:[%s5 + $0x3488] sm:$0xff]
    %v2900 = vld [vmem:[%s5 + $0x3490] sm:$0xff]
    %v2901 = vld [vmem:[%s5 + $0x3498] sm:$0xff]
    %v2902 = vld [vmem:[%s5 + $0x34a0] sm:$0xff]
    %v2903 = vld [vmem:[%s5 + $0x34a8] sm:$0xff]
    %v2904 = vld [vmem:[%s5 + $0x34b0] sm:$0xff]
    %v2905 = vld [vmem:[%s5 + $0x34b8] sm:$0xff]
    %v2906 = vld [vmem:[%s5 + $0x34c0] sm:$0xff]
    %v2907 = vld [vmem:[%s5 + $0x34c8] sm:$0xff]
    %v2908 = vld [vmem:[%s5 + $0x34d0] sm:$0xff]
    %v2909 = vld [vmem:[%s5 + $0x34d8] sm:$0xff]
    %v2910 = vld [vmem:[%s5 + $0x34e0] sm:$0xff]
    %v2911 = vld [vmem:[%s5 + $0x34e8] sm:$0xff]
    %v2912 = vld [vmem:[%s5 + $0x34f0] sm:$0xff]
    %v2913 = vld [vmem:[%s5 + $0x34f8] sm:$0xff]
    %v2914 = vld [vmem:[%s5 + $0x3500] sm:$0xff]
    %v2915 = vld [vmem:[%s5 + $0x3508] sm:$0xff]
    %v2916 = vld [vmem:[%s5 + $0x3510] sm:$0xff]
    %v2917 = vld [vmem:[%s5 + $0x3518] sm:$0xff]
    %v2918 = vld [vmem:[%s5 + $0x3520] sm:$0xff]
    %v2919 = vld [vmem:[%s5 + $0x3528] sm:$0xff]
    %v2920 = vld [vmem:[%s5 + $0x3530] sm:$0xff]
    %v2921 = vld [vmem:[%s5 + $0x3538] sm:$0xff]
    %v2922 = vld [vmem:[%s5 + $0x3540] sm:$0xff]
    %v2923 = vld [vmem:[%s5 + $0x3548] sm:$0xff]
    %v2924 = vld [vmem:[%s5 + $0x3550] sm:$0xff]
    %v2925 = vld [vmem:[%s5 + $0x3558] sm:$0xff]
    %v2926 = vld [vmem:[%s5 + $0x3560] sm:$0xff]
    %v2927 = vld [vmem:[%s5 + $0x3568] sm:$0xff]
    %v2928 = vld [vmem:[%s5 + $0x3570] sm:$0xff]
    %v2929 = vld [vmem:[%s5 + $0x3578] sm:$0xff]
    %v2930 = vld [vmem:[%s5 + $0x3580] sm:$0xff]
    %v2931 = vld [vmem:[%s5 + $0x3588] sm:$0xff]
    %v2932 = vld [vmem:[%s5 + $0x3590] sm:$0xff]
    %v2933 = vld [vmem:[%s5 + $0x3598] sm:$0xff]
    %v2934 = vld [vmem:[%s5 + $0x35a0] sm:$0xff]
    %v2935 = vld [vmem:[%s5 + $0x35a8] sm:$0xff]
    %v2936 = vld [vmem:[%s5 + $0x35b0] sm:$0xff]
    %v2937 = vld [vmem:[%s5 + $0x35b8] sm:$0xff]
    %v2938 = vld [vmem:[%s5 + $0x35c0] sm:$0xff]
    %v2939 = vld [vmem:[%s5 + $0x35c8] sm:$0xff]
    %v2940 = vld [vmem:[%s5 + $0x35d0] sm:$0xff]
    %v2941 = vld [vmem:[%s5 + $0x35d8] sm:$0xff]
    %v2942 = vld [vmem:[%s5 + $0x35e0] sm:$0xff]
    %v2943 = vld [vmem:[%s5 + $0x35e8] sm:$0xff]
    %v2944 = vld [vmem:[%s5 + $0x35f0] sm:$0xff]
    %v2945 = vld [vmem:[%s5 + $0x35f8] sm:$0xff]
    %v2946 = vld [vmem:[%s5 + $0x3600] sm:$0xff]
    %v2947 = vld [vmem:[%s5 + $0x3608] sm:$0xff]
    %v2948 = vld [vmem:[%s5 + $0x3610] sm:$0xff]
    %v2949 = vld [vmem:[%s5 + $0x3618] sm:$0xff]
    %v2950 = vld [vmem:[%s5 + $0x3620] sm:$0xff]
    %v2951 = vld [vmem:[%s5 + $0x3628] sm:$0xff]
    %v2952 = vld [vmem:[%s5 + $0x3630] sm:$0xff]
    %v2953 = vld [vmem:[%s5 + $0x3638] sm:$0xff]
    %v2954 = vld [vmem:[%s5 + $0x3640] sm:$0xff]
    %v2955 = vld [vmem:[%s5 + $0x3648] sm:$0xff]
    %v2956 = vld [vmem:[%s5 + $0x3650] sm:$0xff]
    %v2957 = vld [vmem:[%s5 + $0x3658] sm:$0xff]
    %v2958 = vld [vmem:[%s5 + $0x3660] sm:$0xff]
    %v2959 = vld [vmem:[%s5 + $0x3668] sm:$0xff]
    %v2960 = vld [vmem:[%s5 + $0x3670] sm:$0xff]
    %v2961 = vld [vmem:[%s5 + $0x3678] sm:$0xff]
    %v2962 = vld [vmem:[%s5 + $0x3680] sm:$0xff]
    %v2963 = vld [vmem:[%s5 + $0x3688] sm:$0xff]
    %v2964 = vld [vmem:[%s5 + $0x3690] sm:$0xff]
    %v2965 = vld [vmem:[%s5 + $0x3698] sm:$0xff]
    %v2966 = vld [vmem:[%s5 + $0x36a0] sm:$0xff]
    %v2967 = vld [vmem:[%s5 + $0x36a8] sm:$0xff]
    %v2968 = vld [vmem:[%s5 + $0x36b0] sm:$0xff]
    %v2969 = vld [vmem:[%s5 + $0x36b8] sm:$0xff]
    %v2970 = vld [vmem:[%s5 + $0x36c0] sm:$0xff]
    %v2971 = vld [vmem:[%s5 + $0x36c8] sm:$0xff]
    %v2972 = vld [vmem:[%s5 + $0x36d0] sm:$0xff]
    %v2973 = vld [vmem:[%s5 + $0x36d8] sm:$0xff]
    %v2974 = vld [vmem:[%s5 + $0x36e0] sm:$0xff]
    %v2975 = vld [vmem:[%s5 + $0x36e8] sm:$0xff]
    %v2976 = vld [vmem:[%s5 + $0x36f0] sm:$0xff]
    %v2977 = vld [vmem:[%s5 + $0x36f8] sm:$0xff]
    %v2978 = vld [vmem:[%s5 + $0x3700] sm:$0xff]
    %v2979 = vld [vmem:[%s5 + $0x3708] sm:$0xff]
    %v2980 = vld [vmem:[%s5 + $0x3710] sm:$0xff]
    %v2981 = vld [vmem:[%s5 + $0x3718] sm:$0xff]
    %v2982 = vld [vmem:[%s5 + $0x3720] sm:$0xff]
    %v2983 = vld [vmem:[%s5 + $0x3728] sm:$0xff]
    %v2984 = vld [vmem:[%s5 + $0x3730] sm:$0xff]
    %v2985 = vld [vmem:[%s5 + $0x3738] sm:$0xff]
    %v2986 = vld [vmem:[%s5 + $0x3740] sm:$0xff]
    %v2987 = vld [vmem:[%s5 + $0x3748] sm:$0xff]
    %v2988 = vld [vmem:[%s5 + $0x3750] sm:$0xff]
    %v2989 = vld [vmem:[%s5 + $0x3758] sm:$0xff]
    %v2990 = vld [vmem:[%s5 + $0x3760] sm:$0xff]
    %v2991 = vld [vmem:[%s5 + $0x3768] sm:$0xff]
    %v2992 = vld [vmem:[%s5 + $0x3770] sm:$0xff]
    %v2993 = vld [vmem:[%s5 + $0x3778] sm:$0xff]
    %v2994 = vld [vmem:[%s5 + $0x3780] sm:$0xff]
    %v2995 = vld [vmem:[%s5 + $0x3788] sm:$0xff]
    %v2996 = vld [vmem:[%s5 + $0x3790] sm:$0xff]
    %v2997 = vld [vmem:[%s5 + $0x3798] sm:$0xff]
    %v2998 = vld [vmem:[%s5 + $0x37a0] sm:$0xff]
    %v2999 = vld [vmem:[%s5 + $0x37a8] sm:$0xff]
    %v3000 = vld [vmem:[%s5 + $0x37b0] sm:$0xff]
    %v3001 = vld [vmem:[%s5 + $0x37b8] sm:$0xff]
    %v3002 = vld [vmem:[%s5 + $0x37c0] sm:$0xff]
    %v3003 = vld [vmem:[%s5 + $0x37c8] sm:$0xff]
    %v3004 = vld [vmem:[%s5 + $0x37d0] sm:$0xff]
    %v3005 = vld [vmem:[%s5 + $0x37d8] sm:$0xff]
    %v3006 = vld [vmem:[%s5 + $0x37e0] sm:$0xff]
    %v3007 = vld [vmem:[%s5 + $0x37e8] sm:$0xff]
    %v3008 = vld [vmem:[%s5 + $0x37f0] sm:$0xff]
    %v3009 = vld [vmem:[%s5 + $0x37f8] sm:$0xff]
    %v3010 = vld [vmem:[%s5 + $0x3800] sm:$0xff]
    %v3011 = vld [vmem:[%s5 + $0x3808] sm:$0xff]
    %v3012 = vld [vmem:[%s5 + $0x3810] sm:$0xff]
    %v3013 = vld [vmem:[%s5 + $0x3818] sm:$0xff]
    %v3014 = vld [vmem:[%s5 + $0x3820] sm:$0xff]
    %v3015 = vld [vmem:[%s5 + $0x3828] sm:$0xff]
    %v3016 = vld [vmem:[%s5 + $0x3830] sm:$0xff]
    %v3017 = vld [vmem:[%s5 + $0x3838] sm:$0xff]
    %v3018 = vld [vmem:[%s5 + $0x3840] sm:$0xff]
    %v3019 = vld [vmem:[%s5 + $0x3848] sm:$0xff]
    %v3020 = vld [vmem:[%s5 + $0x3850] sm:$0xff]
    %v3021 = vld [vmem:[%s5 + $0x3858] sm:$0xff]
    %v3022 = vld [vmem:[%s5 + $0x3860] sm:$0xff]
    %v3023 = vld [vmem:[%s5 + $0x3868] sm:$0xff]
    %v3024 = vld [vmem:[%s5 + $0x3870] sm:$0xff]
    %v3025 = vld [vmem:[%s5 + $0x3878] sm:$0xff]
    %v3026 = vld [vmem:[%s5 + $0x3880] sm:$0xff]
    %v3027 = vld [vmem:[%s5 + $0x3888] sm:$0xff]
    %v3028 = vld [vmem:[%s5 + $0x3890] sm:$0xff]
    %v3029 = vld [vmem:[%s5 + $0x3898] sm:$0xff]
    %v3030 = vld [vmem:[%s5 + $0x38a0] sm:$0xff]
    %v3031 = vld [vmem:[%s5 + $0x38a8] sm:$0xff]
    %v3032 = vld [vmem:[%s5 + $0x38b0] sm:$0xff]
    %v3033 = vld [vmem:[%s5 + $0x38b8] sm:$0xff]
    %v3034 = vld [vmem:[%s5 + $0x38c0] sm:$0xff]
    %v3035 = vld [vmem:[%s5 + $0x38c8] sm:$0xff]
    %v3036 = vld [vmem:[%s5 + $0x38d0] sm:$0xff]
    %v3037 = vld [vmem:[%s5 + $0x38d8] sm:$0xff]
    %v3038 = vld [vmem:[%s5 + $0x38e0] sm:$0xff]
    %v3039 = vld [vmem:[%s5 + $0x38e8] sm:$0xff]
    %v3040 = vld [vmem:[%s5 + $0x38f0] sm:$0xff]
    %v3041 = vld [vmem:[%s5 + $0x38f8] sm:$0xff]
    %v3042 = vld [vmem:[%s5 + $0x3900] sm:$0xff]
    %v3043 = vld [vmem:[%s5 + $0x3908] sm:$0xff]
    %v3044 = vld [vmem:[%s5 + $0x3910] sm:$0xff]
    %v3045 = vld [vmem:[%s5 + $0x3918] sm:$0xff]
    %v3046 = vld [vmem:[%s5 + $0x3920] sm:$0xff]
    %v3047 = vld [vmem:[%s5 + $0x3928] sm:$0xff]
    %v3048 = vld [vmem:[%s5 + $0x3930] sm:$0xff]
    %v3049 = vld [vmem:[%s5 + $0x3938] sm:$0xff]
    %v3050 = vld [vmem:[%s5 + $0x3940] sm:$0xff]
    %v3051 = vld [vmem:[%s5 + $0x3948] sm:$0xff]
    %v3052 = vld [vmem:[%s5 + $0x3950] sm:$0xff]
    %v3053 = vld [vmem:[%s5 + $0x3958] sm:$0xff]
    %v3054 = vld [vmem:[%s5 + $0x3960] sm:$0xff]
    %v3055 = vld [vmem:[%s5 + $0x3968] sm:$0xff]
    %v3056 = vld [vmem:[%s5 + $0x3970] sm:$0xff]
    %v3057 = vld [vmem:[%s5 + $0x3978] sm:$0xff]
    %v3058 = vld [vmem:[%s5 + $0x3980] sm:$0xff]
    %v3059 = vld [vmem:[%s5 + $0x3988] sm:$0xff]
    %v3060 = vld [vmem:[%s5 + $0x3990] sm:$0xff]
    %v3061 = vld [vmem:[%s5 + $0x3998] sm:$0xff]
    %v3062 = vld [vmem:[%s5 + $0x39a0] sm:$0xff]
    %v3063 = vld [vmem:[%s5 + $0x39a8] sm:$0xff]
    %v3064 = vld [vmem:[%s5 + $0x39b0] sm:$0xff]
    %v3065 = vld [vmem:[%s5 + $0x39b8] sm:$0xff]
    %v3066 = vld [vmem:[%s5 + $0x39c0] sm:$0xff]
    %v3067 = vld [vmem:[%s5 + $0x39c8] sm:$0xff]
    %v3068 = vld [vmem:[%s5 + $0x39d0] sm:$0xff]
    %v3069 = vld [vmem:[%s5 + $0x39d8] sm:$0xff]
    %v3070 = vld [vmem:[%s5 + $0x39e0] sm:$0xff]
    %v3071 = vld [vmem:[%s5 + $0x39e8] sm:$0xff]
    %v3072 = vld [vmem:[%s5 + $0x39f0] sm:$0xff]
    %v3073 = vld [vmem:[%s5 + $0x39f8] sm:$0xff]
    %v3074 = vld [vmem:[%s5 + $0x3a00] sm:$0xff]
    %v3075 = vld [vmem:[%s5 + $0x3a08] sm:$0xff]
    %v3076 = vld [vmem:[%s5 + $0x3a10] sm:$0xff]
    %v3077 = vld [vmem:[%s5 + $0x3a18] sm:$0xff]
    %v3078 = vld [vmem:[%s5 + $0x3a20] sm:$0xff]
    %v3079 = vld [vmem:[%s5 + $0x3a28] sm:$0xff]
    %v3080 = vld [vmem:[%s5 + $0x3a30] sm:$0xff]
    %v3081 = vld [vmem:[%s5 + $0x3a38] sm:$0xff]
    %v3082 = vld [vmem:[%s5 + $0x3a40] sm:$0xff]
    %v3083 = vld [vmem:[%s5 + $0x3a48] sm:$0xff]
    %v3084 = vld [vmem:[%s5 + $0x3a50] sm:$0xff]
    %v3085 = vld [vmem:[%s5 + $0x3a58] sm:$0xff]
    %v3086 = vld [vmem:[%s5 + $0x3a60] sm:$0xff]
    %v3087 = vld [vmem:[%s5 + $0x3a68] sm:$0xff]
    %v3088 = vld [vmem:[%s5 + $0x3a70] sm:$0xff]
    %v3089 = vld [vmem:[%s5 + $0x3a78] sm:$0xff]
    %v3090 = vld [vmem:[%s5 + $0x3a80] sm:$0xff]
    %v3091 = vld [vmem:[%s5 + $0x3a88] sm:$0xff]
    %v3092 = vld [vmem:[%s5 + $0x3a90] sm:$0xff]
    %v3093 = vld [vmem:[%s5 + $0x3a98] sm:$0xff]
    %v3094 = vld [vmem:[%s5 + $0x3aa0] sm:$0xff]
    %v3095 = vld [vmem:[%s5 + $0x3aa8] sm:$0xff]
    %v3096 = vld [vmem:[%s5 + $0x3ab0] sm:$0xff]
    %v3097 = vld [vmem:[%s5 + $0x3ab8] sm:$0xff]
    %v3098 = vld [vmem:[%s5 + $0x3ac0] sm:$0xff]
    %v3099 = vld [vmem:[%s5 + $0x3ac8] sm:$0xff]
    %v3100 = vld [vmem:[%s5 + $0x3ad0] sm:$0xff]
    %v3101 = vld [vmem:[%s5 + $0x3ad8] sm:$0xff]
    %v3102 = vld [vmem:[%s5 + $0x3ae0] sm:$0xff]
    %v3103 = vld [vmem:[%s5 + $0x3ae8] sm:$0xff]
    %v3104 = vld [vmem:[%s5 + $0x3af0] sm:$0xff]
    %v3105 = vld [vmem:[%s5 + $0x3af8] sm:$0xff]
    %v3106 = vld [vmem:[%s5 + $0x3b00] sm:$0xff]
    %v3107 = vld [vmem:[%s5 + $0x3b08] sm:$0xff]
    %v3108 = vld [vmem:[%s5 + $0x3b10] sm:$0xff]
    %v3109 = vld [vmem:[%s5 + $0x3b18] sm:$0xff]
    %v3110 = vld [vmem:[%s5 + $0x3b20] sm:$0xff]
    %v3111 = vld [vmem:[%s5 + $0x3b28] sm:$0xff]
    %v3112 = vld [vmem:[%s5 + $0x3b30] sm:$0xff]
    %v3113 = vld [vmem:[%s5 + $0x3b38] sm:$0xff]
    %v3114 = vld [vmem:[%s5 + $0x3b40] sm:$0xff]
    %v3115 = vld [vmem:[%s5 + $0x3b48] sm:$0xff]
    %v3116 = vld [vmem:[%s5 + $0x3b50] sm:$0xff]
    %v3117 = vld [vmem:[%s5 + $0x3b58] sm:$0xff]
    %v3118 = vld [vmem:[%s5 + $0x3b60] sm:$0xff]
    %v3119 = vld [vmem:[%s5 + $0x3b68] sm:$0xff]
    %v3120 = vld [vmem:[%s5 + $0x3b70] sm:$0xff]
    %v3121 = vld [vmem:[%s5 + $0x3b78] sm:$0xff]
    %v3122 = vld [vmem:[%s5 + $0x3b80] sm:$0xff]
    %v3123 = vld [vmem:[%s5 + $0x3b88] sm:$0xff]
    %v3124 = vld [vmem:[%s5 + $0x3b90] sm:$0xff]
    %v3125 = vld [vmem:[%s5 + $0x3b98] sm:$0xff]
    %v3126 = vld [vmem:[%s5 + $0x3ba0] sm:$0xff]
    %v3127 = vld [vmem:[%s5 + $0x3ba8] sm:$0xff]
    %v3128 = vld [vmem:[%s5 + $0x3bb0] sm:$0xff]
    %v3129 = vld [vmem:[%s5 + $0x3bb8] sm:$0xff]
    %v3130 = vld [vmem:[%s5 + $0x3bc0] sm:$0xff]
    %v3131 = vld [vmem:[%s5 + $0x3bc8] sm:$0xff]
    %v3132 = vld [vmem:[%s5 + $0x3bd0] sm:$0xff]
    %v3133 = vld [vmem:[%s5 + $0x3bd8] sm:$0xff]
    %v3134 = vld [vmem:[%s5 + $0x3be0] sm:$0xff]
    %v3135 = vld [vmem:[%s5 + $0x3be8] sm:$0xff]
    %v3136 = vld [vmem:[%s5 + $0x3bf0] sm:$0xff]
    %v3137 = vld [vmem:[%s5 + $0x3bf8] sm:$0xff]
    %v3138 = vld [vmem:[%s5 + $0x3c00] sm:$0xff]
    %v3139 = vld [vmem:[%s5 + $0x3c08] sm:$0xff]
    %v3140 = vld [vmem:[%s5 + $0x3c10] sm:$0xff]
    %v3141 = vld [vmem:[%s5 + $0x3c18] sm:$0xff]
    %v3142 = vld [vmem:[%s5 + $0x3c20] sm:$0xff]
    %v3143 = vld [vmem:[%s5 + $0x3c28] sm:$0xff]
    %v3144 = vld [vmem:[%s5 + $0x3c30] sm:$0xff]
    %v3145 = vld [vmem:[%s5 + $0x3c38] sm:$0xff]
    %v3146 = vld [vmem:[%s5 + $0x3c40] sm:$0xff]
    %v3147 = vld [vmem:[%s5 + $0x3c48] sm:$0xff]
    %v3148 = vld [vmem:[%s5 + $0x3c50] sm:$0xff]
    %v3149 = vld [vmem:[%s5 + $0x3c58] sm:$0xff]
    %v3150 = vld [vmem:[%s5 + $0x3c60] sm:$0xff]
    %v3151 = vld [vmem:[%s5 + $0x3c68] sm:$0xff]
    %v3152 = vld [vmem:[%s5 + $0x3c70] sm:$0xff]
    %v3153 = vld [vmem:[%s5 + $0x3c78] sm:$0xff]
    %v3154 = vld [vmem:[%s5 + $0x3c80] sm:$0xff]
    %v3155 = vld [vmem:[%s5 + $0x3c88] sm:$0xff]
    %v3156 = vld [vmem:[%s5 + $0x3c90] sm:$0xff]
    %v3157 = vld [vmem:[%s5 + $0x3c98] sm:$0xff]
    %v3158 = vld [vmem:[%s5 + $0x3ca0] sm:$0xff]
    %v3159 = vld [vmem:[%s5 + $0x3ca8] sm:$0xff]
    %v3160 = vld [vmem:[%s5 + $0x3cb0] sm:$0xff]
    %v3161 = vld [vmem:[%s5 + $0x3cb8] sm:$0xff]
    %v3162 = vld [vmem:[%s5 + $0x3cc0] sm:$0xff]
    %v3163 = vld [vmem:[%s5 + $0x3cc8] sm:$0xff]
    %v3164 = vld [vmem:[%s5 + $0x3cd0] sm:$0xff]
    %v3165 = vld [vmem:[%s5 + $0x3cd8] sm:$0xff]
    %v3166 = vld [vmem:[%s5 + $0x3ce0] sm:$0xff]
    %v3167 = vld [vmem:[%s5 + $0x3ce8] sm:$0xff]
    %v3168 = vld [vmem:[%s5 + $0x3cf0] sm:$0xff]
    %v3169 = vld [vmem:[%s5 + $0x3cf8] sm:$0xff]
    %v3170 = vld [vmem:[%s5 + $0x3d00] sm:$0xff]
    %v3171 = vld [vmem:[%s5 + $0x3d08] sm:$0xff]
    %v3172 = vld [vmem:[%s5 + $0x3d10] sm:$0xff]
    %v3173 = vld [vmem:[%s5 + $0x3d18] sm:$0xff]
    %v3174 = vld [vmem:[%s5 + $0x3d20] sm:$0xff]
    %v3175 = vld [vmem:[%s5 + $0x3d28] sm:$0xff]
    %v3176 = vld [vmem:[%s5 + $0x3d30] sm:$0xff]
    %v3177 = vld [vmem:[%s5 + $0x3d38] sm:$0xff]
    %v3178 = vld [vmem:[%s5 + $0x3d40] sm:$0xff]
    %v3179 = vld [vmem:[%s5 + $0x3d48] sm:$0xff]
    %v3180 = vld [vmem:[%s5 + $0x3d50] sm:$0xff]
    %v3181 = vld [vmem:[%s5 + $0x3d58] sm:$0xff]
    %v3182 = vld [vmem:[%s5 + $0x3d60] sm:$0xff]
    %v3183 = vld [vmem:[%s5 + $0x3d68] sm:$0xff]
    %v3184 = vld [vmem:[%s5 + $0x3d70] sm:$0xff]
    %v3185 = vld [vmem:[%s5 + $0x3d78] sm:$0xff]
    %v3186 = vld [vmem:[%s5 + $0x3d80] sm:$0xff]
    %v3187 = vld [vmem:[%s5 + $0x3d88] sm:$0xff]
    %v3188 = vld [vmem:[%s5 + $0x3d90] sm:$0xff]
    %v3189 = vld [vmem:[%s5 + $0x3d98] sm:$0xff]
    %v3190 = vld [vmem:[%s5 + $0x3da0] sm:$0xff]
    %v3191 = vld [vmem:[%s5 + $0x3da8] sm:$0xff]
    %v3192 = vld [vmem:[%s5 + $0x3db0] sm:$0xff]
    %v3193 = vld [vmem:[%s5 + $0x3db8] sm:$0xff]
    %v3194 = vld [vmem:[%s5 + $0x3dc0] sm:$0xff]
    %v3195 = vld [vmem:[%s5 + $0x3dc8] sm:$0xff]
    %v3196 = vld [vmem:[%s5 + $0x3dd0] sm:$0xff]
    %v3197 = vld [vmem:[%s5 + $0x3dd8] sm:$0xff]
    %v3198 = vld [vmem:[%s5 + $0x3de0] sm:$0xff]
    %v3199 = vld [vmem:[%s5 + $0x3de8] sm:$0xff]
    %v3200 = vld [vmem:[%s5 + $0x3df0] sm:$0xff]
    %v3201 = vld [vmem:[%s5 + $0x3df8] sm:$0xff]
    %v3202 = vld [vmem:[%s5 + $0x3e00] sm:$0xff]
    %v3203 = vld [vmem:[%s5 + $0x3e08] sm:$0xff]
    %v3204 = vld [vmem:[%s5 + $0x3e10] sm:$0xff]
    %v3205 = vld [vmem:[%s5 + $0x3e18] sm:$0xff]
    %v3206 = vld [vmem:[%s5 + $0x3e20] sm:$0xff]
    %v3207 = vld [vmem:[%s5 + $0x3e28] sm:$0xff]
    %v3208 = vld [vmem:[%s5 + $0x3e30] sm:$0xff]
    %v3209 = vld [vmem:[%s5 + $0x3e38] sm:$0xff]
    %v3210 = vld [vmem:[%s5 + $0x3e40] sm:$0xff]
    %v3211 = vld [vmem:[%s5 + $0x3e48] sm:$0xff]
    %v3212 = vld [vmem:[%s5 + $0x3e50] sm:$0xff]
    %v3213 = vld [vmem:[%s5 + $0x3e58] sm:$0xff]
    %v3214 = vld [vmem:[%s5 + $0x3e60] sm:$0xff]
    %v3215 = vld [vmem:[%s5 + $0x3e68] sm:$0xff]
    %v3216 = vld [vmem:[%s5 + $0x3e70] sm:$0xff]
    %v3217 = vld [vmem:[%s5 + $0x3e78] sm:$0xff]
    %v3218 = vld [vmem:[%s5 + $0x3e80] sm:$0xff]
    %v3219 = vld [vmem:[%s5 + $0x3e88] sm:$0xff]
    %v3220 = vld [vmem:[%s5 + $0x3e90] sm:$0xff]
    %v3221 = vld [vmem:[%s5 + $0x3e98] sm:$0xff]
    %v3222 = vld [vmem:[%s5 + $0x3ea0] sm:$0xff]
    %v3223 = vld [vmem:[%s5 + $0x3ea8] sm:$0xff]
    %v3224 = vld [vmem:[%s5 + $0x3eb0] sm:$0xff]
    %v3225 = vld [vmem:[%s5 + $0x3eb8] sm:$0xff]
    %v3226 = vld [vmem:[%s5 + $0x3ec0] sm:$0xff]
    %v3227 = vld [vmem:[%s5 + $0x3ec8] sm:$0xff]
    %v3228 = vld [vmem:[%s5 + $0x3ed0] sm:$0xff]
    %v3229 = vld [vmem:[%s5 + $0x3ed8] sm:$0xff]
    %v3230 = vld [vmem:[%s5 + $0x3ee0] sm:$0xff]
    %v3231 = vld [vmem:[%s5 + $0x3ee8] sm:$0xff]
    %v3232 = vld [vmem:[%s5 + $0x3ef0] sm:$0xff]
    %v3233 = vld [vmem:[%s5 + $0x3ef8] sm:$0xff]
    %v3234 = vld [vmem:[%s5 + $0x3f00] sm:$0xff]
    %v3235 = vld [vmem:[%s5 + $0x3f08] sm:$0xff]
    %v3236 = vld [vmem:[%s5 + $0x3f10] sm:$0xff]
    %v3237 = vld [vmem:[%s5 + $0x3f18] sm:$0xff]
    %v3238 = vld [vmem:[%s5 + $0x3f20] sm:$0xff]
    %v3239 = vld [vmem:[%s5 + $0x3f28] sm:$0xff]
    %v3240 = vld [vmem:[%s5 + $0x3f30] sm:$0xff]
    %v3241 = vld [vmem:[%s5 + $0x3f38] sm:$0xff]
    %v3242 = vld [vmem:[%s5 + $0x3f40] sm:$0xff]
    %v3243 = vld [vmem:[%s5 + $0x3f48] sm:$0xff]
    %v3244 = vld [vmem:[%s5 + $0x3f50] sm:$0xff]
    %v3245 = vld [vmem:[%s5 + $0x3f58] sm:$0xff]
    %v3246 = vld [vmem:[%s5 + $0x3f60] sm:$0xff]
    %v3247 = vld [vmem:[%s5 + $0x3f68] sm:$0xff]
    %v3248 = vld [vmem:[%s5 + $0x3f70] sm:$0xff]
    %v3249 = vld [vmem:[%s5 + $0x3f78] sm:$0xff]
    %v3250 = vld [vmem:[%s5 + $0x3f80] sm:$0xff]
    %v3251 = vld [vmem:[%s5 + $0x3f88] sm:$0xff]
    %v3252 = vld [vmem:[%s5 + $0x3f90] sm:$0xff]
    %v3253 = vld [vmem:[%s5 + $0x3f98] sm:$0xff]
    %v3254 = vld [vmem:[%s5 + $0x3fa0] sm:$0xff]
    %v3255 = vld [vmem:[%s5 + $0x3fa8] sm:$0xff]
    %v3256 = vld [vmem:[%s5 + $0x3fb0] sm:$0xff]
    %v3257 = vld [vmem:[%s5 + $0x3fb8] sm:$0xff]
    %v3258 = vld [vmem:[%s5 + $0x3fc0] sm:$0xff]
    %v3259 = vld [vmem:[%s5 + $0x3fc8] sm:$0xff]
    %v3260 = vld [vmem:[%s5 + $0x3fd0] sm:$0xff]
    %v3261 = vld [vmem:[%s5 + $0x3fd8] sm:$0xff]
    %v3262 = vld [vmem:[%s5 + $0x3fe0] sm:$0xff]
    %v3263 = vld [vmem:[%s5 + $0x3fe8] sm:$0xff]
    %v3264 = vld [vmem:[%s5 + $0x3ff0] sm:$0xff]
    %v3265 = vld [vmem:[%s5 + $0x3ff8] sm:$0xff]
    %v3266 = vld [vmem:[%s5 + $0x4000] sm:$0xff]
    %v3267 = vld [vmem:[%s5 + $0x4008] sm:$0xff]
    %v3268 = vld [vmem:[%s5 + $0x4010] sm:$0xff]
    %v3269 = vld [vmem:[%s5 + $0x4018] sm:$0xff]
    %v3270 = vld [vmem:[%s5 + $0x4020] sm:$0xff]
    %v3271 = vld [vmem:[%s5 + $0x4028] sm:$0xff]
    %v3272 = vld [vmem:[%s5 + $0x4030] sm:$0xff]
    %v3273 = vld [vmem:[%s5 + $0x4038] sm:$0xff]
    %v3274 = vld [vmem:[%s5 + $0x4040] sm:$0xff]
    %v3275 = vld [vmem:[%s5 + $0x4048] sm:$0xff]
    %v3276 = vld [vmem:[%s5 + $0x4050] sm:$0xff]
    %v3277 = vld [vmem:[%s5 + $0x4058] sm:$0xff]
    %v3278 = vld [vmem:[%s5 + $0x4060] sm:$0xff]
    %v3279 = vld [vmem:[%s5 + $0x4068] sm:$0xff]
    %v3280 = vld [vmem:[%s5 + $0x4070] sm:$0xff]
    %v3281 = vld [vmem:[%s5 + $0x4078] sm:$0xff]
    %v3282 = vld [vmem:[%s5 + $0x4080] sm:$0xff]
    %v3283 = vld [vmem:[%s5 + $0x4088] sm:$0xff]
    %v3284 = vld [vmem:[%s5 + $0x4090] sm:$0xff]
    %v3285 = vld [vmem:[%s5 + $0x4098] sm:$0xff]
    %v3286 = vld [vmem:[%s5 + $0x40a0] sm:$0xff]
    %v3287 = vld [vmem:[%s5 + $0x40a8] sm:$0xff]
    %v3288 = vld [vmem:[%s5 + $0x40b0] sm:$0xff]
    %v3289 = vld [vmem:[%s5 + $0x40b8] sm:$0xff]
    %v3290 = vld [vmem:[%s5 + $0x40c0] sm:$0xff]
    %v3291 = vld [vmem:[%s5 + $0x40c8] sm:$0xff]
    %v3292 = vld [vmem:[%s5 + $0x40d0] sm:$0xff]
    %v3293 = vld [vmem:[%s5 + $0x40d8] sm:$0xff]
    %v3294 = vld [vmem:[%s5 + $0x40e0] sm:$0xff]
    %v3295 = vld [vmem:[%s5 + $0x40e8] sm:$0xff]
    %v3296 = vld [vmem:[%s5 + $0x40f0] sm:$0xff]
    %v3297 = vld [vmem:[%s5 + $0x40f8] sm:$0xff]
    %v3298 = vld [vmem:[%s5 + $0x4100] sm:$0xff]
    %v3299 = vld [vmem:[%s5 + $0x4108] sm:$0xff]
    %v3300 = vld [vmem:[%s5 + $0x4110] sm:$0xff]
    %v3301 = vld [vmem:[%s5 + $0x4118] sm:$0xff]
    %v3302 = vld [vmem:[%s5 + $0x4120] sm:$0xff]
    %v3303 = vld [vmem:[%s5 + $0x4128] sm:$0xff]
    %v3304 = vld [vmem:[%s5 + $0x4130] sm:$0xff]
    %v3305 = vld [vmem:[%s5 + $0x4138] sm:$0xff]
    %v3306 = vld [vmem:[%s5 + $0x4140] sm:$0xff]
    %v3307 = vld [vmem:[%s5 + $0x4148] sm:$0xff]
    %v3308 = vld [vmem:[%s5 + $0x4150] sm:$0xff]
    %v3309 = vld [vmem:[%s5 + $0x4158] sm:$0xff]
    %v3310 = vld [vmem:[%s5 + $0x4160] sm:$0xff]
    %v3311 = vld [vmem:[%s5 + $0x4168] sm:$0xff]
    %v3312 = vld [vmem:[%s5 + $0x4170] sm:$0xff]
    %v3313 = vld [vmem:[%s5 + $0x4178] sm:$0xff]
    %v3314 = vld [vmem:[%s5 + $0x4180] sm:$0xff]
    %v3315 = vld [vmem:[%s5 + $0x4188] sm:$0xff]
    %v3316 = vld [vmem:[%s5 + $0x4190] sm:$0xff]
    %v3317 = vld [vmem:[%s5 + $0x4198] sm:$0xff]
    %v3318 = vld [vmem:[%s5 + $0x41a0] sm:$0xff]
    %v3319 = vld [vmem:[%s5 + $0x41a8] sm:$0xff]
    %v3320 = vld [vmem:[%s5 + $0x41b0] sm:$0xff]
    %v3321 = vld [vmem:[%s5 + $0x41b8] sm:$0xff]
    %v3322 = vld [vmem:[%s5 + $0x41c0] sm:$0xff]
    %v3323 = vld [vmem:[%s5 + $0x41c8] sm:$0xff]
    %v3324 = vld [vmem:[%s5 + $0x41d0] sm:$0xff]
    %v3325 = vld [vmem:[%s5 + $0x41d8] sm:$0xff]
    %v3326 = vld [vmem:[%s5 + $0x41e0] sm:$0xff]
    %v3327 = vld [vmem:[%s5 + $0x41e8] sm:$0xff]
    %v3328 = vld [vmem:[%s5 + $0x41f0] sm:$0xff]
    %v3329 = vld [vmem:[%s5 + $0x41f8] sm:$0xff]
    %v3330 = vld [vmem:[%s5 + $0x4200] sm:$0xff]
    %v3331 = vld [vmem:[%s5 + $0x4208] sm:$0xff]
    %v3332 = vld [vmem:[%s5 + $0x4210] sm:$0xff]
    %v3333 = vld [vmem:[%s5 + $0x4218] sm:$0xff]
    %v3334 = vld [vmem:[%s5 + $0x4220] sm:$0xff]
    %v3335 = vld [vmem:[%s5 + $0x4228] sm:$0xff]
    %v3336 = vld [vmem:[%s5 + $0x4230] sm:$0xff]
    %v3337 = vld [vmem:[%s5 + $0x4238] sm:$0xff]
    %v3338 = vld [vmem:[%s5 + $0x4240] sm:$0xff]
    %v3339 = vld [vmem:[%s5 + $0x4248] sm:$0xff]
    %v3340 = vld [vmem:[%s5 + $0x4250] sm:$0xff]
    %v3341 = vld [vmem:[%s5 + $0x4258] sm:$0xff]
    %v3342 = vld [vmem:[%s5 + $0x4260] sm:$0xff]
    %v3343 = vld [vmem:[%s5 + $0x4268] sm:$0xff]
    %v3344 = vld [vmem:[%s5 + $0x4270] sm:$0xff]
    %v3345 = vld [vmem:[%s5 + $0x4278] sm:$0xff]
    %v3346 = vld [vmem:[%s5 + $0x4280] sm:$0xff]
    %v3347 = vld [vmem:[%s5 + $0x4288] sm:$0xff]
    %v3348 = vld [vmem:[%s5 + $0x4290] sm:$0xff]
    %v3349 = vld [vmem:[%s5 + $0x4298] sm:$0xff]
    %v3350 = vld [vmem:[%s5 + $0x42a0] sm:$0xff]
    %v3351 = vld [vmem:[%s5 + $0x42a8] sm:$0xff]
    %v3352 = vld [vmem:[%s5 + $0x42b0] sm:$0xff]
    %v3353 = vld [vmem:[%s5 + $0x42b8] sm:$0xff]
    %v3354 = vld [vmem:[%s5 + $0x42c0] sm:$0xff]
    %v3355 = vld [vmem:[%s5 + $0x42c8] sm:$0xff]
    %v3356 = vld [vmem:[%s5 + $0x42d0] sm:$0xff]
    %v3357 = vld [vmem:[%s5 + $0x42d8] sm:$0xff]
    %v3358 = vld [vmem:[%s5 + $0x42e0] sm:$0xff]
    %v3359 = vld [vmem:[%s5 + $0x42e8] sm:$0xff]
    %v3360 = vld [vmem:[%s5 + $0x42f0] sm:$0xff]
    %v3361 = vld [vmem:[%s5 + $0x42f8] sm:$0xff]
    %v3362 = vld [vmem:[%s5 + $0x4300] sm:$0xff]
    %v3363 = vld [vmem:[%s5 + $0x4308] sm:$0xff]
    %v3364 = vld [vmem:[%s5 + $0x4310] sm:$0xff]
    %v3365 = vld [vmem:[%s5 + $0x4318] sm:$0xff]
    %v3366 = vld [vmem:[%s5 + $0x4320] sm:$0xff]
    %v3367 = vld [vmem:[%s5 + $0x4328] sm:$0xff]
    %v3368 = vld [vmem:[%s5 + $0x4330] sm:$0xff]
    %v3369 = vld [vmem:[%s5 + $0x4338] sm:$0xff]
    %v3370 = vld [vmem:[%s5 + $0x4340] sm:$0xff]
    %v3371 = vld [vmem:[%s5 + $0x4348] sm:$0xff]
    %v3372 = vld [vmem:[%s5 + $0x4350] sm:$0xff]
    %v3373 = vld [vmem:[%s5 + $0x4358] sm:$0xff]
    %v3374 = vld [vmem:[%s5 + $0x4360] sm:$0xff]
    %v3375 = vld [vmem:[%s5 + $0x4368] sm:$0xff]
    %v3376 = vld [vmem:[%s5 + $0x4370] sm:$0xff]
    %v3377 = vld [vmem:[%s5 + $0x4378] sm:$0xff]
    %v3378 = vld [vmem:[%s5 + $0x4380] sm:$0xff]
    %v3379 = vld [vmem:[%s5 + $0x4388] sm:$0xff]
    %v3380 = vld [vmem:[%s5 + $0x4390] sm:$0xff]
    %v3381 = vld [vmem:[%s5 + $0x4398] sm:$0xff]
    %v3382 = vld [vmem:[%s5 + $0x43a0] sm:$0xff]
    %v3383 = vld [vmem:[%s5 + $0x43a8] sm:$0xff]
    %v3384 = vld [vmem:[%s5 + $0x43b0] sm:$0xff]
    %v3385 = vld [vmem:[%s5 + $0x43b8] sm:$0xff]
    %v3386 = vld [vmem:[%s5 + $0x43c0] sm:$0xff]
    %v3387 = vld [vmem:[%s5 + $0x43c8] sm:$0xff]
    %v3388 = vld [vmem:[%s5 + $0x43d0] sm:$0xff]
    %v3389 = vld [vmem:[%s5 + $0x43d8] sm:$0xff]
    %v3390 = vld [vmem:[%s5 + $0x43e0] sm:$0xff]
    %v3391 = vld [vmem:[%s5 + $0x43e8] sm:$0xff]
    %v3392 = vld [vmem:[%s5 + $0x43f0] sm:$0xff]
    %v3393 = vld [vmem:[%s5 + $0x43f8] sm:$0xff]
    %v3394 = vld [vmem:[%s5 + $0x4400] sm:$0xff]
    %v3395 = vld [vmem:[%s5 + $0x4408] sm:$0xff]
    %v3396 = vld [vmem:[%s5 + $0x4410] sm:$0xff]
    %v3397 = vld [vmem:[%s5 + $0x4418] sm:$0xff]
    %v3398 = vld [vmem:[%s5 + $0x4420] sm:$0xff]
    %v3399 = vld [vmem:[%s5 + $0x4428] sm:$0xff]
    %v3400 = vld [vmem:[%s5 + $0x4430] sm:$0xff]
    %v3401 = vld [vmem:[%s5 + $0x4438] sm:$0xff]
    %v3402 = vld [vmem:[%s5 + $0x4440] sm:$0xff]
    %v3403 = vld [vmem:[%s5 + $0x4448] sm:$0xff]
    %v3404 = vld [vmem:[%s5 + $0x4450] sm:$0xff]
    %v3405 = vld [vmem:[%s5 + $0x4458] sm:$0xff]
    %v3406 = vld [vmem:[%s5 + $0x4460] sm:$0xff]
    %v3407 = vld [vmem:[%s5 + $0x4468] sm:$0xff]
    %v3408 = vld [vmem:[%s5 + $0x4470] sm:$0xff]
    %v3409 = vld [vmem:[%s5 + $0x4478] sm:$0xff]
    %v3410 = vld [vmem:[%s5 + $0x4480] sm:$0xff]
    %v3411 = vld [vmem:[%s5 + $0x4488] sm:$0xff]
    %v3412 = vld [vmem:[%s5 + $0x4490] sm:$0xff]
    %v3413 = vld [vmem:[%s5 + $0x4498] sm:$0xff]
    %v3414 = vld [vmem:[%s5 + $0x44a0] sm:$0xff]
    %v3415 = vld [vmem:[%s5 + $0x44a8] sm:$0xff]
    %v3416 = vld [vmem:[%s5 + $0x44b0] sm:$0xff]
    %v3417 = vld [vmem:[%s5 + $0x44b8] sm:$0xff]
    %v3418 = vld [vmem:[%s5 + $0x44c0] sm:$0xff]
    %v3419 = vld [vmem:[%s5 + $0x44c8] sm:$0xff]
    %v3420 = vld [vmem:[%s5 + $0x44d0] sm:$0xff]
    %v3421 = vld [vmem:[%s5 + $0x44d8] sm:$0xff]
    %v3422 = vld [vmem:[%s5 + $0x44e0] sm:$0xff]
    %v3423 = vld [vmem:[%s5 + $0x44e8] sm:$0xff]
    %v3424 = vld [vmem:[%s5 + $0x44f0] sm:$0xff]
    %v3425 = vld [vmem:[%s5 + $0x44f8] sm:$0xff]
    %v3426 = vld [vmem:[%s5 + $0x4500] sm:$0xff]
    %v3427 = vld [vmem:[%s5 + $0x4508] sm:$0xff]
    %v3428 = vld [vmem:[%s5 + $0x4510] sm:$0xff]
    %v3429 = vld [vmem:[%s5 + $0x4518] sm:$0xff]
    %v3430 = vld [vmem:[%s5 + $0x4520] sm:$0xff]
    %v3431 = vld [vmem:[%s5 + $0x4528] sm:$0xff]
    %v3432 = vld [vmem:[%s5 + $0x4530] sm:$0xff]
    %v3433 = vld [vmem:[%s5 + $0x4538] sm:$0xff]
    %v3434 = vld [vmem:[%s5 + $0x4540] sm:$0xff]
    %v3435 = vld [vmem:[%s5 + $0x4548] sm:$0xff]
    %v3436 = vld [vmem:[%s5 + $0x4550] sm:$0xff]
    %v3437 = vld [vmem:[%s5 + $0x4558] sm:$0xff]
    %v3438 = vld [vmem:[%s5 + $0x4560] sm:$0xff]
    %v3439 = vld [vmem:[%s5 + $0x4568] sm:$0xff]
    %v3440 = vld [vmem:[%s5 + $0x4570] sm:$0xff]
    %v3441 = vld [vmem:[%s5 + $0x4578] sm:$0xff]
    %v3442 = vld [vmem:[%s5 + $0x4580] sm:$0xff]
    %v3443 = vld [vmem:[%s5 + $0x4588] sm:$0xff]
    %v3444 = vld [vmem:[%s5 + $0x4590] sm:$0xff]
    %v3445 = vld [vmem:[%s5 + $0x4598] sm:$0xff]
    %v3446 = vld [vmem:[%s5 + $0x45a0] sm:$0xff]
    %v3447 = vld [vmem:[%s5 + $0x45a8] sm:$0xff]
    %v3448 = vld [vmem:[%s5 + $0x45b0] sm:$0xff]
    %v3449 = vld [vmem:[%s5 + $0x45b8] sm:$0xff]
    %v3450 = vld [vmem:[%s5 + $0x45c0] sm:$0xff]
    %v3451 = vld [vmem:[%s5 + $0x45c8] sm:$0xff]
    %v3452 = vld [vmem:[%s5 + $0x45d0] sm:$0xff]
    %v3453 = vld [vmem:[%s5 + $0x45d8] sm:$0xff]
    %v3454 = vld [vmem:[%s5 + $0x45e0] sm:$0xff]
    %v3455 = vld [vmem:[%s5 + $0x45e8] sm:$0xff]
    %v3456 = vld [vmem:[%s5 + $0x45f0] sm:$0xff]
    %v3457 = vld [vmem:[%s5 + $0x45f8] sm:$0xff]
    %v3458 = vld [vmem:[%s5 + $0x4600] sm:$0xff]
    %v3459 = vld [vmem:[%s5 + $0x4608] sm:$0xff]
    %v3460 = vld [vmem:[%s5 + $0x4610] sm:$0xff]
    %v3461 = vld [vmem:[%s5 + $0x4618] sm:$0xff]
    %v3462 = vld [vmem:[%s5 + $0x4620] sm:$0xff]
    %v3463 = vld [vmem:[%s5 + $0x4628] sm:$0xff]
    %v3464 = vld [vmem:[%s5 + $0x4630] sm:$0xff]
    %v3465 = vld [vmem:[%s5 + $0x4638] sm:$0xff]
    %v3466 = vld [vmem:[%s5 + $0x4640] sm:$0xff]
    %v3467 = vld [vmem:[%s5 + $0x4648] sm:$0xff]
    %v3468 = vld [vmem:[%s5 + $0x4650] sm:$0xff]
    %v3469 = vld [vmem:[%s5 + $0x4658] sm:$0xff]
    %v3470 = vld [vmem:[%s5 + $0x4660] sm:$0xff]
    %v3471 = vld [vmem:[%s5 + $0x4668] sm:$0xff]
    %v3472 = vld [vmem:[%s5 + $0x4670] sm:$0xff]
    %v3473 = vld [vmem:[%s5 + $0x4678] sm:$0xff]
    %v3474 = vld [vmem:[%s5 + $0x4680] sm:$0xff]
    %v3475 = vld [vmem:[%s5 + $0x4688] sm:$0xff]
    %v3476 = vld [vmem:[%s5 + $0x4690] sm:$0xff]
    %v3477 = vld [vmem:[%s5 + $0x4698] sm:$0xff]
    %v3478 = vld [vmem:[%s5 + $0x46a0] sm:$0xff]
    %v3479 = vld [vmem:[%s5 + $0x46a8] sm:$0xff]
    %v3480 = vld [vmem:[%s5 + $0x46b0] sm:$0xff]
    %v3481 = vld [vmem:[%s5 + $0x46b8] sm:$0xff]
    %v3482 = vld [vmem:[%s5 + $0x46c0] sm:$0xff]
    %v3483 = vld [vmem:[%s5 + $0x46c8] sm:$0xff]
    %v3484 = vld [vmem:[%s5 + $0x46d0] sm:$0xff]
    %v3485 = vld [vmem:[%s5 + $0x46d8] sm:$0xff]
    %v3486 = vld [vmem:[%s5 + $0x46e0] sm:$0xff]
    %v3487 = vld [vmem:[%s5 + $0x46e8] sm:$0xff]
    %v3488 = vld [vmem:[%s5 + $0x46f0] sm:$0xff]
    %v3489 = vld [vmem:[%s5 + $0x46f8] sm:$0xff]
    %v3490 = vld [vmem:[%s5 + $0x4700] sm:$0xff]
    %v3491 = vld [vmem:[%s5 + $0x4708] sm:$0xff]
    %v3492 = vld [vmem:[%s5 + $0x4710] sm:$0xff]
    %v3493 = vld [vmem:[%s5 + $0x4718] sm:$0xff]
    %v3494 = vld [vmem:[%s5 + $0x4720] sm:$0xff]
    %v3495 = vld [vmem:[%s5 + $0x4728] sm:$0xff]
    %v3496 = vld [vmem:[%s5 + $0x4730] sm:$0xff]
    %v3497 = vld [vmem:[%s5 + $0x4738] sm:$0xff]
    %v3498 = vld [vmem:[%s5 + $0x4740] sm:$0xff]
    %v3499 = vld [vmem:[%s5 + $0x4748] sm:$0xff]
    %v3500 = vld [vmem:[%s5 + $0x4750] sm:$0xff]
    %v3501 = vld [vmem:[%s5 + $0x4758] sm:$0xff]
    %v3502 = vld [vmem:[%s5 + $0x4760] sm:$0xff]
    %v3503 = vld [vmem:[%s5 + $0x4768] sm:$0xff]
    %v3504 = vld [vmem:[%s5 + $0x4770] sm:$0xff]
    %v3505 = vld [vmem:[%s5 + $0x4778] sm:$0xff]
    %v3506 = vld [vmem:[%s5 + $0x4780] sm:$0xff]
    %v3507 = vld [vmem:[%s5 + $0x4788] sm:$0xff]
    %v3508 = vld [vmem:[%s5 + $0x4790] sm:$0xff]
    %v3509 = vld [vmem:[%s5 + $0x4798] sm:$0xff]
    %v3510 = vld [vmem:[%s5 + $0x47a0] sm:$0xff]
    %v3511 = vld [vmem:[%s5 + $0x47a8] sm:$0xff]
    %v3512 = vld [vmem:[%s5 + $0x47b0] sm:$0xff]
    %v3513 = vld [vmem:[%s5 + $0x47b8] sm:$0xff]
    %v3514 = vld [vmem:[%s5 + $0x47c0] sm:$0xff]
    %v3515 = vld [vmem:[%s5 + $0x47c8] sm:$0xff]
    %v3516 = vld [vmem:[%s5 + $0x47d0] sm:$0xff]
    %v3517 = vld [vmem:[%s5 + $0x47d8] sm:$0xff]
    %v3518 = vld [vmem:[%s5 + $0x47e0] sm:$0xff]
    %v3519 = vld [vmem:[%s5 + $0x47e8] sm:$0xff]
    %v3520 = vld [vmem:[%s5 + $0x47f0] sm:$0xff]
    %v3521 = vld [vmem:[%s5 + $0x47f8] sm:$0xff]
    %v3522 = vld [vmem:[%s6] sm:$0x1]
    %v3524 = vperm.slane %v3522, 0
    %3562 = vst [vmem:[#allocation1] ss:$4 sm:$0xff] %v1182
    %s3563 = scalar_lea.vmem [#allocation1], 32
    %3564 = vst [vmem:[%s3563] ss:$4 sm:$0xff] %v1183
    %v3565 = vld.sshfl [vmem:[#allocation1] sm:$0xff pattern:$0x73625140]
    %v3566 = vld.sshfl [vmem:[#allocation1 + $0x8] sm:$0xff pattern:$0x73625140]
    %v3567 = vld.sshfl [vmem:[#allocation1 + $0x10] sm:$0xff pattern:$0x73625140]
    %v3568 = vld.sshfl [vmem:[#allocation1 + $0x18] sm:$0xff pattern:$0x73625140]
    %v3569 = vld.sshfl [vmem:[#allocation1 + $0x20] sm:$0xff pattern:$0x73625140]
    %v3570 = vld.sshfl [vmem:[#allocation1 + $0x28] sm:$0xff pattern:$0x73625140]
    %v3571 = vld.sshfl [vmem:[#allocation1 + $0x30] sm:$0xff pattern:$0x73625140]
    %v3572 = vld.sshfl [vmem:[#allocation1 + $0x38] sm:$0xff pattern:$0x73625140]
    %3573 = vst [vmem:[#allocation1] ss:$4 sm:$0xff] %v1184
    %3574 = vst [vmem:[%s3563] ss:$4 sm:$0xff] %v1185
    %v3575 = vld.sshfl [vmem:[#allocation1] sm:$0xff pattern:$0x73625140]
    %v3576 = vld.sshfl [vmem:[#allocation1 + $0x8] sm:$0xff pattern:$0x73625140]
    %v3577 = vld.sshfl [vmem:[#allocation1 + $0x10] sm:$0xff pattern:$0x73625140]
    %v3578 = vld.sshfl [vmem:[#allocation1 + $0x18] sm:$0xff pattern:$0x73625140]
    %v3579 = vld.sshfl [vmem:[#allocation1 + $0x20] sm:$0xff pattern:$0x73625140]
    %v3580 = vld.sshfl [vmem:[#allocation1 + $0x28] sm:$0xff pattern:$0x73625140]
    %v3581 = vld.sshfl [vmem:[#allocation1 + $0x30] sm:$0xff pattern:$0x73625140]
    %v3582 = vld.sshfl [vmem:[#allocation1 + $0x38] sm:$0xff pattern:$0x73625140]
    %3583 = vst [vmem:[#allocation1] ss:$4 sm:$0xff] %v1186
    %3584 = vst [vmem:[%s3563] ss:$4 sm:$0xff] %v1187
    %v3585 = vld.sshfl [vmem:[#allocation1] sm:$0xff pattern:$0x73625140]
    %v3586 = vld.sshfl [vmem:[#allocation1 + $0x8] sm:$0xff pattern:$0x73625140]
    %v3587 = vld.sshfl [vmem:[#allocation1 + $0x10] sm:$0xff pattern:$0x73625140]
    %v3588 = vld.sshfl [vmem:[#allocation1 + $0x18] sm:$0xff pattern:$0x73625140]
    %v3589 = vld.sshfl [vmem:[#allocation1 + $0x20] sm:$0xff pattern:$0x73625140]
    %v3590 = vld.sshfl [vmem:[#allocation1 + $0x28] sm:$0xff pattern:$0x73625140]
    %v3591 = vld.sshfl [vmem:[#allocation1 + $0x30] sm:$0xff pattern:$0x73625140]
    %v3592 = vld.sshfl [vmem:[#allocation1 + $0x38] sm:$0xff pattern:$0x73625140]
    %3593 = vst [vmem:[#allocation1] ss:$4 sm:$0xff] %v1188
    %3594 = vst [vmem:[%s3563] ss:$4 sm:$0xff] %v1189
    %v3595 = vld.sshfl [vmem:[#allocation1] sm:$0xff pattern:$0x73625140]
    %v3596 = vld.sshfl [vmem:[#allocation1 + $0x8] sm:$0xff pattern:$0x73625140]
    %v3597 = vld.sshfl [vmem:[#allocation1 + $0x10] sm:$0xff pattern:$0x73625140]
    %v3598 = vld.sshfl [vmem:[#allocation1 + $0x18] sm:$0xff pattern:$0x73625140]
    %v3599 = vld.sshfl [vmem:[#allocation1 + $0x20] sm:$0xff pattern:$0x73625140]
    %v3600 = vld.sshfl [vmem:[#allocation1 + $0x28] sm:$0xff pattern:$0x73625140]
    %v3601 = vld.sshfl [vmem:[#allocation1 + $0x30] sm:$0xff pattern:$0x73625140]
    %v3602 = vld.sshfl [vmem:[#allocation1 + $0x38] sm:$0xff pattern:$0x73625140]
    %3603 = vst [vmem:[#allocation1] ss:$4 sm:$0xff] %v1190
    %3604 = vst [vmem:[%s3563] ss:$4 sm:$0xff] %v1191
    %v3605 = vld.sshfl [vmem:[#allocation1] sm:$0xff pattern:$0x73625140]
    %v3606 = vld.sshfl [vmem:[#allocation1 + $0x8] sm:$0xff pattern:$0x73625140]
    %v3607 = vld.sshfl [vmem:[#allocation1 + $0x10] sm:$0xff pattern:$0x73625140]
    %v3608 = vld.sshfl [vmem:[#allocation1 + $0x18] sm:$0xff pattern:$0x73625140]
    %v3609 = vld.sshfl [vmem:[#allocation1 + $0x20] sm:$0xff pattern:$0x73625140]
    %v3610 = vld.sshfl [vmem:[#allocation1 + $0x28] sm:$0xff pattern:$0x73625140]
    %v3611 = vld.sshfl [vmem:[#allocation1 + $0x30] sm:$0xff pattern:$0x73625140]
    %v3612 = vld.sshfl [vmem:[#allocation1 + $0x38] sm:$0xff pattern:$0x73625140]
    %3613 = vst [vmem:[#allocation1] ss:$4 sm:$0xff] %v1192
    %3614 = vst [vmem:[%s3563] ss:$4 sm:$0xff] %v1193
    %v3615 = vld.sshfl [vmem:[#allocation1] sm:$0xff pattern:$0x73625140]
    %v3616 = vld.sshfl [vmem:[#allocation1 + $0x8] sm:$0xff pattern:$0x73625140]
    %v3617 = vld.sshfl [vmem:[#allocation1 + $0x10] sm:$0xff pattern:$0x73625140]
    %v3618 = vld.sshfl [vmem:[#allocation1 + $0x18] sm:$0xff pattern:$0x73625140]
    %v3619 = vld.sshfl [vmem:[#allocation1 + $0x20] sm:$0xff pattern:$0x73625140]
    %v3620 = vld.sshfl [vmem:[#allocation1 + $0x28] sm:$0xff pattern:$0x73625140]
    %v3621 = vld.sshfl [vmem:[#allocation1 + $0x30] sm:$0xff pattern:$0x73625140]
    %v3622 = vld.sshfl [vmem:[#allocation1 + $0x38] sm:$0xff pattern:$0x73625140]
    %3623 = vst [vmem:[#allocation1] ss:$4 sm:$0xff] %v1194
    %3624 = vst [vmem:[%s3563] ss:$4 sm:$0xff] %v1195
    %v3625 = vld.sshfl [vmem:[#allocation1] sm:$0xff pattern:$0x73625140]
    %v3626 = vld.sshfl [vmem:[#allocation1 + $0x8] sm:$0xff pattern:$0x73625140]
    %v3627 = vld.sshfl [vmem:[#allocation1 + $0x10] sm:$0xff pattern:$0x73625140]
    %v3628 = vld.sshfl [vmem:[#allocation1 + $0x18] sm:$0xff pattern:$0x73625140]
    %v3629 = vld.sshfl [vmem:[#allocation1 + $0x20] sm:$0xff pattern:$0x73625140]
    %v3630 = vld.sshfl [vmem:[#allocation1 + $0x28] sm:$0xff pattern:$0x73625140]
    %v3631 = vld.sshfl [vmem:[#allocation1 + $0x30] sm:$0xff pattern:$0x73625140]
    %v3632 = vld.sshfl [vmem:[#allocation1 + $0x38] sm:$0xff pattern:$0x73625140]
    %3633 = vst [vmem:[#allocation1] ss:$4 sm:$0xff] %v1196
    %3634 = vst [vmem:[%s3563] ss:$4 sm:$0xff] %v1197
    %v3635 = vld.sshfl [vmem:[#allocation1] sm:$0xff pattern:$0x73625140]
    %v3636 = vld.sshfl [vmem:[#allocation1 + $0x8] sm:$0xff pattern:$0x73625140]
    %v3637 = vld.sshfl [vmem:[#allocation1 + $0x10] sm:$0xff pattern:$0x73625140]
    %v3638 = vld.sshfl [vmem:[#allocation1 + $0x18] sm:$0xff pattern:$0x73625140]
    %v3639 = vld.sshfl [vmem:[#allocation1 + $0x20] sm:$0xff pattern:$0x73625140]
    %v3640 = vld.sshfl [vmem:[#allocation1 + $0x28] sm:$0xff pattern:$0x73625140]
    %v3641 = vld.sshfl [vmem:[#allocation1 + $0x30] sm:$0xff pattern:$0x73625140]
    %v3642 = vld.sshfl [vmem:[#allocation1 + $0x38] sm:$0xff pattern:$0x73625140]
    %3643 = vst [vmem:[#allocation1] ss:$4 sm:$0xff] %v1198
    %3644 = vst [vmem:[%s3563] ss:$4 sm:$0xff] %v1199
    %v3645 = vld.sshfl [vmem:[#allocation1] sm:$0xff pattern:$0x73625140]
    %v3646 = vld.sshfl [vmem:[#allocation1 + $0x8] sm:$0xff pattern:$0x73625140]
    %v3647 = vld.sshfl [vmem:[#allocation1 + $0x10] sm:$0xff pattern:$0x73625140]
    %v3648 = vld.sshfl [vmem:[#allocation1 + $0x18] sm:$0xff pattern:$0x73625140]
    %v3649 = vld.sshfl [vmem:[#allocation1 + $0x20] sm:$0xff pattern:$0x73625140]
    %v3650 = vld.sshfl [vmem:[#allocation1 + $0x28] sm:$0xff pattern:$0x73625140]
    %v3651 = vld.sshfl [vmem:[#allocation1 + $0x30] sm:$0xff pattern:$0x73625140]
    %v3652 = vld.sshfl [vmem:[#allocation1 + $0x38] sm:$0xff pattern:$0x73625140]
    %3653 = vst [vmem:[#allocation1] ss:$4 sm:$0xff] %v1200
    %3654 = vst [vmem:[%s3563] ss:$4 sm:$0xff] %v1201
    %v3655 = vld.sshfl [vmem:[#allocation1] sm:$0xff pattern:$0x73625140]
    %v3656 = vld.sshfl [vmem:[#allocation1 + $0x8] sm:$0xff pattern:$0x73625140]
    %v3657 = vld.sshfl [vmem:[#allocation1 + $0x10] sm:$0xff pattern:$0x73625140]
    %v3658 = vld.sshfl [vmem:[#allocation1 + $0x18] sm:$0xff pattern:$0x73625140]
    %v3659 = vld.sshfl [vmem:[#allocation1 + $0x20] sm:$0xff pattern:$0x73625140]
    %v3660 = vld.sshfl [vmem:[#allocation1 + $0x28] sm:$0xff pattern:$0x73625140]
    %v3661 = vld.sshfl [vmem:[#allocation1 + $0x30] sm:$0xff pattern:$0x73625140]
    %v3662 = vld.sshfl [vmem:[#allocation1 + $0x38] sm:$0xff pattern:$0x73625140]
    %3663 = vst [vmem:[#allocation1] ss:$4 sm:$0xff] %v1202
    %3664 = vst [vmem:[%s3563] ss:$4 sm:$0xff] %v1203
    %v3665 = vld.sshfl [vmem:[#allocation1] sm:$0xff pattern:$0x73625140]
    %v3666 = vld.sshfl [vmem:[#allocation1 + $0x8] sm:$0xff pattern:$0x73625140]
    %v3667 = vld.sshfl [vmem:[#allocation1 + $0x10] sm:$0xff pattern:$0x73625140]
    %v3668 = vld.sshfl [vmem:[#allocation1 + $0x18] sm:$0xff pattern:$0x73625140]
    %v3669 = vld.sshfl [vmem:[#allocation1 + $0x20] sm:$0xff pattern:$0x73625140]
    %v3670 = vld.sshfl [vmem:[#allocation1 + $0x28] sm:$0xff pattern:$0x73625140]
    %v3671 = vld.sshfl [vmem:[#allocation1 + $0x30] sm:$0xff pattern:$0x73625140]
    %v3672 = vld.sshfl [vmem:[#allocation1 + $0x38] sm:$0xff pattern:$0x73625140]
    %3673 = vst [vmem:[#allocation1] ss:$4 sm:$0xff] %v1204
    %3674 = vst [vmem:[%s3563] ss:$4 sm:$0xff] %v1205
    %v3675 = vld.sshfl [vmem:[#allocation1] sm:$0xff pattern:$0x73625140]
    %v3676 = vld.sshfl [vmem:[#allocation1 + $0x8] sm:$0xff pattern:$0x73625140]
    %v3677 = vld.sshfl [vmem:[#allocation1 + $0x10] sm:$0xff pattern:$0x73625140]
    %v3678 = vld.sshfl [vmem:[#allocation1 + $0x18] sm:$0xff pattern:$0x73625140]
    %v3679 = vld.sshfl [vmem:[#allocation1 + $0x20] sm:$0xff pattern:$0x73625140]
    %v3680 = vld.sshfl [vmem:[#allocation1 + $0x28] sm:$0xff pattern:$0x73625140]
    %v3681 = vld.sshfl [vmem:[#allocation1 + $0x30] sm:$0xff pattern:$0x73625140]
    %v3682 = vld.sshfl [vmem:[#allocation1 + $0x38] sm:$0xff pattern:$0x73625140]
    %3683 = vst [vmem:[#allocation1] ss:$4 sm:$0xff] %v1206
    %3684 = vst [vmem:[%s3563] ss:$4 sm:$0xff] %v1207
    %v3685 = vld.sshfl [vmem:[#allocation1] sm:$0xff pattern:$0x73625140]
    %v3686 = vld.sshfl [vmem:[#allocation1 + $0x8] sm:$0xff pattern:$0x73625140]
    %v3687 = vld.sshfl [vmem:[#allocation1 + $0x10] sm:$0xff pattern:$0x73625140]
    %v3688 = vld.sshfl [vmem:[#allocation1 + $0x18] sm:$0xff pattern:$0x73625140]
    %v3689 = vld.sshfl [vmem:[#allocation1 + $0x20] sm:$0xff pattern:$0x73625140]
    %v3690 = vld.sshfl [vmem:[#allocation1 + $0x28] sm:$0xff pattern:$0x73625140]
    %v3691 = vld.sshfl [vmem:[#allocation1 + $0x30] sm:$0xff pattern:$0x73625140]
    %v3692 = vld.sshfl [vmem:[#allocation1 + $0x38] sm:$0xff pattern:$0x73625140]
    %3693 = vst [vmem:[#allocation1] ss:$4 sm:$0xff] %v1208
    %3694 = vst [vmem:[%s3563] ss:$4 sm:$0xff] %v1209
    %v3695 = vld.sshfl [vmem:[#allocation1] sm:$0xff pattern:$0x73625140]
    %v3696 = vld.sshfl [vmem:[#allocation1 + $0x8] sm:$0xff pattern:$0x73625140]
    %v3697 = vld.sshfl [vmem:[#allocation1 + $0x10] sm:$0xff pattern:$0x73625140]
    %v3698 = vld.sshfl [vmem:[#allocation1 + $0x18] sm:$0xff pattern:$0x73625140]
    %v3699 = vld.sshfl [vmem:[#allocation1 + $0x20] sm:$0xff pattern:$0x73625140]
    %v3700 = vld.sshfl [vmem:[#allocation1 + $0x28] sm:$0xff pattern:$0x73625140]
    %v3701 = vld.sshfl [vmem:[#allocation1 + $0x30] sm:$0xff pattern:$0x73625140]
    %v3702 = vld.sshfl [vmem:[#allocation1 + $0x38] sm:$0xff pattern:$0x73625140]
    %3703 = vst [vmem:[#allocation1] ss:$4 sm:$0xff] %v1210
    %3704 = vst [vmem:[%s3563] ss:$4 sm:$0xff] %v1211
    %v3705 = vld.sshfl [vmem:[#allocation1] sm:$0xff pattern:$0x73625140]
    %v3706 = vld.sshfl [vmem:[#allocation1 + $0x8] sm:$0xff pattern:$0x73625140]
    %v3707 = vld.sshfl [vmem:[#allocation1 + $0x10] sm:$0xff pattern:$0x73625140]
    %v3708 = vld.sshfl [vmem:[#allocation1 + $0x18] sm:$0xff pattern:$0x73625140]
    %v3709 = vld.sshfl [vmem:[#allocation1 + $0x20] sm:$0xff pattern:$0x73625140]
    %v3710 = vld.sshfl [vmem:[#allocation1 + $0x28] sm:$0xff pattern:$0x73625140]
    %v3711 = vld.sshfl [vmem:[#allocation1 + $0x30] sm:$0xff pattern:$0x73625140]
    %v3712 = vld.sshfl [vmem:[#allocation1 + $0x38] sm:$0xff pattern:$0x73625140]
    %3713 = vst [vmem:[#allocation1] ss:$4 sm:$0xff] %v1212
    %3714 = vst [vmem:[%s3563] ss:$4 sm:$0xff] %v1213
    %v3715 = vld.sshfl [vmem:[#allocation1] sm:$0xff pattern:$0x73625140]
    %v3716 = vld.sshfl [vmem:[#allocation1 + $0x8] sm:$0xff pattern:$0x73625140]
    %v3717 = vld.sshfl [vmem:[#allocation1 + $0x10] sm:$0xff pattern:$0x73625140]
    %v3718 = vld.sshfl [vmem:[#allocation1 + $0x18] sm:$0xff pattern:$0x73625140]
    %v3719 = vld.sshfl [vmem:[#allocation1 + $0x20] sm:$0xff pattern:$0x73625140]
    %v3720 = vld.sshfl [vmem:[#allocation1 + $0x28] sm:$0xff pattern:$0x73625140]
    %v3721 = vld.sshfl [vmem:[#allocation1 + $0x30] sm:$0xff pattern:$0x73625140]
    %v3722 = vld.sshfl [vmem:[#allocation1 + $0x38] sm:$0xff pattern:$0x73625140]
    %3723 = vst [vmem:[#allocation1] ss:$4 sm:$0xff] %v1214
    %3724 = vst [vmem:[%s3563] ss:$4 sm:$0xff] %v1215
    %v3725 = vld.sshfl [vmem:[#allocation1] sm:$0xff pattern:$0x73625140]
    %v3726 = vld.sshfl [vmem:[#allocation1 + $0x8] sm:$0xff pattern:$0x73625140]
    %v3727 = vld.sshfl [vmem:[#allocation1 + $0x10] sm:$0xff pattern:$0x73625140]
    %v3728 = vld.sshfl [vmem:[#allocation1 + $0x18] sm:$0xff pattern:$0x73625140]
    %v3729 = vld.sshfl [vmem:[#allocation1 + $0x20] sm:$0xff pattern:$0x73625140]
    %v3730 = vld.sshfl [vmem:[#allocation1 + $0x28] sm:$0xff pattern:$0x73625140]
    %v3731 = vld.sshfl [vmem:[#allocation1 + $0x30] sm:$0xff pattern:$0x73625140]
    %v3732 = vld.sshfl [vmem:[#allocation1 + $0x38] sm:$0xff pattern:$0x73625140]
    %3733 = vst [vmem:[#allocation1] ss:$4 sm:$0xff] %v1216
    %3734 = vst [vmem:[%s3563] ss:$4 sm:$0xff] %v1217
    %v3735 = vld.sshfl [vmem:[#allocation1] sm:$0xff pattern:$0x73625140]
    %v3736 = vld.sshfl [vmem:[#allocation1 + $0x8] sm:$0xff pattern:$0x73625140]
    %v3737 = vld.sshfl [vmem:[#allocation1 + $0x10] sm:$0xff pattern:$0x73625140]
    %v3738 = vld.sshfl [vmem:[#allocation1 + $0x18] sm:$0xff pattern:$0x73625140]
    %v3739 = vld.sshfl [vmem:[#allocation1 + $0x20] sm:$0xff pattern:$0x73625140]
    %v3740 = vld.sshfl [vmem:[#allocation1 + $0x28] sm:$0xff pattern:$0x73625140]
    %v3741 = vld.sshfl [vmem:[#allocation1 + $0x30] sm:$0xff pattern:$0x73625140]
    %v3742 = vld.sshfl [vmem:[#allocation1 + $0x38] sm:$0xff pattern:$0x73625140]
    %3887 = vmatpush.msra.mxu0 %v1233
    %3888 = vmatpush.msra.mxu0 %v1232
    %3889 = vmatpush.msra.mxu0 %v1231
    %3890 = vmatpush.msra.mxu0 %v1230
    %3891 = vmatpush.msra.mxu0 %v1229
    %3892 = vmatpush.msra.mxu0 %v1228
    %3893 = vmatpush.msra.mxu0 %v1227
    %3894 = vmatpush.msra.mxu0 %v1226
    %3895 = vmatpush.msra.mxu0 %v1225
    %3896 = vmatpush.msra.mxu0 %v1224
    %3897 = vmatpush.msra.mxu0 %v1223
    %3898 = vmatpush.msra.mxu0 %v1222
    %3899 = vmatpush.msra.mxu0 %v1221
    %3900 = vmatpush.msra.mxu0 %v1220
    %3901 = vmatpush.msra.mxu0 %v1219
    %3902 = vmatpush.msra.mxu0 %v1218
    %3903 = vmatmul.f32.gmra.mxu0 %v3565
    %v3904 = vpop.f32.mrf.mxu0
    %v3905 = vadd.f32 %v3524, %v3904
    %3906 = vdwg.mxu0
    %3907 = vmatpush.msra.mxu0 %v1249
    %3908 = vmatpush.msra.mxu0 %v1248
    %3909 = vmatpush.msra.mxu0 %v1247
    %3910 = vmatpush.msra.mxu0 %v1246
    %3911 = vmatpush.msra.mxu0 %v1245
    %3912 = vmatpush.msra.mxu0 %v1244
    %3913 = vmatpush.msra.mxu0 %v1243
    %3914 = vmatpush.msra.mxu0 %v1242
    %3915 = vmatpush.msra.mxu0 %v1241
    %3916 = vmatpush.msra.mxu0 %v1240
    %3917 = vmatpush.msra.mxu0 %v1239
    %3918 = vmatpush.msra.mxu0 %v1238
    %3919 = vmatpush.msra.mxu0 %v1237
    %3920 = vmatpush.msra.mxu0 %v1236
    %3921 = vmatpush.msra.mxu0 %v1235
    %3922 = vmatpush.msra.mxu0 %v1234
    %3923 = vmatmul.f32.gmra.mxu0 %v3566
    %v3924 = vpop.f32.mrf.mxu0
    %v3925 = vadd.f32 %v3905, %v3924
    %3926 = vdwg.mxu0
    %3927 = vmatpush.msra.mxu0 %v1265
    %3928 = vmatpush.msra.mxu0 %v1264
    %3929 = vmatpush.msra.mxu0 %v1263
    %3930 = vmatpush.msra.mxu0 %v1262
    %3931 = vmatpush.msra.mxu0 %v1261
    %3932 = vmatpush.msra.mxu0 %v1260
    %3933 = vmatpush.msra.mxu0 %v1259
    %3934 = vmatpush.msra.mxu0 %v1258
    %3935 = vmatpush.msra.mxu0 %v1257
    %3936 = vmatpush.msra.mxu0 %v1256
    %3937 = vmatpush.msra.mxu0 %v1255
    %3938 = vmatpush.msra.mxu0 %v1254
    %3939 = vmatpush.msra.mxu0 %v1253
    %3940 = vmatpush.msra.mxu0 %v1252
    %3941 = vmatpush.msra.mxu0 %v1251
    %3942 = vmatpush.msra.mxu0 %v1250
    %3943 = vmatmul.f32.gmra.mxu0 %v3567
    %v3944 = vpop.f32.mrf.mxu0
    %v3945 = vadd.f32 %v3925, %v3944
    %3946 = vdwg.mxu0
    %3947 = vmatpush.msra.mxu0 %v1281
    %3948 = vmatpush.msra.mxu0 %v1280
    %3949 = vmatpush.msra.mxu0 %v1279
    %3950 = vmatpush.msra.mxu0 %v1278
    %3951 = vmatpush.msra.mxu0 %v1277
    %3952 = vmatpush.msra.mxu0 %v1276
    %3953 = vmatpush.msra.mxu0 %v1275
    %3954 = vmatpush.msra.mxu0 %v1274
    %3955 = vmatpush.msra.mxu0 %v1273
    %3956 = vmatpush.msra.mxu0 %v1272
    %3957 = vmatpush.msra.mxu0 %v1271
    %3958 = vmatpush.msra.mxu0 %v1270
    %3959 = vmatpush.msra.mxu0 %v1269
    %3960 = vmatpush.msra.mxu0 %v1268
    %3961 = vmatpush.msra.mxu0 %v1267
    %3962 = vmatpush.msra.mxu0 %v1266
    %3963 = vmatmul.f32.gmra.mxu0 %v3568
    %v3964 = vpop.f32.mrf.mxu0
    %v3965 = vadd.f32 %v3945, %v3964
    %3966 = vdwg.mxu0
    %3967 = vmatpush.msra.mxu0 %v1297
    %3968 = vmatpush.msra.mxu0 %v1296
    %3969 = vmatpush.msra.mxu0 %v1295
    %3970 = vmatpush.msra.mxu0 %v1294
    %3971 = vmatpush.msra.mxu0 %v1293
    %3972 = vmatpush.msra.mxu0 %v1292
    %3973 = vmatpush.msra.mxu0 %v1291
    %3974 = vmatpush.msra.mxu0 %v1290
    %3975 = vmatpush.msra.mxu0 %v1289
    %3976 = vmatpush.msra.mxu0 %v1288
    %3977 = vmatpush.msra.mxu0 %v1287
    %3978 = vmatpush.msra.mxu0 %v1286
    %3979 = vmatpush.msra.mxu0 %v1285
    %3980 = vmatpush.msra.mxu0 %v1284
    %3981 = vmatpush.msra.mxu0 %v1283
    %3982 = vmatpush.msra.mxu0 %v1282
    %3983 = vmatmul.f32.gmra.mxu0 %v3569
    %v3984 = vpop.f32.mrf.mxu0
    %v3985 = vadd.f32 %v3965, %v3984
    %3986 = vdwg.mxu0
    %3987 = vmatpush.msra.mxu0 %v1313
    %3988 = vmatpush.msra.mxu0 %v1312
    %3989 = vmatpush.msra.mxu0 %v1311
    %3990 = vmatpush.msra.mxu0 %v1310
    %3991 = vmatpush.msra.mxu0 %v1309
    %3992 = vmatpush.msra.mxu0 %v1308
    %3993 = vmatpush.msra.mxu0 %v1307
    %3994 = vmatpush.msra.mxu0 %v1306
    %3995 = vmatpush.msra.mxu0 %v1305
    %3996 = vmatpush.msra.mxu0 %v1304
    %3997 = vmatpush.msra.mxu0 %v1303
    %3998 = vmatpush.msra.mxu0 %v1302
    %3999 = vmatpush.msra.mxu0 %v1301
    %4000 = vmatpush.msra.mxu0 %v1300
    %4001 = vmatpush.msra.mxu0 %v1299
    %4002 = vmatpush.msra.mxu0 %v1298
    %4003 = vmatmul.f32.gmra.mxu0 %v3570
    %v4004 = vpop.f32.mrf.mxu0
    %v4005 = vadd.f32 %v3985, %v4004
    %4006 = vdwg.mxu0
    %4007 = vmatpush.msra.mxu0 %v1329
    %4008 = vmatpush.msra.mxu0 %v1328
    %4009 = vmatpush.msra.mxu0 %v1327
    %4010 = vmatpush.msra.mxu0 %v1326
    %4011 = vmatpush.msra.mxu0 %v1325
    %4012 = vmatpush.msra.mxu0 %v1324
    %4013 = vmatpush.msra.mxu0 %v1323
    %4014 = vmatpush.msra.mxu0 %v1322
    %4015 = vmatpush.msra.mxu0 %v1321
    %4016 = vmatpush.msra.mxu0 %v1320
    %4017 = vmatpush.msra.mxu0 %v1319
    %4018 = vmatpush.msra.mxu0 %v1318
    %4019 = vmatpush.msra.mxu0 %v1317
    %4020 = vmatpush.msra.mxu0 %v1316
    %4021 = vmatpush.msra.mxu0 %v1315
    %4022 = vmatpush.msra.mxu0 %v1314
    %4023 = vmatmul.f32.gmra.mxu0 %v3571
    %v4024 = vpop.f32.mrf.mxu0
    %v4025 = vadd.f32 %v4005, %v4024
    %4026 = vdwg.mxu0
    %4027 = vmatpush.msra.mxu0 %v1345
    %4028 = vmatpush.msra.mxu0 %v1344
    %4029 = vmatpush.msra.mxu0 %v1343
    %4030 = vmatpush.msra.mxu0 %v1342
    %4031 = vmatpush.msra.mxu0 %v1341
    %4032 = vmatpush.msra.mxu0 %v1340
    %4033 = vmatpush.msra.mxu0 %v1339
    %4034 = vmatpush.msra.mxu0 %v1338
    %4035 = vmatpush.msra.mxu0 %v1337
    %4036 = vmatpush.msra.mxu0 %v1336
    %4037 = vmatpush.msra.mxu0 %v1335
    %4038 = vmatpush.msra.mxu0 %v1334
    %4039 = vmatpush.msra.mxu0 %v1333
    %4040 = vmatpush.msra.mxu0 %v1332
    %4041 = vmatpush.msra.mxu0 %v1331
    %4042 = vmatpush.msra.mxu0 %v1330
    %4043 = vmatmul.f32.gmra.mxu0 %v3572
    %v4044 = vpop.f32.mrf.mxu0
    %v4045 = vadd.f32 %v4025, %v4044
    %4046 = vdwg.mxu0
    %4047 = vmatpush.msra.mxu0 %v1361
    %4048 = vmatpush.msra.mxu0 %v1360
    %4049 = vmatpush.msra.mxu0 %v1359
    %4050 = vmatpush.msra.mxu0 %v1358
    %4051 = vmatpush.msra.mxu0 %v1357
    %4052 = vmatpush.msra.mxu0 %v1356
    %4053 = vmatpush.msra.mxu0 %v1355
    %4054 = vmatpush.msra.mxu0 %v1354
    %4055 = vmatpush.msra.mxu0 %v1353
    %4056 = vmatpush.msra.mxu0 %v1352
    %4057 = vmatpush.msra.mxu0 %v1351
    %4058 = vmatpush.msra.mxu0 %v1350
    %4059 = vmatpush.msra.mxu0 %v1349
    %4060 = vmatpush.msra.mxu0 %v1348
    %4061 = vmatpush.msra.mxu0 %v1347
    %4062 = vmatpush.msra.mxu0 %v1346
    %4063 = vmatmul.f32.gmra.mxu0 %v3575
    %v4064 = vpop.f32.mrf.mxu0
    %v4065 = vadd.f32 %v4045, %v4064
    %4066 = vdwg.mxu0
    %4067 = vmatpush.msra.mxu0 %v1377
    %4068 = vmatpush.msra.mxu0 %v1376
    %4069 = vmatpush.msra.mxu0 %v1375
    %4070 = vmatpush.msra.mxu0 %v1374
    %4071 = vmatpush.msra.mxu0 %v1373
    %4072 = vmatpush.msra.mxu0 %v1372
    %4073 = vmatpush.msra.mxu0 %v1371
    %4074 = vmatpush.msra.mxu0 %v1370
    %4075 = vmatpush.msra.mxu0 %v1369
    %4076 = vmatpush.msra.mxu0 %v1368
    %4077 = vmatpush.msra.mxu0 %v1367
    %4078 = vmatpush.msra.mxu0 %v1366
    %4079 = vmatpush.msra.mxu0 %v1365
    %4080 = vmatpush.msra.mxu0 %v1364
    %4081 = vmatpush.msra.mxu0 %v1363
    %4082 = vmatpush.msra.mxu0 %v1362
    %4083 = vmatmul.f32.gmra.mxu0 %v3576
    %v4084 = vpop.f32.mrf.mxu0
    %v4085 = vadd.f32 %v4065, %v4084
    %4086 = vdwg.mxu0
    %4087 = vmatpush.msra.mxu0 %v1393
    %4088 = vmatpush.msra.mxu0 %v1392
    %4089 = vmatpush.msra.mxu0 %v1391
    %4090 = vmatpush.msra.mxu0 %v1390
    %4091 = vmatpush.msra.mxu0 %v1389
    %4092 = vmatpush.msra.mxu0 %v1388
    %4093 = vmatpush.msra.mxu0 %v1387
    %4094 = vmatpush.msra.mxu0 %v1386
    %4095 = vmatpush.msra.mxu0 %v1385
    %4096 = vmatpush.msra.mxu0 %v1384
    %4097 = vmatpush.msra.mxu0 %v1383
    %4098 = vmatpush.msra.mxu0 %v1382
    %4099 = vmatpush.msra.mxu0 %v1381
    %4100 = vmatpush.msra.mxu0 %v1380
    %4101 = vmatpush.msra.mxu0 %v1379
    %4102 = vmatpush.msra.mxu0 %v1378
    %4103 = vmatmul.f32.gmra.mxu0 %v3577
    %v4104 = vpop.f32.mrf.mxu0
    %v4105 = vadd.f32 %v4085, %v4104
    %4106 = vdwg.mxu0
    %4107 = vmatpush.msra.mxu0 %v1409
    %4108 = vmatpush.msra.mxu0 %v1408
    %4109 = vmatpush.msra.mxu0 %v1407
    %4110 = vmatpush.msra.mxu0 %v1406
    %4111 = vmatpush.msra.mxu0 %v1405
    %4112 = vmatpush.msra.mxu0 %v1404
    %4113 = vmatpush.msra.mxu0 %v1403
    %4114 = vmatpush.msra.mxu0 %v1402
    %4115 = vmatpush.msra.mxu0 %v1401
    %4116 = vmatpush.msra.mxu0 %v1400
    %4117 = vmatpush.msra.mxu0 %v1399
    %4118 = vmatpush.msra.mxu0 %v1398
    %4119 = vmatpush.msra.mxu0 %v1397
    %4120 = vmatpush.msra.mxu0 %v1396
    %4121 = vmatpush.msra.mxu0 %v1395
    %4122 = vmatpush.msra.mxu0 %v1394
    %4123 = vmatmul.f32.gmra.mxu0 %v3578
    %v4124 = vpop.f32.mrf.mxu0
    %v4125 = vadd.f32 %v4105, %v4124
    %4126 = vdwg.mxu0
    %4127 = vmatpush.msra.mxu0 %v1425
    %4128 = vmatpush.msra.mxu0 %v1424
    %4129 = vmatpush.msra.mxu0 %v1423
    %4130 = vmatpush.msra.mxu0 %v1422
    %4131 = vmatpush.msra.mxu0 %v1421
    %4132 = vmatpush.msra.mxu0 %v1420
    %4133 = vmatpush.msra.mxu0 %v1419
    %4134 = vmatpush.msra.mxu0 %v1418
    %4135 = vmatpush.msra.mxu0 %v1417
    %4136 = vmatpush.msra.mxu0 %v1416
    %4137 = vmatpush.msra.mxu0 %v1415
    %4138 = vmatpush.msra.mxu0 %v1414
    %4139 = vmatpush.msra.mxu0 %v1413
    %4140 = vmatpush.msra.mxu0 %v1412
    %4141 = vmatpush.msra.mxu0 %v1411
    %4142 = vmatpush.msra.mxu0 %v1410
    %4143 = vmatmul.f32.gmra.mxu0 %v3579
    %v4144 = vpop.f32.mrf.mxu0
    %v4145 = vadd.f32 %v4125, %v4144
    %4146 = vdwg.mxu0
    %4147 = vmatpush.msra.mxu0 %v1441
    %4148 = vmatpush.msra.mxu0 %v1440
    %4149 = vmatpush.msra.mxu0 %v1439
    %4150 = vmatpush.msra.mxu0 %v1438
    %4151 = vmatpush.msra.mxu0 %v1437
    %4152 = vmatpush.msra.mxu0 %v1436
    %4153 = vmatpush.msra.mxu0 %v1435
    %4154 = vmatpush.msra.mxu0 %v1434
    %4155 = vmatpush.msra.mxu0 %v1433
    %4156 = vmatpush.msra.mxu0 %v1432
    %4157 = vmatpush.msra.mxu0 %v1431
    %4158 = vmatpush.msra.mxu0 %v1430
    %4159 = vmatpush.msra.mxu0 %v1429
    %4160 = vmatpush.msra.mxu0 %v1428
    %4161 = vmatpush.msra.mxu0 %v1427
    %4162 = vmatpush.msra.mxu0 %v1426
    %4163 = vmatmul.f32.gmra.mxu0 %v3580
    %v4164 = vpop.f32.mrf.mxu0
    %v4165 = vadd.f32 %v4145, %v4164
    %4166 = vdwg.mxu0
    %4167 = vmatpush.msra.mxu0 %v1457
    %4168 = vmatpush.msra.mxu0 %v1456
    %4169 = vmatpush.msra.mxu0 %v1455
    %4170 = vmatpush.msra.mxu0 %v1454
    %4171 = vmatpush.msra.mxu0 %v1453
    %4172 = vmatpush.msra.mxu0 %v1452
    %4173 = vmatpush.msra.mxu0 %v1451
    %4174 = vmatpush.msra.mxu0 %v1450
    %4175 = vmatpush.msra.mxu0 %v1449
    %4176 = vmatpush.msra.mxu0 %v1448
    %4177 = vmatpush.msra.mxu0 %v1447
    %4178 = vmatpush.msra.mxu0 %v1446
    %4179 = vmatpush.msra.mxu0 %v1445
    %4180 = vmatpush.msra.mxu0 %v1444
    %4181 = vmatpush.msra.mxu0 %v1443
    %4182 = vmatpush.msra.mxu0 %v1442
    %4183 = vmatmul.f32.gmra.mxu0 %v3581
    %v4184 = vpop.f32.mrf.mxu0
    %v4185 = vadd.f32 %v4165, %v4184
    %4186 = vdwg.mxu0
    %4187 = vmatpush.msra.mxu0 %v1473
    %4188 = vmatpush.msra.mxu0 %v1472
    %4189 = vmatpush.msra.mxu0 %v1471
    %4190 = vmatpush.msra.mxu0 %v1470
    %4191 = vmatpush.msra.mxu0 %v1469
    %4192 = vmatpush.msra.mxu0 %v1468
    %4193 = vmatpush.msra.mxu0 %v1467
    %4194 = vmatpush.msra.mxu0 %v1466
    %4195 = vmatpush.msra.mxu0 %v1465
    %4196 = vmatpush.msra.mxu0 %v1464
    %4197 = vmatpush.msra.mxu0 %v1463
    %4198 = vmatpush.msra.mxu0 %v1462
    %4199 = vmatpush.msra.mxu0 %v1461
    %4200 = vmatpush.msra.mxu0 %v1460
    %4201 = vmatpush.msra.mxu0 %v1459
    %4202 = vmatpush.msra.mxu0 %v1458
    %4203 = vmatmul.f32.gmra.mxu0 %v3582
    %v4204 = vpop.f32.mrf.mxu0
    %v4205 = vadd.f32 %v4185, %v4204
    %4206 = vdwg.mxu0
    %4207 = vmatpush.msra.mxu0 %v1489
    %4208 = vmatpush.msra.mxu0 %v1488
    %4209 = vmatpush.msra.mxu0 %v1487
    %4210 = vmatpush.msra.mxu0 %v1486
    %4211 = vmatpush.msra.mxu0 %v1485
    %4212 = vmatpush.msra.mxu0 %v1484
    %4213 = vmatpush.msra.mxu0 %v1483
    %4214 = vmatpush.msra.mxu0 %v1482
    %4215 = vmatpush.msra.mxu0 %v1481
    %4216 = vmatpush.msra.mxu0 %v1480
    %4217 = vmatpush.msra.mxu0 %v1479
    %4218 = vmatpush.msra.mxu0 %v1478
    %4219 = vmatpush.msra.mxu0 %v1477
    %4220 = vmatpush.msra.mxu0 %v1476
    %4221 = vmatpush.msra.mxu0 %v1475
    %4222 = vmatpush.msra.mxu0 %v1474
    %4223 = vmatmul.f32.gmra.mxu0 %v3585
    %v4224 = vpop.f32.mrf.mxu0
    %v4225 = vadd.f32 %v4205, %v4224
    %4226 = vdwg.mxu0
    %4227 = vmatpush.msra.mxu0 %v1505
    %4228 = vmatpush.msra.mxu0 %v1504
    %4229 = vmatpush.msra.mxu0 %v1503
    %4230 = vmatpush.msra.mxu0 %v1502
    %4231 = vmatpush.msra.mxu0 %v1501
    %4232 = vmatpush.msra.mxu0 %v1500
    %4233 = vmatpush.msra.mxu0 %v1499
    %4234 = vmatpush.msra.mxu0 %v1498
    %4235 = vmatpush.msra.mxu0 %v1497
    %4236 = vmatpush.msra.mxu0 %v1496
    %4237 = vmatpush.msra.mxu0 %v1495
    %4238 = vmatpush.msra.mxu0 %v1494
    %4239 = vmatpush.msra.mxu0 %v1493
    %4240 = vmatpush.msra.mxu0 %v1492
    %4241 = vmatpush.msra.mxu0 %v1491
    %4242 = vmatpush.msra.mxu0 %v1490
    %4243 = vmatmul.f32.gmra.mxu0 %v3586
    %v4244 = vpop.f32.mrf.mxu0
    %v4245 = vadd.f32 %v4225, %v4244
    %4246 = vdwg.mxu0
    %4247 = vmatpush.msra.mxu0 %v1521
    %4248 = vmatpush.msra.mxu0 %v1520
    %4249 = vmatpush.msra.mxu0 %v1519
    %4250 = vmatpush.msra.mxu0 %v1518
    %4251 = vmatpush.msra.mxu0 %v1517
    %4252 = vmatpush.msra.mxu0 %v1516
    %4253 = vmatpush.msra.mxu0 %v1515
    %4254 = vmatpush.msra.mxu0 %v1514
    %4255 = vmatpush.msra.mxu0 %v1513
    %4256 = vmatpush.msra.mxu0 %v1512
    %4257 = vmatpush.msra.mxu0 %v1511
    %4258 = vmatpush.msra.mxu0 %v1510
    %4259 = vmatpush.msra.mxu0 %v1509
    %4260 = vmatpush.msra.mxu0 %v1508
    %4261 = vmatpush.msra.mxu0 %v1507
    %4262 = vmatpush.msra.mxu0 %v1506
    %4263 = vmatmul.f32.gmra.mxu0 %v3587
    %v4264 = vpop.f32.mrf.mxu0
    %v4265 = vadd.f32 %v4245, %v4264
    %4266 = vdwg.mxu0
    %4267 = vmatpush.msra.mxu0 %v1537
    %4268 = vmatpush.msra.mxu0 %v1536
    %4269 = vmatpush.msra.mxu0 %v1535
    %4270 = vmatpush.msra.mxu0 %v1534
    %4271 = vmatpush.msra.mxu0 %v1533
    %4272 = vmatpush.msra.mxu0 %v1532
    %4273 = vmatpush.msra.mxu0 %v1531
    %4274 = vmatpush.msra.mxu0 %v1530
    %4275 = vmatpush.msra.mxu0 %v1529
    %4276 = vmatpush.msra.mxu0 %v1528
    %4277 = vmatpush.msra.mxu0 %v1527
    %4278 = vmatpush.msra.mxu0 %v1526
    %4279 = vmatpush.msra.mxu0 %v1525
    %4280 = vmatpush.msra.mxu0 %v1524
    %4281 = vmatpush.msra.mxu0 %v1523
    %4282 = vmatpush.msra.mxu0 %v1522
    %4283 = vmatmul.f32.gmra.mxu0 %v3588
    %v4284 = vpop.f32.mrf.mxu0
    %v4285 = vadd.f32 %v4265, %v4284
    %4286 = vdwg.mxu0
    %4287 = vmatpush.msra.mxu0 %v1553
    %4288 = vmatpush.msra.mxu0 %v1552
    %4289 = vmatpush.msra.mxu0 %v1551
    %4290 = vmatpush.msra.mxu0 %v1550
    %4291 = vmatpush.msra.mxu0 %v1549
    %4292 = vmatpush.msra.mxu0 %v1548
    %4293 = vmatpush.msra.mxu0 %v1547
    %4294 = vmatpush.msra.mxu0 %v1546
    %4295 = vmatpush.msra.mxu0 %v1545
    %4296 = vmatpush.msra.mxu0 %v1544
    %4297 = vmatpush.msra.mxu0 %v1543
    %4298 = vmatpush.msra.mxu0 %v1542
    %4299 = vmatpush.msra.mxu0 %v1541
    %4300 = vmatpush.msra.mxu0 %v1540
    %4301 = vmatpush.msra.mxu0 %v1539
    %4302 = vmatpush.msra.mxu0 %v1538
    %4303 = vmatmul.f32.gmra.mxu0 %v3589
    %v4304 = vpop.f32.mrf.mxu0
    %v4305 = vadd.f32 %v4285, %v4304
    %4306 = vdwg.mxu0
    %4307 = vmatpush.msra.mxu0 %v1569
    %4308 = vmatpush.msra.mxu0 %v1568
    %4309 = vmatpush.msra.mxu0 %v1567
    %4310 = vmatpush.msra.mxu0 %v1566
    %4311 = vmatpush.msra.mxu0 %v1565
    %4312 = vmatpush.msra.mxu0 %v1564
    %4313 = vmatpush.msra.mxu0 %v1563
    %4314 = vmatpush.msra.mxu0 %v1562
    %4315 = vmatpush.msra.mxu0 %v1561
    %4316 = vmatpush.msra.mxu0 %v1560
    %4317 = vmatpush.msra.mxu0 %v1559
    %4318 = vmatpush.msra.mxu0 %v1558
    %4319 = vmatpush.msra.mxu0 %v1557
    %4320 = vmatpush.msra.mxu0 %v1556
    %4321 = vmatpush.msra.mxu0 %v1555
    %4322 = vmatpush.msra.mxu0 %v1554
    %4323 = vmatmul.f32.gmra.mxu0 %v3590
    %v4324 = vpop.f32.mrf.mxu0
    %v4325 = vadd.f32 %v4305, %v4324
    %4326 = vdwg.mxu0
    %4327 = vmatpush.msra.mxu0 %v1585
    %4328 = vmatpush.msra.mxu0 %v1584
    %4329 = vmatpush.msra.mxu0 %v1583
    %4330 = vmatpush.msra.mxu0 %v1582
    %4331 = vmatpush.msra.mxu0 %v1581
    %4332 = vmatpush.msra.mxu0 %v1580
    %4333 = vmatpush.msra.mxu0 %v1579
    %4334 = vmatpush.msra.mxu0 %v1578
    %4335 = vmatpush.msra.mxu0 %v1577
    %4336 = vmatpush.msra.mxu0 %v1576
    %4337 = vmatpush.msra.mxu0 %v1575
    %4338 = vmatpush.msra.mxu0 %v1574
    %4339 = vmatpush.msra.mxu0 %v1573
    %4340 = vmatpush.msra.mxu0 %v1572
    %4341 = vmatpush.msra.mxu0 %v1571
    %4342 = vmatpush.msra.mxu0 %v1570
    %4343 = vmatmul.f32.gmra.mxu0 %v3591
    %v4344 = vpop.f32.mrf.mxu0
    %v4345 = vadd.f32 %v4325, %v4344
    %4346 = vdwg.mxu0
    %4347 = vmatpush.msra.mxu0 %v1601
    %4348 = vmatpush.msra.mxu0 %v1600
    %4349 = vmatpush.msra.mxu0 %v1599
    %4350 = vmatpush.msra.mxu0 %v1598
    %4351 = vmatpush.msra.mxu0 %v1597
    %4352 = vmatpush.msra.mxu0 %v1596
    %4353 = vmatpush.msra.mxu0 %v1595
    %4354 = vmatpush.msra.mxu0 %v1594
    %4355 = vmatpush.msra.mxu0 %v1593
    %4356 = vmatpush.msra.mxu0 %v1592
    %4357 = vmatpush.msra.mxu0 %v1591
    %4358 = vmatpush.msra.mxu0 %v1590
    %4359 = vmatpush.msra.mxu0 %v1589
    %4360 = vmatpush.msra.mxu0 %v1588
    %4361 = vmatpush.msra.mxu0 %v1587
    %4362 = vmatpush.msra.mxu0 %v1586
    %4363 = vmatmul.f32.gmra.mxu0 %v3592
    %v4364 = vpop.f32.mrf.mxu0
    %v4365 = vadd.f32 %v4345, %v4364
    %4366 = vdwg.mxu0
    %4367 = vmatpush.msra.mxu0 %v1617
    %4368 = vmatpush.msra.mxu0 %v1616
    %4369 = vmatpush.msra.mxu0 %v1615
    %4370 = vmatpush.msra.mxu0 %v1614
    %4371 = vmatpush.msra.mxu0 %v1613
    %4372 = vmatpush.msra.mxu0 %v1612
    %4373 = vmatpush.msra.mxu0 %v1611
    %4374 = vmatpush.msra.mxu0 %v1610
    %4375 = vmatpush.msra.mxu0 %v1609
    %4376 = vmatpush.msra.mxu0 %v1608
    %4377 = vmatpush.msra.mxu0 %v1607
    %4378 = vmatpush.msra.mxu0 %v1606
    %4379 = vmatpush.msra.mxu0 %v1605
    %4380 = vmatpush.msra.mxu0 %v1604
    %4381 = vmatpush.msra.mxu0 %v1603
    %4382 = vmatpush.msra.mxu0 %v1602
    %4383 = vmatmul.f32.gmra.mxu0 %v3595
    %v4384 = vpop.f32.mrf.mxu0
    %v4385 = vadd.f32 %v4365, %v4384
    %4386 = vdwg.mxu0
    %4387 = vmatpush.msra.mxu0 %v1633
    %4388 = vmatpush.msra.mxu0 %v1632
    %4389 = vmatpush.msra.mxu0 %v1631
    %4390 = vmatpush.msra.mxu0 %v1630
    %4391 = vmatpush.msra.mxu0 %v1629
    %4392 = vmatpush.msra.mxu0 %v1628
    %4393 = vmatpush.msra.mxu0 %v1627
    %4394 = vmatpush.msra.mxu0 %v1626
    %4395 = vmatpush.msra.mxu0 %v1625
    %4396 = vmatpush.msra.mxu0 %v1624
    %4397 = vmatpush.msra.mxu0 %v1623
    %4398 = vmatpush.msra.mxu0 %v1622
    %4399 = vmatpush.msra.mxu0 %v1621
    %4400 = vmatpush.msra.mxu0 %v1620
    %4401 = vmatpush.msra.mxu0 %v1619
    %4402 = vmatpush.msra.mxu0 %v1618
    %4403 = vmatmul.f32.gmra.mxu0 %v3596
    %v4404 = vpop.f32.mrf.mxu0
    %v4405 = vadd.f32 %v4385, %v4404
    %4406 = vdwg.mxu0
    %4407 = vmatpush.msra.mxu0 %v1649
    %4408 = vmatpush.msra.mxu0 %v1648
    %4409 = vmatpush.msra.mxu0 %v1647
    %4410 = vmatpush.msra.mxu0 %v1646
    %4411 = vmatpush.msra.mxu0 %v1645
    %4412 = vmatpush.msra.mxu0 %v1644
    %4413 = vmatpush.msra.mxu0 %v1643
    %4414 = vmatpush.msra.mxu0 %v1642
    %4415 = vmatpush.msra.mxu0 %v1641
    %4416 = vmatpush.msra.mxu0 %v1640
    %4417 = vmatpush.msra.mxu0 %v1639
    %4418 = vmatpush.msra.mxu0 %v1638
    %4419 = vmatpush.msra.mxu0 %v1637
    %4420 = vmatpush.msra.mxu0 %v1636
    %4421 = vmatpush.msra.mxu0 %v1635
    %4422 = vmatpush.msra.mxu0 %v1634
    %4423 = vmatmul.f32.gmra.mxu0 %v3597
    %v4424 = vpop.f32.mrf.mxu0
    %v4425 = vadd.f32 %v4405, %v4424
    %4426 = vdwg.mxu0
    %4427 = vmatpush.msra.mxu0 %v1665
    %4428 = vmatpush.msra.mxu0 %v1664
    %4429 = vmatpush.msra.mxu0 %v1663
    %4430 = vmatpush.msra.mxu0 %v1662
    %4431 = vmatpush.msra.mxu0 %v1661
    %4432 = vmatpush.msra.mxu0 %v1660
    %4433 = vmatpush.msra.mxu0 %v1659
    %4434 = vmatpush.msra.mxu0 %v1658
    %4435 = vmatpush.msra.mxu0 %v1657
    %4436 = vmatpush.msra.mxu0 %v1656
    %4437 = vmatpush.msra.mxu0 %v1655
    %4438 = vmatpush.msra.mxu0 %v1654
    %4439 = vmatpush.msra.mxu0 %v1653
    %4440 = vmatpush.msra.mxu0 %v1652
    %4441 = vmatpush.msra.mxu0 %v1651
    %4442 = vmatpush.msra.mxu0 %v1650
    %4443 = vmatmul.f32.gmra.mxu0 %v3598
    %v4444 = vpop.f32.mrf.mxu0
    %v4445 = vadd.f32 %v4425, %v4444
    %4446 = vdwg.mxu0
    %4447 = vmatpush.msra.mxu0 %v1681
    %4448 = vmatpush.msra.mxu0 %v1680
    %4449 = vmatpush.msra.mxu0 %v1679
    %4450 = vmatpush.msra.mxu0 %v1678
    %4451 = vmatpush.msra.mxu0 %v1677
    %4452 = vmatpush.msra.mxu0 %v1676
    %4453 = vmatpush.msra.mxu0 %v1675
    %4454 = vmatpush.msra.mxu0 %v1674
    %4455 = vmatpush.msra.mxu0 %v1673
    %4456 = vmatpush.msra.mxu0 %v1672
    %4457 = vmatpush.msra.mxu0 %v1671
    %4458 = vmatpush.msra.mxu0 %v1670
    %4459 = vmatpush.msra.mxu0 %v1669
    %4460 = vmatpush.msra.mxu0 %v1668
    %4461 = vmatpush.msra.mxu0 %v1667
    %4462 = vmatpush.msra.mxu0 %v1666
    %4463 = vmatmul.f32.gmra.mxu0 %v3599
    %v4464 = vpop.f32.mrf.mxu0
    %v4465 = vadd.f32 %v4445, %v4464
    %4466 = vdwg.mxu0
    %4467 = vmatpush.msra.mxu0 %v1697
    %4468 = vmatpush.msra.mxu0 %v1696
    %4469 = vmatpush.msra.mxu0 %v1695
    %4470 = vmatpush.msra.mxu0 %v1694
    %4471 = vmatpush.msra.mxu0 %v1693
    %4472 = vmatpush.msra.mxu0 %v1692
    %4473 = vmatpush.msra.mxu0 %v1691
    %4474 = vmatpush.msra.mxu0 %v1690
    %4475 = vmatpush.msra.mxu0 %v1689
    %4476 = vmatpush.msra.mxu0 %v1688
    %4477 = vmatpush.msra.mxu0 %v1687
    %4478 = vmatpush.msra.mxu0 %v1686
    %4479 = vmatpush.msra.mxu0 %v1685
    %4480 = vmatpush.msra.mxu0 %v1684
    %4481 = vmatpush.msra.mxu0 %v1683
    %4482 = vmatpush.msra.mxu0 %v1682
    %4483 = vmatmul.f32.gmra.mxu0 %v3600
    %v4484 = vpop.f32.mrf.mxu0
    %v4485 = vadd.f32 %v4465, %v4484
    %4486 = vdwg.mxu0
    %4487 = vmatpush.msra.mxu0 %v1713
    %4488 = vmatpush.msra.mxu0 %v1712
    %4489 = vmatpush.msra.mxu0 %v1711
    %4490 = vmatpush.msra.mxu0 %v1710
    %4491 = vmatpush.msra.mxu0 %v1709
    %4492 = vmatpush.msra.mxu0 %v1708
    %4493 = vmatpush.msra.mxu0 %v1707
    %4494 = vmatpush.msra.mxu0 %v1706
    %4495 = vmatpush.msra.mxu0 %v1705
    %4496 = vmatpush.msra.mxu0 %v1704
    %4497 = vmatpush.msra.mxu0 %v1703
    %4498 = vmatpush.msra.mxu0 %v1702
    %4499 = vmatpush.msra.mxu0 %v1701
    %4500 = vmatpush.msra.mxu0 %v1700
    %4501 = vmatpush.msra.mxu0 %v1699
    %4502 = vmatpush.msra.mxu0 %v1698
    %4503 = vmatmul.f32.gmra.mxu0 %v3601
    %v4504 = vpop.f32.mrf.mxu0
    %v4505 = vadd.f32 %v4485, %v4504
    %4506 = vdwg.mxu0
    %4507 = vmatpush.msra.mxu0 %v1729
    %4508 = vmatpush.msra.mxu0 %v1728
    %4509 = vmatpush.msra.mxu0 %v1727
    %4510 = vmatpush.msra.mxu0 %v1726
    %4511 = vmatpush.msra.mxu0 %v1725
    %4512 = vmatpush.msra.mxu0 %v1724
    %4513 = vmatpush.msra.mxu0 %v1723
    %4514 = vmatpush.msra.mxu0 %v1722
    %4515 = vmatpush.msra.mxu0 %v1721
    %4516 = vmatpush.msra.mxu0 %v1720
    %4517 = vmatpush.msra.mxu0 %v1719
    %4518 = vmatpush.msra.mxu0 %v1718
    %4519 = vmatpush.msra.mxu0 %v1717
    %4520 = vmatpush.msra.mxu0 %v1716
    %4521 = vmatpush.msra.mxu0 %v1715
    %4522 = vmatpush.msra.mxu0 %v1714
    %4523 = vmatmul.f32.gmra.mxu0 %v3602
    %v4524 = vpop.f32.mrf.mxu0
    %v4525 = vadd.f32 %v4505, %v4524
    %4526 = vdwg.mxu0
    %4527 = vmatpush.msra.mxu0 %v1745
    %4528 = vmatpush.msra.mxu0 %v1744
    %4529 = vmatpush.msra.mxu0 %v1743
    %4530 = vmatpush.msra.mxu0 %v1742
    %4531 = vmatpush.msra.mxu0 %v1741
    %4532 = vmatpush.msra.mxu0 %v1740
    %4533 = vmatpush.msra.mxu0 %v1739
    %4534 = vmatpush.msra.mxu0 %v1738
    %4535 = vmatpush.msra.mxu0 %v1737
    %4536 = vmatpush.msra.mxu0 %v1736
    %4537 = vmatpush.msra.mxu0 %v1735
    %4538 = vmatpush.msra.mxu0 %v1734
    %4539 = vmatpush.msra.mxu0 %v1733
    %4540 = vmatpush.msra.mxu0 %v1732
    %4541 = vmatpush.msra.mxu0 %v1731
    %4542 = vmatpush.msra.mxu0 %v1730
    %4543 = vmatmul.f32.gmra.mxu0 %v3605
    %v4544 = vpop.f32.mrf.mxu0
    %v4545 = vadd.f32 %v4525, %v4544
    %4546 = vdwg.mxu0
    %4547 = vmatpush.msra.mxu0 %v1761
    %4548 = vmatpush.msra.mxu0 %v1760
    %4549 = vmatpush.msra.mxu0 %v1759
    %4550 = vmatpush.msra.mxu0 %v1758
    %4551 = vmatpush.msra.mxu0 %v1757
    %4552 = vmatpush.msra.mxu0 %v1756
    %4553 = vmatpush.msra.mxu0 %v1755
    %4554 = vmatpush.msra.mxu0 %v1754
    %4555 = vmatpush.msra.mxu0 %v1753
    %4556 = vmatpush.msra.mxu0 %v1752
    %4557 = vmatpush.msra.mxu0 %v1751
    %4558 = vmatpush.msra.mxu0 %v1750
    %4559 = vmatpush.msra.mxu0 %v1749
    %4560 = vmatpush.msra.mxu0 %v1748
    %4561 = vmatpush.msra.mxu0 %v1747
    %4562 = vmatpush.msra.mxu0 %v1746
    %4563 = vmatmul.f32.gmra.mxu0 %v3606
    %v4564 = vpop.f32.mrf.mxu0
    %v4565 = vadd.f32 %v4545, %v4564
    %4566 = vdwg.mxu0
    %4567 = vmatpush.msra.mxu0 %v1777
    %4568 = vmatpush.msra.mxu0 %v1776
    %4569 = vmatpush.msra.mxu0 %v1775
    %4570 = vmatpush.msra.mxu0 %v1774
    %4571 = vmatpush.msra.mxu0 %v1773
    %4572 = vmatpush.msra.mxu0 %v1772
    %4573 = vmatpush.msra.mxu0 %v1771
    %4574 = vmatpush.msra.mxu0 %v1770
    %4575 = vmatpush.msra.mxu0 %v1769
    %4576 = vmatpush.msra.mxu0 %v1768
    %4577 = vmatpush.msra.mxu0 %v1767
    %4578 = vmatpush.msra.mxu0 %v1766
    %4579 = vmatpush.msra.mxu0 %v1765
    %4580 = vmatpush.msra.mxu0 %v1764
    %4581 = vmatpush.msra.mxu0 %v1763
    %4582 = vmatpush.msra.mxu0 %v1762
    %4583 = vmatmul.f32.gmra.mxu0 %v3607
    %v4584 = vpop.f32.mrf.mxu0
    %v4585 = vadd.f32 %v4565, %v4584
    %4586 = vdwg.mxu0
    %4587 = vmatpush.msra.mxu0 %v1793
    %4588 = vmatpush.msra.mxu0 %v1792
    %4589 = vmatpush.msra.mxu0 %v1791
    %4590 = vmatpush.msra.mxu0 %v1790
    %4591 = vmatpush.msra.mxu0 %v1789
    %4592 = vmatpush.msra.mxu0 %v1788
    %4593 = vmatpush.msra.mxu0 %v1787
    %4594 = vmatpush.msra.mxu0 %v1786
    %4595 = vmatpush.msra.mxu0 %v1785
    %4596 = vmatpush.msra.mxu0 %v1784
    %4597 = vmatpush.msra.mxu0 %v1783
    %4598 = vmatpush.msra.mxu0 %v1782
    %4599 = vmatpush.msra.mxu0 %v1781
    %4600 = vmatpush.msra.mxu0 %v1780
    %4601 = vmatpush.msra.mxu0 %v1779
    %4602 = vmatpush.msra.mxu0 %v1778
    %4603 = vmatmul.f32.gmra.mxu0 %v3608
    %v4604 = vpop.f32.mrf.mxu0
    %v4605 = vadd.f32 %v4585, %v4604
    %4606 = vdwg.mxu0
    %4607 = vmatpush.msra.mxu0 %v1809
    %4608 = vmatpush.msra.mxu0 %v1808
    %4609 = vmatpush.msra.mxu0 %v1807
    %4610 = vmatpush.msra.mxu0 %v1806
    %4611 = vmatpush.msra.mxu0 %v1805
    %4612 = vmatpush.msra.mxu0 %v1804
    %4613 = vmatpush.msra.mxu0 %v1803
    %4614 = vmatpush.msra.mxu0 %v1802
    %4615 = vmatpush.msra.mxu0 %v1801
    %4616 = vmatpush.msra.mxu0 %v1800
    %4617 = vmatpush.msra.mxu0 %v1799
    %4618 = vmatpush.msra.mxu0 %v1798
    %4619 = vmatpush.msra.mxu0 %v1797
    %4620 = vmatpush.msra.mxu0 %v1796
    %4621 = vmatpush.msra.mxu0 %v1795
    %4622 = vmatpush.msra.mxu0 %v1794
    %4623 = vmatmul.f32.gmra.mxu0 %v3609
    %v4624 = vpop.f32.mrf.mxu0
    %v4625 = vadd.f32 %v4605, %v4624
    %4626 = vdwg.mxu0
    %4627 = vmatpush.msra.mxu0 %v1825
    %4628 = vmatpush.msra.mxu0 %v1824
    %4629 = vmatpush.msra.mxu0 %v1823
    %4630 = vmatpush.msra.mxu0 %v1822
    %4631 = vmatpush.msra.mxu0 %v1821
    %4632 = vmatpush.msra.mxu0 %v1820
    %4633 = vmatpush.msra.mxu0 %v1819
    %4634 = vmatpush.msra.mxu0 %v1818
    %4635 = vmatpush.msra.mxu0 %v1817
    %4636 = vmatpush.msra.mxu0 %v1816
    %4637 = vmatpush.msra.mxu0 %v1815
    %4638 = vmatpush.msra.mxu0 %v1814
    %4639 = vmatpush.msra.mxu0 %v1813
    %4640 = vmatpush.msra.mxu0 %v1812
    %4641 = vmatpush.msra.mxu0 %v1811
    %4642 = vmatpush.msra.mxu0 %v1810
    %4643 = vmatmul.f32.gmra.mxu0 %v3610
    %v4644 = vpop.f32.mrf.mxu0
    %v4645 = vadd.f32 %v4625, %v4644
    %4646 = vdwg.mxu0
    %4647 = vmatpush.msra.mxu0 %v1841
    %4648 = vmatpush.msra.mxu0 %v1840
    %4649 = vmatpush.msra.mxu0 %v1839
    %4650 = vmatpush.msra.mxu0 %v1838
    %4651 = vmatpush.msra.mxu0 %v1837
    %4652 = vmatpush.msra.mxu0 %v1836
    %4653 = vmatpush.msra.mxu0 %v1835
    %4654 = vmatpush.msra.mxu0 %v1834
    %4655 = vmatpush.msra.mxu0 %v1833
    %4656 = vmatpush.msra.mxu0 %v1832
    %4657 = vmatpush.msra.mxu0 %v1831
    %4658 = vmatpush.msra.mxu0 %v1830
    %4659 = vmatpush.msra.mxu0 %v1829
    %4660 = vmatpush.msra.mxu0 %v1828
    %4661 = vmatpush.msra.mxu0 %v1827
    %4662 = vmatpush.msra.mxu0 %v1826
    %4663 = vmatmul.f32.gmra.mxu0 %v3611
    %v4664 = vpop.f32.mrf.mxu0
    %v4665 = vadd.f32 %v4645, %v4664
    %4666 = vdwg.mxu0
    %4667 = vmatpush.msra.mxu0 %v1857
    %4668 = vmatpush.msra.mxu0 %v1856
    %4669 = vmatpush.msra.mxu0 %v1855
    %4670 = vmatpush.msra.mxu0 %v1854
    %4671 = vmatpush.msra.mxu0 %v1853
    %4672 = vmatpush.msra.mxu0 %v1852
    %4673 = vmatpush.msra.mxu0 %v1851
    %4674 = vmatpush.msra.mxu0 %v1850
    %4675 = vmatpush.msra.mxu0 %v1849
    %4676 = vmatpush.msra.mxu0 %v1848
    %4677 = vmatpush.msra.mxu0 %v1847
    %4678 = vmatpush.msra.mxu0 %v1846
    %4679 = vmatpush.msra.mxu0 %v1845
    %4680 = vmatpush.msra.mxu0 %v1844
    %4681 = vmatpush.msra.mxu0 %v1843
    %4682 = vmatpush.msra.mxu0 %v1842
    %4683 = vmatmul.f32.gmra.mxu0 %v3612
    %v4684 = vpop.f32.mrf.mxu0
    %v4685 = vadd.f32 %v4665, %v4684
    %4686 = vdwg.mxu0
    %4687 = vmatpush.msra.mxu0 %v1873
    %4688 = vmatpush.msra.mxu0 %v1872
    %4689 = vmatpush.msra.mxu0 %v1871
    %4690 = vmatpush.msra.mxu0 %v1870
    %4691 = vmatpush.msra.mxu0 %v1869
    %4692 = vmatpush.msra.mxu0 %v1868
    %4693 = vmatpush.msra.mxu0 %v1867
    %4694 = vmatpush.msra.mxu0 %v1866
    %4695 = vmatpush.msra.mxu0 %v1865
    %4696 = vmatpush.msra.mxu0 %v1864
    %4697 = vmatpush.msra.mxu0 %v1863
    %4698 = vmatpush.msra.mxu0 %v1862
    %4699 = vmatpush.msra.mxu0 %v1861
    %4700 = vmatpush.msra.mxu0 %v1860
    %4701 = vmatpush.msra.mxu0 %v1859
    %4702 = vmatpush.msra.mxu0 %v1858
    %4703 = vmatmul.f32.gmra.mxu0 %v3615
    %v4704 = vpop.f32.mrf.mxu0
    %v4705 = vadd.f32 %v4685, %v4704
    %4706 = vdwg.mxu0
    %4707 = vmatpush.msra.mxu0 %v1889
    %4708 = vmatpush.msra.mxu0 %v1888
    %4709 = vmatpush.msra.mxu0 %v1887
    %4710 = vmatpush.msra.mxu0 %v1886
    %4711 = vmatpush.msra.mxu0 %v1885
    %4712 = vmatpush.msra.mxu0 %v1884
    %4713 = vmatpush.msra.mxu0 %v1883
    %4714 = vmatpush.msra.mxu0 %v1882
    %4715 = vmatpush.msra.mxu0 %v1881
    %4716 = vmatpush.msra.mxu0 %v1880
    %4717 = vmatpush.msra.mxu0 %v1879
    %4718 = vmatpush.msra.mxu0 %v1878
    %4719 = vmatpush.msra.mxu0 %v1877
    %4720 = vmatpush.msra.mxu0 %v1876
    %4721 = vmatpush.msra.mxu0 %v1875
    %4722 = vmatpush.msra.mxu0 %v1874
    %4723 = vmatmul.f32.gmra.mxu0 %v3616
    %v4724 = vpop.f32.mrf.mxu0
    %v4725 = vadd.f32 %v4705, %v4724
    %4726 = vdwg.mxu0
    %4727 = vmatpush.msra.mxu0 %v1905
    %4728 = vmatpush.msra.mxu0 %v1904
    %4729 = vmatpush.msra.mxu0 %v1903
    %4730 = vmatpush.msra.mxu0 %v1902
    %4731 = vmatpush.msra.mxu0 %v1901
    %4732 = vmatpush.msra.mxu0 %v1900
    %4733 = vmatpush.msra.mxu0 %v1899
    %4734 = vmatpush.msra.mxu0 %v1898
    %4735 = vmatpush.msra.mxu0 %v1897
    %4736 = vmatpush.msra.mxu0 %v1896
    %4737 = vmatpush.msra.mxu0 %v1895
    %4738 = vmatpush.msra.mxu0 %v1894
    %4739 = vmatpush.msra.mxu0 %v1893
    %4740 = vmatpush.msra.mxu0 %v1892
    %4741 = vmatpush.msra.mxu0 %v1891
    %4742 = vmatpush.msra.mxu0 %v1890
    %4743 = vmatmul.f32.gmra.mxu0 %v3617
    %v4744 = vpop.f32.mrf.mxu0
    %v4745 = vadd.f32 %v4725, %v4744
    %4746 = vdwg.mxu0
    %4747 = vmatpush.msra.mxu0 %v1921
    %4748 = vmatpush.msra.mxu0 %v1920
    %4749 = vmatpush.msra.mxu0 %v1919
    %4750 = vmatpush.msra.mxu0 %v1918
    %4751 = vmatpush.msra.mxu0 %v1917
    %4752 = vmatpush.msra.mxu0 %v1916
    %4753 = vmatpush.msra.mxu0 %v1915
    %4754 = vmatpush.msra.mxu0 %v1914
    %4755 = vmatpush.msra.mxu0 %v1913
    %4756 = vmatpush.msra.mxu0 %v1912
    %4757 = vmatpush.msra.mxu0 %v1911
    %4758 = vmatpush.msra.mxu0 %v1910
    %4759 = vmatpush.msra.mxu0 %v1909
    %4760 = vmatpush.msra.mxu0 %v1908
    %4761 = vmatpush.msra.mxu0 %v1907
    %4762 = vmatpush.msra.mxu0 %v1906
    %4763 = vmatmul.f32.gmra.mxu0 %v3618
    %v4764 = vpop.f32.mrf.mxu0
    %v4765 = vadd.f32 %v4745, %v4764
    %4766 = vdwg.mxu0
    %4767 = vmatpush.msra.mxu0 %v1937
    %4768 = vmatpush.msra.mxu0 %v1936
    %4769 = vmatpush.msra.mxu0 %v1935
    %4770 = vmatpush.msra.mxu0 %v1934
    %4771 = vmatpush.msra.mxu0 %v1933
    %4772 = vmatpush.msra.mxu0 %v1932
    %4773 = vmatpush.msra.mxu0 %v1931
    %4774 = vmatpush.msra.mxu0 %v1930
    %4775 = vmatpush.msra.mxu0 %v1929
    %4776 = vmatpush.msra.mxu0 %v1928
    %4777 = vmatpush.msra.mxu0 %v1927
    %4778 = vmatpush.msra.mxu0 %v1926
    %4779 = vmatpush.msra.mxu0 %v1925
    %4780 = vmatpush.msra.mxu0 %v1924
    %4781 = vmatpush.msra.mxu0 %v1923
    %4782 = vmatpush.msra.mxu0 %v1922
    %4783 = vmatmul.f32.gmra.mxu0 %v3619
    %v4784 = vpop.f32.mrf.mxu0
    %v4785 = vadd.f32 %v4765, %v4784
    %4786 = vdwg.mxu0
    %4787 = vmatpush.msra.mxu0 %v1953
    %4788 = vmatpush.msra.mxu0 %v1952
    %4789 = vmatpush.msra.mxu0 %v1951
    %4790 = vmatpush.msra.mxu0 %v1950
    %4791 = vmatpush.msra.mxu0 %v1949
    %4792 = vmatpush.msra.mxu0 %v1948
    %4793 = vmatpush.msra.mxu0 %v1947
    %4794 = vmatpush.msra.mxu0 %v1946
    %4795 = vmatpush.msra.mxu0 %v1945
    %4796 = vmatpush.msra.mxu0 %v1944
    %4797 = vmatpush.msra.mxu0 %v1943
    %4798 = vmatpush.msra.mxu0 %v1942
    %4799 = vmatpush.msra.mxu0 %v1941
    %4800 = vmatpush.msra.mxu0 %v1940
    %4801 = vmatpush.msra.mxu0 %v1939
    %4802 = vmatpush.msra.mxu0 %v1938
    %4803 = vmatmul.f32.gmra.mxu0 %v3620
    %v4804 = vpop.f32.mrf.mxu0
    %v4805 = vadd.f32 %v4785, %v4804
    %4806 = vdwg.mxu0
    %4807 = vmatpush.msra.mxu0 %v1969
    %4808 = vmatpush.msra.mxu0 %v1968
    %4809 = vmatpush.msra.mxu0 %v1967
    %4810 = vmatpush.msra.mxu0 %v1966
    %4811 = vmatpush.msra.mxu0 %v1965
    %4812 = vmatpush.msra.mxu0 %v1964
    %4813 = vmatpush.msra.mxu0 %v1963
    %4814 = vmatpush.msra.mxu0 %v1962
    %4815 = vmatpush.msra.mxu0 %v1961
    %4816 = vmatpush.msra.mxu0 %v1960
    %4817 = vmatpush.msra.mxu0 %v1959
    %4818 = vmatpush.msra.mxu0 %v1958
    %4819 = vmatpush.msra.mxu0 %v1957
    %4820 = vmatpush.msra.mxu0 %v1956
    %4821 = vmatpush.msra.mxu0 %v1955
    %4822 = vmatpush.msra.mxu0 %v1954
    %4823 = vmatmul.f32.gmra.mxu0 %v3621
    %v4824 = vpop.f32.mrf.mxu0
    %v4825 = vadd.f32 %v4805, %v4824
    %4826 = vdwg.mxu0
    %4827 = vmatpush.msra.mxu0 %v1985
    %4828 = vmatpush.msra.mxu0 %v1984
    %4829 = vmatpush.msra.mxu0 %v1983
    %4830 = vmatpush.msra.mxu0 %v1982
    %4831 = vmatpush.msra.mxu0 %v1981
    %4832 = vmatpush.msra.mxu0 %v1980
    %4833 = vmatpush.msra.mxu0 %v1979
    %4834 = vmatpush.msra.mxu0 %v1978
    %4835 = vmatpush.msra.mxu0 %v1977
    %4836 = vmatpush.msra.mxu0 %v1976
    %4837 = vmatpush.msra.mxu0 %v1975
    %4838 = vmatpush.msra.mxu0 %v1974
    %4839 = vmatpush.msra.mxu0 %v1973
    %4840 = vmatpush.msra.mxu0 %v1972
    %4841 = vmatpush.msra.mxu0 %v1971
    %4842 = vmatpush.msra.mxu0 %v1970
    %4843 = vmatmul.f32.gmra.mxu0 %v3622
    %v4844 = vpop.f32.mrf.mxu0
    %v4845 = vadd.f32 %v4825, %v4844
    %4846 = vdwg.mxu0
    %4847 = vmatpush.msra.mxu0 %v2001
    %4848 = vmatpush.msra.mxu0 %v2000
    %4849 = vmatpush.msra.mxu0 %v1999
    %4850 = vmatpush.msra.mxu0 %v1998
    %4851 = vmatpush.msra.mxu0 %v1997
    %4852 = vmatpush.msra.mxu0 %v1996
    %4853 = vmatpush.msra.mxu0 %v1995
    %4854 = vmatpush.msra.mxu0 %v1994
    %4855 = vmatpush.msra.mxu0 %v1993
    %4856 = vmatpush.msra.mxu0 %v1992
    %4857 = vmatpush.msra.mxu0 %v1991
    %4858 = vmatpush.msra.mxu0 %v1990
    %4859 = vmatpush.msra.mxu0 %v1989
    %4860 = vmatpush.msra.mxu0 %v1988
    %4861 = vmatpush.msra.mxu0 %v1987
    %4862 = vmatpush.msra.mxu0 %v1986
    %4863 = vmatmul.f32.gmra.mxu0 %v3625
    %v4864 = vpop.f32.mrf.mxu0
    %v4865 = vadd.f32 %v4845, %v4864
    %4866 = vdwg.mxu0
    %4867 = vmatpush.msra.mxu0 %v2017
    %4868 = vmatpush.msra.mxu0 %v2016
    %4869 = vmatpush.msra.mxu0 %v2015
    %4870 = vmatpush.msra.mxu0 %v2014
    %4871 = vmatpush.msra.mxu0 %v2013
    %4872 = vmatpush.msra.mxu0 %v2012
    %4873 = vmatpush.msra.mxu0 %v2011
    %4874 = vmatpush.msra.mxu0 %v2010
    %4875 = vmatpush.msra.mxu0 %v2009
    %4876 = vmatpush.msra.mxu0 %v2008
    %4877 = vmatpush.msra.mxu0 %v2007
    %4878 = vmatpush.msra.mxu0 %v2006
    %4879 = vmatpush.msra.mxu0 %v2005
    %4880 = vmatpush.msra.mxu0 %v2004
    %4881 = vmatpush.msra.mxu0 %v2003
    %4882 = vmatpush.msra.mxu0 %v2002
    %4883 = vmatmul.f32.gmra.mxu0 %v3626
    %v4884 = vpop.f32.mrf.mxu0
    %v4885 = vadd.f32 %v4865, %v4884
    %4886 = vdwg.mxu0
    %4887 = vmatpush.msra.mxu0 %v2033
    %4888 = vmatpush.msra.mxu0 %v2032
    %4889 = vmatpush.msra.mxu0 %v2031
    %4890 = vmatpush.msra.mxu0 %v2030
    %4891 = vmatpush.msra.mxu0 %v2029
    %4892 = vmatpush.msra.mxu0 %v2028
    %4893 = vmatpush.msra.mxu0 %v2027
    %4894 = vmatpush.msra.mxu0 %v2026
    %4895 = vmatpush.msra.mxu0 %v2025
    %4896 = vmatpush.msra.mxu0 %v2024
    %4897 = vmatpush.msra.mxu0 %v2023
    %4898 = vmatpush.msra.mxu0 %v2022
    %4899 = vmatpush.msra.mxu0 %v2021
    %4900 = vmatpush.msra.mxu0 %v2020
    %4901 = vmatpush.msra.mxu0 %v2019
    %4902 = vmatpush.msra.mxu0 %v2018
    %4903 = vmatmul.f32.gmra.mxu0 %v3627
    %v4904 = vpop.f32.mrf.mxu0
    %v4905 = vadd.f32 %v4885, %v4904
    %4906 = vdwg.mxu0
    %4907 = vmatpush.msra.mxu0 %v2049
    %4908 = vmatpush.msra.mxu0 %v2048
    %4909 = vmatpush.msra.mxu0 %v2047
    %4910 = vmatpush.msra.mxu0 %v2046
    %4911 = vmatpush.msra.mxu0 %v2045
    %4912 = vmatpush.msra.mxu0 %v2044
    %4913 = vmatpush.msra.mxu0 %v2043
    %4914 = vmatpush.msra.mxu0 %v2042
    %4915 = vmatpush.msra.mxu0 %v2041
    %4916 = vmatpush.msra.mxu0 %v2040
    %4917 = vmatpush.msra.mxu0 %v2039
    %4918 = vmatpush.msra.mxu0 %v2038
    %4919 = vmatpush.msra.mxu0 %v2037
    %4920 = vmatpush.msra.mxu0 %v2036
    %4921 = vmatpush.msra.mxu0 %v2035
    %4922 = vmatpush.msra.mxu0 %v2034
    %4923 = vmatmul.f32.gmra.mxu0 %v3628
    %v4924 = vpop.f32.mrf.mxu0
    %v4925 = vadd.f32 %v4905, %v4924
    %4926 = vdwg.mxu0
    %4927 = vmatpush.msra.mxu0 %v2065
    %4928 = vmatpush.msra.mxu0 %v2064
    %4929 = vmatpush.msra.mxu0 %v2063
    %4930 = vmatpush.msra.mxu0 %v2062
    %4931 = vmatpush.msra.mxu0 %v2061
    %4932 = vmatpush.msra.mxu0 %v2060
    %4933 = vmatpush.msra.mxu0 %v2059
    %4934 = vmatpush.msra.mxu0 %v2058
    %4935 = vmatpush.msra.mxu0 %v2057
    %4936 = vmatpush.msra.mxu0 %v2056
    %4937 = vmatpush.msra.mxu0 %v2055
    %4938 = vmatpush.msra.mxu0 %v2054
    %4939 = vmatpush.msra.mxu0 %v2053
    %4940 = vmatpush.msra.mxu0 %v2052
    %4941 = vmatpush.msra.mxu0 %v2051
    %4942 = vmatpush.msra.mxu0 %v2050
    %4943 = vmatmul.f32.gmra.mxu0 %v3629
    %v4944 = vpop.f32.mrf.mxu0
    %v4945 = vadd.f32 %v4925, %v4944
    %4946 = vdwg.mxu0
    %4947 = vmatpush.msra.mxu0 %v2081
    %4948 = vmatpush.msra.mxu0 %v2080
    %4949 = vmatpush.msra.mxu0 %v2079
    %4950 = vmatpush.msra.mxu0 %v2078
    %4951 = vmatpush.msra.mxu0 %v2077
    %4952 = vmatpush.msra.mxu0 %v2076
    %4953 = vmatpush.msra.mxu0 %v2075
    %4954 = vmatpush.msra.mxu0 %v2074
    %4955 = vmatpush.msra.mxu0 %v2073
    %4956 = vmatpush.msra.mxu0 %v2072
    %4957 = vmatpush.msra.mxu0 %v2071
    %4958 = vmatpush.msra.mxu0 %v2070
    %4959 = vmatpush.msra.mxu0 %v2069
    %4960 = vmatpush.msra.mxu0 %v2068
    %4961 = vmatpush.msra.mxu0 %v2067
    %4962 = vmatpush.msra.mxu0 %v2066
    %4963 = vmatmul.f32.gmra.mxu0 %v3630
    %v4964 = vpop.f32.mrf.mxu0
    %v4965 = vadd.f32 %v4945, %v4964
    %4966 = vdwg.mxu0
    %4967 = vmatpush.msra.mxu0 %v2097
    %4968 = vmatpush.msra.mxu0 %v2096
    %4969 = vmatpush.msra.mxu0 %v2095
    %4970 = vmatpush.msra.mxu0 %v2094
    %4971 = vmatpush.msra.mxu0 %v2093
    %4972 = vmatpush.msra.mxu0 %v2092
    %4973 = vmatpush.msra.mxu0 %v2091
    %4974 = vmatpush.msra.mxu0 %v2090
    %4975 = vmatpush.msra.mxu0 %v2089
    %4976 = vmatpush.msra.mxu0 %v2088
    %4977 = vmatpush.msra.mxu0 %v2087
    %4978 = vmatpush.msra.mxu0 %v2086
    %4979 = vmatpush.msra.mxu0 %v2085
    %4980 = vmatpush.msra.mxu0 %v2084
    %4981 = vmatpush.msra.mxu0 %v2083
    %4982 = vmatpush.msra.mxu0 %v2082
    %4983 = vmatmul.f32.gmra.mxu0 %v3631
    %v4984 = vpop.f32.mrf.mxu0
    %v4985 = vadd.f32 %v4965, %v4984
    %4986 = vdwg.mxu0
    %4987 = vmatpush.msra.mxu0 %v2113
    %4988 = vmatpush.msra.mxu0 %v2112
    %4989 = vmatpush.msra.mxu0 %v2111
    %4990 = vmatpush.msra.mxu0 %v2110
    %4991 = vmatpush.msra.mxu0 %v2109
    %4992 = vmatpush.msra.mxu0 %v2108
    %4993 = vmatpush.msra.mxu0 %v2107
    %4994 = vmatpush.msra.mxu0 %v2106
    %4995 = vmatpush.msra.mxu0 %v2105
    %4996 = vmatpush.msra.mxu0 %v2104
    %4997 = vmatpush.msra.mxu0 %v2103
    %4998 = vmatpush.msra.mxu0 %v2102
    %4999 = vmatpush.msra.mxu0 %v2101
    %5000 = vmatpush.msra.mxu0 %v2100
    %5001 = vmatpush.msra.mxu0 %v2099
    %5002 = vmatpush.msra.mxu0 %v2098
    %5003 = vmatmul.f32.gmra.mxu0 %v3632
    %v5004 = vpop.f32.mrf.mxu0
    %v5005 = vadd.f32 %v4985, %v5004
    %5006 = vdwg.mxu0
    %5007 = vmatpush.msra.mxu0 %v2129
    %5008 = vmatpush.msra.mxu0 %v2128
    %5009 = vmatpush.msra.mxu0 %v2127
    %5010 = vmatpush.msra.mxu0 %v2126
    %5011 = vmatpush.msra.mxu0 %v2125
    %5012 = vmatpush.msra.mxu0 %v2124
    %5013 = vmatpush.msra.mxu0 %v2123
    %5014 = vmatpush.msra.mxu0 %v2122
    %5015 = vmatpush.msra.mxu0 %v2121
    %5016 = vmatpush.msra.mxu0 %v2120
    %5017 = vmatpush.msra.mxu0 %v2119
    %5018 = vmatpush.msra.mxu0 %v2118
    %5019 = vmatpush.msra.mxu0 %v2117
    %5020 = vmatpush.msra.mxu0 %v2116
    %5021 = vmatpush.msra.mxu0 %v2115
    %5022 = vmatpush.msra.mxu0 %v2114
    %5023 = vmatmul.f32.gmra.mxu0 %v3635
    %v5024 = vpop.f32.mrf.mxu0
    %v5025 = vadd.f32 %v5005, %v5024
    %5026 = vdwg.mxu0
    %5027 = vmatpush.msra.mxu0 %v2145
    %5028 = vmatpush.msra.mxu0 %v2144
    %5029 = vmatpush.msra.mxu0 %v2143
    %5030 = vmatpush.msra.mxu0 %v2142
    %5031 = vmatpush.msra.mxu0 %v2141
    %5032 = vmatpush.msra.mxu0 %v2140
    %5033 = vmatpush.msra.mxu0 %v2139
    %5034 = vmatpush.msra.mxu0 %v2138
    %5035 = vmatpush.msra.mxu0 %v2137
    %5036 = vmatpush.msra.mxu0 %v2136
    %5037 = vmatpush.msra.mxu0 %v2135
    %5038 = vmatpush.msra.mxu0 %v2134
    %5039 = vmatpush.msra.mxu0 %v2133
    %5040 = vmatpush.msra.mxu0 %v2132
    %5041 = vmatpush.msra.mxu0 %v2131
    %5042 = vmatpush.msra.mxu0 %v2130
    %5043 = vmatmul.f32.gmra.mxu0 %v3636
    %v5044 = vpop.f32.mrf.mxu0
    %v5045 = vadd.f32 %v5025, %v5044
    %5046 = vdwg.mxu0
    %5047 = vmatpush.msra.mxu0 %v2161
    %5048 = vmatpush.msra.mxu0 %v2160
    %5049 = vmatpush.msra.mxu0 %v2159
    %5050 = vmatpush.msra.mxu0 %v2158
    %5051 = vmatpush.msra.mxu0 %v2157
    %5052 = vmatpush.msra.mxu0 %v2156
    %5053 = vmatpush.msra.mxu0 %v2155
    %5054 = vmatpush.msra.mxu0 %v2154
    %5055 = vmatpush.msra.mxu0 %v2153
    %5056 = vmatpush.msra.mxu0 %v2152
    %5057 = vmatpush.msra.mxu0 %v2151
    %5058 = vmatpush.msra.mxu0 %v2150
    %5059 = vmatpush.msra.mxu0 %v2149
    %5060 = vmatpush.msra.mxu0 %v2148
    %5061 = vmatpush.msra.mxu0 %v2147
    %5062 = vmatpush.msra.mxu0 %v2146
    %5063 = vmatmul.f32.gmra.mxu0 %v3637
    %v5064 = vpop.f32.mrf.mxu0
    %v5065 = vadd.f32 %v5045, %v5064
    %5066 = vdwg.mxu0
    %5067 = vmatpush.msra.mxu0 %v2177
    %5068 = vmatpush.msra.mxu0 %v2176
    %5069 = vmatpush.msra.mxu0 %v2175
    %5070 = vmatpush.msra.mxu0 %v2174
    %5071 = vmatpush.msra.mxu0 %v2173
    %5072 = vmatpush.msra.mxu0 %v2172
    %5073 = vmatpush.msra.mxu0 %v2171
    %5074 = vmatpush.msra.mxu0 %v2170
    %5075 = vmatpush.msra.mxu0 %v2169
    %5076 = vmatpush.msra.mxu0 %v2168
    %5077 = vmatpush.msra.mxu0 %v2167
    %5078 = vmatpush.msra.mxu0 %v2166
    %5079 = vmatpush.msra.mxu0 %v2165
    %5080 = vmatpush.msra.mxu0 %v2164
    %5081 = vmatpush.msra.mxu0 %v2163
    %5082 = vmatpush.msra.mxu0 %v2162
    %5083 = vmatmul.f32.gmra.mxu0 %v3638
    %v5084 = vpop.f32.mrf.mxu0
    %v5085 = vadd.f32 %v5065, %v5084
    %5086 = vdwg.mxu0
    %5087 = vmatpush.msra.mxu0 %v2193
    %5088 = vmatpush.msra.mxu0 %v2192
    %5089 = vmatpush.msra.mxu0 %v2191
    %5090 = vmatpush.msra.mxu0 %v2190
    %5091 = vmatpush.msra.mxu0 %v2189
    %5092 = vmatpush.msra.mxu0 %v2188
    %5093 = vmatpush.msra.mxu0 %v2187
    %5094 = vmatpush.msra.mxu0 %v2186
    %5095 = vmatpush.msra.mxu0 %v2185
    %5096 = vmatpush.msra.mxu0 %v2184
    %5097 = vmatpush.msra.mxu0 %v2183
    %5098 = vmatpush.msra.mxu0 %v2182
    %5099 = vmatpush.msra.mxu0 %v2181
    %5100 = vmatpush.msra.mxu0 %v2180
    %5101 = vmatpush.msra.mxu0 %v2179
    %5102 = vmatpush.msra.mxu0 %v2178
    %5103 = vmatmul.f32.gmra.mxu0 %v3639
    %v5104 = vpop.f32.mrf.mxu0
    %v5105 = vadd.f32 %v5085, %v5104
    %5106 = vdwg.mxu0
    %5107 = vmatpush.msra.mxu0 %v2209
    %5108 = vmatpush.msra.mxu0 %v2208
    %5109 = vmatpush.msra.mxu0 %v2207
    %5110 = vmatpush.msra.mxu0 %v2206
    %5111 = vmatpush.msra.mxu0 %v2205
    %5112 = vmatpush.msra.mxu0 %v2204
    %5113 = vmatpush.msra.mxu0 %v2203
    %5114 = vmatpush.msra.mxu0 %v2202
    %5115 = vmatpush.msra.mxu0 %v2201
    %5116 = vmatpush.msra.mxu0 %v2200
    %5117 = vmatpush.msra.mxu0 %v2199
    %5118 = vmatpush.msra.mxu0 %v2198
    %5119 = vmatpush.msra.mxu0 %v2197
    %5120 = vmatpush.msra.mxu0 %v2196
    %5121 = vmatpush.msra.mxu0 %v2195
    %5122 = vmatpush.msra.mxu0 %v2194
    %5123 = vmatmul.f32.gmra.mxu0 %v3640
    %v5124 = vpop.f32.mrf.mxu0
    %v5125 = vadd.f32 %v5105, %v5124
    %5126 = vdwg.mxu0
    %5127 = vmatpush.msra.mxu0 %v2225
    %5128 = vmatpush.msra.mxu0 %v2224
    %5129 = vmatpush.msra.mxu0 %v2223
    %5130 = vmatpush.msra.mxu0 %v2222
    %5131 = vmatpush.msra.mxu0 %v2221
    %5132 = vmatpush.msra.mxu0 %v2220
    %5133 = vmatpush.msra.mxu0 %v2219
    %5134 = vmatpush.msra.mxu0 %v2218
    %5135 = vmatpush.msra.mxu0 %v2217
    %5136 = vmatpush.msra.mxu0 %v2216
    %5137 = vmatpush.msra.mxu0 %v2215
    %5138 = vmatpush.msra.mxu0 %v2214
    %5139 = vmatpush.msra.mxu0 %v2213
    %5140 = vmatpush.msra.mxu0 %v2212
    %5141 = vmatpush.msra.mxu0 %v2211
    %5142 = vmatpush.msra.mxu0 %v2210
    %5143 = vmatmul.f32.gmra.mxu0 %v3641
    %v5144 = vpop.f32.mrf.mxu0
    %v5145 = vadd.f32 %v5125, %v5144
    %5146 = vdwg.mxu0
    %5147 = vmatpush.msra.mxu0 %v2241
    %5148 = vmatpush.msra.mxu0 %v2240
    %5149 = vmatpush.msra.mxu0 %v2239
    %5150 = vmatpush.msra.mxu0 %v2238
    %5151 = vmatpush.msra.mxu0 %v2237
    %5152 = vmatpush.msra.mxu0 %v2236
    %5153 = vmatpush.msra.mxu0 %v2235
    %5154 = vmatpush.msra.mxu0 %v2234
    %5155 = vmatpush.msra.mxu0 %v2233
    %5156 = vmatpush.msra.mxu0 %v2232
    %5157 = vmatpush.msra.mxu0 %v2231
    %5158 = vmatpush.msra.mxu0 %v2230
    %5159 = vmatpush.msra.mxu0 %v2229
    %5160 = vmatpush.msra.mxu0 %v2228
    %5161 = vmatpush.msra.mxu0 %v2227
    %5162 = vmatpush.msra.mxu0 %v2226
    %5163 = vmatmul.f32.gmra.mxu0 %v3642
    %v5164 = vpop.f32.mrf.mxu0
    %v5165 = vadd.f32 %v5145, %v5164
    %5166 = vdwg.mxu0
    %5167 = vmatpush.msra.mxu0 %v2257
    %5168 = vmatpush.msra.mxu0 %v2256
    %5169 = vmatpush.msra.mxu0 %v2255
    %5170 = vmatpush.msra.mxu0 %v2254
    %5171 = vmatpush.msra.mxu0 %v2253
    %5172 = vmatpush.msra.mxu0 %v2252
    %5173 = vmatpush.msra.mxu0 %v2251
    %5174 = vmatpush.msra.mxu0 %v2250
    %5175 = vmatpush.msra.mxu0 %v2249
    %5176 = vmatpush.msra.mxu0 %v2248
    %5177 = vmatpush.msra.mxu0 %v2247
    %5178 = vmatpush.msra.mxu0 %v2246
    %5179 = vmatpush.msra.mxu0 %v2245
    %5180 = vmatpush.msra.mxu0 %v2244
    %5181 = vmatpush.msra.mxu0 %v2243
    %5182 = vmatpush.msra.mxu0 %v2242
    %5183 = vmatmul.f32.gmra.mxu0 %v3645
    %v5184 = vpop.f32.mrf.mxu0
    %v5185 = vadd.f32 %v5165, %v5184
    %5186 = vdwg.mxu0
    %5187 = vmatpush.msra.mxu0 %v2273
    %5188 = vmatpush.msra.mxu0 %v2272
    %5189 = vmatpush.msra.mxu0 %v2271
    %5190 = vmatpush.msra.mxu0 %v2270
    %5191 = vmatpush.msra.mxu0 %v2269
    %5192 = vmatpush.msra.mxu0 %v2268
    %5193 = vmatpush.msra.mxu0 %v2267
    %5194 = vmatpush.msra.mxu0 %v2266
    %5195 = vmatpush.msra.mxu0 %v2265
    %5196 = vmatpush.msra.mxu0 %v2264
    %5197 = vmatpush.msra.mxu0 %v2263
    %5198 = vmatpush.msra.mxu0 %v2262
    %5199 = vmatpush.msra.mxu0 %v2261
    %5200 = vmatpush.msra.mxu0 %v2260
    %5201 = vmatpush.msra.mxu0 %v2259
    %5202 = vmatpush.msra.mxu0 %v2258
    %5203 = vmatmul.f32.gmra.mxu0 %v3646
    %v5204 = vpop.f32.mrf.mxu0
    %v5205 = vadd.f32 %v5185, %v5204
    %5206 = vdwg.mxu0
    %5207 = vmatpush.msra.mxu0 %v2289
    %5208 = vmatpush.msra.mxu0 %v2288
    %5209 = vmatpush.msra.mxu0 %v2287
    %5210 = vmatpush.msra.mxu0 %v2286
    %5211 = vmatpush.msra.mxu0 %v2285
    %5212 = vmatpush.msra.mxu0 %v2284
    %5213 = vmatpush.msra.mxu0 %v2283
    %5214 = vmatpush.msra.mxu0 %v2282
    %5215 = vmatpush.msra.mxu0 %v2281
    %5216 = vmatpush.msra.mxu0 %v2280
    %5217 = vmatpush.msra.mxu0 %v2279
    %5218 = vmatpush.msra.mxu0 %v2278
    %5219 = vmatpush.msra.mxu0 %v2277
    %5220 = vmatpush.msra.mxu0 %v2276
    %5221 = vmatpush.msra.mxu0 %v2275
    %5222 = vmatpush.msra.mxu0 %v2274
    %5223 = vmatmul.f32.gmra.mxu0 %v3647
    %v5224 = vpop.f32.mrf.mxu0
    %v5225 = vadd.f32 %v5205, %v5224
    %5226 = vdwg.mxu0
    %5227 = vmatpush.msra.mxu0 %v2305
    %5228 = vmatpush.msra.mxu0 %v2304
    %5229 = vmatpush.msra.mxu0 %v2303
    %5230 = vmatpush.msra.mxu0 %v2302
    %5231 = vmatpush.msra.mxu0 %v2301
    %5232 = vmatpush.msra.mxu0 %v2300
    %5233 = vmatpush.msra.mxu0 %v2299
    %5234 = vmatpush.msra.mxu0 %v2298
    %5235 = vmatpush.msra.mxu0 %v2297
    %5236 = vmatpush.msra.mxu0 %v2296
    %5237 = vmatpush.msra.mxu0 %v2295
    %5238 = vmatpush.msra.mxu0 %v2294
    %5239 = vmatpush.msra.mxu0 %v2293
    %5240 = vmatpush.msra.mxu0 %v2292
    %5241 = vmatpush.msra.mxu0 %v2291
    %5242 = vmatpush.msra.mxu0 %v2290
    %5243 = vmatmul.f32.gmra.mxu0 %v3648
    %v5244 = vpop.f32.mrf.mxu0
    %v5245 = vadd.f32 %v5225, %v5244
    %5246 = vdwg.mxu0
    %5247 = vmatpush.msra.mxu0 %v2321
    %5248 = vmatpush.msra.mxu0 %v2320
    %5249 = vmatpush.msra.mxu0 %v2319
    %5250 = vmatpush.msra.mxu0 %v2318
    %5251 = vmatpush.msra.mxu0 %v2317
    %5252 = vmatpush.msra.mxu0 %v2316
    %5253 = vmatpush.msra.mxu0 %v2315
    %5254 = vmatpush.msra.mxu0 %v2314
    %5255 = vmatpush.msra.mxu0 %v2313
    %5256 = vmatpush.msra.mxu0 %v2312
    %5257 = vmatpush.msra.mxu0 %v2311
    %5258 = vmatpush.msra.mxu0 %v2310
    %5259 = vmatpush.msra.mxu0 %v2309
    %5260 = vmatpush.msra.mxu0 %v2308
    %5261 = vmatpush.msra.mxu0 %v2307
    %5262 = vmatpush.msra.mxu0 %v2306
    %5263 = vmatmul.f32.gmra.mxu0 %v3649
    %v5264 = vpop.f32.mrf.mxu0
    %v5265 = vadd.f32 %v5245, %v5264
    %5266 = vdwg.mxu0
    %5267 = vmatpush.msra.mxu0 %v2337
    %5268 = vmatpush.msra.mxu0 %v2336
    %5269 = vmatpush.msra.mxu0 %v2335
    %5270 = vmatpush.msra.mxu0 %v2334
    %5271 = vmatpush.msra.mxu0 %v2333
    %5272 = vmatpush.msra.mxu0 %v2332
    %5273 = vmatpush.msra.mxu0 %v2331
    %5274 = vmatpush.msra.mxu0 %v2330
    %5275 = vmatpush.msra.mxu0 %v2329
    %5276 = vmatpush.msra.mxu0 %v2328
    %5277 = vmatpush.msra.mxu0 %v2327
    %5278 = vmatpush.msra.mxu0 %v2326
    %5279 = vmatpush.msra.mxu0 %v2325
    %5280 = vmatpush.msra.mxu0 %v2324
    %5281 = vmatpush.msra.mxu0 %v2323
    %5282 = vmatpush.msra.mxu0 %v2322
    %5283 = vmatmul.f32.gmra.mxu0 %v3650
    %v5284 = vpop.f32.mrf.mxu0
    %v5285 = vadd.f32 %v5265, %v5284
    %5286 = vdwg.mxu0
    %5287 = vmatpush.msra.mxu0 %v2353
    %5288 = vmatpush.msra.mxu0 %v2352
    %5289 = vmatpush.msra.mxu0 %v2351
    %5290 = vmatpush.msra.mxu0 %v2350
    %5291 = vmatpush.msra.mxu0 %v2349
    %5292 = vmatpush.msra.mxu0 %v2348
    %5293 = vmatpush.msra.mxu0 %v2347
    %5294 = vmatpush.msra.mxu0 %v2346
    %5295 = vmatpush.msra.mxu0 %v2345
    %5296 = vmatpush.msra.mxu0 %v2344
    %5297 = vmatpush.msra.mxu0 %v2343
    %5298 = vmatpush.msra.mxu0 %v2342
    %5299 = vmatpush.msra.mxu0 %v2341
    %5300 = vmatpush.msra.mxu0 %v2340
    %5301 = vmatpush.msra.mxu0 %v2339
    %5302 = vmatpush.msra.mxu0 %v2338
    %5303 = vmatmul.f32.gmra.mxu0 %v3651
    %v5304 = vpop.f32.mrf.mxu0
    %v5305 = vadd.f32 %v5285, %v5304
    %5306 = vdwg.mxu0
    %5307 = vmatpush.msra.mxu0 %v2369
    %5308 = vmatpush.msra.mxu0 %v2368
    %5309 = vmatpush.msra.mxu0 %v2367
    %5310 = vmatpush.msra.mxu0 %v2366
    %5311 = vmatpush.msra.mxu0 %v2365
    %5312 = vmatpush.msra.mxu0 %v2364
    %5313 = vmatpush.msra.mxu0 %v2363
    %5314 = vmatpush.msra.mxu0 %v2362
    %5315 = vmatpush.msra.mxu0 %v2361
    %5316 = vmatpush.msra.mxu0 %v2360
    %5317 = vmatpush.msra.mxu0 %v2359
    %5318 = vmatpush.msra.mxu0 %v2358
    %5319 = vmatpush.msra.mxu0 %v2357
    %5320 = vmatpush.msra.mxu0 %v2356
    %5321 = vmatpush.msra.mxu0 %v2355
    %5322 = vmatpush.msra.mxu0 %v2354
    %5323 = vmatmul.f32.gmra.mxu0 %v3652
    %v5324 = vpop.f32.mrf.mxu0
    %v5325 = vadd.f32 %v5305, %v5324
    %5326 = vdwg.mxu0
    %5327 = vmatpush.msra.mxu0 %v2385
    %5328 = vmatpush.msra.mxu0 %v2384
    %5329 = vmatpush.msra.mxu0 %v2383
    %5330 = vmatpush.msra.mxu0 %v2382
    %5331 = vmatpush.msra.mxu0 %v2381
    %5332 = vmatpush.msra.mxu0 %v2380
    %5333 = vmatpush.msra.mxu0 %v2379
    %5334 = vmatpush.msra.mxu0 %v2378
    %5335 = vmatpush.msra.mxu0 %v2377
    %5336 = vmatpush.msra.mxu0 %v2376
    %5337 = vmatpush.msra.mxu0 %v2375
    %5338 = vmatpush.msra.mxu0 %v2374
    %5339 = vmatpush.msra.mxu0 %v2373
    %5340 = vmatpush.msra.mxu0 %v2372
    %5341 = vmatpush.msra.mxu0 %v2371
    %5342 = vmatpush.msra.mxu0 %v2370
    %5343 = vmatmul.f32.gmra.mxu0 %v3655
    %v5344 = vpop.f32.mrf.mxu0
    %v5345 = vadd.f32 %v5325, %v5344
    %5346 = vdwg.mxu0
    %5347 = vmatpush.msra.mxu0 %v2401
    %5348 = vmatpush.msra.mxu0 %v2400
    %5349 = vmatpush.msra.mxu0 %v2399
    %5350 = vmatpush.msra.mxu0 %v2398
    %5351 = vmatpush.msra.mxu0 %v2397
    %5352 = vmatpush.msra.mxu0 %v2396
    %5353 = vmatpush.msra.mxu0 %v2395
    %5354 = vmatpush.msra.mxu0 %v2394
    %5355 = vmatpush.msra.mxu0 %v2393
    %5356 = vmatpush.msra.mxu0 %v2392
    %5357 = vmatpush.msra.mxu0 %v2391
    %5358 = vmatpush.msra.mxu0 %v2390
    %5359 = vmatpush.msra.mxu0 %v2389
    %5360 = vmatpush.msra.mxu0 %v2388
    %5361 = vmatpush.msra.mxu0 %v2387
    %5362 = vmatpush.msra.mxu0 %v2386
    %5363 = vmatmul.f32.gmra.mxu0 %v3656
    %v5364 = vpop.f32.mrf.mxu0
    %v5365 = vadd.f32 %v5345, %v5364
    %5366 = vdwg.mxu0
    %5367 = vmatpush.msra.mxu0 %v2417
    %5368 = vmatpush.msra.mxu0 %v2416
    %5369 = vmatpush.msra.mxu0 %v2415
    %5370 = vmatpush.msra.mxu0 %v2414
    %5371 = vmatpush.msra.mxu0 %v2413
    %5372 = vmatpush.msra.mxu0 %v2412
    %5373 = vmatpush.msra.mxu0 %v2411
    %5374 = vmatpush.msra.mxu0 %v2410
    %5375 = vmatpush.msra.mxu0 %v2409
    %5376 = vmatpush.msra.mxu0 %v2408
    %5377 = vmatpush.msra.mxu0 %v2407
    %5378 = vmatpush.msra.mxu0 %v2406
    %5379 = vmatpush.msra.mxu0 %v2405
    %5380 = vmatpush.msra.mxu0 %v2404
    %5381 = vmatpush.msra.mxu0 %v2403
    %5382 = vmatpush.msra.mxu0 %v2402
    %5383 = vmatmul.f32.gmra.mxu0 %v3657
    %v5384 = vpop.f32.mrf.mxu0
    %v5385 = vadd.f32 %v5365, %v5384
    %5386 = vdwg.mxu0
    %5387 = vmatpush.msra.mxu0 %v2433
    %5388 = vmatpush.msra.mxu0 %v2432
    %5389 = vmatpush.msra.mxu0 %v2431
    %5390 = vmatpush.msra.mxu0 %v2430
    %5391 = vmatpush.msra.mxu0 %v2429
    %5392 = vmatpush.msra.mxu0 %v2428
    %5393 = vmatpush.msra.mxu0 %v2427
    %5394 = vmatpush.msra.mxu0 %v2426
    %5395 = vmatpush.msra.mxu0 %v2425
    %5396 = vmatpush.msra.mxu0 %v2424
    %5397 = vmatpush.msra.mxu0 %v2423
    %5398 = vmatpush.msra.mxu0 %v2422
    %5399 = vmatpush.msra.mxu0 %v2421
    %5400 = vmatpush.msra.mxu0 %v2420
    %5401 = vmatpush.msra.mxu0 %v2419
    %5402 = vmatpush.msra.mxu0 %v2418
    %5403 = vmatmul.f32.gmra.mxu0 %v3658
    %v5404 = vpop.f32.mrf.mxu0
    %v5405 = vadd.f32 %v5385, %v5404
    %5406 = vdwg.mxu0
    %5407 = vmatpush.msra.mxu0 %v2449
    %5408 = vmatpush.msra.mxu0 %v2448
    %5409 = vmatpush.msra.mxu0 %v2447
    %5410 = vmatpush.msra.mxu0 %v2446
    %5411 = vmatpush.msra.mxu0 %v2445
    %5412 = vmatpush.msra.mxu0 %v2444
    %5413 = vmatpush.msra.mxu0 %v2443
    %5414 = vmatpush.msra.mxu0 %v2442
    %5415 = vmatpush.msra.mxu0 %v2441
    %5416 = vmatpush.msra.mxu0 %v2440
    %5417 = vmatpush.msra.mxu0 %v2439
    %5418 = vmatpush.msra.mxu0 %v2438
    %5419 = vmatpush.msra.mxu0 %v2437
    %5420 = vmatpush.msra.mxu0 %v2436
    %5421 = vmatpush.msra.mxu0 %v2435
    %5422 = vmatpush.msra.mxu0 %v2434
    %5423 = vmatmul.f32.gmra.mxu0 %v3659
    %v5424 = vpop.f32.mrf.mxu0
    %v5425 = vadd.f32 %v5405, %v5424
    %5426 = vdwg.mxu0
    %5427 = vmatpush.msra.mxu0 %v2465
    %5428 = vmatpush.msra.mxu0 %v2464
    %5429 = vmatpush.msra.mxu0 %v2463
    %5430 = vmatpush.msra.mxu0 %v2462
    %5431 = vmatpush.msra.mxu0 %v2461
    %5432 = vmatpush.msra.mxu0 %v2460
    %5433 = vmatpush.msra.mxu0 %v2459
    %5434 = vmatpush.msra.mxu0 %v2458
    %5435 = vmatpush.msra.mxu0 %v2457
    %5436 = vmatpush.msra.mxu0 %v2456
    %5437 = vmatpush.msra.mxu0 %v2455
    %5438 = vmatpush.msra.mxu0 %v2454
    %5439 = vmatpush.msra.mxu0 %v2453
    %5440 = vmatpush.msra.mxu0 %v2452
    %5441 = vmatpush.msra.mxu0 %v2451
    %5442 = vmatpush.msra.mxu0 %v2450
    %5443 = vmatmul.f32.gmra.mxu0 %v3660
    %v5444 = vpop.f32.mrf.mxu0
    %v5445 = vadd.f32 %v5425, %v5444
    %5446 = vdwg.mxu0
    %5447 = vmatpush.msra.mxu0 %v2481
    %5448 = vmatpush.msra.mxu0 %v2480
    %5449 = vmatpush.msra.mxu0 %v2479
    %5450 = vmatpush.msra.mxu0 %v2478
    %5451 = vmatpush.msra.mxu0 %v2477
    %5452 = vmatpush.msra.mxu0 %v2476
    %5453 = vmatpush.msra.mxu0 %v2475
    %5454 = vmatpush.msra.mxu0 %v2474
    %5455 = vmatpush.msra.mxu0 %v2473
    %5456 = vmatpush.msra.mxu0 %v2472
    %5457 = vmatpush.msra.mxu0 %v2471
    %5458 = vmatpush.msra.mxu0 %v2470
    %5459 = vmatpush.msra.mxu0 %v2469
    %5460 = vmatpush.msra.mxu0 %v2468
    %5461 = vmatpush.msra.mxu0 %v2467
    %5462 = vmatpush.msra.mxu0 %v2466
    %5463 = vmatmul.f32.gmra.mxu0 %v3661
    %v5464 = vpop.f32.mrf.mxu0
    %v5465 = vadd.f32 %v5445, %v5464
    %5466 = vdwg.mxu0
    %5467 = vmatpush.msra.mxu0 %v2497
    %5468 = vmatpush.msra.mxu0 %v2496
    %5469 = vmatpush.msra.mxu0 %v2495
    %5470 = vmatpush.msra.mxu0 %v2494
    %5471 = vmatpush.msra.mxu0 %v2493
    %5472 = vmatpush.msra.mxu0 %v2492
    %5473 = vmatpush.msra.mxu0 %v2491
    %5474 = vmatpush.msra.mxu0 %v2490
    %5475 = vmatpush.msra.mxu0 %v2489
    %5476 = vmatpush.msra.mxu0 %v2488
    %5477 = vmatpush.msra.mxu0 %v2487
    %5478 = vmatpush.msra.mxu0 %v2486
    %5479 = vmatpush.msra.mxu0 %v2485
    %5480 = vmatpush.msra.mxu0 %v2484
    %5481 = vmatpush.msra.mxu0 %v2483
    %5482 = vmatpush.msra.mxu0 %v2482
    %5483 = vmatmul.f32.gmra.mxu0 %v3662
    %v5484 = vpop.f32.mrf.mxu0
    %v5485 = vadd.f32 %v5465, %v5484
    %5486 = vdwg.mxu0
    %5487 = vmatpush.msra.mxu0 %v2513
    %5488 = vmatpush.msra.mxu0 %v2512
    %5489 = vmatpush.msra.mxu0 %v2511
    %5490 = vmatpush.msra.mxu0 %v2510
    %5491 = vmatpush.msra.mxu0 %v2509
    %5492 = vmatpush.msra.mxu0 %v2508
    %5493 = vmatpush.msra.mxu0 %v2507
    %5494 = vmatpush.msra.mxu0 %v2506
    %5495 = vmatpush.msra.mxu0 %v2505
    %5496 = vmatpush.msra.mxu0 %v2504
    %5497 = vmatpush.msra.mxu0 %v2503
    %5498 = vmatpush.msra.mxu0 %v2502
    %5499 = vmatpush.msra.mxu0 %v2501
    %5500 = vmatpush.msra.mxu0 %v2500
    %5501 = vmatpush.msra.mxu0 %v2499
    %5502 = vmatpush.msra.mxu0 %v2498
    %5503 = vmatmul.f32.gmra.mxu0 %v3665
    %v5504 = vpop.f32.mrf.mxu0
    %v5505 = vadd.f32 %v5485, %v5504
    %5506 = vdwg.mxu0
    %5507 = vmatpush.msra.mxu0 %v2529
    %5508 = vmatpush.msra.mxu0 %v2528
    %5509 = vmatpush.msra.mxu0 %v2527
    %5510 = vmatpush.msra.mxu0 %v2526
    %5511 = vmatpush.msra.mxu0 %v2525
    %5512 = vmatpush.msra.mxu0 %v2524
    %5513 = vmatpush.msra.mxu0 %v2523
    %5514 = vmatpush.msra.mxu0 %v2522
    %5515 = vmatpush.msra.mxu0 %v2521
    %5516 = vmatpush.msra.mxu0 %v2520
    %5517 = vmatpush.msra.mxu0 %v2519
    %5518 = vmatpush.msra.mxu0 %v2518
    %5519 = vmatpush.msra.mxu0 %v2517
    %5520 = vmatpush.msra.mxu0 %v2516
    %5521 = vmatpush.msra.mxu0 %v2515
    %5522 = vmatpush.msra.mxu0 %v2514
    %5523 = vmatmul.f32.gmra.mxu0 %v3666
    %v5524 = vpop.f32.mrf.mxu0
    %v5525 = vadd.f32 %v5505, %v5524
    %5526 = vdwg.mxu0
    %5527 = vmatpush.msra.mxu0 %v2545
    %5528 = vmatpush.msra.mxu0 %v2544
    %5529 = vmatpush.msra.mxu0 %v2543
    %5530 = vmatpush.msra.mxu0 %v2542
    %5531 = vmatpush.msra.mxu0 %v2541
    %5532 = vmatpush.msra.mxu0 %v2540
    %5533 = vmatpush.msra.mxu0 %v2539
    %5534 = vmatpush.msra.mxu0 %v2538
    %5535 = vmatpush.msra.mxu0 %v2537
    %5536 = vmatpush.msra.mxu0 %v2536
    %5537 = vmatpush.msra.mxu0 %v2535
    %5538 = vmatpush.msra.mxu0 %v2534
    %5539 = vmatpush.msra.mxu0 %v2533
    %5540 = vmatpush.msra.mxu0 %v2532
    %5541 = vmatpush.msra.mxu0 %v2531
    %5542 = vmatpush.msra.mxu0 %v2530
    %5543 = vmatmul.f32.gmra.mxu0 %v3667
    %v5544 = vpop.f32.mrf.mxu0
    %v5545 = vadd.f32 %v5525, %v5544
    %5546 = vdwg.mxu0
    %5547 = vmatpush.msra.mxu0 %v2561
    %5548 = vmatpush.msra.mxu0 %v2560
    %5549 = vmatpush.msra.mxu0 %v2559
    %5550 = vmatpush.msra.mxu0 %v2558
    %5551 = vmatpush.msra.mxu0 %v2557
    %5552 = vmatpush.msra.mxu0 %v2556
    %5553 = vmatpush.msra.mxu0 %v2555
    %5554 = vmatpush.msra.mxu0 %v2554
    %5555 = vmatpush.msra.mxu0 %v2553
    %5556 = vmatpush.msra.mxu0 %v2552
    %5557 = vmatpush.msra.mxu0 %v2551
    %5558 = vmatpush.msra.mxu0 %v2550
    %5559 = vmatpush.msra.mxu0 %v2549
    %5560 = vmatpush.msra.mxu0 %v2548
    %5561 = vmatpush.msra.mxu0 %v2547
    %5562 = vmatpush.msra.mxu0 %v2546
    %5563 = vmatmul.f32.gmra.mxu0 %v3668
    %v5564 = vpop.f32.mrf.mxu0
    %v5565 = vadd.f32 %v5545, %v5564
    %5566 = vdwg.mxu0
    %5567 = vmatpush.msra.mxu0 %v2577
    %5568 = vmatpush.msra.mxu0 %v2576
    %5569 = vmatpush.msra.mxu0 %v2575
    %5570 = vmatpush.msra.mxu0 %v2574
    %5571 = vmatpush.msra.mxu0 %v2573
    %5572 = vmatpush.msra.mxu0 %v2572
    %5573 = vmatpush.msra.mxu0 %v2571
    %5574 = vmatpush.msra.mxu0 %v2570
    %5575 = vmatpush.msra.mxu0 %v2569
    %5576 = vmatpush.msra.mxu0 %v2568
    %5577 = vmatpush.msra.mxu0 %v2567
    %5578 = vmatpush.msra.mxu0 %v2566
    %5579 = vmatpush.msra.mxu0 %v2565
    %5580 = vmatpush.msra.mxu0 %v2564
    %5581 = vmatpush.msra.mxu0 %v2563
    %5582 = vmatpush.msra.mxu0 %v2562
    %5583 = vmatmul.f32.gmra.mxu0 %v3669
    %v5584 = vpop.f32.mrf.mxu0
    %v5585 = vadd.f32 %v5565, %v5584
    %5586 = vdwg.mxu0
    %5587 = vmatpush.msra.mxu0 %v2593
    %5588 = vmatpush.msra.mxu0 %v2592
    %5589 = vmatpush.msra.mxu0 %v2591
    %5590 = vmatpush.msra.mxu0 %v2590
    %5591 = vmatpush.msra.mxu0 %v2589
    %5592 = vmatpush.msra.mxu0 %v2588
    %5593 = vmatpush.msra.mxu0 %v2587
    %5594 = vmatpush.msra.mxu0 %v2586
    %5595 = vmatpush.msra.mxu0 %v2585
    %5596 = vmatpush.msra.mxu0 %v2584
    %5597 = vmatpush.msra.mxu0 %v2583
    %5598 = vmatpush.msra.mxu0 %v2582
    %5599 = vmatpush.msra.mxu0 %v2581
    %5600 = vmatpush.msra.mxu0 %v2580
    %5601 = vmatpush.msra.mxu0 %v2579
    %5602 = vmatpush.msra.mxu0 %v2578
    %5603 = vmatmul.f32.gmra.mxu0 %v3670
    %v5604 = vpop.f32.mrf.mxu0
    %v5605 = vadd.f32 %v5585, %v5604
    %5606 = vdwg.mxu0
    %5607 = vmatpush.msra.mxu0 %v2609
    %5608 = vmatpush.msra.mxu0 %v2608
    %5609 = vmatpush.msra.mxu0 %v2607
    %5610 = vmatpush.msra.mxu0 %v2606
    %5611 = vmatpush.msra.mxu0 %v2605
    %5612 = vmatpush.msra.mxu0 %v2604
    %5613 = vmatpush.msra.mxu0 %v2603
    %5614 = vmatpush.msra.mxu0 %v2602
    %5615 = vmatpush.msra.mxu0 %v2601
    %5616 = vmatpush.msra.mxu0 %v2600
    %5617 = vmatpush.msra.mxu0 %v2599
    %5618 = vmatpush.msra.mxu0 %v2598
    %5619 = vmatpush.msra.mxu0 %v2597
    %5620 = vmatpush.msra.mxu0 %v2596
    %5621 = vmatpush.msra.mxu0 %v2595
    %5622 = vmatpush.msra.mxu0 %v2594
    %5623 = vmatmul.f32.gmra.mxu0 %v3671
    %v5624 = vpop.f32.mrf.mxu0
    %v5625 = vadd.f32 %v5605, %v5624
    %5626 = vdwg.mxu0
    %5627 = vmatpush.msra.mxu0 %v2625
    %5628 = vmatpush.msra.mxu0 %v2624
    %5629 = vmatpush.msra.mxu0 %v2623
    %5630 = vmatpush.msra.mxu0 %v2622
    %5631 = vmatpush.msra.mxu0 %v2621
    %5632 = vmatpush.msra.mxu0 %v2620
    %5633 = vmatpush.msra.mxu0 %v2619
    %5634 = vmatpush.msra.mxu0 %v2618
    %5635 = vmatpush.msra.mxu0 %v2617
    %5636 = vmatpush.msra.mxu0 %v2616
    %5637 = vmatpush.msra.mxu0 %v2615
    %5638 = vmatpush.msra.mxu0 %v2614
    %5639 = vmatpush.msra.mxu0 %v2613
    %5640 = vmatpush.msra.mxu0 %v2612
    %5641 = vmatpush.msra.mxu0 %v2611
    %5642 = vmatpush.msra.mxu0 %v2610
    %5643 = vmatmul.f32.gmra.mxu0 %v3672
    %v5644 = vpop.f32.mrf.mxu0
    %v5645 = vadd.f32 %v5625, %v5644
    %5646 = vdwg.mxu0
    %5647 = vmatpush.msra.mxu0 %v2641
    %5648 = vmatpush.msra.mxu0 %v2640
    %5649 = vmatpush.msra.mxu0 %v2639
    %5650 = vmatpush.msra.mxu0 %v2638
    %5651 = vmatpush.msra.mxu0 %v2637
    %5652 = vmatpush.msra.mxu0 %v2636
    %5653 = vmatpush.msra.mxu0 %v2635
    %5654 = vmatpush.msra.mxu0 %v2634
    %5655 = vmatpush.msra.mxu0 %v2633
    %5656 = vmatpush.msra.mxu0 %v2632
    %5657 = vmatpush.msra.mxu0 %v2631
    %5658 = vmatpush.msra.mxu0 %v2630
    %5659 = vmatpush.msra.mxu0 %v2629
    %5660 = vmatpush.msra.mxu0 %v2628
    %5661 = vmatpush.msra.mxu0 %v2627
    %5662 = vmatpush.msra.mxu0 %v2626
    %5663 = vmatmul.f32.gmra.mxu0 %v3675
    %v5664 = vpop.f32.mrf.mxu0
    %v5665 = vadd.f32 %v5645, %v5664
    %5666 = vdwg.mxu0
    %5667 = vmatpush.msra.mxu0 %v2657
    %5668 = vmatpush.msra.mxu0 %v2656
    %5669 = vmatpush.msra.mxu0 %v2655
    %5670 = vmatpush.msra.mxu0 %v2654
    %5671 = vmatpush.msra.mxu0 %v2653
    %5672 = vmatpush.msra.mxu0 %v2652
    %5673 = vmatpush.msra.mxu0 %v2651
    %5674 = vmatpush.msra.mxu0 %v2650
    %5675 = vmatpush.msra.mxu0 %v2649
    %5676 = vmatpush.msra.mxu0 %v2648
    %5677 = vmatpush.msra.mxu0 %v2647
    %5678 = vmatpush.msra.mxu0 %v2646
    %5679 = vmatpush.msra.mxu0 %v2645
    %5680 = vmatpush.msra.mxu0 %v2644
    %5681 = vmatpush.msra.mxu0 %v2643
    %5682 = vmatpush.msra.mxu0 %v2642
    %5683 = vmatmul.f32.gmra.mxu0 %v3676
    %v5684 = vpop.f32.mrf.mxu0
    %v5685 = vadd.f32 %v5665, %v5684
    %5686 = vdwg.mxu0
    %5687 = vmatpush.msra.mxu0 %v2673
    %5688 = vmatpush.msra.mxu0 %v2672
    %5689 = vmatpush.msra.mxu0 %v2671
    %5690 = vmatpush.msra.mxu0 %v2670
    %5691 = vmatpush.msra.mxu0 %v2669
    %5692 = vmatpush.msra.mxu0 %v2668
    %5693 = vmatpush.msra.mxu0 %v2667
    %5694 = vmatpush.msra.mxu0 %v2666
    %5695 = vmatpush.msra.mxu0 %v2665
    %5696 = vmatpush.msra.mxu0 %v2664
    %5697 = vmatpush.msra.mxu0 %v2663
    %5698 = vmatpush.msra.mxu0 %v2662
    %5699 = vmatpush.msra.mxu0 %v2661
    %5700 = vmatpush.msra.mxu0 %v2660
    %5701 = vmatpush.msra.mxu0 %v2659
    %5702 = vmatpush.msra.mxu0 %v2658
    %5703 = vmatmul.f32.gmra.mxu0 %v3677
    %v5704 = vpop.f32.mrf.mxu0
    %v5705 = vadd.f32 %v5685, %v5704
    %5706 = vdwg.mxu0
    %5707 = vmatpush.msra.mxu0 %v2689
    %5708 = vmatpush.msra.mxu0 %v2688
    %5709 = vmatpush.msra.mxu0 %v2687
    %5710 = vmatpush.msra.mxu0 %v2686
    %5711 = vmatpush.msra.mxu0 %v2685
    %5712 = vmatpush.msra.mxu0 %v2684
    %5713 = vmatpush.msra.mxu0 %v2683
    %5714 = vmatpush.msra.mxu0 %v2682
    %5715 = vmatpush.msra.mxu0 %v2681
    %5716 = vmatpush.msra.mxu0 %v2680
    %5717 = vmatpush.msra.mxu0 %v2679
    %5718 = vmatpush.msra.mxu0 %v2678
    %5719 = vmatpush.msra.mxu0 %v2677
    %5720 = vmatpush.msra.mxu0 %v2676
    %5721 = vmatpush.msra.mxu0 %v2675
    %5722 = vmatpush.msra.mxu0 %v2674
    %5723 = vmatmul.f32.gmra.mxu0 %v3678
    %v5724 = vpop.f32.mrf.mxu0
    %v5725 = vadd.f32 %v5705, %v5724
    %5726 = vdwg.mxu0
    %5727 = vmatpush.msra.mxu0 %v2705
    %5728 = vmatpush.msra.mxu0 %v2704
    %5729 = vmatpush.msra.mxu0 %v2703
    %5730 = vmatpush.msra.mxu0 %v2702
    %5731 = vmatpush.msra.mxu0 %v2701
    %5732 = vmatpush.msra.mxu0 %v2700
    %5733 = vmatpush.msra.mxu0 %v2699
    %5734 = vmatpush.msra.mxu0 %v2698
    %5735 = vmatpush.msra.mxu0 %v2697
    %5736 = vmatpush.msra.mxu0 %v2696
    %5737 = vmatpush.msra.mxu0 %v2695
    %5738 = vmatpush.msra.mxu0 %v2694
    %5739 = vmatpush.msra.mxu0 %v2693
    %5740 = vmatpush.msra.mxu0 %v2692
    %5741 = vmatpush.msra.mxu0 %v2691
    %5742 = vmatpush.msra.mxu0 %v2690
    %5743 = vmatmul.f32.gmra.mxu0 %v3679
    %v5744 = vpop.f32.mrf.mxu0
    %v5745 = vadd.f32 %v5725, %v5744
    %5746 = vdwg.mxu0
    %5747 = vmatpush.msra.mxu0 %v2721
    %5748 = vmatpush.msra.mxu0 %v2720
    %5749 = vmatpush.msra.mxu0 %v2719
    %5750 = vmatpush.msra.mxu0 %v2718
    %5751 = vmatpush.msra.mxu0 %v2717
    %5752 = vmatpush.msra.mxu0 %v2716
    %5753 = vmatpush.msra.mxu0 %v2715
    %5754 = vmatpush.msra.mxu0 %v2714
    %5755 = vmatpush.msra.mxu0 %v2713
    %5756 = vmatpush.msra.mxu0 %v2712
    %5757 = vmatpush.msra.mxu0 %v2711
    %5758 = vmatpush.msra.mxu0 %v2710
    %5759 = vmatpush.msra.mxu0 %v2709
    %5760 = vmatpush.msra.mxu0 %v2708
    %5761 = vmatpush.msra.mxu0 %v2707
    %5762 = vmatpush.msra.mxu0 %v2706
    %5763 = vmatmul.f32.gmra.mxu0 %v3680
    %v5764 = vpop.f32.mrf.mxu0
    %v5765 = vadd.f32 %v5745, %v5764
    %5766 = vdwg.mxu0
    %5767 = vmatpush.msra.mxu0 %v2737
    %5768 = vmatpush.msra.mxu0 %v2736
    %5769 = vmatpush.msra.mxu0 %v2735
    %5770 = vmatpush.msra.mxu0 %v2734
    %5771 = vmatpush.msra.mxu0 %v2733
    %5772 = vmatpush.msra.mxu0 %v2732
    %5773 = vmatpush.msra.mxu0 %v2731
    %5774 = vmatpush.msra.mxu0 %v2730
    %5775 = vmatpush.msra.mxu0 %v2729
    %5776 = vmatpush.msra.mxu0 %v2728
    %5777 = vmatpush.msra.mxu0 %v2727
    %5778 = vmatpush.msra.mxu0 %v2726
    %5779 = vmatpush.msra.mxu0 %v2725
    %5780 = vmatpush.msra.mxu0 %v2724
    %5781 = vmatpush.msra.mxu0 %v2723
    %5782 = vmatpush.msra.mxu0 %v2722
    %5783 = vmatmul.f32.gmra.mxu0 %v3681
    %v5784 = vpop.f32.mrf.mxu0
    %v5785 = vadd.f32 %v5765, %v5784
    %5786 = vdwg.mxu0
    %5787 = vmatpush.msra.mxu0 %v2753
    %5788 = vmatpush.msra.mxu0 %v2752
    %5789 = vmatpush.msra.mxu0 %v2751
    %5790 = vmatpush.msra.mxu0 %v2750
    %5791 = vmatpush.msra.mxu0 %v2749
    %5792 = vmatpush.msra.mxu0 %v2748
    %5793 = vmatpush.msra.mxu0 %v2747
    %5794 = vmatpush.msra.mxu0 %v2746
    %5795 = vmatpush.msra.mxu0 %v2745
    %5796 = vmatpush.msra.mxu0 %v2744
    %5797 = vmatpush.msra.mxu0 %v2743
    %5798 = vmatpush.msra.mxu0 %v2742
    %5799 = vmatpush.msra.mxu0 %v2741
    %5800 = vmatpush.msra.mxu0 %v2740
    %5801 = vmatpush.msra.mxu0 %v2739
    %5802 = vmatpush.msra.mxu0 %v2738
    %5803 = vmatmul.f32.gmra.mxu0 %v3682
    %v5804 = vpop.f32.mrf.mxu0
    %v5805 = vadd.f32 %v5785, %v5804
    %5806 = vdwg.mxu0
    %5807 = vmatpush.msra.mxu0 %v2769
    %5808 = vmatpush.msra.mxu0 %v2768
    %5809 = vmatpush.msra.mxu0 %v2767
    %5810 = vmatpush.msra.mxu0 %v2766
    %5811 = vmatpush.msra.mxu0 %v2765
    %5812 = vmatpush.msra.mxu0 %v2764
    %5813 = vmatpush.msra.mxu0 %v2763
    %5814 = vmatpush.msra.mxu0 %v2762
    %5815 = vmatpush.msra.mxu0 %v2761
    %5816 = vmatpush.msra.mxu0 %v2760
    %5817 = vmatpush.msra.mxu0 %v2759
    %5818 = vmatpush.msra.mxu0 %v2758
    %5819 = vmatpush.msra.mxu0 %v2757
    %5820 = vmatpush.msra.mxu0 %v2756
    %5821 = vmatpush.msra.mxu0 %v2755
    %5822 = vmatpush.msra.mxu0 %v2754
    %5823 = vmatmul.f32.gmra.mxu0 %v3685
    %v5824 = vpop.f32.mrf.mxu0
    %v5825 = vadd.f32 %v5805, %v5824
    %5826 = vdwg.mxu0
    %5827 = vmatpush.msra.mxu0 %v2785
    %5828 = vmatpush.msra.mxu0 %v2784
    %5829 = vmatpush.msra.mxu0 %v2783
    %5830 = vmatpush.msra.mxu0 %v2782
    %5831 = vmatpush.msra.mxu0 %v2781
    %5832 = vmatpush.msra.mxu0 %v2780
    %5833 = vmatpush.msra.mxu0 %v2779
    %5834 = vmatpush.msra.mxu0 %v2778
    %5835 = vmatpush.msra.mxu0 %v2777
    %5836 = vmatpush.msra.mxu0 %v2776
    %5837 = vmatpush.msra.mxu0 %v2775
    %5838 = vmatpush.msra.mxu0 %v2774
    %5839 = vmatpush.msra.mxu0 %v2773
    %5840 = vmatpush.msra.mxu0 %v2772
    %5841 = vmatpush.msra.mxu0 %v2771
    %5842 = vmatpush.msra.mxu0 %v2770
    %5843 = vmatmul.f32.gmra.mxu0 %v3686
    %v5844 = vpop.f32.mrf.mxu0
    %v5845 = vadd.f32 %v5825, %v5844
    %5846 = vdwg.mxu0
    %5847 = vmatpush.msra.mxu0 %v2801
    %5848 = vmatpush.msra.mxu0 %v2800
    %5849 = vmatpush.msra.mxu0 %v2799
    %5850 = vmatpush.msra.mxu0 %v2798
    %5851 = vmatpush.msra.mxu0 %v2797
    %5852 = vmatpush.msra.mxu0 %v2796
    %5853 = vmatpush.msra.mxu0 %v2795
    %5854 = vmatpush.msra.mxu0 %v2794
    %5855 = vmatpush.msra.mxu0 %v2793
    %5856 = vmatpush.msra.mxu0 %v2792
    %5857 = vmatpush.msra.mxu0 %v2791
    %5858 = vmatpush.msra.mxu0 %v2790
    %5859 = vmatpush.msra.mxu0 %v2789
    %5860 = vmatpush.msra.mxu0 %v2788
    %5861 = vmatpush.msra.mxu0 %v2787
    %5862 = vmatpush.msra.mxu0 %v2786
    %5863 = vmatmul.f32.gmra.mxu0 %v3687
    %v5864 = vpop.f32.mrf.mxu0
    %v5865 = vadd.f32 %v5845, %v5864
    %5866 = vdwg.mxu0
    %5867 = vmatpush.msra.mxu0 %v2817
    %5868 = vmatpush.msra.mxu0 %v2816
    %5869 = vmatpush.msra.mxu0 %v2815
    %5870 = vmatpush.msra.mxu0 %v2814
    %5871 = vmatpush.msra.mxu0 %v2813
    %5872 = vmatpush.msra.mxu0 %v2812
    %5873 = vmatpush.msra.mxu0 %v2811
    %5874 = vmatpush.msra.mxu0 %v2810
    %5875 = vmatpush.msra.mxu0 %v2809
    %5876 = vmatpush.msra.mxu0 %v2808
    %5877 = vmatpush.msra.mxu0 %v2807
    %5878 = vmatpush.msra.mxu0 %v2806
    %5879 = vmatpush.msra.mxu0 %v2805
    %5880 = vmatpush.msra.mxu0 %v2804
    %5881 = vmatpush.msra.mxu0 %v2803
    %5882 = vmatpush.msra.mxu0 %v2802
    %5883 = vmatmul.f32.gmra.mxu0 %v3688
    %v5884 = vpop.f32.mrf.mxu0
    %v5885 = vadd.f32 %v5865, %v5884
    %5886 = vdwg.mxu0
    %5887 = vmatpush.msra.mxu0 %v2833
    %5888 = vmatpush.msra.mxu0 %v2832
    %5889 = vmatpush.msra.mxu0 %v2831
    %5890 = vmatpush.msra.mxu0 %v2830
    %5891 = vmatpush.msra.mxu0 %v2829
    %5892 = vmatpush.msra.mxu0 %v2828
    %5893 = vmatpush.msra.mxu0 %v2827
    %5894 = vmatpush.msra.mxu0 %v2826
    %5895 = vmatpush.msra.mxu0 %v2825
    %5896 = vmatpush.msra.mxu0 %v2824
    %5897 = vmatpush.msra.mxu0 %v2823
    %5898 = vmatpush.msra.mxu0 %v2822
    %5899 = vmatpush.msra.mxu0 %v2821
    %5900 = vmatpush.msra.mxu0 %v2820
    %5901 = vmatpush.msra.mxu0 %v2819
    %5902 = vmatpush.msra.mxu0 %v2818
    %5903 = vmatmul.f32.gmra.mxu0 %v3689
    %v5904 = vpop.f32.mrf.mxu0
    %v5905 = vadd.f32 %v5885, %v5904
    %5906 = vdwg.mxu0
    %5907 = vmatpush.msra.mxu0 %v2849
    %5908 = vmatpush.msra.mxu0 %v2848
    %5909 = vmatpush.msra.mxu0 %v2847
    %5910 = vmatpush.msra.mxu0 %v2846
    %5911 = vmatpush.msra.mxu0 %v2845
    %5912 = vmatpush.msra.mxu0 %v2844
    %5913 = vmatpush.msra.mxu0 %v2843
    %5914 = vmatpush.msra.mxu0 %v2842
    %5915 = vmatpush.msra.mxu0 %v2841
    %5916 = vmatpush.msra.mxu0 %v2840
    %5917 = vmatpush.msra.mxu0 %v2839
    %5918 = vmatpush.msra.mxu0 %v2838
    %5919 = vmatpush.msra.mxu0 %v2837
    %5920 = vmatpush.msra.mxu0 %v2836
    %5921 = vmatpush.msra.mxu0 %v2835
    %5922 = vmatpush.msra.mxu0 %v2834
    %5923 = vmatmul.f32.gmra.mxu0 %v3690
    %v5924 = vpop.f32.mrf.mxu0
    %v5925 = vadd.f32 %v5905, %v5924
    %5926 = vdwg.mxu0
    %5927 = vmatpush.msra.mxu0 %v2865
    %5928 = vmatpush.msra.mxu0 %v2864
    %5929 = vmatpush.msra.mxu0 %v2863
    %5930 = vmatpush.msra.mxu0 %v2862
    %5931 = vmatpush.msra.mxu0 %v2861
    %5932 = vmatpush.msra.mxu0 %v2860
    %5933 = vmatpush.msra.mxu0 %v2859
    %5934 = vmatpush.msra.mxu0 %v2858
    %5935 = vmatpush.msra.mxu0 %v2857
    %5936 = vmatpush.msra.mxu0 %v2856
    %5937 = vmatpush.msra.mxu0 %v2855
    %5938 = vmatpush.msra.mxu0 %v2854
    %5939 = vmatpush.msra.mxu0 %v2853
    %5940 = vmatpush.msra.mxu0 %v2852
    %5941 = vmatpush.msra.mxu0 %v2851
    %5942 = vmatpush.msra.mxu0 %v2850
    %5943 = vmatmul.f32.gmra.mxu0 %v3691
    %v5944 = vpop.f32.mrf.mxu0
    %v5945 = vadd.f32 %v5925, %v5944
    %5946 = vdwg.mxu0
    %5947 = vmatpush.msra.mxu0 %v2881
    %5948 = vmatpush.msra.mxu0 %v2880
    %5949 = vmatpush.msra.mxu0 %v2879
    %5950 = vmatpush.msra.mxu0 %v2878
    %5951 = vmatpush.msra.mxu0 %v2877
    %5952 = vmatpush.msra.mxu0 %v2876
    %5953 = vmatpush.msra.mxu0 %v2875
    %5954 = vmatpush.msra.mxu0 %v2874
    %5955 = vmatpush.msra.mxu0 %v2873
    %5956 = vmatpush.msra.mxu0 %v2872
    %5957 = vmatpush.msra.mxu0 %v2871
    %5958 = vmatpush.msra.mxu0 %v2870
    %5959 = vmatpush.msra.mxu0 %v2869
    %5960 = vmatpush.msra.mxu0 %v2868
    %5961 = vmatpush.msra.mxu0 %v2867
    %5962 = vmatpush.msra.mxu0 %v2866
    %5963 = vmatmul.f32.gmra.mxu0 %v3692
    %v5964 = vpop.f32.mrf.mxu0
    %v5965 = vadd.f32 %v5945, %v5964
    %5966 = vdwg.mxu0
    %5967 = vmatpush.msra.mxu0 %v2897
    %5968 = vmatpush.msra.mxu0 %v2896
    %5969 = vmatpush.msra.mxu0 %v2895
    %5970 = vmatpush.msra.mxu0 %v2894
    %5971 = vmatpush.msra.mxu0 %v2893
    %5972 = vmatpush.msra.mxu0 %v2892
    %5973 = vmatpush.msra.mxu0 %v2891
    %5974 = vmatpush.msra.mxu0 %v2890
    %5975 = vmatpush.msra.mxu0 %v2889
    %5976 = vmatpush.msra.mxu0 %v2888
    %5977 = vmatpush.msra.mxu0 %v2887
    %5978 = vmatpush.msra.mxu0 %v2886
    %5979 = vmatpush.msra.mxu0 %v2885
    %5980 = vmatpush.msra.mxu0 %v2884
    %5981 = vmatpush.msra.mxu0 %v2883
    %5982 = vmatpush.msra.mxu0 %v2882
    %5983 = vmatmul.f32.gmra.mxu0 %v3695
    %v5984 = vpop.f32.mrf.mxu0
    %v5985 = vadd.f32 %v5965, %v5984
    %5986 = vdwg.mxu0
    %5987 = vmatpush.msra.mxu0 %v2913
    %5988 = vmatpush.msra.mxu0 %v2912
    %5989 = vmatpush.msra.mxu0 %v2911
    %5990 = vmatpush.msra.mxu0 %v2910
    %5991 = vmatpush.msra.mxu0 %v2909
    %5992 = vmatpush.msra.mxu0 %v2908
    %5993 = vmatpush.msra.mxu0 %v2907
    %5994 = vmatpush.msra.mxu0 %v2906
    %5995 = vmatpush.msra.mxu0 %v2905
    %5996 = vmatpush.msra.mxu0 %v2904
    %5997 = vmatpush.msra.mxu0 %v2903
    %5998 = vmatpush.msra.mxu0 %v2902
    %5999 = vmatpush.msra.mxu0 %v2901
    %6000 = vmatpush.msra.mxu0 %v2900
    %6001 = vmatpush.msra.mxu0 %v2899
    %6002 = vmatpush.msra.mxu0 %v2898
    %6003 = vmatmul.f32.gmra.mxu0 %v3696
    %v6004 = vpop.f32.mrf.mxu0
    %v6005 = vadd.f32 %v5985, %v6004
    %6006 = vdwg.mxu0
    %6007 = vmatpush.msra.mxu0 %v2929
    %6008 = vmatpush.msra.mxu0 %v2928
    %6009 = vmatpush.msra.mxu0 %v2927
    %6010 = vmatpush.msra.mxu0 %v2926
    %6011 = vmatpush.msra.mxu0 %v2925
    %6012 = vmatpush.msra.mxu0 %v2924
    %6013 = vmatpush.msra.mxu0 %v2923
    %6014 = vmatpush.msra.mxu0 %v2922
    %6015 = vmatpush.msra.mxu0 %v2921
    %6016 = vmatpush.msra.mxu0 %v2920
    %6017 = vmatpush.msra.mxu0 %v2919
    %6018 = vmatpush.msra.mxu0 %v2918
    %6019 = vmatpush.msra.mxu0 %v2917
    %6020 = vmatpush.msra.mxu0 %v2916
    %6021 = vmatpush.msra.mxu0 %v2915
    %6022 = vmatpush.msra.mxu0 %v2914
    %6023 = vmatmul.f32.gmra.mxu0 %v3697
    %v6024 = vpop.f32.mrf.mxu0
    %v6025 = vadd.f32 %v6005, %v6024
    %6026 = vdwg.mxu0
    %6027 = vmatpush.msra.mxu0 %v2945
    %6028 = vmatpush.msra.mxu0 %v2944
    %6029 = vmatpush.msra.mxu0 %v2943
    %6030 = vmatpush.msra.mxu0 %v2942
    %6031 = vmatpush.msra.mxu0 %v2941
    %6032 = vmatpush.msra.mxu0 %v2940
    %6033 = vmatpush.msra.mxu0 %v2939
    %6034 = vmatpush.msra.mxu0 %v2938
    %6035 = vmatpush.msra.mxu0 %v2937
    %6036 = vmatpush.msra.mxu0 %v2936
    %6037 = vmatpush.msra.mxu0 %v2935
    %6038 = vmatpush.msra.mxu0 %v2934
    %6039 = vmatpush.msra.mxu0 %v2933
    %6040 = vmatpush.msra.mxu0 %v2932
    %6041 = vmatpush.msra.mxu0 %v2931
    %6042 = vmatpush.msra.mxu0 %v2930
    %6043 = vmatmul.f32.gmra.mxu0 %v3698
    %v6044 = vpop.f32.mrf.mxu0
    %v6045 = vadd.f32 %v6025, %v6044
    %6046 = vdwg.mxu0
    %6047 = vmatpush.msra.mxu0 %v2961
    %6048 = vmatpush.msra.mxu0 %v2960
    %6049 = vmatpush.msra.mxu0 %v2959
    %6050 = vmatpush.msra.mxu0 %v2958
    %6051 = vmatpush.msra.mxu0 %v2957
    %6052 = vmatpush.msra.mxu0 %v2956
    %6053 = vmatpush.msra.mxu0 %v2955
    %6054 = vmatpush.msra.mxu0 %v2954
    %6055 = vmatpush.msra.mxu0 %v2953
    %6056 = vmatpush.msra.mxu0 %v2952
    %6057 = vmatpush.msra.mxu0 %v2951
    %6058 = vmatpush.msra.mxu0 %v2950
    %6059 = vmatpush.msra.mxu0 %v2949
    %6060 = vmatpush.msra.mxu0 %v2948
    %6061 = vmatpush.msra.mxu0 %v2947
    %6062 = vmatpush.msra.mxu0 %v2946
    %6063 = vmatmul.f32.gmra.mxu0 %v3699
    %v6064 = vpop.f32.mrf.mxu0
    %v6065 = vadd.f32 %v6045, %v6064
    %6066 = vdwg.mxu0
    %6067 = vmatpush.msra.mxu0 %v2977
    %6068 = vmatpush.msra.mxu0 %v2976
    %6069 = vmatpush.msra.mxu0 %v2975
    %6070 = vmatpush.msra.mxu0 %v2974
    %6071 = vmatpush.msra.mxu0 %v2973
    %6072 = vmatpush.msra.mxu0 %v2972
    %6073 = vmatpush.msra.mxu0 %v2971
    %6074 = vmatpush.msra.mxu0 %v2970
    %6075 = vmatpush.msra.mxu0 %v2969
    %6076 = vmatpush.msra.mxu0 %v2968
    %6077 = vmatpush.msra.mxu0 %v2967
    %6078 = vmatpush.msra.mxu0 %v2966
    %6079 = vmatpush.msra.mxu0 %v2965
    %6080 = vmatpush.msra.mxu0 %v2964
    %6081 = vmatpush.msra.mxu0 %v2963
    %6082 = vmatpush.msra.mxu0 %v2962
    %6083 = vmatmul.f32.gmra.mxu0 %v3700
    %v6084 = vpop.f32.mrf.mxu0
    %v6085 = vadd.f32 %v6065, %v6084
    %6086 = vdwg.mxu0
    %6087 = vmatpush.msra.mxu0 %v2993
    %6088 = vmatpush.msra.mxu0 %v2992
    %6089 = vmatpush.msra.mxu0 %v2991
    %6090 = vmatpush.msra.mxu0 %v2990
    %6091 = vmatpush.msra.mxu0 %v2989
    %6092 = vmatpush.msra.mxu0 %v2988
    %6093 = vmatpush.msra.mxu0 %v2987
    %6094 = vmatpush.msra.mxu0 %v2986
    %6095 = vmatpush.msra.mxu0 %v2985
    %6096 = vmatpush.msra.mxu0 %v2984
    %6097 = vmatpush.msra.mxu0 %v2983
    %6098 = vmatpush.msra.mxu0 %v2982
    %6099 = vmatpush.msra.mxu0 %v2981
    %6100 = vmatpush.msra.mxu0 %v2980
    %6101 = vmatpush.msra.mxu0 %v2979
    %6102 = vmatpush.msra.mxu0 %v2978
    %6103 = vmatmul.f32.gmra.mxu0 %v3701
    %v6104 = vpop.f32.mrf.mxu0
    %v6105 = vadd.f32 %v6085, %v6104
    %6106 = vdwg.mxu0
    %6107 = vmatpush.msra.mxu0 %v3009
    %6108 = vmatpush.msra.mxu0 %v3008
    %6109 = vmatpush.msra.mxu0 %v3007
    %6110 = vmatpush.msra.mxu0 %v3006
    %6111 = vmatpush.msra.mxu0 %v3005
    %6112 = vmatpush.msra.mxu0 %v3004
    %6113 = vmatpush.msra.mxu0 %v3003
    %6114 = vmatpush.msra.mxu0 %v3002
    %6115 = vmatpush.msra.mxu0 %v3001
    %6116 = vmatpush.msra.mxu0 %v3000
    %6117 = vmatpush.msra.mxu0 %v2999
    %6118 = vmatpush.msra.mxu0 %v2998
    %6119 = vmatpush.msra.mxu0 %v2997
    %6120 = vmatpush.msra.mxu0 %v2996
    %6121 = vmatpush.msra.mxu0 %v2995
    %6122 = vmatpush.msra.mxu0 %v2994
    %6123 = vmatmul.f32.gmra.mxu0 %v3702
    %v6124 = vpop.f32.mrf.mxu0
    %v6125 = vadd.f32 %v6105, %v6124
    %6126 = vdwg.mxu0
    %6127 = vmatpush.msra.mxu0 %v3025
    %6128 = vmatpush.msra.mxu0 %v3024
    %6129 = vmatpush.msra.mxu0 %v3023
    %6130 = vmatpush.msra.mxu0 %v3022
    %6131 = vmatpush.msra.mxu0 %v3021
    %6132 = vmatpush.msra.mxu0 %v3020
    %6133 = vmatpush.msra.mxu0 %v3019
    %6134 = vmatpush.msra.mxu0 %v3018
    %6135 = vmatpush.msra.mxu0 %v3017
    %6136 = vmatpush.msra.mxu0 %v3016
    %6137 = vmatpush.msra.mxu0 %v3015
    %6138 = vmatpush.msra.mxu0 %v3014
    %6139 = vmatpush.msra.mxu0 %v3013
    %6140 = vmatpush.msra.mxu0 %v3012
    %6141 = vmatpush.msra.mxu0 %v3011
    %6142 = vmatpush.msra.mxu0 %v3010
    %6143 = vmatmul.f32.gmra.mxu0 %v3705
    %v6144 = vpop.f32.mrf.mxu0
    %v6145 = vadd.f32 %v6125, %v6144
    %6146 = vdwg.mxu0
    %6147 = vmatpush.msra.mxu0 %v3041
    %6148 = vmatpush.msra.mxu0 %v3040
    %6149 = vmatpush.msra.mxu0 %v3039
    %6150 = vmatpush.msra.mxu0 %v3038
    %6151 = vmatpush.msra.mxu0 %v3037
    %6152 = vmatpush.msra.mxu0 %v3036
    %6153 = vmatpush.msra.mxu0 %v3035
    %6154 = vmatpush.msra.mxu0 %v3034
    %6155 = vmatpush.msra.mxu0 %v3033
    %6156 = vmatpush.msra.mxu0 %v3032
    %6157 = vmatpush.msra.mxu0 %v3031
    %6158 = vmatpush.msra.mxu0 %v3030
    %6159 = vmatpush.msra.mxu0 %v3029
    %6160 = vmatpush.msra.mxu0 %v3028
    %6161 = vmatpush.msra.mxu0 %v3027
    %6162 = vmatpush.msra.mxu0 %v3026
    %6163 = vmatmul.f32.gmra.mxu0 %v3706
    %v6164 = vpop.f32.mrf.mxu0
    %v6165 = vadd.f32 %v6145, %v6164
    %6166 = vdwg.mxu0
    %6167 = vmatpush.msra.mxu0 %v3057
    %6168 = vmatpush.msra.mxu0 %v3056
    %6169 = vmatpush.msra.mxu0 %v3055
    %6170 = vmatpush.msra.mxu0 %v3054
    %6171 = vmatpush.msra.mxu0 %v3053
    %6172 = vmatpush.msra.mxu0 %v3052
    %6173 = vmatpush.msra.mxu0 %v3051
    %6174 = vmatpush.msra.mxu0 %v3050
    %6175 = vmatpush.msra.mxu0 %v3049
    %6176 = vmatpush.msra.mxu0 %v3048
    %6177 = vmatpush.msra.mxu0 %v3047
    %6178 = vmatpush.msra.mxu0 %v3046
    %6179 = vmatpush.msra.mxu0 %v3045
    %6180 = vmatpush.msra.mxu0 %v3044
    %6181 = vmatpush.msra.mxu0 %v3043
    %6182 = vmatpush.msra.mxu0 %v3042
    %6183 = vmatmul.f32.gmra.mxu0 %v3707
    %v6184 = vpop.f32.mrf.mxu0
    %v6185 = vadd.f32 %v6165, %v6184
    %6186 = vdwg.mxu0
    %6187 = vmatpush.msra.mxu0 %v3073
    %6188 = vmatpush.msra.mxu0 %v3072
    %6189 = vmatpush.msra.mxu0 %v3071
    %6190 = vmatpush.msra.mxu0 %v3070
    %6191 = vmatpush.msra.mxu0 %v3069
    %6192 = vmatpush.msra.mxu0 %v3068
    %6193 = vmatpush.msra.mxu0 %v3067
    %6194 = vmatpush.msra.mxu0 %v3066
    %6195 = vmatpush.msra.mxu0 %v3065
    %6196 = vmatpush.msra.mxu0 %v3064
    %6197 = vmatpush.msra.mxu0 %v3063
    %6198 = vmatpush.msra.mxu0 %v3062
    %6199 = vmatpush.msra.mxu0 %v3061
    %6200 = vmatpush.msra.mxu0 %v3060
    %6201 = vmatpush.msra.mxu0 %v3059
    %6202 = vmatpush.msra.mxu0 %v3058
    %6203 = vmatmul.f32.gmra.mxu0 %v3708
    %v6204 = vpop.f32.mrf.mxu0
    %v6205 = vadd.f32 %v6185, %v6204
    %6206 = vdwg.mxu0
    %6207 = vmatpush.msra.mxu0 %v3089
    %6208 = vmatpush.msra.mxu0 %v3088
    %6209 = vmatpush.msra.mxu0 %v3087
    %6210 = vmatpush.msra.mxu0 %v3086
    %6211 = vmatpush.msra.mxu0 %v3085
    %6212 = vmatpush.msra.mxu0 %v3084
    %6213 = vmatpush.msra.mxu0 %v3083
    %6214 = vmatpush.msra.mxu0 %v3082
    %6215 = vmatpush.msra.mxu0 %v3081
    %6216 = vmatpush.msra.mxu0 %v3080
    %6217 = vmatpush.msra.mxu0 %v3079
    %6218 = vmatpush.msra.mxu0 %v3078
    %6219 = vmatpush.msra.mxu0 %v3077
    %6220 = vmatpush.msra.mxu0 %v3076
    %6221 = vmatpush.msra.mxu0 %v3075
    %6222 = vmatpush.msra.mxu0 %v3074
    %6223 = vmatmul.f32.gmra.mxu0 %v3709
    %v6224 = vpop.f32.mrf.mxu0
    %v6225 = vadd.f32 %v6205, %v6224
    %6226 = vdwg.mxu0
    %6227 = vmatpush.msra.mxu0 %v3105
    %6228 = vmatpush.msra.mxu0 %v3104
    %6229 = vmatpush.msra.mxu0 %v3103
    %6230 = vmatpush.msra.mxu0 %v3102
    %6231 = vmatpush.msra.mxu0 %v3101
    %6232 = vmatpush.msra.mxu0 %v3100
    %6233 = vmatpush.msra.mxu0 %v3099
    %6234 = vmatpush.msra.mxu0 %v3098
    %6235 = vmatpush.msra.mxu0 %v3097
    %6236 = vmatpush.msra.mxu0 %v3096
    %6237 = vmatpush.msra.mxu0 %v3095
    %6238 = vmatpush.msra.mxu0 %v3094
    %6239 = vmatpush.msra.mxu0 %v3093
    %6240 = vmatpush.msra.mxu0 %v3092
    %6241 = vmatpush.msra.mxu0 %v3091
    %6242 = vmatpush.msra.mxu0 %v3090
    %6243 = vmatmul.f32.gmra.mxu0 %v3710
    %v6244 = vpop.f32.mrf.mxu0
    %v6245 = vadd.f32 %v6225, %v6244
    %6246 = vdwg.mxu0
    %6247 = vmatpush.msra.mxu0 %v3121
    %6248 = vmatpush.msra.mxu0 %v3120
    %6249 = vmatpush.msra.mxu0 %v3119
    %6250 = vmatpush.msra.mxu0 %v3118
    %6251 = vmatpush.msra.mxu0 %v3117
    %6252 = vmatpush.msra.mxu0 %v3116
    %6253 = vmatpush.msra.mxu0 %v3115
    %6254 = vmatpush.msra.mxu0 %v3114
    %6255 = vmatpush.msra.mxu0 %v3113
    %6256 = vmatpush.msra.mxu0 %v3112
    %6257 = vmatpush.msra.mxu0 %v3111
    %6258 = vmatpush.msra.mxu0 %v3110
    %6259 = vmatpush.msra.mxu0 %v3109
    %6260 = vmatpush.msra.mxu0 %v3108
    %6261 = vmatpush.msra.mxu0 %v3107
    %6262 = vmatpush.msra.mxu0 %v3106
    %6263 = vmatmul.f32.gmra.mxu0 %v3711
    %v6264 = vpop.f32.mrf.mxu0
    %v6265 = vadd.f32 %v6245, %v6264
    %6266 = vdwg.mxu0
    %6267 = vmatpush.msra.mxu0 %v3137
    %6268 = vmatpush.msra.mxu0 %v3136
    %6269 = vmatpush.msra.mxu0 %v3135
    %6270 = vmatpush.msra.mxu0 %v3134
    %6271 = vmatpush.msra.mxu0 %v3133
    %6272 = vmatpush.msra.mxu0 %v3132
    %6273 = vmatpush.msra.mxu0 %v3131
    %6274 = vmatpush.msra.mxu0 %v3130
    %6275 = vmatpush.msra.mxu0 %v3129
    %6276 = vmatpush.msra.mxu0 %v3128
    %6277 = vmatpush.msra.mxu0 %v3127
    %6278 = vmatpush.msra.mxu0 %v3126
    %6279 = vmatpush.msra.mxu0 %v3125
    %6280 = vmatpush.msra.mxu0 %v3124
    %6281 = vmatpush.msra.mxu0 %v3123
    %6282 = vmatpush.msra.mxu0 %v3122
    %6283 = vmatmul.f32.gmra.mxu0 %v3712
    %v6284 = vpop.f32.mrf.mxu0
    %v6285 = vadd.f32 %v6265, %v6284
    %6286 = vdwg.mxu0
    %6287 = vmatpush.msra.mxu0 %v3153
    %6288 = vmatpush.msra.mxu0 %v3152
    %6289 = vmatpush.msra.mxu0 %v3151
    %6290 = vmatpush.msra.mxu0 %v3150
    %6291 = vmatpush.msra.mxu0 %v3149
    %6292 = vmatpush.msra.mxu0 %v3148
    %6293 = vmatpush.msra.mxu0 %v3147
    %6294 = vmatpush.msra.mxu0 %v3146
    %6295 = vmatpush.msra.mxu0 %v3145
    %6296 = vmatpush.msra.mxu0 %v3144
    %6297 = vmatpush.msra.mxu0 %v3143
    %6298 = vmatpush.msra.mxu0 %v3142
    %6299 = vmatpush.msra.mxu0 %v3141
    %6300 = vmatpush.msra.mxu0 %v3140
    %6301 = vmatpush.msra.mxu0 %v3139
    %6302 = vmatpush.msra.mxu0 %v3138
    %6303 = vmatmul.f32.gmra.mxu0 %v3715
    %v6304 = vpop.f32.mrf.mxu0
    %v6305 = vadd.f32 %v6285, %v6304
    %6306 = vdwg.mxu0
    %6307 = vmatpush.msra.mxu0 %v3169
    %6308 = vmatpush.msra.mxu0 %v3168
    %6309 = vmatpush.msra.mxu0 %v3167
    %6310 = vmatpush.msra.mxu0 %v3166
    %6311 = vmatpush.msra.mxu0 %v3165
    %6312 = vmatpush.msra.mxu0 %v3164
    %6313 = vmatpush.msra.mxu0 %v3163
    %6314 = vmatpush.msra.mxu0 %v3162
    %6315 = vmatpush.msra.mxu0 %v3161
    %6316 = vmatpush.msra.mxu0 %v3160
    %6317 = vmatpush.msra.mxu0 %v3159
    %6318 = vmatpush.msra.mxu0 %v3158
    %6319 = vmatpush.msra.mxu0 %v3157
    %6320 = vmatpush.msra.mxu0 %v3156
    %6321 = vmatpush.msra.mxu0 %v3155
    %6322 = vmatpush.msra.mxu0 %v3154
    %6323 = vmatmul.f32.gmra.mxu0 %v3716
    %v6324 = vpop.f32.mrf.mxu0
    %v6325 = vadd.f32 %v6305, %v6324
    %6326 = vdwg.mxu0
    %6327 = vmatpush.msra.mxu0 %v3185
    %6328 = vmatpush.msra.mxu0 %v3184
    %6329 = vmatpush.msra.mxu0 %v3183
    %6330 = vmatpush.msra.mxu0 %v3182
    %6331 = vmatpush.msra.mxu0 %v3181
    %6332 = vmatpush.msra.mxu0 %v3180
    %6333 = vmatpush.msra.mxu0 %v3179
    %6334 = vmatpush.msra.mxu0 %v3178
    %6335 = vmatpush.msra.mxu0 %v3177
    %6336 = vmatpush.msra.mxu0 %v3176
    %6337 = vmatpush.msra.mxu0 %v3175
    %6338 = vmatpush.msra.mxu0 %v3174
    %6339 = vmatpush.msra.mxu0 %v3173
    %6340 = vmatpush.msra.mxu0 %v3172
    %6341 = vmatpush.msra.mxu0 %v3171
    %6342 = vmatpush.msra.mxu0 %v3170
    %6343 = vmatmul.f32.gmra.mxu0 %v3717
    %v6344 = vpop.f32.mrf.mxu0
    %v6345 = vadd.f32 %v6325, %v6344
    %6346 = vdwg.mxu0
    %6347 = vmatpush.msra.mxu0 %v3201
    %6348 = vmatpush.msra.mxu0 %v3200
    %6349 = vmatpush.msra.mxu0 %v3199
    %6350 = vmatpush.msra.mxu0 %v3198
    %6351 = vmatpush.msra.mxu0 %v3197
    %6352 = vmatpush.msra.mxu0 %v3196
    %6353 = vmatpush.msra.mxu0 %v3195
    %6354 = vmatpush.msra.mxu0 %v3194
    %6355 = vmatpush.msra.mxu0 %v3193
    %6356 = vmatpush.msra.mxu0 %v3192
    %6357 = vmatpush.msra.mxu0 %v3191
    %6358 = vmatpush.msra.mxu0 %v3190
    %6359 = vmatpush.msra.mxu0 %v3189
    %6360 = vmatpush.msra.mxu0 %v3188
    %6361 = vmatpush.msra.mxu0 %v3187
    %6362 = vmatpush.msra.mxu0 %v3186
    %6363 = vmatmul.f32.gmra.mxu0 %v3718
    %v6364 = vpop.f32.mrf.mxu0
    %v6365 = vadd.f32 %v6345, %v6364
    %6366 = vdwg.mxu0
    %6367 = vmatpush.msra.mxu0 %v3217
    %6368 = vmatpush.msra.mxu0 %v3216
    %6369 = vmatpush.msra.mxu0 %v3215
    %6370 = vmatpush.msra.mxu0 %v3214
    %6371 = vmatpush.msra.mxu0 %v3213
    %6372 = vmatpush.msra.mxu0 %v3212
    %6373 = vmatpush.msra.mxu0 %v3211
    %6374 = vmatpush.msra.mxu0 %v3210
    %6375 = vmatpush.msra.mxu0 %v3209
    %6376 = vmatpush.msra.mxu0 %v3208
    %6377 = vmatpush.msra.mxu0 %v3207
    %6378 = vmatpush.msra.mxu0 %v3206
    %6379 = vmatpush.msra.mxu0 %v3205
    %6380 = vmatpush.msra.mxu0 %v3204
    %6381 = vmatpush.msra.mxu0 %v3203
    %6382 = vmatpush.msra.mxu0 %v3202
    %6383 = vmatmul.f32.gmra.mxu0 %v3719
    %v6384 = vpop.f32.mrf.mxu0
    %v6385 = vadd.f32 %v6365, %v6384
    %6386 = vdwg.mxu0
    %6387 = vmatpush.msra.mxu0 %v3233
    %6388 = vmatpush.msra.mxu0 %v3232
    %6389 = vmatpush.msra.mxu0 %v3231
    %6390 = vmatpush.msra.mxu0 %v3230
    %6391 = vmatpush.msra.mxu0 %v3229
    %6392 = vmatpush.msra.mxu0 %v3228
    %6393 = vmatpush.msra.mxu0 %v3227
    %6394 = vmatpush.msra.mxu0 %v3226
    %6395 = vmatpush.msra.mxu0 %v3225
    %6396 = vmatpush.msra.mxu0 %v3224
    %6397 = vmatpush.msra.mxu0 %v3223
    %6398 = vmatpush.msra.mxu0 %v3222
    %6399 = vmatpush.msra.mxu0 %v3221
    %6400 = vmatpush.msra.mxu0 %v3220
    %6401 = vmatpush.msra.mxu0 %v3219
    %6402 = vmatpush.msra.mxu0 %v3218
    %6403 = vmatmul.f32.gmra.mxu0 %v3720
    %v6404 = vpop.f32.mrf.mxu0
    %v6405 = vadd.f32 %v6385, %v6404
    %6406 = vdwg.mxu0
    %6407 = vmatpush.msra.mxu0 %v3249
    %6408 = vmatpush.msra.mxu0 %v3248
    %6409 = vmatpush.msra.mxu0 %v3247
    %6410 = vmatpush.msra.mxu0 %v3246
    %6411 = vmatpush.msra.mxu0 %v3245
    %6412 = vmatpush.msra.mxu0 %v3244
    %6413 = vmatpush.msra.mxu0 %v3243
    %6414 = vmatpush.msra.mxu0 %v3242
    %6415 = vmatpush.msra.mxu0 %v3241
    %6416 = vmatpush.msra.mxu0 %v3240
    %6417 = vmatpush.msra.mxu0 %v3239
    %6418 = vmatpush.msra.mxu0 %v3238
    %6419 = vmatpush.msra.mxu0 %v3237
    %6420 = vmatpush.msra.mxu0 %v3236
    %6421 = vmatpush.msra.mxu0 %v3235
    %6422 = vmatpush.msra.mxu0 %v3234
    %6423 = vmatmul.f32.gmra.mxu0 %v3721
    %v6424 = vpop.f32.mrf.mxu0
    %v6425 = vadd.f32 %v6405, %v6424
    %6426 = vdwg.mxu0
    %6427 = vmatpush.msra.mxu0 %v3265
    %6428 = vmatpush.msra.mxu0 %v3264
    %6429 = vmatpush.msra.mxu0 %v3263
    %6430 = vmatpush.msra.mxu0 %v3262
    %6431 = vmatpush.msra.mxu0 %v3261
    %6432 = vmatpush.msra.mxu0 %v3260
    %6433 = vmatpush.msra.mxu0 %v3259
    %6434 = vmatpush.msra.mxu0 %v3258
    %6435 = vmatpush.msra.mxu0 %v3257
    %6436 = vmatpush.msra.mxu0 %v3256
    %6437 = vmatpush.msra.mxu0 %v3255
    %6438 = vmatpush.msra.mxu0 %v3254
    %6439 = vmatpush.msra.mxu0 %v3253
    %6440 = vmatpush.msra.mxu0 %v3252
    %6441 = vmatpush.msra.mxu0 %v3251
    %6442 = vmatpush.msra.mxu0 %v3250
    %6443 = vmatmul.f32.gmra.mxu0 %v3722
    %v6444 = vpop.f32.mrf.mxu0
    %v6445 = vadd.f32 %v6425, %v6444
    %6446 = vdwg.mxu0
    %6447 = vmatpush.msra.mxu0 %v3281
    %6448 = vmatpush.msra.mxu0 %v3280
    %6449 = vmatpush.msra.mxu0 %v3279
    %6450 = vmatpush.msra.mxu0 %v3278
    %6451 = vmatpush.msra.mxu0 %v3277
    %6452 = vmatpush.msra.mxu0 %v3276
    %6453 = vmatpush.msra.mxu0 %v3275
    %6454 = vmatpush.msra.mxu0 %v3274
    %6455 = vmatpush.msra.mxu0 %v3273
    %6456 = vmatpush.msra.mxu0 %v3272
    %6457 = vmatpush.msra.mxu0 %v3271
    %6458 = vmatpush.msra.mxu0 %v3270
    %6459 = vmatpush.msra.mxu0 %v3269
    %6460 = vmatpush.msra.mxu0 %v3268
    %6461 = vmatpush.msra.mxu0 %v3267
    %6462 = vmatpush.msra.mxu0 %v3266
    %6463 = vmatmul.f32.gmra.mxu0 %v3725
    %v6464 = vpop.f32.mrf.mxu0
    %v6465 = vadd.f32 %v6445, %v6464
    %6466 = vdwg.mxu0
    %6467 = vmatpush.msra.mxu0 %v3297
    %6468 = vmatpush.msra.mxu0 %v3296
    %6469 = vmatpush.msra.mxu0 %v3295
    %6470 = vmatpush.msra.mxu0 %v3294
    %6471 = vmatpush.msra.mxu0 %v3293
    %6472 = vmatpush.msra.mxu0 %v3292
    %6473 = vmatpush.msra.mxu0 %v3291
    %6474 = vmatpush.msra.mxu0 %v3290
    %6475 = vmatpush.msra.mxu0 %v3289
    %6476 = vmatpush.msra.mxu0 %v3288
    %6477 = vmatpush.msra.mxu0 %v3287
    %6478 = vmatpush.msra.mxu0 %v3286
    %6479 = vmatpush.msra.mxu0 %v3285
    %6480 = vmatpush.msra.mxu0 %v3284
    %6481 = vmatpush.msra.mxu0 %v3283
    %6482 = vmatpush.msra.mxu0 %v3282
    %6483 = vmatmul.f32.gmra.mxu0 %v3726
    %v6484 = vpop.f32.mrf.mxu0
    %v6485 = vadd.f32 %v6465, %v6484
    %6486 = vdwg.mxu0
    %6487 = vmatpush.msra.mxu0 %v3313
    %6488 = vmatpush.msra.mxu0 %v3312
    %6489 = vmatpush.msra.mxu0 %v3311
    %6490 = vmatpush.msra.mxu0 %v3310
    %6491 = vmatpush.msra.mxu0 %v3309
    %6492 = vmatpush.msra.mxu0 %v3308
    %6493 = vmatpush.msra.mxu0 %v3307
    %6494 = vmatpush.msra.mxu0 %v3306
    %6495 = vmatpush.msra.mxu0 %v3305
    %6496 = vmatpush.msra.mxu0 %v3304
    %6497 = vmatpush.msra.mxu0 %v3303
    %6498 = vmatpush.msra.mxu0 %v3302
    %6499 = vmatpush.msra.mxu0 %v3301
    %6500 = vmatpush.msra.mxu0 %v3300
    %6501 = vmatpush.msra.mxu0 %v3299
    %6502 = vmatpush.msra.mxu0 %v3298
    %6503 = vmatmul.f32.gmra.mxu0 %v3727
    %v6504 = vpop.f32.mrf.mxu0
    %v6505 = vadd.f32 %v6485, %v6504
    %6506 = vdwg.mxu0
    %6507 = vmatpush.msra.mxu0 %v3329
    %6508 = vmatpush.msra.mxu0 %v3328
    %6509 = vmatpush.msra.mxu0 %v3327
    %6510 = vmatpush.msra.mxu0 %v3326
    %6511 = vmatpush.msra.mxu0 %v3325
    %6512 = vmatpush.msra.mxu0 %v3324
    %6513 = vmatpush.msra.mxu0 %v3323
    %6514 = vmatpush.msra.mxu0 %v3322
    %6515 = vmatpush.msra.mxu0 %v3321
    %6516 = vmatpush.msra.mxu0 %v3320
    %6517 = vmatpush.msra.mxu0 %v3319
    %6518 = vmatpush.msra.mxu0 %v3318
    %6519 = vmatpush.msra.mxu0 %v3317
    %6520 = vmatpush.msra.mxu0 %v3316
    %6521 = vmatpush.msra.mxu0 %v3315
    %6522 = vmatpush.msra.mxu0 %v3314
    %6523 = vmatmul.f32.gmra.mxu0 %v3728
    %v6524 = vpop.f32.mrf.mxu0
    %v6525 = vadd.f32 %v6505, %v6524
    %6526 = vdwg.mxu0
    %6527 = vmatpush.msra.mxu0 %v3345
    %6528 = vmatpush.msra.mxu0 %v3344
    %6529 = vmatpush.msra.mxu0 %v3343
    %6530 = vmatpush.msra.mxu0 %v3342
    %6531 = vmatpush.msra.mxu0 %v3341
    %6532 = vmatpush.msra.mxu0 %v3340
    %6533 = vmatpush.msra.mxu0 %v3339
    %6534 = vmatpush.msra.mxu0 %v3338
    %6535 = vmatpush.msra.mxu0 %v3337
    %6536 = vmatpush.msra.mxu0 %v3336
    %6537 = vmatpush.msra.mxu0 %v3335
    %6538 = vmatpush.msra.mxu0 %v3334
    %6539 = vmatpush.msra.mxu0 %v3333
    %6540 = vmatpush.msra.mxu0 %v3332
    %6541 = vmatpush.msra.mxu0 %v3331
    %6542 = vmatpush.msra.mxu0 %v3330
    %6543 = vmatmul.f32.gmra.mxu0 %v3729
    %v6544 = vpop.f32.mrf.mxu0
    %v6545 = vadd.f32 %v6525, %v6544
    %6546 = vdwg.mxu0
    %6547 = vmatpush.msra.mxu0 %v3361
    %6548 = vmatpush.msra.mxu0 %v3360
    %6549 = vmatpush.msra.mxu0 %v3359
    %6550 = vmatpush.msra.mxu0 %v3358
    %6551 = vmatpush.msra.mxu0 %v3357
    %6552 = vmatpush.msra.mxu0 %v3356
    %6553 = vmatpush.msra.mxu0 %v3355
    %6554 = vmatpush.msra.mxu0 %v3354
    %6555 = vmatpush.msra.mxu0 %v3353
    %6556 = vmatpush.msra.mxu0 %v3352
    %6557 = vmatpush.msra.mxu0 %v3351
    %6558 = vmatpush.msra.mxu0 %v3350
    %6559 = vmatpush.msra.mxu0 %v3349
    %6560 = vmatpush.msra.mxu0 %v3348
    %6561 = vmatpush.msra.mxu0 %v3347
    %6562 = vmatpush.msra.mxu0 %v3346
    %6563 = vmatmul.f32.gmra.mxu0 %v3730
    %v6564 = vpop.f32.mrf.mxu0
    %v6565 = vadd.f32 %v6545, %v6564
    %6566 = vdwg.mxu0
    %6567 = vmatpush.msra.mxu0 %v3377
    %6568 = vmatpush.msra.mxu0 %v3376
    %6569 = vmatpush.msra.mxu0 %v3375
    %6570 = vmatpush.msra.mxu0 %v3374
    %6571 = vmatpush.msra.mxu0 %v3373
    %6572 = vmatpush.msra.mxu0 %v3372
    %6573 = vmatpush.msra.mxu0 %v3371
    %6574 = vmatpush.msra.mxu0 %v3370
    %6575 = vmatpush.msra.mxu0 %v3369
    %6576 = vmatpush.msra.mxu0 %v3368
    %6577 = vmatpush.msra.mxu0 %v3367
    %6578 = vmatpush.msra.mxu0 %v3366
    %6579 = vmatpush.msra.mxu0 %v3365
    %6580 = vmatpush.msra.mxu0 %v3364
    %6581 = vmatpush.msra.mxu0 %v3363
    %6582 = vmatpush.msra.mxu0 %v3362
    %6583 = vmatmul.f32.gmra.mxu0 %v3731
    %v6584 = vpop.f32.mrf.mxu0
    %v6585 = vadd.f32 %v6565, %v6584
    %6586 = vdwg.mxu0
    %6587 = vmatpush.msra.mxu0 %v3393
    %6588 = vmatpush.msra.mxu0 %v3392
    %6589 = vmatpush.msra.mxu0 %v3391
    %6590 = vmatpush.msra.mxu0 %v3390
    %6591 = vmatpush.msra.mxu0 %v3389
    %6592 = vmatpush.msra.mxu0 %v3388
    %6593 = vmatpush.msra.mxu0 %v3387
    %6594 = vmatpush.msra.mxu0 %v3386
    %6595 = vmatpush.msra.mxu0 %v3385
    %6596 = vmatpush.msra.mxu0 %v3384
    %6597 = vmatpush.msra.mxu0 %v3383
    %6598 = vmatpush.msra.mxu0 %v3382
    %6599 = vmatpush.msra.mxu0 %v3381
    %6600 = vmatpush.msra.mxu0 %v3380
    %6601 = vmatpush.msra.mxu0 %v3379
    %6602 = vmatpush.msra.mxu0 %v3378
    %6603 = vmatmul.f32.gmra.mxu0 %v3732
    %v6604 = vpop.f32.mrf.mxu0
    %v6605 = vadd.f32 %v6585, %v6604
    %6606 = vdwg.mxu0
    %6607 = vmatpush.msra.mxu0 %v3409
    %6608 = vmatpush.msra.mxu0 %v3408
    %6609 = vmatpush.msra.mxu0 %v3407
    %6610 = vmatpush.msra.mxu0 %v3406
    %6611 = vmatpush.msra.mxu0 %v3405
    %6612 = vmatpush.msra.mxu0 %v3404
    %6613 = vmatpush.msra.mxu0 %v3403
    %6614 = vmatpush.msra.mxu0 %v3402
    %6615 = vmatpush.msra.mxu0 %v3401
    %6616 = vmatpush.msra.mxu0 %v3400
    %6617 = vmatpush.msra.mxu0 %v3399
    %6618 = vmatpush.msra.mxu0 %v3398
    %6619 = vmatpush.msra.mxu0 %v3397
    %6620 = vmatpush.msra.mxu0 %v3396
    %6621 = vmatpush.msra.mxu0 %v3395
    %6622 = vmatpush.msra.mxu0 %v3394
    %6623 = vmatmul.f32.gmra.mxu0 %v3735
    %v6624 = vpop.f32.mrf.mxu0
    %v6625 = vadd.f32 %v6605, %v6624
    %6626 = vdwg.mxu0
    %6627 = vmatpush.msra.mxu0 %v3425
    %6628 = vmatpush.msra.mxu0 %v3424
    %6629 = vmatpush.msra.mxu0 %v3423
    %6630 = vmatpush.msra.mxu0 %v3422
    %6631 = vmatpush.msra.mxu0 %v3421
    %6632 = vmatpush.msra.mxu0 %v3420
    %6633 = vmatpush.msra.mxu0 %v3419
    %6634 = vmatpush.msra.mxu0 %v3418
    %6635 = vmatpush.msra.mxu0 %v3417
    %6636 = vmatpush.msra.mxu0 %v3416
    %6637 = vmatpush.msra.mxu0 %v3415
    %6638 = vmatpush.msra.mxu0 %v3414
    %6639 = vmatpush.msra.mxu0 %v3413
    %6640 = vmatpush.msra.mxu0 %v3412
    %6641 = vmatpush.msra.mxu0 %v3411
    %6642 = vmatpush.msra.mxu0 %v3410
    %6643 = vmatmul.f32.gmra.mxu0 %v3736
    %v6644 = vpop.f32.mrf.mxu0
    %v6645 = vadd.f32 %v6625, %v6644
    %6646 = vdwg.mxu0
    %6647 = vmatpush.msra.mxu0 %v3441
    %6648 = vmatpush.msra.mxu0 %v3440
    %6649 = vmatpush.msra.mxu0 %v3439
    %6650 = vmatpush.msra.mxu0 %v3438
    %6651 = vmatpush.msra.mxu0 %v3437
    %6652 = vmatpush.msra.mxu0 %v3436
    %6653 = vmatpush.msra.mxu0 %v3435
    %6654 = vmatpush.msra.mxu0 %v3434
    %6655 = vmatpush.msra.mxu0 %v3433
    %6656 = vmatpush.msra.mxu0 %v3432
    %6657 = vmatpush.msra.mxu0 %v3431
    %6658 = vmatpush.msra.mxu0 %v3430
    %6659 = vmatpush.msra.mxu0 %v3429
    %6660 = vmatpush.msra.mxu0 %v3428
    %6661 = vmatpush.msra.mxu0 %v3427
    %6662 = vmatpush.msra.mxu0 %v3426
    %6663 = vmatmul.f32.gmra.mxu0 %v3737
    %v6664 = vpop.f32.mrf.mxu0
    %v6665 = vadd.f32 %v6645, %v6664
    %6666 = vdwg.mxu0
    %6667 = vmatpush.msra.mxu0 %v3457
    %6668 = vmatpush.msra.mxu0 %v3456
    %6669 = vmatpush.msra.mxu0 %v3455
    %6670 = vmatpush.msra.mxu0 %v3454
    %6671 = vmatpush.msra.mxu0 %v3453
    %6672 = vmatpush.msra.mxu0 %v3452
    %6673 = vmatpush.msra.mxu0 %v3451
    %6674 = vmatpush.msra.mxu0 %v3450
    %6675 = vmatpush.msra.mxu0 %v3449
    %6676 = vmatpush.msra.mxu0 %v3448
    %6677 = vmatpush.msra.mxu0 %v3447
    %6678 = vmatpush.msra.mxu0 %v3446
    %6679 = vmatpush.msra.mxu0 %v3445
    %6680 = vmatpush.msra.mxu0 %v3444
    %6681 = vmatpush.msra.mxu0 %v3443
    %6682 = vmatpush.msra.mxu0 %v3442
    %6683 = vmatmul.f32.gmra.mxu0 %v3738
    %v6684 = vpop.f32.mrf.mxu0
    %v6685 = vadd.f32 %v6665, %v6684
    %6686 = vdwg.mxu0
    %6687 = vmatpush.msra.mxu0 %v3473
    %6688 = vmatpush.msra.mxu0 %v3472
    %6689 = vmatpush.msra.mxu0 %v3471
    %6690 = vmatpush.msra.mxu0 %v3470
    %6691 = vmatpush.msra.mxu0 %v3469
    %6692 = vmatpush.msra.mxu0 %v3468
    %6693 = vmatpush.msra.mxu0 %v3467
    %6694 = vmatpush.msra.mxu0 %v3466
    %6695 = vmatpush.msra.mxu0 %v3465
    %6696 = vmatpush.msra.mxu0 %v3464
    %6697 = vmatpush.msra.mxu0 %v3463
    %6698 = vmatpush.msra.mxu0 %v3462
    %6699 = vmatpush.msra.mxu0 %v3461
    %6700 = vmatpush.msra.mxu0 %v3460
    %6701 = vmatpush.msra.mxu0 %v3459
    %6702 = vmatpush.msra.mxu0 %v3458
    %6703 = vmatmul.f32.gmra.mxu0 %v3739
    %v6704 = vpop.f32.mrf.mxu0
    %v6705 = vadd.f32 %v6685, %v6704
    %6706 = vdwg.mxu0
    %6707 = vmatpush.msra.mxu0 %v3489
    %6708 = vmatpush.msra.mxu0 %v3488
    %6709 = vmatpush.msra.mxu0 %v3487
    %6710 = vmatpush.msra.mxu0 %v3486
    %6711 = vmatpush.msra.mxu0 %v3485
    %6712 = vmatpush.msra.mxu0 %v3484
    %6713 = vmatpush.msra.mxu0 %v3483
    %6714 = vmatpush.msra.mxu0 %v3482
    %6715 = vmatpush.msra.mxu0 %v3481
    %6716 = vmatpush.msra.mxu0 %v3480
    %6717 = vmatpush.msra.mxu0 %v3479
    %6718 = vmatpush.msra.mxu0 %v3478
    %6719 = vmatpush.msra.mxu0 %v3477
    %6720 = vmatpush.msra.mxu0 %v3476
    %6721 = vmatpush.msra.mxu0 %v3475
    %6722 = vmatpush.msra.mxu0 %v3474
    %6723 = vmatmul.f32.gmra.mxu0 %v3740
    %v6724 = vpop.f32.mrf.mxu0
    %v6725 = vadd.f32 %v6705, %v6724
    %6726 = vdwg.mxu0
    %6727 = vmatpush.msra.mxu0 %v3505
    %6728 = vmatpush.msra.mxu0 %v3504
    %6729 = vmatpush.msra.mxu0 %v3503
    %6730 = vmatpush.msra.mxu0 %v3502
    %6731 = vmatpush.msra.mxu0 %v3501
    %6732 = vmatpush.msra.mxu0 %v3500
    %6733 = vmatpush.msra.mxu0 %v3499
    %6734 = vmatpush.msra.mxu0 %v3498
    %6735 = vmatpush.msra.mxu0 %v3497
    %6736 = vmatpush.msra.mxu0 %v3496
    %6737 = vmatpush.msra.mxu0 %v3495
    %6738 = vmatpush.msra.mxu0 %v3494
    %6739 = vmatpush.msra.mxu0 %v3493
    %6740 = vmatpush.msra.mxu0 %v3492
    %6741 = vmatpush.msra.mxu0 %v3491
    %6742 = vmatpush.msra.mxu0 %v3490
    %6743 = vmatmul.f32.gmra.mxu0 %v3741
    %v6744 = vpop.f32.mrf.mxu0
    %v6745 = vadd.f32 %v6725, %v6744
    %6746 = vdwg.mxu0
    %6747 = vmatpush.msra.mxu0 %v3521
    %6748 = vmatpush.msra.mxu0 %v3520
    %6749 = vmatpush.msra.mxu0 %v3519
    %6750 = vmatpush.msra.mxu0 %v3518
    %6751 = vmatpush.msra.mxu0 %v3517
    %6752 = vmatpush.msra.mxu0 %v3516
    %6753 = vmatpush.msra.mxu0 %v3515
    %6754 = vmatpush.msra.mxu0 %v3514
    %6755 = vmatpush.msra.mxu0 %v3513
    %6756 = vmatpush.msra.mxu0 %v3512
    %6757 = vmatpush.msra.mxu0 %v3511
    %6758 = vmatpush.msra.mxu0 %v3510
    %6759 = vmatpush.msra.mxu0 %v3509
    %6760 = vmatpush.msra.mxu0 %v3508
    %6761 = vmatpush.msra.mxu0 %v3507
    %6762 = vmatpush.msra.mxu0 %v3506
    %6763 = vmatmul.f32.gmra.mxu0 %v3742
    %v6764 = vpop.f32.mrf.mxu0
    %v6765 = vadd.f32 %v6745, %v6764
    %6766 = vdwg.mxu0
    %vm6767 = vcmask 156672
    %6768 = vst.msk [vmem:[#allocation4] sm:$0x3] %vm6767, %v6765
    // Predicated region
    $region30: #{bn_before_flatten_linear.1} parent=1 // pred_check
      _
    $region31: #{bn_before_flatten_linear.1} parent=1 // pred_check_branch
      %6770 = sbr.rel (0) target = $region33
    $region32: #{bn_before_flatten_linear.1} parent=1 // pred_region
      %6772 = vsyncadd [#allocation5], 0
      %s6774 = sshll.u32 [#allocation4], 4
      %s6775 = int_to_ptr.vmem [resolvable:$true] %s6774
      %s6776 = sshll.u32 %s7, 4
      %s6777 = int_to_ptr.hbm [resolvable:$true] %s6776
      %6779 = dma.vmem_to_hbm [thread:$0]  %s6775, 32, %s6777, [#allocation5]
    $region33: #{bn_before_flatten_linear.1} parent=1 // pred_fallthru
      _
    // Predicated region
    $region34: #{bn_before_flatten_linear.1} parent=1 // pred_check
      _
    $region35: #{bn_before_flatten_linear.1} parent=1 // pred_check_branch
      %6781 = sbr.rel (0) target = $region37
    $region36: #{bn_before_flatten_linear.1} parent=1 // pred_region
      %6783 = dma.done [#allocation5], 32
    $region37: #{bn_before_flatten_linear.1} parent=1 // pred_fallthru
      _
    %6784 = vsyncpa [#allocation5], 1

</llo_original>
